<compile_context>
chip_gen: v5e
topology: v5e:2x2
jax: 0.10.0
libtpu: 0.0.40
codegen_flags: <defaults>
</compile_context>

<pallas_src>
import jax
import jax.numpy as jnp
from jax import lax
from jax.experimental import pallas as pl
from jax.experimental.pallas import tpu as pltpu

FEATURE_DIM = 2048
HEAD_DIMS = [1024, 512, 256, 128]                    # shared_head Linear widths
PROJ_DIM = 128                                       # contrastive_head output
LAYER_DIMS = [FEATURE_DIM] + HEAD_DIMS + [PROJ_DIM]  # 2048,1024,512,256,128,128
EPS = 1e-12                                          # F.normalize default eps
TILE_B = 512                                         # max batch tile (halves step count vs 256)


def _round_up(x, m):
    return ((x + m - 1) // m) * m


def _pick_batch_tile(B):
    """Batch-aware tile.

    - tiny batches: one 8-row tile (sublane multiple),
    - mid-size batches: split roughly in half (rounded to 8) so the grid has
      >= 2 steps and v7x's second TensorCore gets work,
    - large batches: cap at TILE_B=512 (big MXU pushes, ~0.35us/step amortized).
    """
    if B <= 8:
        return 8
    half = _round_up(pl.cdiv(B, 2), 8)
    return min(TILE_B, half)


def _vmem_limit_bytes():
    """Generation-aware scoped-VMEM cap: ~48 MiB on v7x (64 MiB physical),
    ~96 MiB on v5e/v6e (128 MiB physical)."""
    cap = 64 << 20
    try:
        cap = int(getattr(pltpu.get_tpu_info(), "vmem_capacity_bytes", cap))
    except Exception:
        pass
    return min((cap * 3) // 4, 100 << 20)


def _resident_spec(shape):
    """VMEM-resident (constant-index) block; single-buffered to free VMEM.

    The weight/bias index_map is always (0, 0), so the block is never
    re-fetched; pl.Buffered(1) avoids reserving a second (unused) buffer.
    """
    try:
        return pl.BlockSpec(shape, lambda i: (0, 0), pipeline_mode=pl.Buffered(1))
    except (TypeError, AttributeError):  # older jax without pipeline_mode
        return pl.BlockSpec(shape, lambda i: (0, 0))


def ssl_head_kernel(f_ref,
                    w1_ref, b1_ref,
                    w2_ref, b2_ref,
                    w3_ref, b3_ref,
                    w4_ref, b4_ref,
                    wc_ref, bc_ref,
                    out_ref):
    """Fused shared_head MLP + contrastive_head + L2-normalize for one batch tile.

    f_ref:   (tile_b, 2048) bf16 features (cast ONCE outside the kernel)
    wK/bK:   bf16 weights (in, out) and f32 biases (1, out) of shared_head
    wc/bc:   contrastive_head Linear (128, 128) bf16 / (1, 128) f32
    out_ref: (tile_b, 128) L2-normalized projections (f32)
    """
    x = f_ref[...]  # already bf16 -> straight into the MXU

    # shared_head: Linear -> ReLU (Dropout = identity at inference).
    # bf16 operands into the MXU, f32 accumulation, bias/ReLU in f32.
    h = jnp.dot(x, w1_ref[...], preferred_element_type=jnp.float32) + b1_ref[...]
    h = jnp.maximum(h, 0.0).astype(jnp.bfloat16)
    h = jnp.dot(h, w2_ref[...], preferred_element_type=jnp.float32) + b2_ref[...]
    h = jnp.maximum(h, 0.0).astype(jnp.bfloat16)
    h = jnp.dot(h, w3_ref[...], preferred_element_type=jnp.float32) + b3_ref[...]
    h = jnp.maximum(h, 0.0).astype(jnp.bfloat16)
    h = jnp.dot(h, w4_ref[...], preferred_element_type=jnp.float32) + b4_ref[...]
    h = jnp.maximum(h, 0.0).astype(jnp.bfloat16)

    # contrastive_head (no activation), f32 accumulate.
    p = jnp.dot(h, wc_ref[...], preferred_element_type=jnp.float32) + bc_ref[...]

    # F.normalize(p, dim=1): p / max(||p||, eps) == p * rsqrt(max(||p||^2, eps^2))
    sq = jnp.sum(p * p, axis=-1, keepdims=True)
    inv = lax.rsqrt(jnp.maximum(sq, EPS * EPS))
    out_ref[...] = p * inv


def prepare_head_params(params):
    """One-time packing of the frozen head parameters for the kernel.

    Weights -> bf16 (in, out), biases -> f32 (1, out).  Call ONCE outside the
    jitted forward so the f32->bf16 casts are not re-executed every call
    (the head is frozen; the bf16 copies can be cached for the model lifetime).
    Real PyTorch weights ((out, in)) must be transposed before this.
    """
    args = []
    for (w, b), d_out in zip(params, LAYER_DIMS[1:]):
        args.append(jnp.asarray(w, dtype=jnp.bfloat16))
        args.append(jnp.asarray(b, dtype=jnp.float32).reshape(1, d_out))
    return tuple(args)


def ssl_head_forward(features, head_args):
    """features: (B, 2048) bf16 -> (B, 128) L2-normalized projections (f32)."""
    B = features.shape[0]
    if features.dtype != jnp.bfloat16:
        features = features.astype(jnp.bfloat16)

    tb = _pick_batch_tile(B)
    Bp = _round_up(B, tb)
    if Bp != B:
        # bf16 pad = half the traffic of the old f32 pad; only hit when B is
        # not a tile multiple.
        # TODO(synk): for very large non-multiple batches, handle the remainder
        # tile with a second small pallas_call instead of padding the tensor.
        features = jnp.pad(features, ((0, Bp - B), (0, 0)))

    in_specs = [pl.BlockSpec((tb, FEATURE_DIM), lambda i: (i, 0))]
    for d_in, d_out in zip(LAYER_DIMS[:-1], LAYER_DIMS[1:]):
        in_specs.append(_resident_spec((d_in, d_out)))   # weight, VMEM-resident
        in_specs.append(_resident_spec((1, d_out)))      # bias,   VMEM-resident

    flops = 2 * Bp * sum(i * o for i, o in zip(LAYER_DIMS[:-1], LAYER_DIMS[1:]))
    weight_bytes = sum(i * o * 2 + o * 4
                       for i, o in zip(LAYER_DIMS[:-1], LAYER_DIMS[1:]))
    bytes_accessed = weight_bytes + Bp * FEATURE_DIM * 2 + Bp * PROJ_DIM * 4

    out = pl.pallas_call(
        ssl_head_kernel,
        out_shape=jax.ShapeDtypeStruct((Bp, PROJ_DIM), jnp.float32),
        grid=(Bp // tb,),
        in_specs=in_specs,
        out_specs=pl.BlockSpec((tb, PROJ_DIM), lambda i: (i, 0)),
        compiler_params=pltpu.CompilerParams(
            dimension_semantics=("parallel",),      # shard batch tiles on v7x's 2 TCs
            vmem_limit_bytes=_vmem_limit_bytes(),   # 48 MiB v7x / ~96 MiB v5e/v6e
        ),
        cost_estimate=pl.CostEstimate(
            flops=flops,
            transcendentals=Bp,                     # one rsqrt per row
            bytes_accessed=bytes_accessed,
        ),
    )(features, *head_args)
    return out[:B]


def make_params(key):
    """Deterministic init of shared_head (4 Linears) + contrastive_head (f32).

    Weight layout is (in, out); real PyTorch weights ((out, in)) must be
    transposed before being passed in.
    """
    params = []
    for i in range(len(LAYER_DIMS) - 1):
        key, kw, kb = jax.random.split(key, 3)
        fan_in = LAYER_DIMS[i]
        bound = 1.0 / jnp.sqrt(fan_in)
        w = jax.random.uniform(kw, (LAYER_DIMS[i], LAYER_DIMS[i + 1]),
                               jnp.float32, -bound, bound)
        b = jax.random.uniform(kb, (LAYER_DIMS[i + 1],), jnp.float32,
                               -bound, bound)
        params.append((w, b))
    return params


def backbone_standin(x, w_feat):
    """Deterministic stand-in for the frozen ResNet50 backbone.

    x: (B, C, H, W) NCHW images -> (B, 2048) bf16 features.
    (Global average pool over spatial dims, fixed projection, ReLU — mimics
     pooled conv features; the real backbone is frozen so no gradients flow
     through it anyway.)  Emits bf16 so the Pallas head streams half the bytes.
    """
    pooled = jnp.mean(x, axis=(2, 3))          # (B, C)
    feats = jnp.maximum(pooled @ w_feat, 0.0)  # (B, 2048)
    return feats.astype(jnp.bfloat16)


@jax.jit
def contrastive_ssl_forward(x, w_feat, head_args):
    features = backbone_standin(x, w_feat)       # frozen backbone (XLA-fused), bf16 out
    return ssl_head_forward(features, head_args)  # fused Pallas MLP head


if __name__ == "__main__":
    key = jax.random.PRNGKey(0)
    k_x, k_feat, k_params = jax.random.split(key, 3)

    # Small example input consistent with the module: NCHW RGB images.
    B, C, H, W = 2, 3, 32, 32
    x = jax.random.normal(k_x, (B, C, H, W), jnp.float32)

    # Stand-in backbone projection (frozen) and head parameters.
    w_feat = jax.random.normal(k_feat, (C, FEATURE_DIM), jnp.float32) * 0.1
    params = make_params(k_params)

    # One-time bf16 packing of the frozen head (cached outside the jitted path).
    head_args = prepare_head_params(params)

    out = contrastive_ssl_forward(x, w_feat, head_args)
    out = jax.block_until_ready(out)

    assert out.shape == (B, PROJ_DIM), out.shape
    # Rows must be unit-norm (F.normalize semantics); normalization is done in
    # f32 on the f32 accumulator, so this holds tightly even with bf16 weights.
    norms = jnp.linalg.norm(out, axis=1)
    assert jnp.allclose(norms, 1.0, atol=1e-4), norms

    print("KERNEL_OK")
</pallas_src>

<mosaic_0001>
module attributes {stable_mosaic.version = 11 : i64} {
  func.func @ssl_head_kernel(%arg0: i32, %arg1: memref<8x2048xbf16, #tpu.memory_space<vmem>>, %arg2: memref<2048x1024xbf16, #tpu.memory_space<vmem>>, %arg3: memref<1x1024xf32, #tpu.memory_space<vmem>>, %arg4: memref<1024x512xbf16, #tpu.memory_space<vmem>>, %arg5: memref<1x512xf32, #tpu.memory_space<vmem>>, %arg6: memref<512x256xbf16, #tpu.memory_space<vmem>>, %arg7: memref<1x256xf32, #tpu.memory_space<vmem>>, %arg8: memref<256x128xbf16, #tpu.memory_space<vmem>>, %arg9: memref<1x128xf32, #tpu.memory_space<vmem>>, %arg10: memref<128x128xbf16, #tpu.memory_space<vmem>>, %arg11: memref<1x128xf32, #tpu.memory_space<vmem>>, %arg12: memref<8x128xf32, #tpu.memory_space<vmem>>) attributes {dimension_semantics = [#tpu.dimension_semantics<parallel>], iteration_bounds = array<i64: 1>, scalar_prefetch = 0 : i64, scratch_operands = 0 : i64, tpu.core_type = #tpu.core_type<tc>, window_params = [{transform_indices = @transform_0, window_bounds = array<i64: 8, 2048>}, {pipeline_mode = #tpu.pipeline_mode<synchronous>, transform_indices = @transform_1, window_bounds = array<i64: 2048, 1024>}, {pipeline_mode = #tpu.pipeline_mode<synchronous>, transform_indices = @transform_2, window_bounds = array<i64: 1, 1024>}, {pipeline_mode = #tpu.pipeline_mode<synchronous>, transform_indices = @transform_3, window_bounds = array<i64: 1024, 512>}, {pipeline_mode = #tpu.pipeline_mode<synchronous>, transform_indices = @transform_4, window_bounds = array<i64: 1, 512>}, {pipeline_mode = #tpu.pipeline_mode<synchronous>, transform_indices = @transform_5, window_bounds = array<i64: 512, 256>}, {pipeline_mode = #tpu.pipeline_mode<synchronous>, transform_indices = @transform_6, window_bounds = array<i64: 1, 256>}, {pipeline_mode = #tpu.pipeline_mode<synchronous>, transform_indices = @transform_7, window_bounds = array<i64: 256, 128>}, {pipeline_mode = #tpu.pipeline_mode<synchronous>, transform_indices = @transform_8, window_bounds = array<i64: 1, 128>}, {pipeline_mode = #tpu.pipeline_mode<synchronous>, transform_indices = @transform_9, window_bounds = array<i64: 128, 128>}, {pipeline_mode = #tpu.pipeline_mode<synchronous>, transform_indices = @transform_10, window_bounds = array<i64: 1, 128>}, {transform_indices = @transform_11, window_bounds = array<i64: 8, 128>}]} {
    %c0 = arith.constant 0 : index
    %c0_0 = arith.constant 0 : index
    %0 = vector.load %arg1[%c0, %c0_0] : memref<8x2048xbf16, #tpu.memory_space<vmem>>, vector<8x2048xbf16>
    %c0_1 = arith.constant 0 : index
    %c0_2 = arith.constant 0 : index
    %1 = vector.load %arg2[%c0_1, %c0_2] : memref<2048x1024xbf16, #tpu.memory_space<vmem>>, vector<2048x1024xbf16>
    %cst = arith.constant dense<0.000000e+00> : vector<8x1024xf32>
    %2 = tpu.matmul %0, %1, %cst {dimension_numbers = #tpu.dot_dimension_numbers<[1], [0], [0], [1], [0, 0, 1, 1], [], []>} : vector<8x2048xbf16>, vector<2048x1024xbf16>, vector<8x1024xf32> -> vector<8x1024xf32>
    %c0_3 = arith.constant 0 : index
    %c0_4 = arith.constant 0 : index
    %3 = vector.load %arg3[%c0_3, %c0_4] : memref<1x1024xf32, #tpu.memory_space<vmem>>, vector<1x1024xf32>
    %4 = vector.broadcast %3 : vector<1x1024xf32> to vector<8x1024xf32>
    %5 = arith.addf %2, %4 : vector<8x1024xf32>
    %cst_5 = arith.constant 0.000000e+00 : f32
    %6 = vector.broadcast %cst_5 : f32 to vector<8x1024xf32>
    %7 = arith.maximumf %5, %6 : vector<8x1024xf32>
    %8 = arith.truncf %7 : vector<8x1024xf32> to vector<8x1024xbf16>
    %c0_6 = arith.constant 0 : index
    %c0_7 = arith.constant 0 : index
    %9 = vector.load %arg4[%c0_6, %c0_7] : memref<1024x512xbf16, #tpu.memory_space<vmem>>, vector<1024x512xbf16>
    %cst_8 = arith.constant dense<0.000000e+00> : vector<8x512xf32>
    %10 = tpu.matmul %8, %9, %cst_8 {dimension_numbers = #tpu.dot_dimension_numbers<[1], [0], [0], [1], [0, 0, 1, 1], [], []>} : vector<8x1024xbf16>, vector<1024x512xbf16>, vector<8x512xf32> -> vector<8x512xf32>
    %c0_9 = arith.constant 0 : index
    %c0_10 = arith.constant 0 : index
    %11 = vector.load %arg5[%c0_9, %c0_10] : memref<1x512xf32, #tpu.memory_space<vmem>>, vector<1x512xf32>
    %12 = vector.broadcast %11 : vector<1x512xf32> to vector<8x512xf32>
    %13 = arith.addf %10, %12 : vector<8x512xf32>
    %cst_11 = arith.constant 0.000000e+00 : f32
    %14 = vector.broadcast %cst_11 : f32 to vector<8x512xf32>
    %15 = arith.maximumf %13, %14 : vector<8x512xf32>
    %16 = arith.truncf %15 : vector<8x512xf32> to vector<8x512xbf16>
    %c0_12 = arith.constant 0 : index
    %c0_13 = arith.constant 0 : index
    %17 = vector.load %arg6[%c0_12, %c0_13] : memref<512x256xbf16, #tpu.memory_space<vmem>>, vector<512x256xbf16>
    %cst_14 = arith.constant dense<0.000000e+00> : vector<8x256xf32>
    %18 = tpu.matmul %16, %17, %cst_14 {dimension_numbers = #tpu.dot_dimension_numbers<[1], [0], [0], [1], [0, 0, 1, 1], [], []>} : vector<8x512xbf16>, vector<512x256xbf16>, vector<8x256xf32> -> vector<8x256xf32>
    %c0_15 = arith.constant 0 : index
    %c0_16 = arith.constant 0 : index
    %19 = vector.load %arg7[%c0_15, %c0_16] : memref<1x256xf32, #tpu.memory_space<vmem>>, vector<1x256xf32>
    %20 = vector.broadcast %19 : vector<1x256xf32> to vector<8x256xf32>
    %21 = arith.addf %18, %20 : vector<8x256xf32>
    %cst_17 = arith.constant 0.000000e+00 : f32
    %22 = vector.broadcast %cst_17 : f32 to vector<8x256xf32>
    %23 = arith.maximumf %21, %22 : vector<8x256xf32>
    %24 = arith.truncf %23 : vector<8x256xf32> to vector<8x256xbf16>
    %c0_18 = arith.constant 0 : index
    %c0_19 = arith.constant 0 : index
    %25 = vector.load %arg8[%c0_18, %c0_19] : memref<256x128xbf16, #tpu.memory_space<vmem>>, vector<256x128xbf16>
    %cst_20 = arith.constant dense<0.000000e+00> : vector<8x128xf32>
    %26 = tpu.matmul %24, %25, %cst_20 {dimension_numbers = #tpu.dot_dimension_numbers<[1], [0], [0], [1], [0, 0, 1, 1], [], []>} : vector<8x256xbf16>, vector<256x128xbf16>, vector<8x128xf32> -> vector<8x128xf32>
    %c0_21 = arith.constant 0 : index
    %c0_22 = arith.constant 0 : index
    %27 = vector.load %arg9[%c0_21, %c0_22] : memref<1x128xf32, #tpu.memory_space<vmem>>, vector<1x128xf32>
    %28 = vector.broadcast %27 : vector<1x128xf32> to vector<8x128xf32>
    %29 = arith.addf %26, %28 : vector<8x128xf32>
    %cst_23 = arith.constant 0.000000e+00 : f32
    %30 = vector.broadcast %cst_23 : f32 to vector<8x128xf32>
    %31 = arith.maximumf %29, %30 : vector<8x128xf32>
    %32 = arith.truncf %31 : vector<8x128xf32> to vector<8x128xbf16>
    %c0_24 = arith.constant 0 : index
    %c0_25 = arith.constant 0 : index
    %33 = vector.load %arg10[%c0_24, %c0_25] : memref<128x128xbf16, #tpu.memory_space<vmem>>, vector<128x128xbf16>
    %cst_26 = arith.constant dense<0.000000e+00> : vector<8x128xf32>
    %34 = tpu.matmul %32, %33, %cst_26 {dimension_numbers = #tpu.dot_dimension_numbers<[1], [0], [0], [1], [0, 0, 1, 1], [], []>} : vector<8x128xbf16>, vector<128x128xbf16>, vector<8x128xf32> -> vector<8x128xf32>
    %c0_27 = arith.constant 0 : index
    %c0_28 = arith.constant 0 : index
    %35 = vector.load %arg11[%c0_27, %c0_28] : memref<1x128xf32, #tpu.memory_space<vmem>>, vector<1x128xf32>
    %36 = vector.broadcast %35 : vector<1x128xf32> to vector<8x128xf32>
    %37 = arith.addf %34, %36 : vector<8x128xf32>
    %38 = arith.mulf %37, %37 : vector<8x128xf32>
    %cst_29 = arith.constant dense<0.000000e+00> : vector<8xf32>
    %39 = vector.multi_reduction <add>, %38, %cst_29 [1] : vector<8x128xf32> to vector<8xf32>
    %40 = vector.shape_cast %39 : vector<8xf32> to vector<8x1xf32>
    %cst_30 = arith.constant 1.000000e-24 : f32
    %41 = vector.broadcast %cst_30 : f32 to vector<8x1xf32>
    %42 = arith.maximumf %40, %41 : vector<8x1xf32>
    %43 = math.rsqrt %42 : vector<8x1xf32>
    %44 = vector.broadcast %43 : vector<8x1xf32> to vector<8x128xf32>
    %45 = arith.mulf %37, %44 : vector<8x128xf32>
    %c0_31 = arith.constant 0 : index
    %c0_32 = arith.constant 0 : index
    %46 = vector.load %arg12[%c0_31, %c0_32] : memref<8x128xf32, #tpu.memory_space<vmem>>, vector<8x128xf32>
    tpu.vector_store %arg12[%c0_31, %c0_32], %45 {strides = array<i32>} : memref<8x128xf32, #tpu.memory_space<vmem>>, vector<8x128xf32>,
    return
  }
  func.func @transform_0(%arg0: i32) -> (i32, i32) {
    %c0_i32 = arith.constant 0 : i32
    %c0_i32_0 = arith.constant 0 : i32
    return %arg0, %c0_i32 : i32, i32
  }
  func.func @transform_1(%arg0: i32) -> (i32, i32) {
    %c0_i32 = arith.constant 0 : i32
    %c0_i32_0 = arith.constant 0 : i32
    %c0_i32_1 = arith.constant 0 : i32
    return %c0_i32, %c0_i32_0 : i32, i32
  }
  func.func @transform_2(%arg0: i32) -> (i32, i32) {
    %c0_i32 = arith.constant 0 : i32
    %c0_i32_0 = arith.constant 0 : i32
    %c0_i32_1 = arith.constant 0 : i32
    return %c0_i32, %c0_i32_0 : i32, i32
  }
  func.func @transform_3(%arg0: i32) -> (i32, i32) {
    %c0_i32 = arith.constant 0 : i32
    %c0_i32_0 = arith.constant 0 : i32
    %c0_i32_1 = arith.constant 0 : i32
    return %c0_i32, %c0_i32_0 : i32, i32
  }
  func.func @transform_4(%arg0: i32) -> (i32, i32) {
    %c0_i32 = arith.constant 0 : i32
    %c0_i32_0 = arith.constant 0 : i32
    %c0_i32_1 = arith.constant 0 : i32
    return %c0_i32, %c0_i32_0 : i32, i32
  }
  func.func @transform_5(%arg0: i32) -> (i32, i32) {
    %c0_i32 = arith.constant 0 : i32
    %c0_i32_0 = arith.constant 0 : i32
    %c0_i32_1 = arith.constant 0 : i32
    return %c0_i32, %c0_i32_0 : i32, i32
  }
  func.func @transform_6(%arg0: i32) -> (i32, i32) {
    %c0_i32 = arith.constant 0 : i32
    %c0_i32_0 = arith.constant 0 : i32
    %c0_i32_1 = arith.constant 0 : i32
    return %c0_i32, %c0_i32_0 : i32, i32
  }
  func.func @transform_7(%arg0: i32) -> (i32, i32) {
    %c0_i32 = arith.constant 0 : i32
    %c0_i32_0 = arith.constant 0 : i32
    %c0_i32_1 = arith.constant 0 : i32
    return %c0_i32, %c0_i32_0 : i32, i32
  }
  func.func @transform_8(%arg0: i32) -> (i32, i32) {
    %c0_i32 = arith.constant 0 : i32
    %c0_i32_0 = arith.constant 0 : i32
    %c0_i32_1 = arith.constant 0 : i32
    return %c0_i32, %c0_i32_0 : i32, i32
  }
  func.func @transform_9(%arg0: i32) -> (i32, i32) {
    %c0_i32 = arith.constant 0 : i32
    %c0_i32_0 = arith.constant 0 : i32
    %c0_i32_1 = arith.constant 0 : i32
    return %c0_i32, %c0_i32_0 : i32, i32
  }
  func.func @transform_10(%arg0: i32) -> (i32, i32) {
    %c0_i32 = arith.constant 0 : i32
    %c0_i32_0 = arith.constant 0 : i32
    %c0_i32_1 = arith.constant 0 : i32
    return %c0_i32, %c0_i32_0 : i32, i32
  }
  func.func @transform_11(%arg0: i32) -> (i32, i32) {
    %c0_i32 = arith.constant 0 : i32
    %c0_i32_0 = arith.constant 0 : i32
    return %arg0, %c0_i32 : i32, i32
  }
}

</mosaic_0001>

<llo_original>
// kernel: contrastive_ssl_forward.1
$region0: #{contrastive_ssl_forward.1}
  #allocation0 [shape = 'u32[]', space=smem, size = 0x4, offset = 0x4, fixed_abs, tag = 'smem constant byte address 0x4 - core index']
  #allocation1 [shape = 'u32[72,128]{1,0:T(1,128)}', space=vmem, size = 0x9000, scoped, tag = 'internal scratch']
  %s0 = inlined_call_operand.vmem [shape: bf16[8,2048], index: 0, kind: input, shape index: {}]
  %s1 = inlined_call_operand.hbm [shape: bf16[2048,1024], index: 1, kind: input, shape index: {}]
  %s2 = inlined_call_operand.hbm [shape: f32[1,1024], index: 2, kind: input, shape index: {}]
  %s3 = inlined_call_operand.hbm [shape: bf16[1024,512], index: 3, kind: input, shape index: {}]
  %s4 = inlined_call_operand.hbm [shape: f32[1,512], index: 4, kind: input, shape index: {}]
  %s5 = inlined_call_operand.hbm [shape: bf16[512,256], index: 5, kind: input, shape index: {}]
  %s6 = inlined_call_operand.hbm [shape: f32[1,256], index: 6, kind: input, shape index: {}]
  %s7 = inlined_call_operand.hbm [shape: bf16[256,128], index: 7, kind: input, shape index: {}]
  %s8 = inlined_call_operand.hbm [shape: f32[1,128], index: 8, kind: input, shape index: {}]
  %s9 = inlined_call_operand.hbm [shape: bf16[128,128], index: 9, kind: input, shape index: {}]
  %s10 = inlined_call_operand.hbm [shape: f32[1,128], index: 10, kind: input, shape index: {}]
  %s11 = inlined_call_operand.vmem [shape: f32[8,128], index: 11, kind: output, shape index: {}]
  %s12 = sld [smem:[#allocation0]]
  $region94: #{contrastive_ssl_forward.1} parent=0
    _
  %s14 = ssub.s32 1, %s12
  %s15 = scalar_select 0, %s14, %s12
  $region1: #{contrastive_ssl_forward.1} parent=0
    #allocation2 [shape = 'u8[4194304]{0}', space=vmem, size = 0x400000, scoped, tag = 'input window, operand 1, single buffered']
    #allocation3 [shape = 's32[1]{0}', space=sflag, size = 0x4, scoped, tag = 'scoped memory for contrastive_ssl_forward.1']
    #allocation4 [shape = 'u8[4096]{0}', space=vmem, size = 0x1000, scoped, tag = 'input window, operand 2, single buffered']
    #allocation5 [shape = 's32[1]{0}', space=sflag, size = 0x4, scoped, tag = 'scoped memory for contrastive_ssl_forward.1']
    #allocation6 [shape = 'u8[1048576]{0}', space=vmem, size = 0x100000, scoped, tag = 'input window, operand 3, single buffered']
    #allocation7 [shape = 'u8[2048]{0}', space=vmem, size = 0x800, scoped, tag = 'input window, operand 4, single buffered']
    #allocation8 [shape = 's32[1]{0}', space=sflag, size = 0x4, scoped, tag = 'scoped memory for contrastive_ssl_forward.1']
    #allocation9 [shape = 'u8[262144]{0}', space=vmem, size = 0x40000, scoped, tag = 'input window, operand 5, single buffered']
    #allocation10 [shape = 'u8[1024]{0}', space=vmem, size = 0x400, scoped, tag = 'input window, operand 6, single buffered']
    #allocation11 [shape = 's32[1]{0}', space=sflag, size = 0x4, scoped, tag = 'scoped memory for contrastive_ssl_forward.1']
    #allocation12 [shape = 'u8[65536]{0}', space=vmem, size = 0x10000, scoped, tag = 'input window, operand 7, single buffered']
    #allocation13 [shape = 'u8[512]{0}', space=vmem, size = 0x400, scoped, tag = 'input window, operand 8, single buffered']
    #allocation14 [shape = 's32[1]{0}', space=sflag, size = 0x4, scoped, tag = 'scoped memory for contrastive_ssl_forward.1']
    #allocation15 [shape = 'u8[32768]{0}', space=vmem, size = 0x8000, scoped, tag = 'input window, operand 9, single buffered']
    #allocation16 [shape = 'u8[512]{0}', space=vmem, size = 0x400, scoped, tag = 'input window, operand 10, single buffered']
    #allocation17 [shape = 's32[1]{0}', space=sflag, size = 0x4, scoped, tag = 'scoped memory for contrastive_ssl_forward.1']
    %16 = vsyncpa [#allocation3], 0
    %17 = vsyncpa [#allocation5], 0
    %18 = vsyncpa [#allocation8], 0
    %19 = vsyncpa [#allocation11], 0
    %20 = vsyncpa [#allocation14], 0
    %21 = vsyncpa [#allocation17], 0
    // Predicated region
    $region2: #{contrastive_ssl_forward.1} parent=1 // pred_check
      _
    $region3: #{contrastive_ssl_forward.1} parent=1 // pred_check_branch
      %23 = sbr.rel (0) target = $region5
    $region4: #{contrastive_ssl_forward.1} parent=1 // pred_region
      _
    $region5: #{contrastive_ssl_forward.1} parent=1 // pred_fallthru
      _
    // Predicated region
    $region6: #{contrastive_ssl_forward.1} parent=1 // pred_check
      _
    $region7: #{contrastive_ssl_forward.1} parent=1 // pred_check_branch
      %25 = sbr.rel (0) target = $region9
    $region8: #{contrastive_ssl_forward.1} parent=1 // pred_region
      %27 = vsyncadd [#allocation3], 0
      %s28 = sshll.u32 %s1, 4
      %s29 = int_to_ptr.hbm [resolvable:$true] %s28
      %s30 = sshll.u32 [#allocation2], 4
      %s31 = int_to_ptr.vmem [resolvable:$true] %s30
      %36 = dma.hbm_to_vmem [thread:$0]  %s29, 131072, %s31, [#allocation3], 512, 512, 32
    $region9: #{contrastive_ssl_forward.1} parent=1 // pred_fallthru
      _
    // Predicated region
    $region10: #{contrastive_ssl_forward.1} parent=1 // pred_check
      _
    $region11: #{contrastive_ssl_forward.1} parent=1 // pred_check_branch
      %38 = sbr.rel (0) target = $region13
    $region12: #{contrastive_ssl_forward.1} parent=1 // pred_region
      %40 = vsyncadd [#allocation5], 0
      %s42 = sshll.u32 %s2, 4
      %s43 = int_to_ptr.hbm [resolvable:$true] %s42
      %s44 = sshll.u32 [#allocation4], 4
      %s45 = int_to_ptr.vmem [resolvable:$true] %s44
      %47 = dma.hbm_to_vmem [thread:$0]  %s43, 128, %s45, [#allocation5]
    $region13: #{contrastive_ssl_forward.1} parent=1 // pred_fallthru
      _
    // Predicated region
    $region14: #{contrastive_ssl_forward.1} parent=1 // pred_check
      _
    $region15: #{contrastive_ssl_forward.1} parent=1 // pred_check_branch
      %49 = sbr.rel (0) target = $region17
    $region16: #{contrastive_ssl_forward.1} parent=1 // pred_region
      %51 = vsyncadd [#allocation5], 0
      %s52 = sshll.u32 %s3, 4
      %s53 = int_to_ptr.hbm [resolvable:$true] %s52
      %s54 = sshll.u32 [#allocation6], 4
      %s55 = int_to_ptr.vmem [resolvable:$true] %s54
      %60 = dma.hbm_to_vmem [thread:$0]  %s53, 32768, %s55, [#allocation5], 256, 256, 16
    $region17: #{contrastive_ssl_forward.1} parent=1 // pred_fallthru
      _
    // Predicated region
    $region18: #{contrastive_ssl_forward.1} parent=1 // pred_check
      _
    $region19: #{contrastive_ssl_forward.1} parent=1 // pred_check_branch
      %62 = sbr.rel (0) target = $region21
    $region20: #{contrastive_ssl_forward.1} parent=1 // pred_region
      %64 = vsyncadd [#allocation8], 0
      %s66 = sshll.u32 %s4, 4
      %s67 = int_to_ptr.hbm [resolvable:$true] %s66
      %s68 = sshll.u32 [#allocation7], 4
      %s69 = int_to_ptr.vmem [resolvable:$true] %s68
      %71 = dma.hbm_to_vmem [thread:$0]  %s67, 64, %s69, [#allocation8]
    $region21: #{contrastive_ssl_forward.1} parent=1 // pred_fallthru
      _
    // Predicated region
    $region22: #{contrastive_ssl_forward.1} parent=1 // pred_check
      _
    $region23: #{contrastive_ssl_forward.1} parent=1 // pred_check_branch
      %73 = sbr.rel (0) target = $region25
    $region24: #{contrastive_ssl_forward.1} parent=1 // pred_region
      %75 = vsyncadd [#allocation8], 0
      %s76 = sshll.u32 %s5, 4
      %s77 = int_to_ptr.hbm [resolvable:$true] %s76
      %s78 = sshll.u32 [#allocation9], 4
      %s79 = int_to_ptr.vmem [resolvable:$true] %s78
      %84 = dma.hbm_to_vmem [thread:$0]  %s77, 8192, %s79, [#allocation8], 128, 128, 8
    $region25: #{contrastive_ssl_forward.1} parent=1 // pred_fallthru
      _
    // Predicated region
    $region26: #{contrastive_ssl_forward.1} parent=1 // pred_check
      _
    $region27: #{contrastive_ssl_forward.1} parent=1 // pred_check_branch
      %86 = sbr.rel (0) target = $region29
    $region28: #{contrastive_ssl_forward.1} parent=1 // pred_region
      %88 = vsyncadd [#allocation11], 0
      %s90 = sshll.u32 %s6, 4
      %s91 = int_to_ptr.hbm [resolvable:$true] %s90
      %s92 = sshll.u32 [#allocation10], 4
      %s93 = int_to_ptr.vmem [resolvable:$true] %s92
      %95 = dma.hbm_to_vmem [thread:$0]  %s91, 32, %s93, [#allocation11]
    $region29: #{contrastive_ssl_forward.1} parent=1 // pred_fallthru
      _
    // Predicated region
    $region30: #{contrastive_ssl_forward.1} parent=1 // pred_check
      _
    $region31: #{contrastive_ssl_forward.1} parent=1 // pred_check_branch
      %97 = sbr.rel (0) target = $region33
    $region32: #{contrastive_ssl_forward.1} parent=1 // pred_region
      %99 = vsyncadd [#allocation11], 0
      %s100 = sshll.u32 %s7, 4
      %s101 = int_to_ptr.hbm [resolvable:$true] %s100
      %s102 = sshll.u32 [#allocation12], 4
      %s103 = int_to_ptr.vmem [resolvable:$true] %s102
      %108 = dma.hbm_to_vmem [thread:$0]  %s101, 2048, %s103, [#allocation11], 64, 64, 4
    $region33: #{contrastive_ssl_forward.1} parent=1 // pred_fallthru
      _
    // Predicated region
    $region34: #{contrastive_ssl_forward.1} parent=1 // pred_check
      _
    $region35: #{contrastive_ssl_forward.1} parent=1 // pred_check_branch
      %110 = sbr.rel (0) target = $region37
    $region36: #{contrastive_ssl_forward.1} parent=1 // pred_region
      %112 = vsyncadd [#allocation14], 0
      %s114 = sshll.u32 %s8, 4
      %s115 = int_to_ptr.hbm [resolvable:$true] %s114
      %s116 = sshll.u32 [#allocation13], 4
      %s117 = int_to_ptr.vmem [resolvable:$true] %s116
      %119 = dma.hbm_to_vmem [thread:$0]  %s115, 16, %s117, [#allocation14]
    $region37: #{contrastive_ssl_forward.1} parent=1 // pred_fallthru
      _
    // Predicated region
    $region38: #{contrastive_ssl_forward.1} parent=1 // pred_check
      _
    $region39: #{contrastive_ssl_forward.1} parent=1 // pred_check_branch
      %121 = sbr.rel (0) target = $region41
    $region40: #{contrastive_ssl_forward.1} parent=1 // pred_region
      %123 = vsyncadd [#allocation14], 0
      %s124 = sshll.u32 %s9, 4
      %s125 = int_to_ptr.hbm [resolvable:$true] %s124
      %s126 = sshll.u32 [#allocation15], 4
      %s127 = int_to_ptr.vmem [resolvable:$true] %s126
      %132 = dma.hbm_to_vmem [thread:$0]  %s125, 1024, %s127, [#allocation14], 64, 64, 4
    $region41: #{contrastive_ssl_forward.1} parent=1 // pred_fallthru
      _
    // Predicated region
    $region42: #{contrastive_ssl_forward.1} parent=1 // pred_check
      _
    $region43: #{contrastive_ssl_forward.1} parent=1 // pred_check_branch
      %134 = sbr.rel (0) target = $region45
    $region44: #{contrastive_ssl_forward.1} parent=1 // pred_region
      %136 = vsyncadd [#allocation17], 0
      %s138 = sshll.u32 %s10, 4
      %s139 = int_to_ptr.hbm [resolvable:$true] %s138
      %s140 = sshll.u32 [#allocation16], 4
      %s141 = int_to_ptr.vmem [resolvable:$true] %s140
      %143 = dma.hbm_to_vmem [thread:$0]  %s139, 16, %s141, [#allocation17]
    $region45: #{contrastive_ssl_forward.1} parent=1 // pred_fallthru
      _
    // Predicated region
    $region46: #{contrastive_ssl_forward.1} parent=1 // pred_check
      _
    $region47: #{contrastive_ssl_forward.1} parent=1 // pred_check_branch
      %145 = sbr.rel (0) target = $region49
    $region48: #{contrastive_ssl_forward.1} parent=1 // pred_region
      %147 = dma.done [#allocation3], 131072
    $region49: #{contrastive_ssl_forward.1} parent=1 // pred_fallthru
      _
    // Predicated region
    $region50: #{contrastive_ssl_forward.1} parent=1 // pred_check
      _
    $region51: #{contrastive_ssl_forward.1} parent=1 // pred_check_branch
      %149 = sbr.rel (0) target = $region53
    $region52: #{contrastive_ssl_forward.1} parent=1 // pred_region
      %151 = dma.done [#allocation5], 128
    $region53: #{contrastive_ssl_forward.1} parent=1 // pred_fallthru
      _
    // Predicated region
    $region54: #{contrastive_ssl_forward.1} parent=1 // pred_check
      _
    $region55: #{contrastive_ssl_forward.1} parent=1 // pred_check_branch
      %153 = sbr.rel (0) target = $region57
    $region56: #{contrastive_ssl_forward.1} parent=1 // pred_region
      %155 = dma.done [#allocation5], 32768
    $region57: #{contrastive_ssl_forward.1} parent=1 // pred_fallthru
      _
    // Predicated region
    $region58: #{contrastive_ssl_forward.1} parent=1 // pred_check
      _
    $region59: #{contrastive_ssl_forward.1} parent=1 // pred_check_branch
      %157 = sbr.rel (0) target = $region61
    $region60: #{contrastive_ssl_forward.1} parent=1 // pred_region
      %159 = dma.done [#allocation8], 64
    $region61: #{contrastive_ssl_forward.1} parent=1 // pred_fallthru
      _
    // Predicated region
    $region62: #{contrastive_ssl_forward.1} parent=1 // pred_check
      _
    $region63: #{contrastive_ssl_forward.1} parent=1 // pred_check_branch
      %161 = sbr.rel (0) target = $region65
    $region64: #{contrastive_ssl_forward.1} parent=1 // pred_region
      %163 = dma.done [#allocation8], 8192
    $region65: #{contrastive_ssl_forward.1} parent=1 // pred_fallthru
      _
    // Predicated region
    $region66: #{contrastive_ssl_forward.1} parent=1 // pred_check
      _
    $region67: #{contrastive_ssl_forward.1} parent=1 // pred_check_branch
      %165 = sbr.rel (0) target = $region69
    $region68: #{contrastive_ssl_forward.1} parent=1 // pred_region
      %167 = dma.done [#allocation11], 32
    $region69: #{contrastive_ssl_forward.1} parent=1 // pred_fallthru
      _
    // Predicated region
    $region70: #{contrastive_ssl_forward.1} parent=1 // pred_check
      _
    $region71: #{contrastive_ssl_forward.1} parent=1 // pred_check_branch
      %169 = sbr.rel (0) target = $region73
    $region72: #{contrastive_ssl_forward.1} parent=1 // pred_region
      %171 = dma.done [#allocation11], 2048
    $region73: #{contrastive_ssl_forward.1} parent=1 // pred_fallthru
      _
    // Predicated region
    $region74: #{contrastive_ssl_forward.1} parent=1 // pred_check
      _
    $region75: #{contrastive_ssl_forward.1} parent=1 // pred_check_branch
      %173 = sbr.rel (0) target = $region77
    $region76: #{contrastive_ssl_forward.1} parent=1 // pred_region
      %175 = dma.done [#allocation14], 16
    $region77: #{contrastive_ssl_forward.1} parent=1 // pred_fallthru
      _
    // Predicated region
    $region78: #{contrastive_ssl_forward.1} parent=1 // pred_check
      _
    $region79: #{contrastive_ssl_forward.1} parent=1 // pred_check_branch
      %177 = sbr.rel (0) target = $region81
    $region80: #{contrastive_ssl_forward.1} parent=1 // pred_region
      %179 = dma.done [#allocation14], 1024
    $region81: #{contrastive_ssl_forward.1} parent=1 // pred_fallthru
      _
    // Predicated region
    $region82: #{contrastive_ssl_forward.1} parent=1 // pred_check
      _
    $region83: #{contrastive_ssl_forward.1} parent=1 // pred_check_branch
      %181 = sbr.rel (0) target = $region85
    $region84: #{contrastive_ssl_forward.1} parent=1 // pred_region
      %183 = dma.done [#allocation17], 16
    $region85: #{contrastive_ssl_forward.1} parent=1 // pred_fallthru
      _
    %v184 = vld [vmem:[%s0] sm:$0xff]
    %v185 = vld [vmem:[%s0 + $0x8] sm:$0xff]
    %v186 = vld [vmem:[%s0 + $0x10] sm:$0xff]
    %v187 = vld [vmem:[%s0 + $0x18] sm:$0xff]
    %v188 = vld [vmem:[%s0 + $0x20] sm:$0xff]
    %v189 = vld [vmem:[%s0 + $0x28] sm:$0xff]
    %v190 = vld [vmem:[%s0 + $0x30] sm:$0xff]
    %v191 = vld [vmem:[%s0 + $0x38] sm:$0xff]
    %v192 = vld [vmem:[#allocation2] sm:$0xff]
    %v193 = vld [vmem:[#allocation2 + $0x8] sm:$0xff]
    %v194 = vld [vmem:[#allocation2 + $0x10] sm:$0xff]
    %v195 = vld [vmem:[#allocation2 + $0x18] sm:$0xff]
    %v196 = vld [vmem:[#allocation2 + $0x20] sm:$0xff]
    %v197 = vld [vmem:[#allocation2 + $0x28] sm:$0xff]
    %v198 = vld [vmem:[#allocation2 + $0x30] sm:$0xff]
    %v199 = vld [vmem:[#allocation2 + $0x38] sm:$0xff]
    %v200 = vld [vmem:[#allocation2 + $0x40] sm:$0xff]
    %v201 = vld [vmem:[#allocation2 + $0x48] sm:$0xff]
    %v202 = vld [vmem:[#allocation2 + $0x50] sm:$0xff]
    %v203 = vld [vmem:[#allocation2 + $0x58] sm:$0xff]
    %v204 = vld [vmem:[#allocation2 + $0x60] sm:$0xff]
    %v205 = vld [vmem:[#allocation2 + $0x68] sm:$0xff]
    %v206 = vld [vmem:[#allocation2 + $0x70] sm:$0xff]
    %v207 = vld [vmem:[#allocation2 + $0x78] sm:$0xff]
    %v208 = vld [vmem:[#allocation2 + $0x80] sm:$0xff]
    %v209 = vld [vmem:[#allocation2 + $0x88] sm:$0xff]
    %v210 = vld [vmem:[#allocation2 + $0x90] sm:$0xff]
    %v211 = vld [vmem:[#allocation2 + $0x98] sm:$0xff]
    %v212 = vld [vmem:[#allocation2 + $0xa0] sm:$0xff]
    %v213 = vld [vmem:[#allocation2 + $0xa8] sm:$0xff]
    %v214 = vld [vmem:[#allocation2 + $0xb0] sm:$0xff]
    %v215 = vld [vmem:[#allocation2 + $0xb8] sm:$0xff]
    %v216 = vld [vmem:[#allocation2 + $0xc0] sm:$0xff]
    %v217 = vld [vmem:[#allocation2 + $0xc8] sm:$0xff]
    %v218 = vld [vmem:[#allocation2 + $0xd0] sm:$0xff]
    %v219 = vld [vmem:[#allocation2 + $0xd8] sm:$0xff]
    %v220 = vld [vmem:[#allocation2 + $0xe0] sm:$0xff]
    %v221 = vld [vmem:[#allocation2 + $0xe8] sm:$0xff]
    %v222 = vld [vmem:[#allocation2 + $0xf0] sm:$0xff]
    %v223 = vld [vmem:[#allocation2 + $0xf8] sm:$0xff]
    %v224 = vld [vmem:[#allocation2 + $0x100] sm:$0xff]
    %v225 = vld [vmem:[#allocation2 + $0x108] sm:$0xff]
    %v226 = vld [vmem:[#allocation2 + $0x110] sm:$0xff]
    %v227 = vld [vmem:[#allocation2 + $0x118] sm:$0xff]
    %v228 = vld [vmem:[#allocation2 + $0x120] sm:$0xff]
    %v229 = vld [vmem:[#allocation2 + $0x128] sm:$0xff]
    %v230 = vld [vmem:[#allocation2 + $0x130] sm:$0xff]
    %v231 = vld [vmem:[#allocation2 + $0x138] sm:$0xff]
    %v232 = vld [vmem:[#allocation2 + $0x140] sm:$0xff]
    %v233 = vld [vmem:[#allocation2 + $0x148] sm:$0xff]
    %v234 = vld [vmem:[#allocation2 + $0x150] sm:$0xff]
    %v235 = vld [vmem:[#allocation2 + $0x158] sm:$0xff]
    %v236 = vld [vmem:[#allocation2 + $0x160] sm:$0xff]
    %v237 = vld [vmem:[#allocation2 + $0x168] sm:$0xff]
    %v238 = vld [vmem:[#allocation2 + $0x170] sm:$0xff]
    %v239 = vld [vmem:[#allocation2 + $0x178] sm:$0xff]
    %v240 = vld [vmem:[#allocation2 + $0x180] sm:$0xff]
    %v241 = vld [vmem:[#allocation2 + $0x188] sm:$0xff]
    %v242 = vld [vmem:[#allocation2 + $0x190] sm:$0xff]
    %v243 = vld [vmem:[#allocation2 + $0x198] sm:$0xff]
    %v244 = vld [vmem:[#allocation2 + $0x1a0] sm:$0xff]
    %v245 = vld [vmem:[#allocation2 + $0x1a8] sm:$0xff]
    %v246 = vld [vmem:[#allocation2 + $0x1b0] sm:$0xff]
    %v247 = vld [vmem:[#allocation2 + $0x1b8] sm:$0xff]
    %v248 = vld [vmem:[#allocation2 + $0x1c0] sm:$0xff]
    %v249 = vld [vmem:[#allocation2 + $0x1c8] sm:$0xff]
    %v250 = vld [vmem:[#allocation2 + $0x1d0] sm:$0xff]
    %v251 = vld [vmem:[#allocation2 + $0x1d8] sm:$0xff]
    %v252 = vld [vmem:[#allocation2 + $0x1e0] sm:$0xff]
    %v253 = vld [vmem:[#allocation2 + $0x1e8] sm:$0xff]
    %v254 = vld [vmem:[#allocation2 + $0x1f0] sm:$0xff]
    %v255 = vld [vmem:[#allocation2 + $0x1f8] sm:$0xff]
    %v256 = vld [vmem:[#allocation2 + $0x200] sm:$0xff]
    %v257 = vld [vmem:[#allocation2 + $0x208] sm:$0xff]
    %v258 = vld [vmem:[#allocation2 + $0x210] sm:$0xff]
    %v259 = vld [vmem:[#allocation2 + $0x218] sm:$0xff]
    %v260 = vld [vmem:[#allocation2 + $0x220] sm:$0xff]
    %v261 = vld [vmem:[#allocation2 + $0x228] sm:$0xff]
    %v262 = vld [vmem:[#allocation2 + $0x230] sm:$0xff]
    %v263 = vld [vmem:[#allocation2 + $0x238] sm:$0xff]
    %v264 = vld [vmem:[#allocation2 + $0x240] sm:$0xff]
    %v265 = vld [vmem:[#allocation2 + $0x248] sm:$0xff]
    %v266 = vld [vmem:[#allocation2 + $0x250] sm:$0xff]
    %v267 = vld [vmem:[#allocation2 + $0x258] sm:$0xff]
    %v268 = vld [vmem:[#allocation2 + $0x260] sm:$0xff]
    %v269 = vld [vmem:[#allocation2 + $0x268] sm:$0xff]
    %v270 = vld [vmem:[#allocation2 + $0x270] sm:$0xff]
    %v271 = vld [vmem:[#allocation2 + $0x278] sm:$0xff]
    %v272 = vld [vmem:[#allocation2 + $0x280] sm:$0xff]
    %v273 = vld [vmem:[#allocation2 + $0x288] sm:$0xff]
    %v274 = vld [vmem:[#allocation2 + $0x290] sm:$0xff]
    %v275 = vld [vmem:[#allocation2 + $0x298] sm:$0xff]
    %v276 = vld [vmem:[#allocation2 + $0x2a0] sm:$0xff]
    %v277 = vld [vmem:[#allocation2 + $0x2a8] sm:$0xff]
    %v278 = vld [vmem:[#allocation2 + $0x2b0] sm:$0xff]
    %v279 = vld [vmem:[#allocation2 + $0x2b8] sm:$0xff]
    %v280 = vld [vmem:[#allocation2 + $0x2c0] sm:$0xff]
    %v281 = vld [vmem:[#allocation2 + $0x2c8] sm:$0xff]
    %v282 = vld [vmem:[#allocation2 + $0x2d0] sm:$0xff]
    %v283 = vld [vmem:[#allocation2 + $0x2d8] sm:$0xff]
    %v284 = vld [vmem:[#allocation2 + $0x2e0] sm:$0xff]
    %v285 = vld [vmem:[#allocation2 + $0x2e8] sm:$0xff]
    %v286 = vld [vmem:[#allocation2 + $0x2f0] sm:$0xff]
    %v287 = vld [vmem:[#allocation2 + $0x2f8] sm:$0xff]
    %v288 = vld [vmem:[#allocation2 + $0x300] sm:$0xff]
    %v289 = vld [vmem:[#allocation2 + $0x308] sm:$0xff]
    %v290 = vld [vmem:[#allocation2 + $0x310] sm:$0xff]
    %v291 = vld [vmem:[#allocation2 + $0x318] sm:$0xff]
    %v292 = vld [vmem:[#allocation2 + $0x320] sm:$0xff]
    %v293 = vld [vmem:[#allocation2 + $0x328] sm:$0xff]
    %v294 = vld [vmem:[#allocation2 + $0x330] sm:$0xff]
    %v295 = vld [vmem:[#allocation2 + $0x338] sm:$0xff]
    %v296 = vld [vmem:[#allocation2 + $0x340] sm:$0xff]
    %v297 = vld [vmem:[#allocation2 + $0x348] sm:$0xff]
    %v298 = vld [vmem:[#allocation2 + $0x350] sm:$0xff]
    %v299 = vld [vmem:[#allocation2 + $0x358] sm:$0xff]
    %v300 = vld [vmem:[#allocation2 + $0x360] sm:$0xff]
    %v301 = vld [vmem:[#allocation2 + $0x368] sm:$0xff]
    %v302 = vld [vmem:[#allocation2 + $0x370] sm:$0xff]
    %v303 = vld [vmem:[#allocation2 + $0x378] sm:$0xff]
    %v304 = vld [vmem:[#allocation2 + $0x380] sm:$0xff]
    %v305 = vld [vmem:[#allocation2 + $0x388] sm:$0xff]
    %v306 = vld [vmem:[#allocation2 + $0x390] sm:$0xff]
    %v307 = vld [vmem:[#allocation2 + $0x398] sm:$0xff]
    %v308 = vld [vmem:[#allocation2 + $0x3a0] sm:$0xff]
    %v309 = vld [vmem:[#allocation2 + $0x3a8] sm:$0xff]
    %v310 = vld [vmem:[#allocation2 + $0x3b0] sm:$0xff]
    %v311 = vld [vmem:[#allocation2 + $0x3b8] sm:$0xff]
    %v312 = vld [vmem:[#allocation2 + $0x3c0] sm:$0xff]
    %v313 = vld [vmem:[#allocation2 + $0x3c8] sm:$0xff]
    %v314 = vld [vmem:[#allocation2 + $0x3d0] sm:$0xff]
    %v315 = vld [vmem:[#allocation2 + $0x3d8] sm:$0xff]
    %v316 = vld [vmem:[#allocation2 + $0x3e0] sm:$0xff]
    %v317 = vld [vmem:[#allocation2 + $0x3e8] sm:$0xff]
    %v318 = vld [vmem:[#allocation2 + $0x3f0] sm:$0xff]
    %v319 = vld [vmem:[#allocation2 + $0x3f8] sm:$0xff]
    %v320 = vld [vmem:[#allocation2 + $0x400] sm:$0xff]
    %v321 = vld [vmem:[#allocation2 + $0x408] sm:$0xff]
    %v322 = vld [vmem:[#allocation2 + $0x410] sm:$0xff]
    %v323 = vld [vmem:[#allocation2 + $0x418] sm:$0xff]
    %v324 = vld [vmem:[#allocation2 + $0x420] sm:$0xff]
    %v325 = vld [vmem:[#allocation2 + $0x428] sm:$0xff]
    %v326 = vld [vmem:[#allocation2 + $0x430] sm:$0xff]
    %v327 = vld [vmem:[#allocation2 + $0x438] sm:$0xff]
    %v328 = vld [vmem:[#allocation2 + $0x440] sm:$0xff]
    %v329 = vld [vmem:[#allocation2 + $0x448] sm:$0xff]
    %v330 = vld [vmem:[#allocation2 + $0x450] sm:$0xff]
    %v331 = vld [vmem:[#allocation2 + $0x458] sm:$0xff]
    %v332 = vld [vmem:[#allocation2 + $0x460] sm:$0xff]
    %v333 = vld [vmem:[#allocation2 + $0x468] sm:$0xff]
    %v334 = vld [vmem:[#allocation2 + $0x470] sm:$0xff]
    %v335 = vld [vmem:[#allocation2 + $0x478] sm:$0xff]
    %v336 = vld [vmem:[#allocation2 + $0x480] sm:$0xff]
    %v337 = vld [vmem:[#allocation2 + $0x488] sm:$0xff]
    %v338 = vld [vmem:[#allocation2 + $0x490] sm:$0xff]
    %v339 = vld [vmem:[#allocation2 + $0x498] sm:$0xff]
    %v340 = vld [vmem:[#allocation2 + $0x4a0] sm:$0xff]
    %v341 = vld [vmem:[#allocation2 + $0x4a8] sm:$0xff]
    %v342 = vld [vmem:[#allocation2 + $0x4b0] sm:$0xff]
    %v343 = vld [vmem:[#allocation2 + $0x4b8] sm:$0xff]
    %v344 = vld [vmem:[#allocation2 + $0x4c0] sm:$0xff]
    %v345 = vld [vmem:[#allocation2 + $0x4c8] sm:$0xff]
    %v346 = vld [vmem:[#allocation2 + $0x4d0] sm:$0xff]
    %v347 = vld [vmem:[#allocation2 + $0x4d8] sm:$0xff]
    %v348 = vld [vmem:[#allocation2 + $0x4e0] sm:$0xff]
    %v349 = vld [vmem:[#allocation2 + $0x4e8] sm:$0xff]
    %v350 = vld [vmem:[#allocation2 + $0x4f0] sm:$0xff]
    %v351 = vld [vmem:[#allocation2 + $0x4f8] sm:$0xff]
    %v352 = vld [vmem:[#allocation2 + $0x500] sm:$0xff]
    %v353 = vld [vmem:[#allocation2 + $0x508] sm:$0xff]
    %v354 = vld [vmem:[#allocation2 + $0x510] sm:$0xff]
    %v355 = vld [vmem:[#allocation2 + $0x518] sm:$0xff]
    %v356 = vld [vmem:[#allocation2 + $0x520] sm:$0xff]
    %v357 = vld [vmem:[#allocation2 + $0x528] sm:$0xff]
    %v358 = vld [vmem:[#allocation2 + $0x530] sm:$0xff]
    %v359 = vld [vmem:[#allocation2 + $0x538] sm:$0xff]
    %v360 = vld [vmem:[#allocation2 + $0x540] sm:$0xff]
    %v361 = vld [vmem:[#allocation2 + $0x548] sm:$0xff]
    %v362 = vld [vmem:[#allocation2 + $0x550] sm:$0xff]
    %v363 = vld [vmem:[#allocation2 + $0x558] sm:$0xff]
    %v364 = vld [vmem:[#allocation2 + $0x560] sm:$0xff]
    %v365 = vld [vmem:[#allocation2 + $0x568] sm:$0xff]
    %v366 = vld [vmem:[#allocation2 + $0x570] sm:$0xff]
    %v367 = vld [vmem:[#allocation2 + $0x578] sm:$0xff]
    %v368 = vld [vmem:[#allocation2 + $0x580] sm:$0xff]
    %v369 = vld [vmem:[#allocation2 + $0x588] sm:$0xff]
    %v370 = vld [vmem:[#allocation2 + $0x590] sm:$0xff]
    %v371 = vld [vmem:[#allocation2 + $0x598] sm:$0xff]
    %v372 = vld [vmem:[#allocation2 + $0x5a0] sm:$0xff]
    %v373 = vld [vmem:[#allocation2 + $0x5a8] sm:$0xff]
    %v374 = vld [vmem:[#allocation2 + $0x5b0] sm:$0xff]
    %v375 = vld [vmem:[#allocation2 + $0x5b8] sm:$0xff]
    %v376 = vld [vmem:[#allocation2 + $0x5c0] sm:$0xff]
    %v377 = vld [vmem:[#allocation2 + $0x5c8] sm:$0xff]
    %v378 = vld [vmem:[#allocation2 + $0x5d0] sm:$0xff]
    %v379 = vld [vmem:[#allocation2 + $0x5d8] sm:$0xff]
    %v380 = vld [vmem:[#allocation2 + $0x5e0] sm:$0xff]
    %v381 = vld [vmem:[#allocation2 + $0x5e8] sm:$0xff]
    %v382 = vld [vmem:[#allocation2 + $0x5f0] sm:$0xff]
    %v383 = vld [vmem:[#allocation2 + $0x5f8] sm:$0xff]
    %v384 = vld [vmem:[#allocation2 + $0x600] sm:$0xff]
    %v385 = vld [vmem:[#allocation2 + $0x608] sm:$0xff]
    %v386 = vld [vmem:[#allocation2 + $0x610] sm:$0xff]
    %v387 = vld [vmem:[#allocation2 + $0x618] sm:$0xff]
    %v388 = vld [vmem:[#allocation2 + $0x620] sm:$0xff]
    %v389 = vld [vmem:[#allocation2 + $0x628] sm:$0xff]
    %v390 = vld [vmem:[#allocation2 + $0x630] sm:$0xff]
    %v391 = vld [vmem:[#allocation2 + $0x638] sm:$0xff]
    %v392 = vld [vmem:[#allocation2 + $0x640] sm:$0xff]
    %v393 = vld [vmem:[#allocation2 + $0x648] sm:$0xff]
    %v394 = vld [vmem:[#allocation2 + $0x650] sm:$0xff]
    %v395 = vld [vmem:[#allocation2 + $0x658] sm:$0xff]
    %v396 = vld [vmem:[#allocation2 + $0x660] sm:$0xff]
    %v397 = vld [vmem:[#allocation2 + $0x668] sm:$0xff]
    %v398 = vld [vmem:[#allocation2 + $0x670] sm:$0xff]
    %v399 = vld [vmem:[#allocation2 + $0x678] sm:$0xff]
    %v400 = vld [vmem:[#allocation2 + $0x680] sm:$0xff]
    %v401 = vld [vmem:[#allocation2 + $0x688] sm:$0xff]
    %v402 = vld [vmem:[#allocation2 + $0x690] sm:$0xff]
    %v403 = vld [vmem:[#allocation2 + $0x698] sm:$0xff]
    %v404 = vld [vmem:[#allocation2 + $0x6a0] sm:$0xff]
    %v405 = vld [vmem:[#allocation2 + $0x6a8] sm:$0xff]
    %v406 = vld [vmem:[#allocation2 + $0x6b0] sm:$0xff]
    %v407 = vld [vmem:[#allocation2 + $0x6b8] sm:$0xff]
    %v408 = vld [vmem:[#allocation2 + $0x6c0] sm:$0xff]
    %v409 = vld [vmem:[#allocation2 + $0x6c8] sm:$0xff]
    %v410 = vld [vmem:[#allocation2 + $0x6d0] sm:$0xff]
    %v411 = vld [vmem:[#allocation2 + $0x6d8] sm:$0xff]
    %v412 = vld [vmem:[#allocation2 + $0x6e0] sm:$0xff]
    %v413 = vld [vmem:[#allocation2 + $0x6e8] sm:$0xff]
    %v414 = vld [vmem:[#allocation2 + $0x6f0] sm:$0xff]
    %v415 = vld [vmem:[#allocation2 + $0x6f8] sm:$0xff]
    %v416 = vld [vmem:[#allocation2 + $0x700] sm:$0xff]
    %v417 = vld [vmem:[#allocation2 + $0x708] sm:$0xff]
    %v418 = vld [vmem:[#allocation2 + $0x710] sm:$0xff]
    %v419 = vld [vmem:[#allocation2 + $0x718] sm:$0xff]
    %v420 = vld [vmem:[#allocation2 + $0x720] sm:$0xff]
    %v421 = vld [vmem:[#allocation2 + $0x728] sm:$0xff]
    %v422 = vld [vmem:[#allocation2 + $0x730] sm:$0xff]
    %v423 = vld [vmem:[#allocation2 + $0x738] sm:$0xff]
    %v424 = vld [vmem:[#allocation2 + $0x740] sm:$0xff]
    %v425 = vld [vmem:[#allocation2 + $0x748] sm:$0xff]
    %v426 = vld [vmem:[#allocation2 + $0x750] sm:$0xff]
    %v427 = vld [vmem:[#allocation2 + $0x758] sm:$0xff]
    %v428 = vld [vmem:[#allocation2 + $0x760] sm:$0xff]
    %v429 = vld [vmem:[#allocation2 + $0x768] sm:$0xff]
    %v430 = vld [vmem:[#allocation2 + $0x770] sm:$0xff]
    %v431 = vld [vmem:[#allocation2 + $0x778] sm:$0xff]
    %v432 = vld [vmem:[#allocation2 + $0x780] sm:$0xff]
    %v433 = vld [vmem:[#allocation2 + $0x788] sm:$0xff]
    %v434 = vld [vmem:[#allocation2 + $0x790] sm:$0xff]
    %v435 = vld [vmem:[#allocation2 + $0x798] sm:$0xff]
    %v436 = vld [vmem:[#allocation2 + $0x7a0] sm:$0xff]
    %v437 = vld [vmem:[#allocation2 + $0x7a8] sm:$0xff]
    %v438 = vld [vmem:[#allocation2 + $0x7b0] sm:$0xff]
    %v439 = vld [vmem:[#allocation2 + $0x7b8] sm:$0xff]
    %v440 = vld [vmem:[#allocation2 + $0x7c0] sm:$0xff]
    %v441 = vld [vmem:[#allocation2 + $0x7c8] sm:$0xff]
    %v442 = vld [vmem:[#allocation2 + $0x7d0] sm:$0xff]
    %v443 = vld [vmem:[#allocation2 + $0x7d8] sm:$0xff]
    %v444 = vld [vmem:[#allocation2 + $0x7e0] sm:$0xff]
    %v445 = vld [vmem:[#allocation2 + $0x7e8] sm:$0xff]
    %v446 = vld [vmem:[#allocation2 + $0x7f0] sm:$0xff]
    %v447 = vld [vmem:[#allocation2 + $0x7f8] sm:$0xff]
    %v448 = vld [vmem:[#allocation2 + $0x800] sm:$0xff]
    %v449 = vld [vmem:[#allocation2 + $0x808] sm:$0xff]
    %v450 = vld [vmem:[#allocation2 + $0x810] sm:$0xff]
    %v451 = vld [vmem:[#allocation2 + $0x818] sm:$0xff]
    %v452 = vld [vmem:[#allocation2 + $0x820] sm:$0xff]
    %v453 = vld [vmem:[#allocation2 + $0x828] sm:$0xff]
    %v454 = vld [vmem:[#allocation2 + $0x830] sm:$0xff]
    %v455 = vld [vmem:[#allocation2 + $0x838] sm:$0xff]
    %v456 = vld [vmem:[#allocation2 + $0x840] sm:$0xff]
    %v457 = vld [vmem:[#allocation2 + $0x848] sm:$0xff]
    %v458 = vld [vmem:[#allocation2 + $0x850] sm:$0xff]
    %v459 = vld [vmem:[#allocation2 + $0x858] sm:$0xff]
    %v460 = vld [vmem:[#allocation2 + $0x860] sm:$0xff]
    %v461 = vld [vmem:[#allocation2 + $0x868] sm:$0xff]
    %v462 = vld [vmem:[#allocation2 + $0x870] sm:$0xff]
    %v463 = vld [vmem:[#allocation2 + $0x878] sm:$0xff]
    %v464 = vld [vmem:[#allocation2 + $0x880] sm:$0xff]
    %v465 = vld [vmem:[#allocation2 + $0x888] sm:$0xff]
    %v466 = vld [vmem:[#allocation2 + $0x890] sm:$0xff]
    %v467 = vld [vmem:[#allocation2 + $0x898] sm:$0xff]
    %v468 = vld [vmem:[#allocation2 + $0x8a0] sm:$0xff]
    %v469 = vld [vmem:[#allocation2 + $0x8a8] sm:$0xff]
    %v470 = vld [vmem:[#allocation2 + $0x8b0] sm:$0xff]
    %v471 = vld [vmem:[#allocation2 + $0x8b8] sm:$0xff]
    %v472 = vld [vmem:[#allocation2 + $0x8c0] sm:$0xff]
    %v473 = vld [vmem:[#allocation2 + $0x8c8] sm:$0xff]
    %v474 = vld [vmem:[#allocation2 + $0x8d0] sm:$0xff]
    %v475 = vld [vmem:[#allocation2 + $0x8d8] sm:$0xff]
    %v476 = vld [vmem:[#allocation2 + $0x8e0] sm:$0xff]
    %v477 = vld [vmem:[#allocation2 + $0x8e8] sm:$0xff]
    %v478 = vld [vmem:[#allocation2 + $0x8f0] sm:$0xff]
    %v479 = vld [vmem:[#allocation2 + $0x8f8] sm:$0xff]
    %v480 = vld [vmem:[#allocation2 + $0x900] sm:$0xff]
    %v481 = vld [vmem:[#allocation2 + $0x908] sm:$0xff]
    %v482 = vld [vmem:[#allocation2 + $0x910] sm:$0xff]
    %v483 = vld [vmem:[#allocation2 + $0x918] sm:$0xff]
    %v484 = vld [vmem:[#allocation2 + $0x920] sm:$0xff]
    %v485 = vld [vmem:[#allocation2 + $0x928] sm:$0xff]
    %v486 = vld [vmem:[#allocation2 + $0x930] sm:$0xff]
    %v487 = vld [vmem:[#allocation2 + $0x938] sm:$0xff]
    %v488 = vld [vmem:[#allocation2 + $0x940] sm:$0xff]
    %v489 = vld [vmem:[#allocation2 + $0x948] sm:$0xff]
    %v490 = vld [vmem:[#allocation2 + $0x950] sm:$0xff]
    %v491 = vld [vmem:[#allocation2 + $0x958] sm:$0xff]
    %v492 = vld [vmem:[#allocation2 + $0x960] sm:$0xff]
    %v493 = vld [vmem:[#allocation2 + $0x968] sm:$0xff]
    %v494 = vld [vmem:[#allocation2 + $0x970] sm:$0xff]
    %v495 = vld [vmem:[#allocation2 + $0x978] sm:$0xff]
    %v496 = vld [vmem:[#allocation2 + $0x980] sm:$0xff]
    %v497 = vld [vmem:[#allocation2 + $0x988] sm:$0xff]
    %v498 = vld [vmem:[#allocation2 + $0x990] sm:$0xff]
    %v499 = vld [vmem:[#allocation2 + $0x998] sm:$0xff]
    %v500 = vld [vmem:[#allocation2 + $0x9a0] sm:$0xff]
    %v501 = vld [vmem:[#allocation2 + $0x9a8] sm:$0xff]
    %v502 = vld [vmem:[#allocation2 + $0x9b0] sm:$0xff]
    %v503 = vld [vmem:[#allocation2 + $0x9b8] sm:$0xff]
    %v504 = vld [vmem:[#allocation2 + $0x9c0] sm:$0xff]
    %v505 = vld [vmem:[#allocation2 + $0x9c8] sm:$0xff]
    %v506 = vld [vmem:[#allocation2 + $0x9d0] sm:$0xff]
    %v507 = vld [vmem:[#allocation2 + $0x9d8] sm:$0xff]
    %v508 = vld [vmem:[#allocation2 + $0x9e0] sm:$0xff]
    %v509 = vld [vmem:[#allocation2 + $0x9e8] sm:$0xff]
    %v510 = vld [vmem:[#allocation2 + $0x9f0] sm:$0xff]
    %v511 = vld [vmem:[#allocation2 + $0x9f8] sm:$0xff]
    %v512 = vld [vmem:[#allocation2 + $0xa00] sm:$0xff]
    %v513 = vld [vmem:[#allocation2 + $0xa08] sm:$0xff]
    %v514 = vld [vmem:[#allocation2 + $0xa10] sm:$0xff]
    %v515 = vld [vmem:[#allocation2 + $0xa18] sm:$0xff]
    %v516 = vld [vmem:[#allocation2 + $0xa20] sm:$0xff]
    %v517 = vld [vmem:[#allocation2 + $0xa28] sm:$0xff]
    %v518 = vld [vmem:[#allocation2 + $0xa30] sm:$0xff]
    %v519 = vld [vmem:[#allocation2 + $0xa38] sm:$0xff]
    %v520 = vld [vmem:[#allocation2 + $0xa40] sm:$0xff]
    %v521 = vld [vmem:[#allocation2 + $0xa48] sm:$0xff]
    %v522 = vld [vmem:[#allocation2 + $0xa50] sm:$0xff]
    %v523 = vld [vmem:[#allocation2 + $0xa58] sm:$0xff]
    %v524 = vld [vmem:[#allocation2 + $0xa60] sm:$0xff]
    %v525 = vld [vmem:[#allocation2 + $0xa68] sm:$0xff]
    %v526 = vld [vmem:[#allocation2 + $0xa70] sm:$0xff]
    %v527 = vld [vmem:[#allocation2 + $0xa78] sm:$0xff]
    %v528 = vld [vmem:[#allocation2 + $0xa80] sm:$0xff]
    %v529 = vld [vmem:[#allocation2 + $0xa88] sm:$0xff]
    %v530 = vld [vmem:[#allocation2 + $0xa90] sm:$0xff]
    %v531 = vld [vmem:[#allocation2 + $0xa98] sm:$0xff]
    %v532 = vld [vmem:[#allocation2 + $0xaa0] sm:$0xff]
    %v533 = vld [vmem:[#allocation2 + $0xaa8] sm:$0xff]
    %v534 = vld [vmem:[#allocation2 + $0xab0] sm:$0xff]
    %v535 = vld [vmem:[#allocation2 + $0xab8] sm:$0xff]
    %v536 = vld [vmem:[#allocation2 + $0xac0] sm:$0xff]
    %v537 = vld [vmem:[#allocation2 + $0xac8] sm:$0xff]
    %v538 = vld [vmem:[#allocation2 + $0xad0] sm:$0xff]
    %v539 = vld [vmem:[#allocation2 + $0xad8] sm:$0xff]
    %v540 = vld [vmem:[#allocation2 + $0xae0] sm:$0xff]
    %v541 = vld [vmem:[#allocation2 + $0xae8] sm:$0xff]
    %v542 = vld [vmem:[#allocation2 + $0xaf0] sm:$0xff]
    %v543 = vld [vmem:[#allocation2 + $0xaf8] sm:$0xff]
    %v544 = vld [vmem:[#allocation2 + $0xb00] sm:$0xff]
    %v545 = vld [vmem:[#allocation2 + $0xb08] sm:$0xff]
    %v546 = vld [vmem:[#allocation2 + $0xb10] sm:$0xff]
    %v547 = vld [vmem:[#allocation2 + $0xb18] sm:$0xff]
    %v548 = vld [vmem:[#allocation2 + $0xb20] sm:$0xff]
    %v549 = vld [vmem:[#allocation2 + $0xb28] sm:$0xff]
    %v550 = vld [vmem:[#allocation2 + $0xb30] sm:$0xff]
    %v551 = vld [vmem:[#allocation2 + $0xb38] sm:$0xff]
    %v552 = vld [vmem:[#allocation2 + $0xb40] sm:$0xff]
    %v553 = vld [vmem:[#allocation2 + $0xb48] sm:$0xff]
    %v554 = vld [vmem:[#allocation2 + $0xb50] sm:$0xff]
    %v555 = vld [vmem:[#allocation2 + $0xb58] sm:$0xff]
    %v556 = vld [vmem:[#allocation2 + $0xb60] sm:$0xff]
    %v557 = vld [vmem:[#allocation2 + $0xb68] sm:$0xff]
    %v558 = vld [vmem:[#allocation2 + $0xb70] sm:$0xff]
    %v559 = vld [vmem:[#allocation2 + $0xb78] sm:$0xff]
    %v560 = vld [vmem:[#allocation2 + $0xb80] sm:$0xff]
    %v561 = vld [vmem:[#allocation2 + $0xb88] sm:$0xff]
    %v562 = vld [vmem:[#allocation2 + $0xb90] sm:$0xff]
    %v563 = vld [vmem:[#allocation2 + $0xb98] sm:$0xff]
    %v564 = vld [vmem:[#allocation2 + $0xba0] sm:$0xff]
    %v565 = vld [vmem:[#allocation2 + $0xba8] sm:$0xff]
    %v566 = vld [vmem:[#allocation2 + $0xbb0] sm:$0xff]
    %v567 = vld [vmem:[#allocation2 + $0xbb8] sm:$0xff]
    %v568 = vld [vmem:[#allocation2 + $0xbc0] sm:$0xff]
    %v569 = vld [vmem:[#allocation2 + $0xbc8] sm:$0xff]
    %v570 = vld [vmem:[#allocation2 + $0xbd0] sm:$0xff]
    %v571 = vld [vmem:[#allocation2 + $0xbd8] sm:$0xff]
    %v572 = vld [vmem:[#allocation2 + $0xbe0] sm:$0xff]
    %v573 = vld [vmem:[#allocation2 + $0xbe8] sm:$0xff]
    %v574 = vld [vmem:[#allocation2 + $0xbf0] sm:$0xff]
    %v575 = vld [vmem:[#allocation2 + $0xbf8] sm:$0xff]
    %v576 = vld [vmem:[#allocation2 + $0xc00] sm:$0xff]
    %v577 = vld [vmem:[#allocation2 + $0xc08] sm:$0xff]
    %v578 = vld [vmem:[#allocation2 + $0xc10] sm:$0xff]
    %v579 = vld [vmem:[#allocation2 + $0xc18] sm:$0xff]
    %v580 = vld [vmem:[#allocation2 + $0xc20] sm:$0xff]
    %v581 = vld [vmem:[#allocation2 + $0xc28] sm:$0xff]
    %v582 = vld [vmem:[#allocation2 + $0xc30] sm:$0xff]
    %v583 = vld [vmem:[#allocation2 + $0xc38] sm:$0xff]
    %v584 = vld [vmem:[#allocation2 + $0xc40] sm:$0xff]
    %v585 = vld [vmem:[#allocation2 + $0xc48] sm:$0xff]
    %v586 = vld [vmem:[#allocation2 + $0xc50] sm:$0xff]
    %v587 = vld [vmem:[#allocation2 + $0xc58] sm:$0xff]
    %v588 = vld [vmem:[#allocation2 + $0xc60] sm:$0xff]
    %v589 = vld [vmem:[#allocation2 + $0xc68] sm:$0xff]
    %v590 = vld [vmem:[#allocation2 + $0xc70] sm:$0xff]
    %v591 = vld [vmem:[#allocation2 + $0xc78] sm:$0xff]
    %v592 = vld [vmem:[#allocation2 + $0xc80] sm:$0xff]
    %v593 = vld [vmem:[#allocation2 + $0xc88] sm:$0xff]
    %v594 = vld [vmem:[#allocation2 + $0xc90] sm:$0xff]
    %v595 = vld [vmem:[#allocation2 + $0xc98] sm:$0xff]
    %v596 = vld [vmem:[#allocation2 + $0xca0] sm:$0xff]
    %v597 = vld [vmem:[#allocation2 + $0xca8] sm:$0xff]
    %v598 = vld [vmem:[#allocation2 + $0xcb0] sm:$0xff]
    %v599 = vld [vmem:[#allocation2 + $0xcb8] sm:$0xff]
    %v600 = vld [vmem:[#allocation2 + $0xcc0] sm:$0xff]
    %v601 = vld [vmem:[#allocation2 + $0xcc8] sm:$0xff]
    %v602 = vld [vmem:[#allocation2 + $0xcd0] sm:$0xff]
    %v603 = vld [vmem:[#allocation2 + $0xcd8] sm:$0xff]
    %v604 = vld [vmem:[#allocation2 + $0xce0] sm:$0xff]
    %v605 = vld [vmem:[#allocation2 + $0xce8] sm:$0xff]
    %v606 = vld [vmem:[#allocation2 + $0xcf0] sm:$0xff]
    %v607 = vld [vmem:[#allocation2 + $0xcf8] sm:$0xff]
    %v608 = vld [vmem:[#allocation2 + $0xd00] sm:$0xff]
    %v609 = vld [vmem:[#allocation2 + $0xd08] sm:$0xff]
    %v610 = vld [vmem:[#allocation2 + $0xd10] sm:$0xff]
    %v611 = vld [vmem:[#allocation2 + $0xd18] sm:$0xff]
    %v612 = vld [vmem:[#allocation2 + $0xd20] sm:$0xff]
    %v613 = vld [vmem:[#allocation2 + $0xd28] sm:$0xff]
    %v614 = vld [vmem:[#allocation2 + $0xd30] sm:$0xff]
    %v615 = vld [vmem:[#allocation2 + $0xd38] sm:$0xff]
    %v616 = vld [vmem:[#allocation2 + $0xd40] sm:$0xff]
    %v617 = vld [vmem:[#allocation2 + $0xd48] sm:$0xff]
    %v618 = vld [vmem:[#allocation2 + $0xd50] sm:$0xff]
    %v619 = vld [vmem:[#allocation2 + $0xd58] sm:$0xff]
    %v620 = vld [vmem:[#allocation2 + $0xd60] sm:$0xff]
    %v621 = vld [vmem:[#allocation2 + $0xd68] sm:$0xff]
    %v622 = vld [vmem:[#allocation2 + $0xd70] sm:$0xff]
    %v623 = vld [vmem:[#allocation2 + $0xd78] sm:$0xff]
    %v624 = vld [vmem:[#allocation2 + $0xd80] sm:$0xff]
    %v625 = vld [vmem:[#allocation2 + $0xd88] sm:$0xff]
    %v626 = vld [vmem:[#allocation2 + $0xd90] sm:$0xff]
    %v627 = vld [vmem:[#allocation2 + $0xd98] sm:$0xff]
    %v628 = vld [vmem:[#allocation2 + $0xda0] sm:$0xff]
    %v629 = vld [vmem:[#allocation2 + $0xda8] sm:$0xff]
    %v630 = vld [vmem:[#allocation2 + $0xdb0] sm:$0xff]
    %v631 = vld [vmem:[#allocation2 + $0xdb8] sm:$0xff]
    %v632 = vld [vmem:[#allocation2 + $0xdc0] sm:$0xff]
    %v633 = vld [vmem:[#allocation2 + $0xdc8] sm:$0xff]
    %v634 = vld [vmem:[#allocation2 + $0xdd0] sm:$0xff]
    %v635 = vld [vmem:[#allocation2 + $0xdd8] sm:$0xff]
    %v636 = vld [vmem:[#allocation2 + $0xde0] sm:$0xff]
    %v637 = vld [vmem:[#allocation2 + $0xde8] sm:$0xff]
    %v638 = vld [vmem:[#allocation2 + $0xdf0] sm:$0xff]
    %v639 = vld [vmem:[#allocation2 + $0xdf8] sm:$0xff]
    %v640 = vld [vmem:[#allocation2 + $0xe00] sm:$0xff]
    %v641 = vld [vmem:[#allocation2 + $0xe08] sm:$0xff]
    %v642 = vld [vmem:[#allocation2 + $0xe10] sm:$0xff]
    %v643 = vld [vmem:[#allocation2 + $0xe18] sm:$0xff]
    %v644 = vld [vmem:[#allocation2 + $0xe20] sm:$0xff]
    %v645 = vld [vmem:[#allocation2 + $0xe28] sm:$0xff]
    %v646 = vld [vmem:[#allocation2 + $0xe30] sm:$0xff]
    %v647 = vld [vmem:[#allocation2 + $0xe38] sm:$0xff]
    %v648 = vld [vmem:[#allocation2 + $0xe40] sm:$0xff]
    %v649 = vld [vmem:[#allocation2 + $0xe48] sm:$0xff]
    %v650 = vld [vmem:[#allocation2 + $0xe50] sm:$0xff]
    %v651 = vld [vmem:[#allocation2 + $0xe58] sm:$0xff]
    %v652 = vld [vmem:[#allocation2 + $0xe60] sm:$0xff]
    %v653 = vld [vmem:[#allocation2 + $0xe68] sm:$0xff]
    %v654 = vld [vmem:[#allocation2 + $0xe70] sm:$0xff]
    %v655 = vld [vmem:[#allocation2 + $0xe78] sm:$0xff]
    %v656 = vld [vmem:[#allocation2 + $0xe80] sm:$0xff]
    %v657 = vld [vmem:[#allocation2 + $0xe88] sm:$0xff]
    %v658 = vld [vmem:[#allocation2 + $0xe90] sm:$0xff]
    %v659 = vld [vmem:[#allocation2 + $0xe98] sm:$0xff]
    %v660 = vld [vmem:[#allocation2 + $0xea0] sm:$0xff]
    %v661 = vld [vmem:[#allocation2 + $0xea8] sm:$0xff]
    %v662 = vld [vmem:[#allocation2 + $0xeb0] sm:$0xff]
    %v663 = vld [vmem:[#allocation2 + $0xeb8] sm:$0xff]
    %v664 = vld [vmem:[#allocation2 + $0xec0] sm:$0xff]
    %v665 = vld [vmem:[#allocation2 + $0xec8] sm:$0xff]
    %v666 = vld [vmem:[#allocation2 + $0xed0] sm:$0xff]
    %v667 = vld [vmem:[#allocation2 + $0xed8] sm:$0xff]
    %v668 = vld [vmem:[#allocation2 + $0xee0] sm:$0xff]
    %v669 = vld [vmem:[#allocation2 + $0xee8] sm:$0xff]
    %v670 = vld [vmem:[#allocation2 + $0xef0] sm:$0xff]
    %v671 = vld [vmem:[#allocation2 + $0xef8] sm:$0xff]
    %v672 = vld [vmem:[#allocation2 + $0xf00] sm:$0xff]
    %v673 = vld [vmem:[#allocation2 + $0xf08] sm:$0xff]
    %v674 = vld [vmem:[#allocation2 + $0xf10] sm:$0xff]
    %v675 = vld [vmem:[#allocation2 + $0xf18] sm:$0xff]
    %v676 = vld [vmem:[#allocation2 + $0xf20] sm:$0xff]
    %v677 = vld [vmem:[#allocation2 + $0xf28] sm:$0xff]
    %v678 = vld [vmem:[#allocation2 + $0xf30] sm:$0xff]
    %v679 = vld [vmem:[#allocation2 + $0xf38] sm:$0xff]
    %v680 = vld [vmem:[#allocation2 + $0xf40] sm:$0xff]
    %v681 = vld [vmem:[#allocation2 + $0xf48] sm:$0xff]
    %v682 = vld [vmem:[#allocation2 + $0xf50] sm:$0xff]
    %v683 = vld [vmem:[#allocation2 + $0xf58] sm:$0xff]
    %v684 = vld [vmem:[#allocation2 + $0xf60] sm:$0xff]
    %v685 = vld [vmem:[#allocation2 + $0xf68] sm:$0xff]
    %v686 = vld [vmem:[#allocation2 + $0xf70] sm:$0xff]
    %v687 = vld [vmem:[#allocation2 + $0xf78] sm:$0xff]
    %v688 = vld [vmem:[#allocation2 + $0xf80] sm:$0xff]
    %v689 = vld [vmem:[#allocation2 + $0xf88] sm:$0xff]
    %v690 = vld [vmem:[#allocation2 + $0xf90] sm:$0xff]
    %v691 = vld [vmem:[#allocation2 + $0xf98] sm:$0xff]
    %v692 = vld [vmem:[#allocation2 + $0xfa0] sm:$0xff]
    %v693 = vld [vmem:[#allocation2 + $0xfa8] sm:$0xff]
    %v694 = vld [vmem:[#allocation2 + $0xfb0] sm:$0xff]
    %v695 = vld [vmem:[#allocation2 + $0xfb8] sm:$0xff]
    %v696 = vld [vmem:[#allocation2 + $0xfc0] sm:$0xff]
    %v697 = vld [vmem:[#allocation2 + $0xfc8] sm:$0xff]
    %v698 = vld [vmem:[#allocation2 + $0xfd0] sm:$0xff]
    %v699 = vld [vmem:[#allocation2 + $0xfd8] sm:$0xff]
    %v700 = vld [vmem:[#allocation2 + $0xfe0] sm:$0xff]
    %v701 = vld [vmem:[#allocation2 + $0xfe8] sm:$0xff]
    %v702 = vld [vmem:[#allocation2 + $0xff0] sm:$0xff]
    %v703 = vld [vmem:[#allocation2 + $0xff8] sm:$0xff]
    %v704 = vld [vmem:[#allocation2 + $0x1000] sm:$0xff]
    %v705 = vld [vmem:[#allocation2 + $0x1008] sm:$0xff]
    %v706 = vld [vmem:[#allocation2 + $0x1010] sm:$0xff]
    %v707 = vld [vmem:[#allocation2 + $0x1018] sm:$0xff]
    %v708 = vld [vmem:[#allocation2 + $0x1020] sm:$0xff]
    %v709 = vld [vmem:[#allocation2 + $0x1028] sm:$0xff]
    %v710 = vld [vmem:[#allocation2 + $0x1030] sm:$0xff]
    %v711 = vld [vmem:[#allocation2 + $0x1038] sm:$0xff]
    %v712 = vld [vmem:[#allocation2 + $0x1040] sm:$0xff]
    %v713 = vld [vmem:[#allocation2 + $0x1048] sm:$0xff]
    %v714 = vld [vmem:[#allocation2 + $0x1050] sm:$0xff]
    %v715 = vld [vmem:[#allocation2 + $0x1058] sm:$0xff]
    %v716 = vld [vmem:[#allocation2 + $0x1060] sm:$0xff]
    %v717 = vld [vmem:[#allocation2 + $0x1068] sm:$0xff]
    %v718 = vld [vmem:[#allocation2 + $0x1070] sm:$0xff]
    %v719 = vld [vmem:[#allocation2 + $0x1078] sm:$0xff]
    %v720 = vld [vmem:[#allocation2 + $0x1080] sm:$0xff]
    %v721 = vld [vmem:[#allocation2 + $0x1088] sm:$0xff]
    %v722 = vld [vmem:[#allocation2 + $0x1090] sm:$0xff]
    %v723 = vld [vmem:[#allocation2 + $0x1098] sm:$0xff]
    %v724 = vld [vmem:[#allocation2 + $0x10a0] sm:$0xff]
    %v725 = vld [vmem:[#allocation2 + $0x10a8] sm:$0xff]
    %v726 = vld [vmem:[#allocation2 + $0x10b0] sm:$0xff]
    %v727 = vld [vmem:[#allocation2 + $0x10b8] sm:$0xff]
    %v728 = vld [vmem:[#allocation2 + $0x10c0] sm:$0xff]
    %v729 = vld [vmem:[#allocation2 + $0x10c8] sm:$0xff]
    %v730 = vld [vmem:[#allocation2 + $0x10d0] sm:$0xff]
    %v731 = vld [vmem:[#allocation2 + $0x10d8] sm:$0xff]
    %v732 = vld [vmem:[#allocation2 + $0x10e0] sm:$0xff]
    %v733 = vld [vmem:[#allocation2 + $0x10e8] sm:$0xff]
    %v734 = vld [vmem:[#allocation2 + $0x10f0] sm:$0xff]
    %v735 = vld [vmem:[#allocation2 + $0x10f8] sm:$0xff]
    %v736 = vld [vmem:[#allocation2 + $0x1100] sm:$0xff]
    %v737 = vld [vmem:[#allocation2 + $0x1108] sm:$0xff]
    %v738 = vld [vmem:[#allocation2 + $0x1110] sm:$0xff]
    %v739 = vld [vmem:[#allocation2 + $0x1118] sm:$0xff]
    %v740 = vld [vmem:[#allocation2 + $0x1120] sm:$0xff]
    %v741 = vld [vmem:[#allocation2 + $0x1128] sm:$0xff]
    %v742 = vld [vmem:[#allocation2 + $0x1130] sm:$0xff]
    %v743 = vld [vmem:[#allocation2 + $0x1138] sm:$0xff]
    %v744 = vld [vmem:[#allocation2 + $0x1140] sm:$0xff]
    %v745 = vld [vmem:[#allocation2 + $0x1148] sm:$0xff]
    %v746 = vld [vmem:[#allocation2 + $0x1150] sm:$0xff]
    %v747 = vld [vmem:[#allocation2 + $0x1158] sm:$0xff]
    %v748 = vld [vmem:[#allocation2 + $0x1160] sm:$0xff]
    %v749 = vld [vmem:[#allocation2 + $0x1168] sm:$0xff]
    %v750 = vld [vmem:[#allocation2 + $0x1170] sm:$0xff]
    %v751 = vld [vmem:[#allocation2 + $0x1178] sm:$0xff]
    %v752 = vld [vmem:[#allocation2 + $0x1180] sm:$0xff]
    %v753 = vld [vmem:[#allocation2 + $0x1188] sm:$0xff]
    %v754 = vld [vmem:[#allocation2 + $0x1190] sm:$0xff]
    %v755 = vld [vmem:[#allocation2 + $0x1198] sm:$0xff]
    %v756 = vld [vmem:[#allocation2 + $0x11a0] sm:$0xff]
    %v757 = vld [vmem:[#allocation2 + $0x11a8] sm:$0xff]
    %v758 = vld [vmem:[#allocation2 + $0x11b0] sm:$0xff]
    %v759 = vld [vmem:[#allocation2 + $0x11b8] sm:$0xff]
    %v760 = vld [vmem:[#allocation2 + $0x11c0] sm:$0xff]
    %v761 = vld [vmem:[#allocation2 + $0x11c8] sm:$0xff]
    %v762 = vld [vmem:[#allocation2 + $0x11d0] sm:$0xff]
    %v763 = vld [vmem:[#allocation2 + $0x11d8] sm:$0xff]
    %v764 = vld [vmem:[#allocation2 + $0x11e0] sm:$0xff]
    %v765 = vld [vmem:[#allocation2 + $0x11e8] sm:$0xff]
    %v766 = vld [vmem:[#allocation2 + $0x11f0] sm:$0xff]
    %v767 = vld [vmem:[#allocation2 + $0x11f8] sm:$0xff]
    %v768 = vld [vmem:[#allocation2 + $0x1200] sm:$0xff]
    %v769 = vld [vmem:[#allocation2 + $0x1208] sm:$0xff]
    %v770 = vld [vmem:[#allocation2 + $0x1210] sm:$0xff]
    %v771 = vld [vmem:[#allocation2 + $0x1218] sm:$0xff]
    %v772 = vld [vmem:[#allocation2 + $0x1220] sm:$0xff]
    %v773 = vld [vmem:[#allocation2 + $0x1228] sm:$0xff]
    %v774 = vld [vmem:[#allocation2 + $0x1230] sm:$0xff]
    %v775 = vld [vmem:[#allocation2 + $0x1238] sm:$0xff]
    %v776 = vld [vmem:[#allocation2 + $0x1240] sm:$0xff]
    %v777 = vld [vmem:[#allocation2 + $0x1248] sm:$0xff]
    %v778 = vld [vmem:[#allocation2 + $0x1250] sm:$0xff]
    %v779 = vld [vmem:[#allocation2 + $0x1258] sm:$0xff]
    %v780 = vld [vmem:[#allocation2 + $0x1260] sm:$0xff]
    %v781 = vld [vmem:[#allocation2 + $0x1268] sm:$0xff]
    %v782 = vld [vmem:[#allocation2 + $0x1270] sm:$0xff]
    %v783 = vld [vmem:[#allocation2 + $0x1278] sm:$0xff]
    %v784 = vld [vmem:[#allocation2 + $0x1280] sm:$0xff]
    %v785 = vld [vmem:[#allocation2 + $0x1288] sm:$0xff]
    %v786 = vld [vmem:[#allocation2 + $0x1290] sm:$0xff]
    %v787 = vld [vmem:[#allocation2 + $0x1298] sm:$0xff]
    %v788 = vld [vmem:[#allocation2 + $0x12a0] sm:$0xff]
    %v789 = vld [vmem:[#allocation2 + $0x12a8] sm:$0xff]
    %v790 = vld [vmem:[#allocation2 + $0x12b0] sm:$0xff]
    %v791 = vld [vmem:[#allocation2 + $0x12b8] sm:$0xff]
    %v792 = vld [vmem:[#allocation2 + $0x12c0] sm:$0xff]
    %v793 = vld [vmem:[#allocation2 + $0x12c8] sm:$0xff]
    %v794 = vld [vmem:[#allocation2 + $0x12d0] sm:$0xff]
    %v795 = vld [vmem:[#allocation2 + $0x12d8] sm:$0xff]
    %v796 = vld [vmem:[#allocation2 + $0x12e0] sm:$0xff]
    %v797 = vld [vmem:[#allocation2 + $0x12e8] sm:$0xff]
    %v798 = vld [vmem:[#allocation2 + $0x12f0] sm:$0xff]
    %v799 = vld [vmem:[#allocation2 + $0x12f8] sm:$0xff]
    %v800 = vld [vmem:[#allocation2 + $0x1300] sm:$0xff]
    %v801 = vld [vmem:[#allocation2 + $0x1308] sm:$0xff]
    %v802 = vld [vmem:[#allocation2 + $0x1310] sm:$0xff]
    %v803 = vld [vmem:[#allocation2 + $0x1318] sm:$0xff]
    %v804 = vld [vmem:[#allocation2 + $0x1320] sm:$0xff]
    %v805 = vld [vmem:[#allocation2 + $0x1328] sm:$0xff]
    %v806 = vld [vmem:[#allocation2 + $0x1330] sm:$0xff]
    %v807 = vld [vmem:[#allocation2 + $0x1338] sm:$0xff]
    %v808 = vld [vmem:[#allocation2 + $0x1340] sm:$0xff]
    %v809 = vld [vmem:[#allocation2 + $0x1348] sm:$0xff]
    %v810 = vld [vmem:[#allocation2 + $0x1350] sm:$0xff]
    %v811 = vld [vmem:[#allocation2 + $0x1358] sm:$0xff]
    %v812 = vld [vmem:[#allocation2 + $0x1360] sm:$0xff]
    %v813 = vld [vmem:[#allocation2 + $0x1368] sm:$0xff]
    %v814 = vld [vmem:[#allocation2 + $0x1370] sm:$0xff]
    %v815 = vld [vmem:[#allocation2 + $0x1378] sm:$0xff]
    %v816 = vld [vmem:[#allocation2 + $0x1380] sm:$0xff]
    %v817 = vld [vmem:[#allocation2 + $0x1388] sm:$0xff]
    %v818 = vld [vmem:[#allocation2 + $0x1390] sm:$0xff]
    %v819 = vld [vmem:[#allocation2 + $0x1398] sm:$0xff]
    %v820 = vld [vmem:[#allocation2 + $0x13a0] sm:$0xff]
    %v821 = vld [vmem:[#allocation2 + $0x13a8] sm:$0xff]
    %v822 = vld [vmem:[#allocation2 + $0x13b0] sm:$0xff]
    %v823 = vld [vmem:[#allocation2 + $0x13b8] sm:$0xff]
    %v824 = vld [vmem:[#allocation2 + $0x13c0] sm:$0xff]
    %v825 = vld [vmem:[#allocation2 + $0x13c8] sm:$0xff]
    %v826 = vld [vmem:[#allocation2 + $0x13d0] sm:$0xff]
    %v827 = vld [vmem:[#allocation2 + $0x13d8] sm:$0xff]
    %v828 = vld [vmem:[#allocation2 + $0x13e0] sm:$0xff]
    %v829 = vld [vmem:[#allocation2 + $0x13e8] sm:$0xff]
    %v830 = vld [vmem:[#allocation2 + $0x13f0] sm:$0xff]
    %v831 = vld [vmem:[#allocation2 + $0x13f8] sm:$0xff]
    %v832 = vld [vmem:[#allocation2 + $0x1400] sm:$0xff]
    %v833 = vld [vmem:[#allocation2 + $0x1408] sm:$0xff]
    %v834 = vld [vmem:[#allocation2 + $0x1410] sm:$0xff]
    %v835 = vld [vmem:[#allocation2 + $0x1418] sm:$0xff]
    %v836 = vld [vmem:[#allocation2 + $0x1420] sm:$0xff]
    %v837 = vld [vmem:[#allocation2 + $0x1428] sm:$0xff]
    %v838 = vld [vmem:[#allocation2 + $0x1430] sm:$0xff]
    %v839 = vld [vmem:[#allocation2 + $0x1438] sm:$0xff]
    %v840 = vld [vmem:[#allocation2 + $0x1440] sm:$0xff]
    %v841 = vld [vmem:[#allocation2 + $0x1448] sm:$0xff]
    %v842 = vld [vmem:[#allocation2 + $0x1450] sm:$0xff]
    %v843 = vld [vmem:[#allocation2 + $0x1458] sm:$0xff]
    %v844 = vld [vmem:[#allocation2 + $0x1460] sm:$0xff]
    %v845 = vld [vmem:[#allocation2 + $0x1468] sm:$0xff]
    %v846 = vld [vmem:[#allocation2 + $0x1470] sm:$0xff]
    %v847 = vld [vmem:[#allocation2 + $0x1478] sm:$0xff]
    %v848 = vld [vmem:[#allocation2 + $0x1480] sm:$0xff]
    %v849 = vld [vmem:[#allocation2 + $0x1488] sm:$0xff]
    %v850 = vld [vmem:[#allocation2 + $0x1490] sm:$0xff]
    %v851 = vld [vmem:[#allocation2 + $0x1498] sm:$0xff]
    %v852 = vld [vmem:[#allocation2 + $0x14a0] sm:$0xff]
    %v853 = vld [vmem:[#allocation2 + $0x14a8] sm:$0xff]
    %v854 = vld [vmem:[#allocation2 + $0x14b0] sm:$0xff]
    %v855 = vld [vmem:[#allocation2 + $0x14b8] sm:$0xff]
    %v856 = vld [vmem:[#allocation2 + $0x14c0] sm:$0xff]
    %v857 = vld [vmem:[#allocation2 + $0x14c8] sm:$0xff]
    %v858 = vld [vmem:[#allocation2 + $0x14d0] sm:$0xff]
    %v859 = vld [vmem:[#allocation2 + $0x14d8] sm:$0xff]
    %v860 = vld [vmem:[#allocation2 + $0x14e0] sm:$0xff]
    %v861 = vld [vmem:[#allocation2 + $0x14e8] sm:$0xff]
    %v862 = vld [vmem:[#allocation2 + $0x14f0] sm:$0xff]
    %v863 = vld [vmem:[#allocation2 + $0x14f8] sm:$0xff]
    %v864 = vld [vmem:[#allocation2 + $0x1500] sm:$0xff]
    %v865 = vld [vmem:[#allocation2 + $0x1508] sm:$0xff]
    %v866 = vld [vmem:[#allocation2 + $0x1510] sm:$0xff]
    %v867 = vld [vmem:[#allocation2 + $0x1518] sm:$0xff]
    %v868 = vld [vmem:[#allocation2 + $0x1520] sm:$0xff]
    %v869 = vld [vmem:[#allocation2 + $0x1528] sm:$0xff]
    %v870 = vld [vmem:[#allocation2 + $0x1530] sm:$0xff]
    %v871 = vld [vmem:[#allocation2 + $0x1538] sm:$0xff]
    %v872 = vld [vmem:[#allocation2 + $0x1540] sm:$0xff]
    %v873 = vld [vmem:[#allocation2 + $0x1548] sm:$0xff]
    %v874 = vld [vmem:[#allocation2 + $0x1550] sm:$0xff]
    %v875 = vld [vmem:[#allocation2 + $0x1558] sm:$0xff]
    %v876 = vld [vmem:[#allocation2 + $0x1560] sm:$0xff]
    %v877 = vld [vmem:[#allocation2 + $0x1568] sm:$0xff]
    %v878 = vld [vmem:[#allocation2 + $0x1570] sm:$0xff]
    %v879 = vld [vmem:[#allocation2 + $0x1578] sm:$0xff]
    %v880 = vld [vmem:[#allocation2 + $0x1580] sm:$0xff]
    %v881 = vld [vmem:[#allocation2 + $0x1588] sm:$0xff]
    %v882 = vld [vmem:[#allocation2 + $0x1590] sm:$0xff]
    %v883 = vld [vmem:[#allocation2 + $0x1598] sm:$0xff]
    %v884 = vld [vmem:[#allocation2 + $0x15a0] sm:$0xff]
    %v885 = vld [vmem:[#allocation2 + $0x15a8] sm:$0xff]
    %v886 = vld [vmem:[#allocation2 + $0x15b0] sm:$0xff]
    %v887 = vld [vmem:[#allocation2 + $0x15b8] sm:$0xff]
    %v888 = vld [vmem:[#allocation2 + $0x15c0] sm:$0xff]
    %v889 = vld [vmem:[#allocation2 + $0x15c8] sm:$0xff]
    %v890 = vld [vmem:[#allocation2 + $0x15d0] sm:$0xff]
    %v891 = vld [vmem:[#allocation2 + $0x15d8] sm:$0xff]
    %v892 = vld [vmem:[#allocation2 + $0x15e0] sm:$0xff]
    %v893 = vld [vmem:[#allocation2 + $0x15e8] sm:$0xff]
    %v894 = vld [vmem:[#allocation2 + $0x15f0] sm:$0xff]
    %v895 = vld [vmem:[#allocation2 + $0x15f8] sm:$0xff]
    %v896 = vld [vmem:[#allocation2 + $0x1600] sm:$0xff]
    %v897 = vld [vmem:[#allocation2 + $0x1608] sm:$0xff]
    %v898 = vld [vmem:[#allocation2 + $0x1610] sm:$0xff]
    %v899 = vld [vmem:[#allocation2 + $0x1618] sm:$0xff]
    %v900 = vld [vmem:[#allocation2 + $0x1620] sm:$0xff]
    %v901 = vld [vmem:[#allocation2 + $0x1628] sm:$0xff]
    %v902 = vld [vmem:[#allocation2 + $0x1630] sm:$0xff]
    %v903 = vld [vmem:[#allocation2 + $0x1638] sm:$0xff]
    %v904 = vld [vmem:[#allocation2 + $0x1640] sm:$0xff]
    %v905 = vld [vmem:[#allocation2 + $0x1648] sm:$0xff]
    %v906 = vld [vmem:[#allocation2 + $0x1650] sm:$0xff]
    %v907 = vld [vmem:[#allocation2 + $0x1658] sm:$0xff]
    %v908 = vld [vmem:[#allocation2 + $0x1660] sm:$0xff]
    %v909 = vld [vmem:[#allocation2 + $0x1668] sm:$0xff]
    %v910 = vld [vmem:[#allocation2 + $0x1670] sm:$0xff]
    %v911 = vld [vmem:[#allocation2 + $0x1678] sm:$0xff]
    %v912 = vld [vmem:[#allocation2 + $0x1680] sm:$0xff]
    %v913 = vld [vmem:[#allocation2 + $0x1688] sm:$0xff]
    %v914 = vld [vmem:[#allocation2 + $0x1690] sm:$0xff]
    %v915 = vld [vmem:[#allocation2 + $0x1698] sm:$0xff]
    %v916 = vld [vmem:[#allocation2 + $0x16a0] sm:$0xff]
    %v917 = vld [vmem:[#allocation2 + $0x16a8] sm:$0xff]
    %v918 = vld [vmem:[#allocation2 + $0x16b0] sm:$0xff]
    %v919 = vld [vmem:[#allocation2 + $0x16b8] sm:$0xff]
    %v920 = vld [vmem:[#allocation2 + $0x16c0] sm:$0xff]
    %v921 = vld [vmem:[#allocation2 + $0x16c8] sm:$0xff]
    %v922 = vld [vmem:[#allocation2 + $0x16d0] sm:$0xff]
    %v923 = vld [vmem:[#allocation2 + $0x16d8] sm:$0xff]
    %v924 = vld [vmem:[#allocation2 + $0x16e0] sm:$0xff]
    %v925 = vld [vmem:[#allocation2 + $0x16e8] sm:$0xff]
    %v926 = vld [vmem:[#allocation2 + $0x16f0] sm:$0xff]
    %v927 = vld [vmem:[#allocation2 + $0x16f8] sm:$0xff]
    %v928 = vld [vmem:[#allocation2 + $0x1700] sm:$0xff]
    %v929 = vld [vmem:[#allocation2 + $0x1708] sm:$0xff]
    %v930 = vld [vmem:[#allocation2 + $0x1710] sm:$0xff]
    %v931 = vld [vmem:[#allocation2 + $0x1718] sm:$0xff]
    %v932 = vld [vmem:[#allocation2 + $0x1720] sm:$0xff]
    %v933 = vld [vmem:[#allocation2 + $0x1728] sm:$0xff]
    %v934 = vld [vmem:[#allocation2 + $0x1730] sm:$0xff]
    %v935 = vld [vmem:[#allocation2 + $0x1738] sm:$0xff]
    %v936 = vld [vmem:[#allocation2 + $0x1740] sm:$0xff]
    %v937 = vld [vmem:[#allocation2 + $0x1748] sm:$0xff]
    %v938 = vld [vmem:[#allocation2 + $0x1750] sm:$0xff]
    %v939 = vld [vmem:[#allocation2 + $0x1758] sm:$0xff]
    %v940 = vld [vmem:[#allocation2 + $0x1760] sm:$0xff]
    %v941 = vld [vmem:[#allocation2 + $0x1768] sm:$0xff]
    %v942 = vld [vmem:[#allocation2 + $0x1770] sm:$0xff]
    %v943 = vld [vmem:[#allocation2 + $0x1778] sm:$0xff]
    %v944 = vld [vmem:[#allocation2 + $0x1780] sm:$0xff]
    %v945 = vld [vmem:[#allocation2 + $0x1788] sm:$0xff]
    %v946 = vld [vmem:[#allocation2 + $0x1790] sm:$0xff]
    %v947 = vld [vmem:[#allocation2 + $0x1798] sm:$0xff]
    %v948 = vld [vmem:[#allocation2 + $0x17a0] sm:$0xff]
    %v949 = vld [vmem:[#allocation2 + $0x17a8] sm:$0xff]
    %v950 = vld [vmem:[#allocation2 + $0x17b0] sm:$0xff]
    %v951 = vld [vmem:[#allocation2 + $0x17b8] sm:$0xff]
    %v952 = vld [vmem:[#allocation2 + $0x17c0] sm:$0xff]
    %v953 = vld [vmem:[#allocation2 + $0x17c8] sm:$0xff]
    %v954 = vld [vmem:[#allocation2 + $0x17d0] sm:$0xff]
    %v955 = vld [vmem:[#allocation2 + $0x17d8] sm:$0xff]
    %v956 = vld [vmem:[#allocation2 + $0x17e0] sm:$0xff]
    %v957 = vld [vmem:[#allocation2 + $0x17e8] sm:$0xff]
    %v958 = vld [vmem:[#allocation2 + $0x17f0] sm:$0xff]
    %v959 = vld [vmem:[#allocation2 + $0x17f8] sm:$0xff]
    %v960 = vld [vmem:[#allocation2 + $0x1800] sm:$0xff]
    %v961 = vld [vmem:[#allocation2 + $0x1808] sm:$0xff]
    %v962 = vld [vmem:[#allocation2 + $0x1810] sm:$0xff]
    %v963 = vld [vmem:[#allocation2 + $0x1818] sm:$0xff]
    %v964 = vld [vmem:[#allocation2 + $0x1820] sm:$0xff]
    %v965 = vld [vmem:[#allocation2 + $0x1828] sm:$0xff]
    %v966 = vld [vmem:[#allocation2 + $0x1830] sm:$0xff]
    %v967 = vld [vmem:[#allocation2 + $0x1838] sm:$0xff]
    %v968 = vld [vmem:[#allocation2 + $0x1840] sm:$0xff]
    %v969 = vld [vmem:[#allocation2 + $0x1848] sm:$0xff]
    %v970 = vld [vmem:[#allocation2 + $0x1850] sm:$0xff]
    %v971 = vld [vmem:[#allocation2 + $0x1858] sm:$0xff]
    %v972 = vld [vmem:[#allocation2 + $0x1860] sm:$0xff]
    %v973 = vld [vmem:[#allocation2 + $0x1868] sm:$0xff]
    %v974 = vld [vmem:[#allocation2 + $0x1870] sm:$0xff]
    %v975 = vld [vmem:[#allocation2 + $0x1878] sm:$0xff]
    %v976 = vld [vmem:[#allocation2 + $0x1880] sm:$0xff]
    %v977 = vld [vmem:[#allocation2 + $0x1888] sm:$0xff]
    %v978 = vld [vmem:[#allocation2 + $0x1890] sm:$0xff]
    %v979 = vld [vmem:[#allocation2 + $0x1898] sm:$0xff]
    %v980 = vld [vmem:[#allocation2 + $0x18a0] sm:$0xff]
    %v981 = vld [vmem:[#allocation2 + $0x18a8] sm:$0xff]
    %v982 = vld [vmem:[#allocation2 + $0x18b0] sm:$0xff]
    %v983 = vld [vmem:[#allocation2 + $0x18b8] sm:$0xff]
    %v984 = vld [vmem:[#allocation2 + $0x18c0] sm:$0xff]
    %v985 = vld [vmem:[#allocation2 + $0x18c8] sm:$0xff]
    %v986 = vld [vmem:[#allocation2 + $0x18d0] sm:$0xff]
    %v987 = vld [vmem:[#allocation2 + $0x18d8] sm:$0xff]
    %v988 = vld [vmem:[#allocation2 + $0x18e0] sm:$0xff]
    %v989 = vld [vmem:[#allocation2 + $0x18e8] sm:$0xff]
    %v990 = vld [vmem:[#allocation2 + $0x18f0] sm:$0xff]
    %v991 = vld [vmem:[#allocation2 + $0x18f8] sm:$0xff]
    %v992 = vld [vmem:[#allocation2 + $0x1900] sm:$0xff]
    %v993 = vld [vmem:[#allocation2 + $0x1908] sm:$0xff]
    %v994 = vld [vmem:[#allocation2 + $0x1910] sm:$0xff]
    %v995 = vld [vmem:[#allocation2 + $0x1918] sm:$0xff]
    %v996 = vld [vmem:[#allocation2 + $0x1920] sm:$0xff]
    %v997 = vld [vmem:[#allocation2 + $0x1928] sm:$0xff]
    %v998 = vld [vmem:[#allocation2 + $0x1930] sm:$0xff]
    %v999 = vld [vmem:[#allocation2 + $0x1938] sm:$0xff]
    %v1000 = vld [vmem:[#allocation2 + $0x1940] sm:$0xff]
    %v1001 = vld [vmem:[#allocation2 + $0x1948] sm:$0xff]
    %v1002 = vld [vmem:[#allocation2 + $0x1950] sm:$0xff]
    %v1003 = vld [vmem:[#allocation2 + $0x1958] sm:$0xff]
    %v1004 = vld [vmem:[#allocation2 + $0x1960] sm:$0xff]
    %v1005 = vld [vmem:[#allocation2 + $0x1968] sm:$0xff]
    %v1006 = vld [vmem:[#allocation2 + $0x1970] sm:$0xff]
    %v1007 = vld [vmem:[#allocation2 + $0x1978] sm:$0xff]
    %v1008 = vld [vmem:[#allocation2 + $0x1980] sm:$0xff]
    %v1009 = vld [vmem:[#allocation2 + $0x1988] sm:$0xff]
    %v1010 = vld [vmem:[#allocation2 + $0x1990] sm:$0xff]
    %v1011 = vld [vmem:[#allocation2 + $0x1998] sm:$0xff]
    %v1012 = vld [vmem:[#allocation2 + $0x19a0] sm:$0xff]
    %v1013 = vld [vmem:[#allocation2 + $0x19a8] sm:$0xff]
    %v1014 = vld [vmem:[#allocation2 + $0x19b0] sm:$0xff]
    %v1015 = vld [vmem:[#allocation2 + $0x19b8] sm:$0xff]
    %v1016 = vld [vmem:[#allocation2 + $0x19c0] sm:$0xff]
    %v1017 = vld [vmem:[#allocation2 + $0x19c8] sm:$0xff]
    %v1018 = vld [vmem:[#allocation2 + $0x19d0] sm:$0xff]
    %v1019 = vld [vmem:[#allocation2 + $0x19d8] sm:$0xff]
    %v1020 = vld [vmem:[#allocation2 + $0x19e0] sm:$0xff]
    %v1021 = vld [vmem:[#allocation2 + $0x19e8] sm:$0xff]
    %v1022 = vld [vmem:[#allocation2 + $0x19f0] sm:$0xff]
    %v1023 = vld [vmem:[#allocation2 + $0x19f8] sm:$0xff]
    %v1024 = vld [vmem:[#allocation2 + $0x1a00] sm:$0xff]
    %v1025 = vld [vmem:[#allocation2 + $0x1a08] sm:$0xff]
    %v1026 = vld [vmem:[#allocation2 + $0x1a10] sm:$0xff]
    %v1027 = vld [vmem:[#allocation2 + $0x1a18] sm:$0xff]
    %v1028 = vld [vmem:[#allocation2 + $0x1a20] sm:$0xff]
    %v1029 = vld [vmem:[#allocation2 + $0x1a28] sm:$0xff]
    %v1030 = vld [vmem:[#allocation2 + $0x1a30] sm:$0xff]
    %v1031 = vld [vmem:[#allocation2 + $0x1a38] sm:$0xff]
    %v1032 = vld [vmem:[#allocation2 + $0x1a40] sm:$0xff]
    %v1033 = vld [vmem:[#allocation2 + $0x1a48] sm:$0xff]
    %v1034 = vld [vmem:[#allocation2 + $0x1a50] sm:$0xff]
    %v1035 = vld [vmem:[#allocation2 + $0x1a58] sm:$0xff]
    %v1036 = vld [vmem:[#allocation2 + $0x1a60] sm:$0xff]
    %v1037 = vld [vmem:[#allocation2 + $0x1a68] sm:$0xff]
    %v1038 = vld [vmem:[#allocation2 + $0x1a70] sm:$0xff]
    %v1039 = vld [vmem:[#allocation2 + $0x1a78] sm:$0xff]
    %v1040 = vld [vmem:[#allocation2 + $0x1a80] sm:$0xff]
    %v1041 = vld [vmem:[#allocation2 + $0x1a88] sm:$0xff]
    %v1042 = vld [vmem:[#allocation2 + $0x1a90] sm:$0xff]
    %v1043 = vld [vmem:[#allocation2 + $0x1a98] sm:$0xff]
    %v1044 = vld [vmem:[#allocation2 + $0x1aa0] sm:$0xff]
    %v1045 = vld [vmem:[#allocation2 + $0x1aa8] sm:$0xff]
    %v1046 = vld [vmem:[#allocation2 + $0x1ab0] sm:$0xff]
    %v1047 = vld [vmem:[#allocation2 + $0x1ab8] sm:$0xff]
    %v1048 = vld [vmem:[#allocation2 + $0x1ac0] sm:$0xff]
    %v1049 = vld [vmem:[#allocation2 + $0x1ac8] sm:$0xff]
    %v1050 = vld [vmem:[#allocation2 + $0x1ad0] sm:$0xff]
    %v1051 = vld [vmem:[#allocation2 + $0x1ad8] sm:$0xff]
    %v1052 = vld [vmem:[#allocation2 + $0x1ae0] sm:$0xff]
    %v1053 = vld [vmem:[#allocation2 + $0x1ae8] sm:$0xff]
    %v1054 = vld [vmem:[#allocation2 + $0x1af0] sm:$0xff]
    %v1055 = vld [vmem:[#allocation2 + $0x1af8] sm:$0xff]
    %v1056 = vld [vmem:[#allocation2 + $0x1b00] sm:$0xff]
    %v1057 = vld [vmem:[#allocation2 + $0x1b08] sm:$0xff]
    %v1058 = vld [vmem:[#allocation2 + $0x1b10] sm:$0xff]
    %v1059 = vld [vmem:[#allocation2 + $0x1b18] sm:$0xff]
    %v1060 = vld [vmem:[#allocation2 + $0x1b20] sm:$0xff]
    %v1061 = vld [vmem:[#allocation2 + $0x1b28] sm:$0xff]
    %v1062 = vld [vmem:[#allocation2 + $0x1b30] sm:$0xff]
    %v1063 = vld [vmem:[#allocation2 + $0x1b38] sm:$0xff]
    %v1064 = vld [vmem:[#allocation2 + $0x1b40] sm:$0xff]
    %v1065 = vld [vmem:[#allocation2 + $0x1b48] sm:$0xff]
    %v1066 = vld [vmem:[#allocation2 + $0x1b50] sm:$0xff]
    %v1067 = vld [vmem:[#allocation2 + $0x1b58] sm:$0xff]
    %v1068 = vld [vmem:[#allocation2 + $0x1b60] sm:$0xff]
    %v1069 = vld [vmem:[#allocation2 + $0x1b68] sm:$0xff]
    %v1070 = vld [vmem:[#allocation2 + $0x1b70] sm:$0xff]
    %v1071 = vld [vmem:[#allocation2 + $0x1b78] sm:$0xff]
    %v1072 = vld [vmem:[#allocation2 + $0x1b80] sm:$0xff]
    %v1073 = vld [vmem:[#allocation2 + $0x1b88] sm:$0xff]
    %v1074 = vld [vmem:[#allocation2 + $0x1b90] sm:$0xff]
    %v1075 = vld [vmem:[#allocation2 + $0x1b98] sm:$0xff]
    %v1076 = vld [vmem:[#allocation2 + $0x1ba0] sm:$0xff]
    %v1077 = vld [vmem:[#allocation2 + $0x1ba8] sm:$0xff]
    %v1078 = vld [vmem:[#allocation2 + $0x1bb0] sm:$0xff]
    %v1079 = vld [vmem:[#allocation2 + $0x1bb8] sm:$0xff]
    %v1080 = vld [vmem:[#allocation2 + $0x1bc0] sm:$0xff]
    %v1081 = vld [vmem:[#allocation2 + $0x1bc8] sm:$0xff]
    %v1082 = vld [vmem:[#allocation2 + $0x1bd0] sm:$0xff]
    %v1083 = vld [vmem:[#allocation2 + $0x1bd8] sm:$0xff]
    %v1084 = vld [vmem:[#allocation2 + $0x1be0] sm:$0xff]
    %v1085 = vld [vmem:[#allocation2 + $0x1be8] sm:$0xff]
    %v1086 = vld [vmem:[#allocation2 + $0x1bf0] sm:$0xff]
    %v1087 = vld [vmem:[#allocation2 + $0x1bf8] sm:$0xff]
    %v1088 = vld [vmem:[#allocation2 + $0x1c00] sm:$0xff]
    %v1089 = vld [vmem:[#allocation2 + $0x1c08] sm:$0xff]
    %v1090 = vld [vmem:[#allocation2 + $0x1c10] sm:$0xff]
    %v1091 = vld [vmem:[#allocation2 + $0x1c18] sm:$0xff]
    %v1092 = vld [vmem:[#allocation2 + $0x1c20] sm:$0xff]
    %v1093 = vld [vmem:[#allocation2 + $0x1c28] sm:$0xff]
    %v1094 = vld [vmem:[#allocation2 + $0x1c30] sm:$0xff]
    %v1095 = vld [vmem:[#allocation2 + $0x1c38] sm:$0xff]
    %v1096 = vld [vmem:[#allocation2 + $0x1c40] sm:$0xff]
    %v1097 = vld [vmem:[#allocation2 + $0x1c48] sm:$0xff]
    %v1098 = vld [vmem:[#allocation2 + $0x1c50] sm:$0xff]
    %v1099 = vld [vmem:[#allocation2 + $0x1c58] sm:$0xff]
    %v1100 = vld [vmem:[#allocation2 + $0x1c60] sm:$0xff]
    %v1101 = vld [vmem:[#allocation2 + $0x1c68] sm:$0xff]
    %v1102 = vld [vmem:[#allocation2 + $0x1c70] sm:$0xff]
    %v1103 = vld [vmem:[#allocation2 + $0x1c78] sm:$0xff]
    %v1104 = vld [vmem:[#allocation2 + $0x1c80] sm:$0xff]
    %v1105 = vld [vmem:[#allocation2 + $0x1c88] sm:$0xff]
    %v1106 = vld [vmem:[#allocation2 + $0x1c90] sm:$0xff]
    %v1107 = vld [vmem:[#allocation2 + $0x1c98] sm:$0xff]
    %v1108 = vld [vmem:[#allocation2 + $0x1ca0] sm:$0xff]
    %v1109 = vld [vmem:[#allocation2 + $0x1ca8] sm:$0xff]
    %v1110 = vld [vmem:[#allocation2 + $0x1cb0] sm:$0xff]
    %v1111 = vld [vmem:[#allocation2 + $0x1cb8] sm:$0xff]
    %v1112 = vld [vmem:[#allocation2 + $0x1cc0] sm:$0xff]
    %v1113 = vld [vmem:[#allocation2 + $0x1cc8] sm:$0xff]
    %v1114 = vld [vmem:[#allocation2 + $0x1cd0] sm:$0xff]
    %v1115 = vld [vmem:[#allocation2 + $0x1cd8] sm:$0xff]
    %v1116 = vld [vmem:[#allocation2 + $0x1ce0] sm:$0xff]
    %v1117 = vld [vmem:[#allocation2 + $0x1ce8] sm:$0xff]
    %v1118 = vld [vmem:[#allocation2 + $0x1cf0] sm:$0xff]
    %v1119 = vld [vmem:[#allocation2 + $0x1cf8] sm:$0xff]
    %v1120 = vld [vmem:[#allocation2 + $0x1d00] sm:$0xff]
    %v1121 = vld [vmem:[#allocation2 + $0x1d08] sm:$0xff]
    %v1122 = vld [vmem:[#allocation2 + $0x1d10] sm:$0xff]
    %v1123 = vld [vmem:[#allocation2 + $0x1d18] sm:$0xff]
    %v1124 = vld [vmem:[#allocation2 + $0x1d20] sm:$0xff]
    %v1125 = vld [vmem:[#allocation2 + $0x1d28] sm:$0xff]
    %v1126 = vld [vmem:[#allocation2 + $0x1d30] sm:$0xff]
    %v1127 = vld [vmem:[#allocation2 + $0x1d38] sm:$0xff]
    %v1128 = vld [vmem:[#allocation2 + $0x1d40] sm:$0xff]
    %v1129 = vld [vmem:[#allocation2 + $0x1d48] sm:$0xff]
    %v1130 = vld [vmem:[#allocation2 + $0x1d50] sm:$0xff]
    %v1131 = vld [vmem:[#allocation2 + $0x1d58] sm:$0xff]
    %v1132 = vld [vmem:[#allocation2 + $0x1d60] sm:$0xff]
    %v1133 = vld [vmem:[#allocation2 + $0x1d68] sm:$0xff]
    %v1134 = vld [vmem:[#allocation2 + $0x1d70] sm:$0xff]
    %v1135 = vld [vmem:[#allocation2 + $0x1d78] sm:$0xff]
    %v1136 = vld [vmem:[#allocation2 + $0x1d80] sm:$0xff]
    %v1137 = vld [vmem:[#allocation2 + $0x1d88] sm:$0xff]
    %v1138 = vld [vmem:[#allocation2 + $0x1d90] sm:$0xff]
    %v1139 = vld [vmem:[#allocation2 + $0x1d98] sm:$0xff]
    %v1140 = vld [vmem:[#allocation2 + $0x1da0] sm:$0xff]
    %v1141 = vld [vmem:[#allocation2 + $0x1da8] sm:$0xff]
    %v1142 = vld [vmem:[#allocation2 + $0x1db0] sm:$0xff]
    %v1143 = vld [vmem:[#allocation2 + $0x1db8] sm:$0xff]
    %v1144 = vld [vmem:[#allocation2 + $0x1dc0] sm:$0xff]
    %v1145 = vld [vmem:[#allocation2 + $0x1dc8] sm:$0xff]
    %v1146 = vld [vmem:[#allocation2 + $0x1dd0] sm:$0xff]
    %v1147 = vld [vmem:[#allocation2 + $0x1dd8] sm:$0xff]
    %v1148 = vld [vmem:[#allocation2 + $0x1de0] sm:$0xff]
    %v1149 = vld [vmem:[#allocation2 + $0x1de8] sm:$0xff]
    %v1150 = vld [vmem:[#allocation2 + $0x1df0] sm:$0xff]
    %v1151 = vld [vmem:[#allocation2 + $0x1df8] sm:$0xff]
    %v1152 = vld [vmem:[#allocation2 + $0x1e00] sm:$0xff]
    %v1153 = vld [vmem:[#allocation2 + $0x1e08] sm:$0xff]
    %v1154 = vld [vmem:[#allocation2 + $0x1e10] sm:$0xff]
    %v1155 = vld [vmem:[#allocation2 + $0x1e18] sm:$0xff]
    %v1156 = vld [vmem:[#allocation2 + $0x1e20] sm:$0xff]
    %v1157 = vld [vmem:[#allocation2 + $0x1e28] sm:$0xff]
    %v1158 = vld [vmem:[#allocation2 + $0x1e30] sm:$0xff]
    %v1159 = vld [vmem:[#allocation2 + $0x1e38] sm:$0xff]
    %v1160 = vld [vmem:[#allocation2 + $0x1e40] sm:$0xff]
    %v1161 = vld [vmem:[#allocation2 + $0x1e48] sm:$0xff]
    %v1162 = vld [vmem:[#allocation2 + $0x1e50] sm:$0xff]
    %v1163 = vld [vmem:[#allocation2 + $0x1e58] sm:$0xff]
    %v1164 = vld [vmem:[#allocation2 + $0x1e60] sm:$0xff]
    %v1165 = vld [vmem:[#allocation2 + $0x1e68] sm:$0xff]
    %v1166 = vld [vmem:[#allocation2 + $0x1e70] sm:$0xff]
    %v1167 = vld [vmem:[#allocation2 + $0x1e78] sm:$0xff]
    %v1168 = vld [vmem:[#allocation2 + $0x1e80] sm:$0xff]
    %v1169 = vld [vmem:[#allocation2 + $0x1e88] sm:$0xff]
    %v1170 = vld [vmem:[#allocation2 + $0x1e90] sm:$0xff]
    %v1171 = vld [vmem:[#allocation2 + $0x1e98] sm:$0xff]
    %v1172 = vld [vmem:[#allocation2 + $0x1ea0] sm:$0xff]
    %v1173 = vld [vmem:[#allocation2 + $0x1ea8] sm:$0xff]
    %v1174 = vld [vmem:[#allocation2 + $0x1eb0] sm:$0xff]
    %v1175 = vld [vmem:[#allocation2 + $0x1eb8] sm:$0xff]
    %v1176 = vld [vmem:[#allocation2 + $0x1ec0] sm:$0xff]
    %v1177 = vld [vmem:[#allocation2 + $0x1ec8] sm:$0xff]
    %v1178 = vld [vmem:[#allocation2 + $0x1ed0] sm:$0xff]
    %v1179 = vld [vmem:[#allocation2 + $0x1ed8] sm:$0xff]
    %v1180 = vld [vmem:[#allocation2 + $0x1ee0] sm:$0xff]
    %v1181 = vld [vmem:[#allocation2 + $0x1ee8] sm:$0xff]
    %v1182 = vld [vmem:[#allocation2 + $0x1ef0] sm:$0xff]
    %v1183 = vld [vmem:[#allocation2 + $0x1ef8] sm:$0xff]
    %v1184 = vld [vmem:[#allocation2 + $0x1f00] sm:$0xff]
    %v1185 = vld [vmem:[#allocation2 + $0x1f08] sm:$0xff]
    %v1186 = vld [vmem:[#allocation2 + $0x1f10] sm:$0xff]
    %v1187 = vld [vmem:[#allocation2 + $0x1f18] sm:$0xff]
    %v1188 = vld [vmem:[#allocation2 + $0x1f20] sm:$0xff]
    %v1189 = vld [vmem:[#allocation2 + $0x1f28] sm:$0xff]
    %v1190 = vld [vmem:[#allocation2 + $0x1f30] sm:$0xff]
    %v1191 = vld [vmem:[#allocation2 + $0x1f38] sm:$0xff]
    %v1192 = vld [vmem:[#allocation2 + $0x1f40] sm:$0xff]
    %v1193 = vld [vmem:[#allocation2 + $0x1f48] sm:$0xff]
    %v1194 = vld [vmem:[#allocation2 + $0x1f50] sm:$0xff]
    %v1195 = vld [vmem:[#allocation2 + $0x1f58] sm:$0xff]
    %v1196 = vld [vmem:[#allocation2 + $0x1f60] sm:$0xff]
    %v1197 = vld [vmem:[#allocation2 + $0x1f68] sm:$0xff]
    %v1198 = vld [vmem:[#allocation2 + $0x1f70] sm:$0xff]
    %v1199 = vld [vmem:[#allocation2 + $0x1f78] sm:$0xff]
    %v1200 = vld [vmem:[#allocation2 + $0x1f80] sm:$0xff]
    %v1201 = vld [vmem:[#allocation2 + $0x1f88] sm:$0xff]
    %v1202 = vld [vmem:[#allocation2 + $0x1f90] sm:$0xff]
    %v1203 = vld [vmem:[#allocation2 + $0x1f98] sm:$0xff]
    %v1204 = vld [vmem:[#allocation2 + $0x1fa0] sm:$0xff]
    %v1205 = vld [vmem:[#allocation2 + $0x1fa8] sm:$0xff]
    %v1206 = vld [vmem:[#allocation2 + $0x1fb0] sm:$0xff]
    %v1207 = vld [vmem:[#allocation2 + $0x1fb8] sm:$0xff]
    %v1208 = vld [vmem:[#allocation2 + $0x1fc0] sm:$0xff]
    %v1209 = vld [vmem:[#allocation2 + $0x1fc8] sm:$0xff]
    %v1210 = vld [vmem:[#allocation2 + $0x1fd0] sm:$0xff]
    %v1211 = vld [vmem:[#allocation2 + $0x1fd8] sm:$0xff]
    %v1212 = vld [vmem:[#allocation2 + $0x1fe0] sm:$0xff]
    %v1213 = vld [vmem:[#allocation2 + $0x1fe8] sm:$0xff]
    %v1214 = vld [vmem:[#allocation2 + $0x1ff0] sm:$0xff]
    %v1215 = vld [vmem:[#allocation2 + $0x1ff8] sm:$0xff]
    %v1216 = vld [vmem:[#allocation4] sm:$0xff]
    %v1218 = vperm.slane %v1216, 0
    %v1219 = vperm.slane %v1216, 1
    %v1220 = vperm.slane %v1216, 2
    %v1221 = vperm.slane %v1216, 3
    %v1222 = vperm.slane %v1216, 4
    %v1223 = vperm.slane %v1216, 5
    %v1224 = vperm.slane %v1216, 6
    %v1225 = vperm.slane %v1216, 7
    %v1242 = vunpack.c.l.b16 %v184
    %v1243 = vunpack.c.h.b16 %v184
    %v1244 = vunpack.c.l.b16 %v185
    %v1245 = vunpack.c.h.b16 %v185
    %v1246 = vunpack.c.l.b16 %v186
    %v1247 = vunpack.c.h.b16 %v186
    %v1248 = vunpack.c.l.b16 %v187
    %v1249 = vunpack.c.h.b16 %v187
    %v1250 = vunpack.c.l.b16 %v188
    %v1251 = vunpack.c.h.b16 %v188
    %v1252 = vunpack.c.l.b16 %v189
    %v1253 = vunpack.c.h.b16 %v189
    %v1254 = vunpack.c.l.b16 %v190
    %v1255 = vunpack.c.h.b16 %v190
    %v1256 = vunpack.c.l.b16 %v191
    %v1257 = vunpack.c.h.b16 %v191
    %v1258 = vpack.c.b16 %v1242, %v1242
    %v1259 = vpack.c.b16 %v1243, %v1243
    %v1260 = vpack.c.b16 %v1244, %v1244
    %v1261 = vpack.c.b16 %v1245, %v1245
    %v1262 = vpack.c.b16 %v1246, %v1246
    %v1263 = vpack.c.b16 %v1247, %v1247
    %v1264 = vpack.c.b16 %v1248, %v1248
    %v1265 = vpack.c.b16 %v1249, %v1249
    %v1266 = vpack.c.b16 %v1250, %v1250
    %v1267 = vpack.c.b16 %v1251, %v1251
    %v1268 = vpack.c.b16 %v1252, %v1252
    %v1269 = vpack.c.b16 %v1253, %v1253
    %v1270 = vpack.c.b16 %v1254, %v1254
    %v1271 = vpack.c.b16 %v1255, %v1255
    %v1272 = vpack.c.b16 %v1256, %v1256
    %v1273 = vpack.c.b16 %v1257, %v1257
    %v2314 = vunpack.c.l.b16 %v192
    %v2315 = vunpack.c.h.b16 %v192
    %v2316 = vunpack.c.l.b16 %v193
    %v2317 = vunpack.c.h.b16 %v193
    %v2318 = vunpack.c.l.b16 %v194
    %v2319 = vunpack.c.h.b16 %v194
    %v2320 = vunpack.c.l.b16 %v195
    %v2321 = vunpack.c.h.b16 %v195
    %v2322 = vunpack.c.l.b16 %v196
    %v2323 = vunpack.c.h.b16 %v196
    %v2324 = vunpack.c.l.b16 %v197
    %v2325 = vunpack.c.h.b16 %v197
    %v2326 = vunpack.c.l.b16 %v198
    %v2327 = vunpack.c.h.b16 %v198
    %v2328 = vunpack.c.l.b16 %v199
    %v2329 = vunpack.c.h.b16 %v199
    %v2330 = vunpack.c.l.b16 %v200
    %v2331 = vunpack.c.h.b16 %v200
    %v2332 = vunpack.c.l.b16 %v201
    %v2333 = vunpack.c.h.b16 %v201
    %v2334 = vunpack.c.l.b16 %v202
    %v2335 = vunpack.c.h.b16 %v202
    %v2336 = vunpack.c.l.b16 %v203
    %v2337 = vunpack.c.h.b16 %v203
    %v2338 = vunpack.c.l.b16 %v204
    %v2339 = vunpack.c.h.b16 %v204
    %v2340 = vunpack.c.l.b16 %v205
    %v2341 = vunpack.c.h.b16 %v205
    %v2342 = vunpack.c.l.b16 %v206
    %v2343 = vunpack.c.h.b16 %v206
    %v2344 = vunpack.c.l.b16 %v207
    %v2345 = vunpack.c.h.b16 %v207
    %v2346 = vunpack.c.l.b16 %v208
    %v2347 = vunpack.c.h.b16 %v208
    %v2348 = vunpack.c.l.b16 %v209
    %v2349 = vunpack.c.h.b16 %v209
    %v2350 = vunpack.c.l.b16 %v210
    %v2351 = vunpack.c.h.b16 %v210
    %v2352 = vunpack.c.l.b16 %v211
    %v2353 = vunpack.c.h.b16 %v211
    %v2354 = vunpack.c.l.b16 %v212
    %v2355 = vunpack.c.h.b16 %v212
    %v2356 = vunpack.c.l.b16 %v213
    %v2357 = vunpack.c.h.b16 %v213
    %v2358 = vunpack.c.l.b16 %v214
    %v2359 = vunpack.c.h.b16 %v214
    %v2360 = vunpack.c.l.b16 %v215
    %v2361 = vunpack.c.h.b16 %v215
    %v2362 = vunpack.c.l.b16 %v216
    %v2363 = vunpack.c.h.b16 %v216
    %v2364 = vunpack.c.l.b16 %v217
    %v2365 = vunpack.c.h.b16 %v217
    %v2366 = vunpack.c.l.b16 %v218
    %v2367 = vunpack.c.h.b16 %v218
    %v2368 = vunpack.c.l.b16 %v219
    %v2369 = vunpack.c.h.b16 %v219
    %v2370 = vunpack.c.l.b16 %v220
    %v2371 = vunpack.c.h.b16 %v220
    %v2372 = vunpack.c.l.b16 %v221
    %v2373 = vunpack.c.h.b16 %v221
    %v2374 = vunpack.c.l.b16 %v222
    %v2375 = vunpack.c.h.b16 %v222
    %v2376 = vunpack.c.l.b16 %v223
    %v2377 = vunpack.c.h.b16 %v223
    %v2378 = vunpack.c.l.b16 %v224
    %v2379 = vunpack.c.h.b16 %v224
    %v2380 = vunpack.c.l.b16 %v225
    %v2381 = vunpack.c.h.b16 %v225
    %v2382 = vunpack.c.l.b16 %v226
    %v2383 = vunpack.c.h.b16 %v226
    %v2384 = vunpack.c.l.b16 %v227
    %v2385 = vunpack.c.h.b16 %v227
    %v2386 = vunpack.c.l.b16 %v228
    %v2387 = vunpack.c.h.b16 %v228
    %v2388 = vunpack.c.l.b16 %v229
    %v2389 = vunpack.c.h.b16 %v229
    %v2390 = vunpack.c.l.b16 %v230
    %v2391 = vunpack.c.h.b16 %v230
    %v2392 = vunpack.c.l.b16 %v231
    %v2393 = vunpack.c.h.b16 %v231
    %v2394 = vunpack.c.l.b16 %v232
    %v2395 = vunpack.c.h.b16 %v232
    %v2396 = vunpack.c.l.b16 %v233
    %v2397 = vunpack.c.h.b16 %v233
    %v2398 = vunpack.c.l.b16 %v234
    %v2399 = vunpack.c.h.b16 %v234
    %v2400 = vunpack.c.l.b16 %v235
    %v2401 = vunpack.c.h.b16 %v235
    %v2402 = vunpack.c.l.b16 %v236
    %v2403 = vunpack.c.h.b16 %v236
    %v2404 = vunpack.c.l.b16 %v237
    %v2405 = vunpack.c.h.b16 %v237
    %v2406 = vunpack.c.l.b16 %v238
    %v2407 = vunpack.c.h.b16 %v238
    %v2408 = vunpack.c.l.b16 %v239
    %v2409 = vunpack.c.h.b16 %v239
    %v2410 = vunpack.c.l.b16 %v240
    %v2411 = vunpack.c.h.b16 %v240
    %v2412 = vunpack.c.l.b16 %v241
    %v2413 = vunpack.c.h.b16 %v241
    %v2414 = vunpack.c.l.b16 %v242
    %v2415 = vunpack.c.h.b16 %v242
    %v2416 = vunpack.c.l.b16 %v243
    %v2417 = vunpack.c.h.b16 %v243
    %v2418 = vunpack.c.l.b16 %v244
    %v2419 = vunpack.c.h.b16 %v244
    %v2420 = vunpack.c.l.b16 %v245
    %v2421 = vunpack.c.h.b16 %v245
    %v2422 = vunpack.c.l.b16 %v246
    %v2423 = vunpack.c.h.b16 %v246
    %v2424 = vunpack.c.l.b16 %v247
    %v2425 = vunpack.c.h.b16 %v247
    %v2426 = vunpack.c.l.b16 %v248
    %v2427 = vunpack.c.h.b16 %v248
    %v2428 = vunpack.c.l.b16 %v249
    %v2429 = vunpack.c.h.b16 %v249
    %v2430 = vunpack.c.l.b16 %v250
    %v2431 = vunpack.c.h.b16 %v250
    %v2432 = vunpack.c.l.b16 %v251
    %v2433 = vunpack.c.h.b16 %v251
    %v2434 = vunpack.c.l.b16 %v252
    %v2435 = vunpack.c.h.b16 %v252
    %v2436 = vunpack.c.l.b16 %v253
    %v2437 = vunpack.c.h.b16 %v253
    %v2438 = vunpack.c.l.b16 %v254
    %v2439 = vunpack.c.h.b16 %v254
    %v2440 = vunpack.c.l.b16 %v255
    %v2441 = vunpack.c.h.b16 %v255
    %v2442 = vunpack.c.l.b16 %v256
    %v2443 = vunpack.c.h.b16 %v256
    %v2444 = vunpack.c.l.b16 %v257
    %v2445 = vunpack.c.h.b16 %v257
    %v2446 = vunpack.c.l.b16 %v258
    %v2447 = vunpack.c.h.b16 %v258
    %v2448 = vunpack.c.l.b16 %v259
    %v2449 = vunpack.c.h.b16 %v259
    %v2450 = vunpack.c.l.b16 %v260
    %v2451 = vunpack.c.h.b16 %v260
    %v2452 = vunpack.c.l.b16 %v261
    %v2453 = vunpack.c.h.b16 %v261
    %v2454 = vunpack.c.l.b16 %v262
    %v2455 = vunpack.c.h.b16 %v262
    %v2456 = vunpack.c.l.b16 %v263
    %v2457 = vunpack.c.h.b16 %v263
    %v2458 = vunpack.c.l.b16 %v264
    %v2459 = vunpack.c.h.b16 %v264
    %v2460 = vunpack.c.l.b16 %v265
    %v2461 = vunpack.c.h.b16 %v265
    %v2462 = vunpack.c.l.b16 %v266
    %v2463 = vunpack.c.h.b16 %v266
    %v2464 = vunpack.c.l.b16 %v267
    %v2465 = vunpack.c.h.b16 %v267
    %v2466 = vunpack.c.l.b16 %v268
    %v2467 = vunpack.c.h.b16 %v268
    %v2468 = vunpack.c.l.b16 %v269
    %v2469 = vunpack.c.h.b16 %v269
    %v2470 = vunpack.c.l.b16 %v270
    %v2471 = vunpack.c.h.b16 %v270
    %v2472 = vunpack.c.l.b16 %v271
    %v2473 = vunpack.c.h.b16 %v271
    %v2474 = vunpack.c.l.b16 %v272
    %v2475 = vunpack.c.h.b16 %v272
    %v2476 = vunpack.c.l.b16 %v273
    %v2477 = vunpack.c.h.b16 %v273
    %v2478 = vunpack.c.l.b16 %v274
    %v2479 = vunpack.c.h.b16 %v274
    %v2480 = vunpack.c.l.b16 %v275
    %v2481 = vunpack.c.h.b16 %v275
    %v2482 = vunpack.c.l.b16 %v276
    %v2483 = vunpack.c.h.b16 %v276
    %v2484 = vunpack.c.l.b16 %v277
    %v2485 = vunpack.c.h.b16 %v277
    %v2486 = vunpack.c.l.b16 %v278
    %v2487 = vunpack.c.h.b16 %v278
    %v2488 = vunpack.c.l.b16 %v279
    %v2489 = vunpack.c.h.b16 %v279
    %v2490 = vunpack.c.l.b16 %v280
    %v2491 = vunpack.c.h.b16 %v280
    %v2492 = vunpack.c.l.b16 %v281
    %v2493 = vunpack.c.h.b16 %v281
    %v2494 = vunpack.c.l.b16 %v282
    %v2495 = vunpack.c.h.b16 %v282
    %v2496 = vunpack.c.l.b16 %v283
    %v2497 = vunpack.c.h.b16 %v283
    %v2498 = vunpack.c.l.b16 %v284
    %v2499 = vunpack.c.h.b16 %v284
    %v2500 = vunpack.c.l.b16 %v285
    %v2501 = vunpack.c.h.b16 %v285
    %v2502 = vunpack.c.l.b16 %v286
    %v2503 = vunpack.c.h.b16 %v286
    %v2504 = vunpack.c.l.b16 %v287
    %v2505 = vunpack.c.h.b16 %v287
    %v2506 = vunpack.c.l.b16 %v288
    %v2507 = vunpack.c.h.b16 %v288
    %v2508 = vunpack.c.l.b16 %v289
    %v2509 = vunpack.c.h.b16 %v289
    %v2510 = vunpack.c.l.b16 %v290
    %v2511 = vunpack.c.h.b16 %v290
    %v2512 = vunpack.c.l.b16 %v291
    %v2513 = vunpack.c.h.b16 %v291
    %v2514 = vunpack.c.l.b16 %v292
    %v2515 = vunpack.c.h.b16 %v292
    %v2516 = vunpack.c.l.b16 %v293
    %v2517 = vunpack.c.h.b16 %v293
    %v2518 = vunpack.c.l.b16 %v294
    %v2519 = vunpack.c.h.b16 %v294
    %v2520 = vunpack.c.l.b16 %v295
    %v2521 = vunpack.c.h.b16 %v295
    %v2522 = vunpack.c.l.b16 %v296
    %v2523 = vunpack.c.h.b16 %v296
    %v2524 = vunpack.c.l.b16 %v297
    %v2525 = vunpack.c.h.b16 %v297
    %v2526 = vunpack.c.l.b16 %v298
    %v2527 = vunpack.c.h.b16 %v298
    %v2528 = vunpack.c.l.b16 %v299
    %v2529 = vunpack.c.h.b16 %v299
    %v2530 = vunpack.c.l.b16 %v300
    %v2531 = vunpack.c.h.b16 %v300
    %v2532 = vunpack.c.l.b16 %v301
    %v2533 = vunpack.c.h.b16 %v301
    %v2534 = vunpack.c.l.b16 %v302
    %v2535 = vunpack.c.h.b16 %v302
    %v2536 = vunpack.c.l.b16 %v303
    %v2537 = vunpack.c.h.b16 %v303
    %v2538 = vunpack.c.l.b16 %v304
    %v2539 = vunpack.c.h.b16 %v304
    %v2540 = vunpack.c.l.b16 %v305
    %v2541 = vunpack.c.h.b16 %v305
    %v2542 = vunpack.c.l.b16 %v306
    %v2543 = vunpack.c.h.b16 %v306
    %v2544 = vunpack.c.l.b16 %v307
    %v2545 = vunpack.c.h.b16 %v307
    %v2546 = vunpack.c.l.b16 %v308
    %v2547 = vunpack.c.h.b16 %v308
    %v2548 = vunpack.c.l.b16 %v309
    %v2549 = vunpack.c.h.b16 %v309
    %v2550 = vunpack.c.l.b16 %v310
    %v2551 = vunpack.c.h.b16 %v310
    %v2552 = vunpack.c.l.b16 %v311
    %v2553 = vunpack.c.h.b16 %v311
    %v2554 = vunpack.c.l.b16 %v312
    %v2555 = vunpack.c.h.b16 %v312
    %v2556 = vunpack.c.l.b16 %v313
    %v2557 = vunpack.c.h.b16 %v313
    %v2558 = vunpack.c.l.b16 %v314
    %v2559 = vunpack.c.h.b16 %v314
    %v2560 = vunpack.c.l.b16 %v315
    %v2561 = vunpack.c.h.b16 %v315
    %v2562 = vunpack.c.l.b16 %v316
    %v2563 = vunpack.c.h.b16 %v316
    %v2564 = vunpack.c.l.b16 %v317
    %v2565 = vunpack.c.h.b16 %v317
    %v2566 = vunpack.c.l.b16 %v318
    %v2567 = vunpack.c.h.b16 %v318
    %v2568 = vunpack.c.l.b16 %v319
    %v2569 = vunpack.c.h.b16 %v319
    %v2570 = vunpack.c.l.b16 %v320
    %v2571 = vunpack.c.h.b16 %v320
    %v2572 = vunpack.c.l.b16 %v321
    %v2573 = vunpack.c.h.b16 %v321
    %v2574 = vunpack.c.l.b16 %v322
    %v2575 = vunpack.c.h.b16 %v322
    %v2576 = vunpack.c.l.b16 %v323
    %v2577 = vunpack.c.h.b16 %v323
    %v2578 = vunpack.c.l.b16 %v324
    %v2579 = vunpack.c.h.b16 %v324
    %v2580 = vunpack.c.l.b16 %v325
    %v2581 = vunpack.c.h.b16 %v325
    %v2582 = vunpack.c.l.b16 %v326
    %v2583 = vunpack.c.h.b16 %v326
    %v2584 = vunpack.c.l.b16 %v327
    %v2585 = vunpack.c.h.b16 %v327
    %v2586 = vunpack.c.l.b16 %v328
    %v2587 = vunpack.c.h.b16 %v328
    %v2588 = vunpack.c.l.b16 %v329
    %v2589 = vunpack.c.h.b16 %v329
    %v2590 = vunpack.c.l.b16 %v330
    %v2591 = vunpack.c.h.b16 %v330
    %v2592 = vunpack.c.l.b16 %v331
    %v2593 = vunpack.c.h.b16 %v331
    %v2594 = vunpack.c.l.b16 %v332
    %v2595 = vunpack.c.h.b16 %v332
    %v2596 = vunpack.c.l.b16 %v333
    %v2597 = vunpack.c.h.b16 %v333
    %v2598 = vunpack.c.l.b16 %v334
    %v2599 = vunpack.c.h.b16 %v334
    %v2600 = vunpack.c.l.b16 %v335
    %v2601 = vunpack.c.h.b16 %v335
    %v2602 = vunpack.c.l.b16 %v336
    %v2603 = vunpack.c.h.b16 %v336
    %v2604 = vunpack.c.l.b16 %v337
    %v2605 = vunpack.c.h.b16 %v337
    %v2606 = vunpack.c.l.b16 %v338
    %v2607 = vunpack.c.h.b16 %v338
    %v2608 = vunpack.c.l.b16 %v339
    %v2609 = vunpack.c.h.b16 %v339
    %v2610 = vunpack.c.l.b16 %v340
    %v2611 = vunpack.c.h.b16 %v340
    %v2612 = vunpack.c.l.b16 %v341
    %v2613 = vunpack.c.h.b16 %v341
    %v2614 = vunpack.c.l.b16 %v342
    %v2615 = vunpack.c.h.b16 %v342
    %v2616 = vunpack.c.l.b16 %v343
    %v2617 = vunpack.c.h.b16 %v343
    %v2618 = vunpack.c.l.b16 %v344
    %v2619 = vunpack.c.h.b16 %v344
    %v2620 = vunpack.c.l.b16 %v345
    %v2621 = vunpack.c.h.b16 %v345
    %v2622 = vunpack.c.l.b16 %v346
    %v2623 = vunpack.c.h.b16 %v346
    %v2624 = vunpack.c.l.b16 %v347
    %v2625 = vunpack.c.h.b16 %v347
    %v2626 = vunpack.c.l.b16 %v348
    %v2627 = vunpack.c.h.b16 %v348
    %v2628 = vunpack.c.l.b16 %v349
    %v2629 = vunpack.c.h.b16 %v349
    %v2630 = vunpack.c.l.b16 %v350
    %v2631 = vunpack.c.h.b16 %v350
    %v2632 = vunpack.c.l.b16 %v351
    %v2633 = vunpack.c.h.b16 %v351
    %v2634 = vunpack.c.l.b16 %v352
    %v2635 = vunpack.c.h.b16 %v352
    %v2636 = vunpack.c.l.b16 %v353
    %v2637 = vunpack.c.h.b16 %v353
    %v2638 = vunpack.c.l.b16 %v354
    %v2639 = vunpack.c.h.b16 %v354
    %v2640 = vunpack.c.l.b16 %v355
    %v2641 = vunpack.c.h.b16 %v355
    %v2642 = vunpack.c.l.b16 %v356
    %v2643 = vunpack.c.h.b16 %v356
    %v2644 = vunpack.c.l.b16 %v357
    %v2645 = vunpack.c.h.b16 %v357
    %v2646 = vunpack.c.l.b16 %v358
    %v2647 = vunpack.c.h.b16 %v358
    %v2648 = vunpack.c.l.b16 %v359
    %v2649 = vunpack.c.h.b16 %v359
    %v2650 = vunpack.c.l.b16 %v360
    %v2651 = vunpack.c.h.b16 %v360
    %v2652 = vunpack.c.l.b16 %v361
    %v2653 = vunpack.c.h.b16 %v361
    %v2654 = vunpack.c.l.b16 %v362
    %v2655 = vunpack.c.h.b16 %v362
    %v2656 = vunpack.c.l.b16 %v363
    %v2657 = vunpack.c.h.b16 %v363
    %v2658 = vunpack.c.l.b16 %v364
    %v2659 = vunpack.c.h.b16 %v364
    %v2660 = vunpack.c.l.b16 %v365
    %v2661 = vunpack.c.h.b16 %v365
    %v2662 = vunpack.c.l.b16 %v366
    %v2663 = vunpack.c.h.b16 %v366
    %v2664 = vunpack.c.l.b16 %v367
    %v2665 = vunpack.c.h.b16 %v367
    %v2666 = vunpack.c.l.b16 %v368
    %v2667 = vunpack.c.h.b16 %v368
    %v2668 = vunpack.c.l.b16 %v369
    %v2669 = vunpack.c.h.b16 %v369
    %v2670 = vunpack.c.l.b16 %v370
    %v2671 = vunpack.c.h.b16 %v370
    %v2672 = vunpack.c.l.b16 %v371
    %v2673 = vunpack.c.h.b16 %v371
    %v2674 = vunpack.c.l.b16 %v372
    %v2675 = vunpack.c.h.b16 %v372
    %v2676 = vunpack.c.l.b16 %v373
    %v2677 = vunpack.c.h.b16 %v373
    %v2678 = vunpack.c.l.b16 %v374
    %v2679 = vunpack.c.h.b16 %v374
    %v2680 = vunpack.c.l.b16 %v375
    %v2681 = vunpack.c.h.b16 %v375
    %v2682 = vunpack.c.l.b16 %v376
    %v2683 = vunpack.c.h.b16 %v376
    %v2684 = vunpack.c.l.b16 %v377
    %v2685 = vunpack.c.h.b16 %v377
    %v2686 = vunpack.c.l.b16 %v378
    %v2687 = vunpack.c.h.b16 %v378
    %v2688 = vunpack.c.l.b16 %v379
    %v2689 = vunpack.c.h.b16 %v379
    %v2690 = vunpack.c.l.b16 %v380
    %v2691 = vunpack.c.h.b16 %v380
    %v2692 = vunpack.c.l.b16 %v381
    %v2693 = vunpack.c.h.b16 %v381
    %v2694 = vunpack.c.l.b16 %v382
    %v2695 = vunpack.c.h.b16 %v382
    %v2696 = vunpack.c.l.b16 %v383
    %v2697 = vunpack.c.h.b16 %v383
    %v2698 = vunpack.c.l.b16 %v384
    %v2699 = vunpack.c.h.b16 %v384
    %v2700 = vunpack.c.l.b16 %v385
    %v2701 = vunpack.c.h.b16 %v385
    %v2702 = vunpack.c.l.b16 %v386
    %v2703 = vunpack.c.h.b16 %v386
    %v2704 = vunpack.c.l.b16 %v387
    %v2705 = vunpack.c.h.b16 %v387
    %v2706 = vunpack.c.l.b16 %v388
    %v2707 = vunpack.c.h.b16 %v388
    %v2708 = vunpack.c.l.b16 %v389
    %v2709 = vunpack.c.h.b16 %v389
    %v2710 = vunpack.c.l.b16 %v390
    %v2711 = vunpack.c.h.b16 %v390
    %v2712 = vunpack.c.l.b16 %v391
    %v2713 = vunpack.c.h.b16 %v391
    %v2714 = vunpack.c.l.b16 %v392
    %v2715 = vunpack.c.h.b16 %v392
    %v2716 = vunpack.c.l.b16 %v393
    %v2717 = vunpack.c.h.b16 %v393
    %v2718 = vunpack.c.l.b16 %v394
    %v2719 = vunpack.c.h.b16 %v394
    %v2720 = vunpack.c.l.b16 %v395
    %v2721 = vunpack.c.h.b16 %v395
    %v2722 = vunpack.c.l.b16 %v396
    %v2723 = vunpack.c.h.b16 %v396
    %v2724 = vunpack.c.l.b16 %v397
    %v2725 = vunpack.c.h.b16 %v397
    %v2726 = vunpack.c.l.b16 %v398
    %v2727 = vunpack.c.h.b16 %v398
    %v2728 = vunpack.c.l.b16 %v399
    %v2729 = vunpack.c.h.b16 %v399
    %v2730 = vunpack.c.l.b16 %v400
    %v2731 = vunpack.c.h.b16 %v400
    %v2732 = vunpack.c.l.b16 %v401
    %v2733 = vunpack.c.h.b16 %v401
    %v2734 = vunpack.c.l.b16 %v402
    %v2735 = vunpack.c.h.b16 %v402
    %v2736 = vunpack.c.l.b16 %v403
    %v2737 = vunpack.c.h.b16 %v403
    %v2738 = vunpack.c.l.b16 %v404
    %v2739 = vunpack.c.h.b16 %v404
    %v2740 = vunpack.c.l.b16 %v405
    %v2741 = vunpack.c.h.b16 %v405
    %v2742 = vunpack.c.l.b16 %v406
    %v2743 = vunpack.c.h.b16 %v406
    %v2744 = vunpack.c.l.b16 %v407
    %v2745 = vunpack.c.h.b16 %v407
    %v2746 = vunpack.c.l.b16 %v408
    %v2747 = vunpack.c.h.b16 %v408
    %v2748 = vunpack.c.l.b16 %v409
    %v2749 = vunpack.c.h.b16 %v409
    %v2750 = vunpack.c.l.b16 %v410
    %v2751 = vunpack.c.h.b16 %v410
    %v2752 = vunpack.c.l.b16 %v411
    %v2753 = vunpack.c.h.b16 %v411
    %v2754 = vunpack.c.l.b16 %v412
    %v2755 = vunpack.c.h.b16 %v412
    %v2756 = vunpack.c.l.b16 %v413
    %v2757 = vunpack.c.h.b16 %v413
    %v2758 = vunpack.c.l.b16 %v414
    %v2759 = vunpack.c.h.b16 %v414
    %v2760 = vunpack.c.l.b16 %v415
    %v2761 = vunpack.c.h.b16 %v415
    %v2762 = vunpack.c.l.b16 %v416
    %v2763 = vunpack.c.h.b16 %v416
    %v2764 = vunpack.c.l.b16 %v417
    %v2765 = vunpack.c.h.b16 %v417
    %v2766 = vunpack.c.l.b16 %v418
    %v2767 = vunpack.c.h.b16 %v418
    %v2768 = vunpack.c.l.b16 %v419
    %v2769 = vunpack.c.h.b16 %v419
    %v2770 = vunpack.c.l.b16 %v420
    %v2771 = vunpack.c.h.b16 %v420
    %v2772 = vunpack.c.l.b16 %v421
    %v2773 = vunpack.c.h.b16 %v421
    %v2774 = vunpack.c.l.b16 %v422
    %v2775 = vunpack.c.h.b16 %v422
    %v2776 = vunpack.c.l.b16 %v423
    %v2777 = vunpack.c.h.b16 %v423
    %v2778 = vunpack.c.l.b16 %v424
    %v2779 = vunpack.c.h.b16 %v424
    %v2780 = vunpack.c.l.b16 %v425
    %v2781 = vunpack.c.h.b16 %v425
    %v2782 = vunpack.c.l.b16 %v426
    %v2783 = vunpack.c.h.b16 %v426
    %v2784 = vunpack.c.l.b16 %v427
    %v2785 = vunpack.c.h.b16 %v427
    %v2786 = vunpack.c.l.b16 %v428
    %v2787 = vunpack.c.h.b16 %v428
    %v2788 = vunpack.c.l.b16 %v429
    %v2789 = vunpack.c.h.b16 %v429
    %v2790 = vunpack.c.l.b16 %v430
    %v2791 = vunpack.c.h.b16 %v430
    %v2792 = vunpack.c.l.b16 %v431
    %v2793 = vunpack.c.h.b16 %v431
    %v2794 = vunpack.c.l.b16 %v432
    %v2795 = vunpack.c.h.b16 %v432
    %v2796 = vunpack.c.l.b16 %v433
    %v2797 = vunpack.c.h.b16 %v433
    %v2798 = vunpack.c.l.b16 %v434
    %v2799 = vunpack.c.h.b16 %v434
    %v2800 = vunpack.c.l.b16 %v435
    %v2801 = vunpack.c.h.b16 %v435
    %v2802 = vunpack.c.l.b16 %v436
    %v2803 = vunpack.c.h.b16 %v436
    %v2804 = vunpack.c.l.b16 %v437
    %v2805 = vunpack.c.h.b16 %v437
    %v2806 = vunpack.c.l.b16 %v438
    %v2807 = vunpack.c.h.b16 %v438
    %v2808 = vunpack.c.l.b16 %v439
    %v2809 = vunpack.c.h.b16 %v439
    %v2810 = vunpack.c.l.b16 %v440
    %v2811 = vunpack.c.h.b16 %v440
    %v2812 = vunpack.c.l.b16 %v441
    %v2813 = vunpack.c.h.b16 %v441
    %v2814 = vunpack.c.l.b16 %v442
    %v2815 = vunpack.c.h.b16 %v442
    %v2816 = vunpack.c.l.b16 %v443
    %v2817 = vunpack.c.h.b16 %v443
    %v2818 = vunpack.c.l.b16 %v444
    %v2819 = vunpack.c.h.b16 %v444
    %v2820 = vunpack.c.l.b16 %v445
    %v2821 = vunpack.c.h.b16 %v445
    %v2822 = vunpack.c.l.b16 %v446
    %v2823 = vunpack.c.h.b16 %v446
    %v2824 = vunpack.c.l.b16 %v447
    %v2825 = vunpack.c.h.b16 %v447
    %v2826 = vunpack.c.l.b16 %v448
    %v2827 = vunpack.c.h.b16 %v448
    %v2828 = vunpack.c.l.b16 %v449
    %v2829 = vunpack.c.h.b16 %v449
    %v2830 = vunpack.c.l.b16 %v450
    %v2831 = vunpack.c.h.b16 %v450
    %v2832 = vunpack.c.l.b16 %v451
    %v2833 = vunpack.c.h.b16 %v451
    %v2834 = vunpack.c.l.b16 %v452
    %v2835 = vunpack.c.h.b16 %v452
    %v2836 = vunpack.c.l.b16 %v453
    %v2837 = vunpack.c.h.b16 %v453
    %v2838 = vunpack.c.l.b16 %v454
    %v2839 = vunpack.c.h.b16 %v454
    %v2840 = vunpack.c.l.b16 %v455
    %v2841 = vunpack.c.h.b16 %v455
    %v2842 = vunpack.c.l.b16 %v456
    %v2843 = vunpack.c.h.b16 %v456
    %v2844 = vunpack.c.l.b16 %v457
    %v2845 = vunpack.c.h.b16 %v457
    %v2846 = vunpack.c.l.b16 %v458
    %v2847 = vunpack.c.h.b16 %v458
    %v2848 = vunpack.c.l.b16 %v459
    %v2849 = vunpack.c.h.b16 %v459
    %v2850 = vunpack.c.l.b16 %v460
    %v2851 = vunpack.c.h.b16 %v460
    %v2852 = vunpack.c.l.b16 %v461
    %v2853 = vunpack.c.h.b16 %v461
    %v2854 = vunpack.c.l.b16 %v462
    %v2855 = vunpack.c.h.b16 %v462
    %v2856 = vunpack.c.l.b16 %v463
    %v2857 = vunpack.c.h.b16 %v463
    %v2858 = vunpack.c.l.b16 %v464
    %v2859 = vunpack.c.h.b16 %v464
    %v2860 = vunpack.c.l.b16 %v465
    %v2861 = vunpack.c.h.b16 %v465
    %v2862 = vunpack.c.l.b16 %v466
    %v2863 = vunpack.c.h.b16 %v466
    %v2864 = vunpack.c.l.b16 %v467
    %v2865 = vunpack.c.h.b16 %v467
    %v2866 = vunpack.c.l.b16 %v468
    %v2867 = vunpack.c.h.b16 %v468
    %v2868 = vunpack.c.l.b16 %v469
    %v2869 = vunpack.c.h.b16 %v469
    %v2870 = vunpack.c.l.b16 %v470
    %v2871 = vunpack.c.h.b16 %v470
    %v2872 = vunpack.c.l.b16 %v471
    %v2873 = vunpack.c.h.b16 %v471
    %v2874 = vunpack.c.l.b16 %v472
    %v2875 = vunpack.c.h.b16 %v472
    %v2876 = vunpack.c.l.b16 %v473
    %v2877 = vunpack.c.h.b16 %v473
    %v2878 = vunpack.c.l.b16 %v474
    %v2879 = vunpack.c.h.b16 %v474
    %v2880 = vunpack.c.l.b16 %v475
    %v2881 = vunpack.c.h.b16 %v475
    %v2882 = vunpack.c.l.b16 %v476
    %v2883 = vunpack.c.h.b16 %v476
    %v2884 = vunpack.c.l.b16 %v477
    %v2885 = vunpack.c.h.b16 %v477
    %v2886 = vunpack.c.l.b16 %v478
    %v2887 = vunpack.c.h.b16 %v478
    %v2888 = vunpack.c.l.b16 %v479
    %v2889 = vunpack.c.h.b16 %v479
    %v2890 = vunpack.c.l.b16 %v480
    %v2891 = vunpack.c.h.b16 %v480
    %v2892 = vunpack.c.l.b16 %v481
    %v2893 = vunpack.c.h.b16 %v481
    %v2894 = vunpack.c.l.b16 %v482
    %v2895 = vunpack.c.h.b16 %v482
    %v2896 = vunpack.c.l.b16 %v483
    %v2897 = vunpack.c.h.b16 %v483
    %v2898 = vunpack.c.l.b16 %v484
    %v2899 = vunpack.c.h.b16 %v484
    %v2900 = vunpack.c.l.b16 %v485
    %v2901 = vunpack.c.h.b16 %v485
    %v2902 = vunpack.c.l.b16 %v486
    %v2903 = vunpack.c.h.b16 %v486
    %v2904 = vunpack.c.l.b16 %v487
    %v2905 = vunpack.c.h.b16 %v487
    %v2906 = vunpack.c.l.b16 %v488
    %v2907 = vunpack.c.h.b16 %v488
    %v2908 = vunpack.c.l.b16 %v489
    %v2909 = vunpack.c.h.b16 %v489
    %v2910 = vunpack.c.l.b16 %v490
    %v2911 = vunpack.c.h.b16 %v490
    %v2912 = vunpack.c.l.b16 %v491
    %v2913 = vunpack.c.h.b16 %v491
    %v2914 = vunpack.c.l.b16 %v492
    %v2915 = vunpack.c.h.b16 %v492
    %v2916 = vunpack.c.l.b16 %v493
    %v2917 = vunpack.c.h.b16 %v493
    %v2918 = vunpack.c.l.b16 %v494
    %v2919 = vunpack.c.h.b16 %v494
    %v2920 = vunpack.c.l.b16 %v495
    %v2921 = vunpack.c.h.b16 %v495
    %v2922 = vunpack.c.l.b16 %v496
    %v2923 = vunpack.c.h.b16 %v496
    %v2924 = vunpack.c.l.b16 %v497
    %v2925 = vunpack.c.h.b16 %v497
    %v2926 = vunpack.c.l.b16 %v498
    %v2927 = vunpack.c.h.b16 %v498
    %v2928 = vunpack.c.l.b16 %v499
    %v2929 = vunpack.c.h.b16 %v499
    %v2930 = vunpack.c.l.b16 %v500
    %v2931 = vunpack.c.h.b16 %v500
    %v2932 = vunpack.c.l.b16 %v501
    %v2933 = vunpack.c.h.b16 %v501
    %v2934 = vunpack.c.l.b16 %v502
    %v2935 = vunpack.c.h.b16 %v502
    %v2936 = vunpack.c.l.b16 %v503
    %v2937 = vunpack.c.h.b16 %v503
    %v2938 = vunpack.c.l.b16 %v504
    %v2939 = vunpack.c.h.b16 %v504
    %v2940 = vunpack.c.l.b16 %v505
    %v2941 = vunpack.c.h.b16 %v505
    %v2942 = vunpack.c.l.b16 %v506
    %v2943 = vunpack.c.h.b16 %v506
    %v2944 = vunpack.c.l.b16 %v507
    %v2945 = vunpack.c.h.b16 %v507
    %v2946 = vunpack.c.l.b16 %v508
    %v2947 = vunpack.c.h.b16 %v508
    %v2948 = vunpack.c.l.b16 %v509
    %v2949 = vunpack.c.h.b16 %v509
    %v2950 = vunpack.c.l.b16 %v510
    %v2951 = vunpack.c.h.b16 %v510
    %v2952 = vunpack.c.l.b16 %v511
    %v2953 = vunpack.c.h.b16 %v511
    %v2954 = vunpack.c.l.b16 %v512
    %v2955 = vunpack.c.h.b16 %v512
    %v2956 = vunpack.c.l.b16 %v513
    %v2957 = vunpack.c.h.b16 %v513
    %v2958 = vunpack.c.l.b16 %v514
    %v2959 = vunpack.c.h.b16 %v514
    %v2960 = vunpack.c.l.b16 %v515
    %v2961 = vunpack.c.h.b16 %v515
    %v2962 = vunpack.c.l.b16 %v516
    %v2963 = vunpack.c.h.b16 %v516
    %v2964 = vunpack.c.l.b16 %v517
    %v2965 = vunpack.c.h.b16 %v517
    %v2966 = vunpack.c.l.b16 %v518
    %v2967 = vunpack.c.h.b16 %v518
    %v2968 = vunpack.c.l.b16 %v519
    %v2969 = vunpack.c.h.b16 %v519
    %v2970 = vunpack.c.l.b16 %v520
    %v2971 = vunpack.c.h.b16 %v520
    %v2972 = vunpack.c.l.b16 %v521
    %v2973 = vunpack.c.h.b16 %v521
    %v2974 = vunpack.c.l.b16 %v522
    %v2975 = vunpack.c.h.b16 %v522
    %v2976 = vunpack.c.l.b16 %v523
    %v2977 = vunpack.c.h.b16 %v523
    %v2978 = vunpack.c.l.b16 %v524
    %v2979 = vunpack.c.h.b16 %v524
    %v2980 = vunpack.c.l.b16 %v525
    %v2981 = vunpack.c.h.b16 %v525
    %v2982 = vunpack.c.l.b16 %v526
    %v2983 = vunpack.c.h.b16 %v526
    %v2984 = vunpack.c.l.b16 %v527
    %v2985 = vunpack.c.h.b16 %v527
    %v2986 = vunpack.c.l.b16 %v528
    %v2987 = vunpack.c.h.b16 %v528
    %v2988 = vunpack.c.l.b16 %v529
    %v2989 = vunpack.c.h.b16 %v529
    %v2990 = vunpack.c.l.b16 %v530
    %v2991 = vunpack.c.h.b16 %v530
    %v2992 = vunpack.c.l.b16 %v531
    %v2993 = vunpack.c.h.b16 %v531
    %v2994 = vunpack.c.l.b16 %v532
    %v2995 = vunpack.c.h.b16 %v532
    %v2996 = vunpack.c.l.b16 %v533
    %v2997 = vunpack.c.h.b16 %v533
    %v2998 = vunpack.c.l.b16 %v534
    %v2999 = vunpack.c.h.b16 %v534
    %v3000 = vunpack.c.l.b16 %v535
    %v3001 = vunpack.c.h.b16 %v535
    %v3002 = vunpack.c.l.b16 %v536
    %v3003 = vunpack.c.h.b16 %v536
    %v3004 = vunpack.c.l.b16 %v537
    %v3005 = vunpack.c.h.b16 %v537
    %v3006 = vunpack.c.l.b16 %v538
    %v3007 = vunpack.c.h.b16 %v538
    %v3008 = vunpack.c.l.b16 %v539
    %v3009 = vunpack.c.h.b16 %v539
    %v3010 = vunpack.c.l.b16 %v540
    %v3011 = vunpack.c.h.b16 %v540
    %v3012 = vunpack.c.l.b16 %v541
    %v3013 = vunpack.c.h.b16 %v541
    %v3014 = vunpack.c.l.b16 %v542
    %v3015 = vunpack.c.h.b16 %v542
    %v3016 = vunpack.c.l.b16 %v543
    %v3017 = vunpack.c.h.b16 %v543
    %v3018 = vunpack.c.l.b16 %v544
    %v3019 = vunpack.c.h.b16 %v544
    %v3020 = vunpack.c.l.b16 %v545
    %v3021 = vunpack.c.h.b16 %v545
    %v3022 = vunpack.c.l.b16 %v546
    %v3023 = vunpack.c.h.b16 %v546
    %v3024 = vunpack.c.l.b16 %v547
    %v3025 = vunpack.c.h.b16 %v547
    %v3026 = vunpack.c.l.b16 %v548
    %v3027 = vunpack.c.h.b16 %v548
    %v3028 = vunpack.c.l.b16 %v549
    %v3029 = vunpack.c.h.b16 %v549
    %v3030 = vunpack.c.l.b16 %v550
    %v3031 = vunpack.c.h.b16 %v550
    %v3032 = vunpack.c.l.b16 %v551
    %v3033 = vunpack.c.h.b16 %v551
    %v3034 = vunpack.c.l.b16 %v552
    %v3035 = vunpack.c.h.b16 %v552
    %v3036 = vunpack.c.l.b16 %v553
    %v3037 = vunpack.c.h.b16 %v553
    %v3038 = vunpack.c.l.b16 %v554
    %v3039 = vunpack.c.h.b16 %v554
    %v3040 = vunpack.c.l.b16 %v555
    %v3041 = vunpack.c.h.b16 %v555
    %v3042 = vunpack.c.l.b16 %v556
    %v3043 = vunpack.c.h.b16 %v556
    %v3044 = vunpack.c.l.b16 %v557
    %v3045 = vunpack.c.h.b16 %v557
    %v3046 = vunpack.c.l.b16 %v558
    %v3047 = vunpack.c.h.b16 %v558
    %v3048 = vunpack.c.l.b16 %v559
    %v3049 = vunpack.c.h.b16 %v559
    %v3050 = vunpack.c.l.b16 %v560
    %v3051 = vunpack.c.h.b16 %v560
    %v3052 = vunpack.c.l.b16 %v561
    %v3053 = vunpack.c.h.b16 %v561
    %v3054 = vunpack.c.l.b16 %v562
    %v3055 = vunpack.c.h.b16 %v562
    %v3056 = vunpack.c.l.b16 %v563
    %v3057 = vunpack.c.h.b16 %v563
    %v3058 = vunpack.c.l.b16 %v564
    %v3059 = vunpack.c.h.b16 %v564
    %v3060 = vunpack.c.l.b16 %v565
    %v3061 = vunpack.c.h.b16 %v565
    %v3062 = vunpack.c.l.b16 %v566
    %v3063 = vunpack.c.h.b16 %v566
    %v3064 = vunpack.c.l.b16 %v567
    %v3065 = vunpack.c.h.b16 %v567
    %v3066 = vunpack.c.l.b16 %v568
    %v3067 = vunpack.c.h.b16 %v568
    %v3068 = vunpack.c.l.b16 %v569
    %v3069 = vunpack.c.h.b16 %v569
    %v3070 = vunpack.c.l.b16 %v570
    %v3071 = vunpack.c.h.b16 %v570
    %v3072 = vunpack.c.l.b16 %v571
    %v3073 = vunpack.c.h.b16 %v571
    %v3074 = vunpack.c.l.b16 %v572
    %v3075 = vunpack.c.h.b16 %v572
    %v3076 = vunpack.c.l.b16 %v573
    %v3077 = vunpack.c.h.b16 %v573
    %v3078 = vunpack.c.l.b16 %v574
    %v3079 = vunpack.c.h.b16 %v574
    %v3080 = vunpack.c.l.b16 %v575
    %v3081 = vunpack.c.h.b16 %v575
    %v3082 = vunpack.c.l.b16 %v576
    %v3083 = vunpack.c.h.b16 %v576
    %v3084 = vunpack.c.l.b16 %v577
    %v3085 = vunpack.c.h.b16 %v577
    %v3086 = vunpack.c.l.b16 %v578
    %v3087 = vunpack.c.h.b16 %v578
    %v3088 = vunpack.c.l.b16 %v579
    %v3089 = vunpack.c.h.b16 %v579
    %v3090 = vunpack.c.l.b16 %v580
    %v3091 = vunpack.c.h.b16 %v580
    %v3092 = vunpack.c.l.b16 %v581
    %v3093 = vunpack.c.h.b16 %v581
    %v3094 = vunpack.c.l.b16 %v582
    %v3095 = vunpack.c.h.b16 %v582
    %v3096 = vunpack.c.l.b16 %v583
    %v3097 = vunpack.c.h.b16 %v583
    %v3098 = vunpack.c.l.b16 %v584
    %v3099 = vunpack.c.h.b16 %v584
    %v3100 = vunpack.c.l.b16 %v585
    %v3101 = vunpack.c.h.b16 %v585
    %v3102 = vunpack.c.l.b16 %v586
    %v3103 = vunpack.c.h.b16 %v586
    %v3104 = vunpack.c.l.b16 %v587
    %v3105 = vunpack.c.h.b16 %v587
    %v3106 = vunpack.c.l.b16 %v588
    %v3107 = vunpack.c.h.b16 %v588
    %v3108 = vunpack.c.l.b16 %v589
    %v3109 = vunpack.c.h.b16 %v589
    %v3110 = vunpack.c.l.b16 %v590
    %v3111 = vunpack.c.h.b16 %v590
    %v3112 = vunpack.c.l.b16 %v591
    %v3113 = vunpack.c.h.b16 %v591
    %v3114 = vunpack.c.l.b16 %v592
    %v3115 = vunpack.c.h.b16 %v592
    %v3116 = vunpack.c.l.b16 %v593
    %v3117 = vunpack.c.h.b16 %v593
    %v3118 = vunpack.c.l.b16 %v594
    %v3119 = vunpack.c.h.b16 %v594
    %v3120 = vunpack.c.l.b16 %v595
    %v3121 = vunpack.c.h.b16 %v595
    %v3122 = vunpack.c.l.b16 %v596
    %v3123 = vunpack.c.h.b16 %v596
    %v3124 = vunpack.c.l.b16 %v597
    %v3125 = vunpack.c.h.b16 %v597
    %v3126 = vunpack.c.l.b16 %v598
    %v3127 = vunpack.c.h.b16 %v598
    %v3128 = vunpack.c.l.b16 %v599
    %v3129 = vunpack.c.h.b16 %v599
    %v3130 = vunpack.c.l.b16 %v600
    %v3131 = vunpack.c.h.b16 %v600
    %v3132 = vunpack.c.l.b16 %v601
    %v3133 = vunpack.c.h.b16 %v601
    %v3134 = vunpack.c.l.b16 %v602
    %v3135 = vunpack.c.h.b16 %v602
    %v3136 = vunpack.c.l.b16 %v603
    %v3137 = vunpack.c.h.b16 %v603
    %v3138 = vunpack.c.l.b16 %v604
    %v3139 = vunpack.c.h.b16 %v604
    %v3140 = vunpack.c.l.b16 %v605
    %v3141 = vunpack.c.h.b16 %v605
    %v3142 = vunpack.c.l.b16 %v606
    %v3143 = vunpack.c.h.b16 %v606
    %v3144 = vunpack.c.l.b16 %v607
    %v3145 = vunpack.c.h.b16 %v607
    %v3146 = vunpack.c.l.b16 %v608
    %v3147 = vunpack.c.h.b16 %v608
    %v3148 = vunpack.c.l.b16 %v609
    %v3149 = vunpack.c.h.b16 %v609
    %v3150 = vunpack.c.l.b16 %v610
    %v3151 = vunpack.c.h.b16 %v610
    %v3152 = vunpack.c.l.b16 %v611
    %v3153 = vunpack.c.h.b16 %v611
    %v3154 = vunpack.c.l.b16 %v612
    %v3155 = vunpack.c.h.b16 %v612
    %v3156 = vunpack.c.l.b16 %v613
    %v3157 = vunpack.c.h.b16 %v613
    %v3158 = vunpack.c.l.b16 %v614
    %v3159 = vunpack.c.h.b16 %v614
    %v3160 = vunpack.c.l.b16 %v615
    %v3161 = vunpack.c.h.b16 %v615
    %v3162 = vunpack.c.l.b16 %v616
    %v3163 = vunpack.c.h.b16 %v616
    %v3164 = vunpack.c.l.b16 %v617
    %v3165 = vunpack.c.h.b16 %v617
    %v3166 = vunpack.c.l.b16 %v618
    %v3167 = vunpack.c.h.b16 %v618
    %v3168 = vunpack.c.l.b16 %v619
    %v3169 = vunpack.c.h.b16 %v619
    %v3170 = vunpack.c.l.b16 %v620
    %v3171 = vunpack.c.h.b16 %v620
    %v3172 = vunpack.c.l.b16 %v621
    %v3173 = vunpack.c.h.b16 %v621
    %v3174 = vunpack.c.l.b16 %v622
    %v3175 = vunpack.c.h.b16 %v622
    %v3176 = vunpack.c.l.b16 %v623
    %v3177 = vunpack.c.h.b16 %v623
    %v3178 = vunpack.c.l.b16 %v624
    %v3179 = vunpack.c.h.b16 %v624
    %v3180 = vunpack.c.l.b16 %v625
    %v3181 = vunpack.c.h.b16 %v625
    %v3182 = vunpack.c.l.b16 %v626
    %v3183 = vunpack.c.h.b16 %v626
    %v3184 = vunpack.c.l.b16 %v627
    %v3185 = vunpack.c.h.b16 %v627
    %v3186 = vunpack.c.l.b16 %v628
    %v3187 = vunpack.c.h.b16 %v628
    %v3188 = vunpack.c.l.b16 %v629
    %v3189 = vunpack.c.h.b16 %v629
    %v3190 = vunpack.c.l.b16 %v630
    %v3191 = vunpack.c.h.b16 %v630
    %v3192 = vunpack.c.l.b16 %v631
    %v3193 = vunpack.c.h.b16 %v631
    %v3194 = vunpack.c.l.b16 %v632
    %v3195 = vunpack.c.h.b16 %v632
    %v3196 = vunpack.c.l.b16 %v633
    %v3197 = vunpack.c.h.b16 %v633
    %v3198 = vunpack.c.l.b16 %v634
    %v3199 = vunpack.c.h.b16 %v634
    %v3200 = vunpack.c.l.b16 %v635
    %v3201 = vunpack.c.h.b16 %v635
    %v3202 = vunpack.c.l.b16 %v636
    %v3203 = vunpack.c.h.b16 %v636
    %v3204 = vunpack.c.l.b16 %v637
    %v3205 = vunpack.c.h.b16 %v637
    %v3206 = vunpack.c.l.b16 %v638
    %v3207 = vunpack.c.h.b16 %v638
    %v3208 = vunpack.c.l.b16 %v639
    %v3209 = vunpack.c.h.b16 %v639
    %v3210 = vunpack.c.l.b16 %v640
    %v3211 = vunpack.c.h.b16 %v640
    %v3212 = vunpack.c.l.b16 %v641
    %v3213 = vunpack.c.h.b16 %v641
    %v3214 = vunpack.c.l.b16 %v642
    %v3215 = vunpack.c.h.b16 %v642
    %v3216 = vunpack.c.l.b16 %v643
    %v3217 = vunpack.c.h.b16 %v643
    %v3218 = vunpack.c.l.b16 %v644
    %v3219 = vunpack.c.h.b16 %v644
    %v3220 = vunpack.c.l.b16 %v645
    %v3221 = vunpack.c.h.b16 %v645
    %v3222 = vunpack.c.l.b16 %v646
    %v3223 = vunpack.c.h.b16 %v646
    %v3224 = vunpack.c.l.b16 %v647
    %v3225 = vunpack.c.h.b16 %v647
    %v3226 = vunpack.c.l.b16 %v648
    %v3227 = vunpack.c.h.b16 %v648
    %v3228 = vunpack.c.l.b16 %v649
    %v3229 = vunpack.c.h.b16 %v649
    %v3230 = vunpack.c.l.b16 %v650
    %v3231 = vunpack.c.h.b16 %v650
    %v3232 = vunpack.c.l.b16 %v651
    %v3233 = vunpack.c.h.b16 %v651
    %v3234 = vunpack.c.l.b16 %v652
    %v3235 = vunpack.c.h.b16 %v652
    %v3236 = vunpack.c.l.b16 %v653
    %v3237 = vunpack.c.h.b16 %v653
    %v3238 = vunpack.c.l.b16 %v654
    %v3239 = vunpack.c.h.b16 %v654
    %v3240 = vunpack.c.l.b16 %v655
    %v3241 = vunpack.c.h.b16 %v655
    %v3242 = vunpack.c.l.b16 %v656
    %v3243 = vunpack.c.h.b16 %v656
    %v3244 = vunpack.c.l.b16 %v657
    %v3245 = vunpack.c.h.b16 %v657
    %v3246 = vunpack.c.l.b16 %v658
    %v3247 = vunpack.c.h.b16 %v658
    %v3248 = vunpack.c.l.b16 %v659
    %v3249 = vunpack.c.h.b16 %v659
    %v3250 = vunpack.c.l.b16 %v660
    %v3251 = vunpack.c.h.b16 %v660
    %v3252 = vunpack.c.l.b16 %v661
    %v3253 = vunpack.c.h.b16 %v661
    %v3254 = vunpack.c.l.b16 %v662
    %v3255 = vunpack.c.h.b16 %v662
    %v3256 = vunpack.c.l.b16 %v663
    %v3257 = vunpack.c.h.b16 %v663
    %v3258 = vunpack.c.l.b16 %v664
    %v3259 = vunpack.c.h.b16 %v664
    %v3260 = vunpack.c.l.b16 %v665
    %v3261 = vunpack.c.h.b16 %v665
    %v3262 = vunpack.c.l.b16 %v666
    %v3263 = vunpack.c.h.b16 %v666
    %v3264 = vunpack.c.l.b16 %v667
    %v3265 = vunpack.c.h.b16 %v667
    %v3266 = vunpack.c.l.b16 %v668
    %v3267 = vunpack.c.h.b16 %v668
    %v3268 = vunpack.c.l.b16 %v669
    %v3269 = vunpack.c.h.b16 %v669
    %v3270 = vunpack.c.l.b16 %v670
    %v3271 = vunpack.c.h.b16 %v670
    %v3272 = vunpack.c.l.b16 %v671
    %v3273 = vunpack.c.h.b16 %v671
    %v3274 = vunpack.c.l.b16 %v672
    %v3275 = vunpack.c.h.b16 %v672
    %v3276 = vunpack.c.l.b16 %v673
    %v3277 = vunpack.c.h.b16 %v673
    %v3278 = vunpack.c.l.b16 %v674
    %v3279 = vunpack.c.h.b16 %v674
    %v3280 = vunpack.c.l.b16 %v675
    %v3281 = vunpack.c.h.b16 %v675
    %v3282 = vunpack.c.l.b16 %v676
    %v3283 = vunpack.c.h.b16 %v676
    %v3284 = vunpack.c.l.b16 %v677
    %v3285 = vunpack.c.h.b16 %v677
    %v3286 = vunpack.c.l.b16 %v678
    %v3287 = vunpack.c.h.b16 %v678
    %v3288 = vunpack.c.l.b16 %v679
    %v3289 = vunpack.c.h.b16 %v679
    %v3290 = vunpack.c.l.b16 %v680
    %v3291 = vunpack.c.h.b16 %v680
    %v3292 = vunpack.c.l.b16 %v681
    %v3293 = vunpack.c.h.b16 %v681
    %v3294 = vunpack.c.l.b16 %v682
    %v3295 = vunpack.c.h.b16 %v682
    %v3296 = vunpack.c.l.b16 %v683
    %v3297 = vunpack.c.h.b16 %v683
    %v3298 = vunpack.c.l.b16 %v684
    %v3299 = vunpack.c.h.b16 %v684
    %v3300 = vunpack.c.l.b16 %v685
    %v3301 = vunpack.c.h.b16 %v685
    %v3302 = vunpack.c.l.b16 %v686
    %v3303 = vunpack.c.h.b16 %v686
    %v3304 = vunpack.c.l.b16 %v687
    %v3305 = vunpack.c.h.b16 %v687
    %v3306 = vunpack.c.l.b16 %v688
    %v3307 = vunpack.c.h.b16 %v688
    %v3308 = vunpack.c.l.b16 %v689
    %v3309 = vunpack.c.h.b16 %v689
    %v3310 = vunpack.c.l.b16 %v690
    %v3311 = vunpack.c.h.b16 %v690
    %v3312 = vunpack.c.l.b16 %v691
    %v3313 = vunpack.c.h.b16 %v691
    %v3314 = vunpack.c.l.b16 %v692
    %v3315 = vunpack.c.h.b16 %v692
    %v3316 = vunpack.c.l.b16 %v693
    %v3317 = vunpack.c.h.b16 %v693
    %v3318 = vunpack.c.l.b16 %v694
    %v3319 = vunpack.c.h.b16 %v694
    %v3320 = vunpack.c.l.b16 %v695
    %v3321 = vunpack.c.h.b16 %v695
    %v3322 = vunpack.c.l.b16 %v696
    %v3323 = vunpack.c.h.b16 %v696
    %v3324 = vunpack.c.l.b16 %v697
    %v3325 = vunpack.c.h.b16 %v697
    %v3326 = vunpack.c.l.b16 %v698
    %v3327 = vunpack.c.h.b16 %v698
    %v3328 = vunpack.c.l.b16 %v699
    %v3329 = vunpack.c.h.b16 %v699
    %v3330 = vunpack.c.l.b16 %v700
    %v3331 = vunpack.c.h.b16 %v700
    %v3332 = vunpack.c.l.b16 %v701
    %v3333 = vunpack.c.h.b16 %v701
    %v3334 = vunpack.c.l.b16 %v702
    %v3335 = vunpack.c.h.b16 %v702
    %v3336 = vunpack.c.l.b16 %v703
    %v3337 = vunpack.c.h.b16 %v703
    %v3338 = vunpack.c.l.b16 %v704
    %v3339 = vunpack.c.h.b16 %v704
    %v3340 = vunpack.c.l.b16 %v705
    %v3341 = vunpack.c.h.b16 %v705
    %v3342 = vunpack.c.l.b16 %v706
    %v3343 = vunpack.c.h.b16 %v706
    %v3344 = vunpack.c.l.b16 %v707
    %v3345 = vunpack.c.h.b16 %v707
    %v3346 = vunpack.c.l.b16 %v708
    %v3347 = vunpack.c.h.b16 %v708
    %v3348 = vunpack.c.l.b16 %v709
    %v3349 = vunpack.c.h.b16 %v709
    %v3350 = vunpack.c.l.b16 %v710
    %v3351 = vunpack.c.h.b16 %v710
    %v3352 = vunpack.c.l.b16 %v711
    %v3353 = vunpack.c.h.b16 %v711
    %v3354 = vunpack.c.l.b16 %v712
    %v3355 = vunpack.c.h.b16 %v712
    %v3356 = vunpack.c.l.b16 %v713
    %v3357 = vunpack.c.h.b16 %v713
    %v3358 = vunpack.c.l.b16 %v714
    %v3359 = vunpack.c.h.b16 %v714
    %v3360 = vunpack.c.l.b16 %v715
    %v3361 = vunpack.c.h.b16 %v715
    %v3362 = vunpack.c.l.b16 %v716
    %v3363 = vunpack.c.h.b16 %v716
    %v3364 = vunpack.c.l.b16 %v717
    %v3365 = vunpack.c.h.b16 %v717
    %v3366 = vunpack.c.l.b16 %v718
    %v3367 = vunpack.c.h.b16 %v718
    %v3368 = vunpack.c.l.b16 %v719
    %v3369 = vunpack.c.h.b16 %v719
    %v3370 = vunpack.c.l.b16 %v720
    %v3371 = vunpack.c.h.b16 %v720
    %v3372 = vunpack.c.l.b16 %v721
    %v3373 = vunpack.c.h.b16 %v721
    %v3374 = vunpack.c.l.b16 %v722
    %v3375 = vunpack.c.h.b16 %v722
    %v3376 = vunpack.c.l.b16 %v723
    %v3377 = vunpack.c.h.b16 %v723
    %v3378 = vunpack.c.l.b16 %v724
    %v3379 = vunpack.c.h.b16 %v724
    %v3380 = vunpack.c.l.b16 %v725
    %v3381 = vunpack.c.h.b16 %v725
    %v3382 = vunpack.c.l.b16 %v726
    %v3383 = vunpack.c.h.b16 %v726
    %v3384 = vunpack.c.l.b16 %v727
    %v3385 = vunpack.c.h.b16 %v727
    %v3386 = vunpack.c.l.b16 %v728
    %v3387 = vunpack.c.h.b16 %v728
    %v3388 = vunpack.c.l.b16 %v729
    %v3389 = vunpack.c.h.b16 %v729
    %v3390 = vunpack.c.l.b16 %v730
    %v3391 = vunpack.c.h.b16 %v730
    %v3392 = vunpack.c.l.b16 %v731
    %v3393 = vunpack.c.h.b16 %v731
    %v3394 = vunpack.c.l.b16 %v732
    %v3395 = vunpack.c.h.b16 %v732
    %v3396 = vunpack.c.l.b16 %v733
    %v3397 = vunpack.c.h.b16 %v733
    %v3398 = vunpack.c.l.b16 %v734
    %v3399 = vunpack.c.h.b16 %v734
    %v3400 = vunpack.c.l.b16 %v735
    %v3401 = vunpack.c.h.b16 %v735
    %v3402 = vunpack.c.l.b16 %v736
    %v3403 = vunpack.c.h.b16 %v736
    %v3404 = vunpack.c.l.b16 %v737
    %v3405 = vunpack.c.h.b16 %v737
    %v3406 = vunpack.c.l.b16 %v738
    %v3407 = vunpack.c.h.b16 %v738
    %v3408 = vunpack.c.l.b16 %v739
    %v3409 = vunpack.c.h.b16 %v739
    %v3410 = vunpack.c.l.b16 %v740
    %v3411 = vunpack.c.h.b16 %v740
    %v3412 = vunpack.c.l.b16 %v741
    %v3413 = vunpack.c.h.b16 %v741
    %v3414 = vunpack.c.l.b16 %v742
    %v3415 = vunpack.c.h.b16 %v742
    %v3416 = vunpack.c.l.b16 %v743
    %v3417 = vunpack.c.h.b16 %v743
    %v3418 = vunpack.c.l.b16 %v744
    %v3419 = vunpack.c.h.b16 %v744
    %v3420 = vunpack.c.l.b16 %v745
    %v3421 = vunpack.c.h.b16 %v745
    %v3422 = vunpack.c.l.b16 %v746
    %v3423 = vunpack.c.h.b16 %v746
    %v3424 = vunpack.c.l.b16 %v747
    %v3425 = vunpack.c.h.b16 %v747
    %v3426 = vunpack.c.l.b16 %v748
    %v3427 = vunpack.c.h.b16 %v748
    %v3428 = vunpack.c.l.b16 %v749
    %v3429 = vunpack.c.h.b16 %v749
    %v3430 = vunpack.c.l.b16 %v750
    %v3431 = vunpack.c.h.b16 %v750
    %v3432 = vunpack.c.l.b16 %v751
    %v3433 = vunpack.c.h.b16 %v751
    %v3434 = vunpack.c.l.b16 %v752
    %v3435 = vunpack.c.h.b16 %v752
    %v3436 = vunpack.c.l.b16 %v753
    %v3437 = vunpack.c.h.b16 %v753
    %v3438 = vunpack.c.l.b16 %v754
    %v3439 = vunpack.c.h.b16 %v754
    %v3440 = vunpack.c.l.b16 %v755
    %v3441 = vunpack.c.h.b16 %v755
    %v3442 = vunpack.c.l.b16 %v756
    %v3443 = vunpack.c.h.b16 %v756
    %v3444 = vunpack.c.l.b16 %v757
    %v3445 = vunpack.c.h.b16 %v757
    %v3446 = vunpack.c.l.b16 %v758
    %v3447 = vunpack.c.h.b16 %v758
    %v3448 = vunpack.c.l.b16 %v759
    %v3449 = vunpack.c.h.b16 %v759
    %v3450 = vunpack.c.l.b16 %v760
    %v3451 = vunpack.c.h.b16 %v760
    %v3452 = vunpack.c.l.b16 %v761
    %v3453 = vunpack.c.h.b16 %v761
    %v3454 = vunpack.c.l.b16 %v762
    %v3455 = vunpack.c.h.b16 %v762
    %v3456 = vunpack.c.l.b16 %v763
    %v3457 = vunpack.c.h.b16 %v763
    %v3458 = vunpack.c.l.b16 %v764
    %v3459 = vunpack.c.h.b16 %v764
    %v3460 = vunpack.c.l.b16 %v765
    %v3461 = vunpack.c.h.b16 %v765
    %v3462 = vunpack.c.l.b16 %v766
    %v3463 = vunpack.c.h.b16 %v766
    %v3464 = vunpack.c.l.b16 %v767
    %v3465 = vunpack.c.h.b16 %v767
    %v3466 = vunpack.c.l.b16 %v768
    %v3467 = vunpack.c.h.b16 %v768
    %v3468 = vunpack.c.l.b16 %v769
    %v3469 = vunpack.c.h.b16 %v769
    %v3470 = vunpack.c.l.b16 %v770
    %v3471 = vunpack.c.h.b16 %v770
    %v3472 = vunpack.c.l.b16 %v771
    %v3473 = vunpack.c.h.b16 %v771
    %v3474 = vunpack.c.l.b16 %v772
    %v3475 = vunpack.c.h.b16 %v772
    %v3476 = vunpack.c.l.b16 %v773
    %v3477 = vunpack.c.h.b16 %v773
    %v3478 = vunpack.c.l.b16 %v774
    %v3479 = vunpack.c.h.b16 %v774
    %v3480 = vunpack.c.l.b16 %v775
    %v3481 = vunpack.c.h.b16 %v775
    %v3482 = vunpack.c.l.b16 %v776
    %v3483 = vunpack.c.h.b16 %v776
    %v3484 = vunpack.c.l.b16 %v777
    %v3485 = vunpack.c.h.b16 %v777
    %v3486 = vunpack.c.l.b16 %v778
    %v3487 = vunpack.c.h.b16 %v778
    %v3488 = vunpack.c.l.b16 %v779
    %v3489 = vunpack.c.h.b16 %v779
    %v3490 = vunpack.c.l.b16 %v780
    %v3491 = vunpack.c.h.b16 %v780
    %v3492 = vunpack.c.l.b16 %v781
    %v3493 = vunpack.c.h.b16 %v781
    %v3494 = vunpack.c.l.b16 %v782
    %v3495 = vunpack.c.h.b16 %v782
    %v3496 = vunpack.c.l.b16 %v783
    %v3497 = vunpack.c.h.b16 %v783
    %v3498 = vunpack.c.l.b16 %v784
    %v3499 = vunpack.c.h.b16 %v784
    %v3500 = vunpack.c.l.b16 %v785
    %v3501 = vunpack.c.h.b16 %v785
    %v3502 = vunpack.c.l.b16 %v786
    %v3503 = vunpack.c.h.b16 %v786
    %v3504 = vunpack.c.l.b16 %v787
    %v3505 = vunpack.c.h.b16 %v787
    %v3506 = vunpack.c.l.b16 %v788
    %v3507 = vunpack.c.h.b16 %v788
    %v3508 = vunpack.c.l.b16 %v789
    %v3509 = vunpack.c.h.b16 %v789
    %v3510 = vunpack.c.l.b16 %v790
    %v3511 = vunpack.c.h.b16 %v790
    %v3512 = vunpack.c.l.b16 %v791
    %v3513 = vunpack.c.h.b16 %v791
    %v3514 = vunpack.c.l.b16 %v792
    %v3515 = vunpack.c.h.b16 %v792
    %v3516 = vunpack.c.l.b16 %v793
    %v3517 = vunpack.c.h.b16 %v793
    %v3518 = vunpack.c.l.b16 %v794
    %v3519 = vunpack.c.h.b16 %v794
    %v3520 = vunpack.c.l.b16 %v795
    %v3521 = vunpack.c.h.b16 %v795
    %v3522 = vunpack.c.l.b16 %v796
    %v3523 = vunpack.c.h.b16 %v796
    %v3524 = vunpack.c.l.b16 %v797
    %v3525 = vunpack.c.h.b16 %v797
    %v3526 = vunpack.c.l.b16 %v798
    %v3527 = vunpack.c.h.b16 %v798
    %v3528 = vunpack.c.l.b16 %v799
    %v3529 = vunpack.c.h.b16 %v799
    %v3530 = vunpack.c.l.b16 %v800
    %v3531 = vunpack.c.h.b16 %v800
    %v3532 = vunpack.c.l.b16 %v801
    %v3533 = vunpack.c.h.b16 %v801
    %v3534 = vunpack.c.l.b16 %v802
    %v3535 = vunpack.c.h.b16 %v802
    %v3536 = vunpack.c.l.b16 %v803
    %v3537 = vunpack.c.h.b16 %v803
    %v3538 = vunpack.c.l.b16 %v804
    %v3539 = vunpack.c.h.b16 %v804
    %v3540 = vunpack.c.l.b16 %v805
    %v3541 = vunpack.c.h.b16 %v805
    %v3542 = vunpack.c.l.b16 %v806
    %v3543 = vunpack.c.h.b16 %v806
    %v3544 = vunpack.c.l.b16 %v807
    %v3545 = vunpack.c.h.b16 %v807
    %v3546 = vunpack.c.l.b16 %v808
    %v3547 = vunpack.c.h.b16 %v808
    %v3548 = vunpack.c.l.b16 %v809
    %v3549 = vunpack.c.h.b16 %v809
    %v3550 = vunpack.c.l.b16 %v810
    %v3551 = vunpack.c.h.b16 %v810
    %v3552 = vunpack.c.l.b16 %v811
    %v3553 = vunpack.c.h.b16 %v811
    %v3554 = vunpack.c.l.b16 %v812
    %v3555 = vunpack.c.h.b16 %v812
    %v3556 = vunpack.c.l.b16 %v813
    %v3557 = vunpack.c.h.b16 %v813
    %v3558 = vunpack.c.l.b16 %v814
    %v3559 = vunpack.c.h.b16 %v814
    %v3560 = vunpack.c.l.b16 %v815
    %v3561 = vunpack.c.h.b16 %v815
    %v3562 = vunpack.c.l.b16 %v816
    %v3563 = vunpack.c.h.b16 %v816
    %v3564 = vunpack.c.l.b16 %v817
    %v3565 = vunpack.c.h.b16 %v817
    %v3566 = vunpack.c.l.b16 %v818
    %v3567 = vunpack.c.h.b16 %v818
    %v3568 = vunpack.c.l.b16 %v819
    %v3569 = vunpack.c.h.b16 %v819
    %v3570 = vunpack.c.l.b16 %v820
    %v3571 = vunpack.c.h.b16 %v820
    %v3572 = vunpack.c.l.b16 %v821
    %v3573 = vunpack.c.h.b16 %v821
    %v3574 = vunpack.c.l.b16 %v822
    %v3575 = vunpack.c.h.b16 %v822
    %v3576 = vunpack.c.l.b16 %v823
    %v3577 = vunpack.c.h.b16 %v823
    %v3578 = vunpack.c.l.b16 %v824
    %v3579 = vunpack.c.h.b16 %v824
    %v3580 = vunpack.c.l.b16 %v825
    %v3581 = vunpack.c.h.b16 %v825
    %v3582 = vunpack.c.l.b16 %v826
    %v3583 = vunpack.c.h.b16 %v826
    %v3584 = vunpack.c.l.b16 %v827
    %v3585 = vunpack.c.h.b16 %v827
    %v3586 = vunpack.c.l.b16 %v828
    %v3587 = vunpack.c.h.b16 %v828
    %v3588 = vunpack.c.l.b16 %v829
    %v3589 = vunpack.c.h.b16 %v829
    %v3590 = vunpack.c.l.b16 %v830
    %v3591 = vunpack.c.h.b16 %v830
    %v3592 = vunpack.c.l.b16 %v831
    %v3593 = vunpack.c.h.b16 %v831
    %v3594 = vunpack.c.l.b16 %v832
    %v3595 = vunpack.c.h.b16 %v832
    %v3596 = vunpack.c.l.b16 %v833
    %v3597 = vunpack.c.h.b16 %v833
    %v3598 = vunpack.c.l.b16 %v834
    %v3599 = vunpack.c.h.b16 %v834
    %v3600 = vunpack.c.l.b16 %v835
    %v3601 = vunpack.c.h.b16 %v835
    %v3602 = vunpack.c.l.b16 %v836
    %v3603 = vunpack.c.h.b16 %v836
    %v3604 = vunpack.c.l.b16 %v837
    %v3605 = vunpack.c.h.b16 %v837
    %v3606 = vunpack.c.l.b16 %v838
    %v3607 = vunpack.c.h.b16 %v838
    %v3608 = vunpack.c.l.b16 %v839
    %v3609 = vunpack.c.h.b16 %v839
    %v3610 = vunpack.c.l.b16 %v840
    %v3611 = vunpack.c.h.b16 %v840
    %v3612 = vunpack.c.l.b16 %v841
    %v3613 = vunpack.c.h.b16 %v841
    %v3614 = vunpack.c.l.b16 %v842
    %v3615 = vunpack.c.h.b16 %v842
    %v3616 = vunpack.c.l.b16 %v843
    %v3617 = vunpack.c.h.b16 %v843
    %v3618 = vunpack.c.l.b16 %v844
    %v3619 = vunpack.c.h.b16 %v844
    %v3620 = vunpack.c.l.b16 %v845
    %v3621 = vunpack.c.h.b16 %v845
    %v3622 = vunpack.c.l.b16 %v846
    %v3623 = vunpack.c.h.b16 %v846
    %v3624 = vunpack.c.l.b16 %v847
    %v3625 = vunpack.c.h.b16 %v847
    %v3626 = vunpack.c.l.b16 %v848
    %v3627 = vunpack.c.h.b16 %v848
    %v3628 = vunpack.c.l.b16 %v849
    %v3629 = vunpack.c.h.b16 %v849
    %v3630 = vunpack.c.l.b16 %v850
    %v3631 = vunpack.c.h.b16 %v850
    %v3632 = vunpack.c.l.b16 %v851
    %v3633 = vunpack.c.h.b16 %v851
    %v3634 = vunpack.c.l.b16 %v852
    %v3635 = vunpack.c.h.b16 %v852
    %v3636 = vunpack.c.l.b16 %v853
    %v3637 = vunpack.c.h.b16 %v853
    %v3638 = vunpack.c.l.b16 %v854
    %v3639 = vunpack.c.h.b16 %v854
    %v3640 = vunpack.c.l.b16 %v855
    %v3641 = vunpack.c.h.b16 %v855
    %v3642 = vunpack.c.l.b16 %v856
    %v3643 = vunpack.c.h.b16 %v856
    %v3644 = vunpack.c.l.b16 %v857
    %v3645 = vunpack.c.h.b16 %v857
    %v3646 = vunpack.c.l.b16 %v858
    %v3647 = vunpack.c.h.b16 %v858
    %v3648 = vunpack.c.l.b16 %v859
    %v3649 = vunpack.c.h.b16 %v859
    %v3650 = vunpack.c.l.b16 %v860
    %v3651 = vunpack.c.h.b16 %v860
    %v3652 = vunpack.c.l.b16 %v861
    %v3653 = vunpack.c.h.b16 %v861
    %v3654 = vunpack.c.l.b16 %v862
    %v3655 = vunpack.c.h.b16 %v862
    %v3656 = vunpack.c.l.b16 %v863
    %v3657 = vunpack.c.h.b16 %v863
    %v3658 = vunpack.c.l.b16 %v864
    %v3659 = vunpack.c.h.b16 %v864
    %v3660 = vunpack.c.l.b16 %v865
    %v3661 = vunpack.c.h.b16 %v865
    %v3662 = vunpack.c.l.b16 %v866
    %v3663 = vunpack.c.h.b16 %v866
    %v3664 = vunpack.c.l.b16 %v867
    %v3665 = vunpack.c.h.b16 %v867
    %v3666 = vunpack.c.l.b16 %v868
    %v3667 = vunpack.c.h.b16 %v868
    %v3668 = vunpack.c.l.b16 %v869
    %v3669 = vunpack.c.h.b16 %v869
    %v3670 = vunpack.c.l.b16 %v870
    %v3671 = vunpack.c.h.b16 %v870
    %v3672 = vunpack.c.l.b16 %v871
    %v3673 = vunpack.c.h.b16 %v871
    %v3674 = vunpack.c.l.b16 %v872
    %v3675 = vunpack.c.h.b16 %v872
    %v3676 = vunpack.c.l.b16 %v873
    %v3677 = vunpack.c.h.b16 %v873
    %v3678 = vunpack.c.l.b16 %v874
    %v3679 = vunpack.c.h.b16 %v874
    %v3680 = vunpack.c.l.b16 %v875
    %v3681 = vunpack.c.h.b16 %v875
    %v3682 = vunpack.c.l.b16 %v876
    %v3683 = vunpack.c.h.b16 %v876
    %v3684 = vunpack.c.l.b16 %v877
    %v3685 = vunpack.c.h.b16 %v877
    %v3686 = vunpack.c.l.b16 %v878
    %v3687 = vunpack.c.h.b16 %v878
    %v3688 = vunpack.c.l.b16 %v879
    %v3689 = vunpack.c.h.b16 %v879
    %v3690 = vunpack.c.l.b16 %v880
    %v3691 = vunpack.c.h.b16 %v880
    %v3692 = vunpack.c.l.b16 %v881
    %v3693 = vunpack.c.h.b16 %v881
    %v3694 = vunpack.c.l.b16 %v882
    %v3695 = vunpack.c.h.b16 %v882
    %v3696 = vunpack.c.l.b16 %v883
    %v3697 = vunpack.c.h.b16 %v883
    %v3698 = vunpack.c.l.b16 %v884
    %v3699 = vunpack.c.h.b16 %v884
    %v3700 = vunpack.c.l.b16 %v885
    %v3701 = vunpack.c.h.b16 %v885
    %v3702 = vunpack.c.l.b16 %v886
    %v3703 = vunpack.c.h.b16 %v886
    %v3704 = vunpack.c.l.b16 %v887
    %v3705 = vunpack.c.h.b16 %v887
    %v3706 = vunpack.c.l.b16 %v888
    %v3707 = vunpack.c.h.b16 %v888
    %v3708 = vunpack.c.l.b16 %v889
    %v3709 = vunpack.c.h.b16 %v889
    %v3710 = vunpack.c.l.b16 %v890
    %v3711 = vunpack.c.h.b16 %v890
    %v3712 = vunpack.c.l.b16 %v891
    %v3713 = vunpack.c.h.b16 %v891
    %v3714 = vunpack.c.l.b16 %v892
    %v3715 = vunpack.c.h.b16 %v892
    %v3716 = vunpack.c.l.b16 %v893
    %v3717 = vunpack.c.h.b16 %v893
    %v3718 = vunpack.c.l.b16 %v894
    %v3719 = vunpack.c.h.b16 %v894
    %v3720 = vunpack.c.l.b16 %v895
    %v3721 = vunpack.c.h.b16 %v895
    %v3722 = vunpack.c.l.b16 %v896
    %v3723 = vunpack.c.h.b16 %v896
    %v3724 = vunpack.c.l.b16 %v897
    %v3725 = vunpack.c.h.b16 %v897
    %v3726 = vunpack.c.l.b16 %v898
    %v3727 = vunpack.c.h.b16 %v898
    %v3728 = vunpack.c.l.b16 %v899
    %v3729 = vunpack.c.h.b16 %v899
    %v3730 = vunpack.c.l.b16 %v900
    %v3731 = vunpack.c.h.b16 %v900
    %v3732 = vunpack.c.l.b16 %v901
    %v3733 = vunpack.c.h.b16 %v901
    %v3734 = vunpack.c.l.b16 %v902
    %v3735 = vunpack.c.h.b16 %v902
    %v3736 = vunpack.c.l.b16 %v903
    %v3737 = vunpack.c.h.b16 %v903
    %v3738 = vunpack.c.l.b16 %v904
    %v3739 = vunpack.c.h.b16 %v904
    %v3740 = vunpack.c.l.b16 %v905
    %v3741 = vunpack.c.h.b16 %v905
    %v3742 = vunpack.c.l.b16 %v906
    %v3743 = vunpack.c.h.b16 %v906
    %v3744 = vunpack.c.l.b16 %v907
    %v3745 = vunpack.c.h.b16 %v907
    %v3746 = vunpack.c.l.b16 %v908
    %v3747 = vunpack.c.h.b16 %v908
    %v3748 = vunpack.c.l.b16 %v909
    %v3749 = vunpack.c.h.b16 %v909
    %v3750 = vunpack.c.l.b16 %v910
    %v3751 = vunpack.c.h.b16 %v910
    %v3752 = vunpack.c.l.b16 %v911
    %v3753 = vunpack.c.h.b16 %v911
    %v3754 = vunpack.c.l.b16 %v912
    %v3755 = vunpack.c.h.b16 %v912
    %v3756 = vunpack.c.l.b16 %v913
    %v3757 = vunpack.c.h.b16 %v913
    %v3758 = vunpack.c.l.b16 %v914
    %v3759 = vunpack.c.h.b16 %v914
    %v3760 = vunpack.c.l.b16 %v915
    %v3761 = vunpack.c.h.b16 %v915
    %v3762 = vunpack.c.l.b16 %v916
    %v3763 = vunpack.c.h.b16 %v916
    %v3764 = vunpack.c.l.b16 %v917
    %v3765 = vunpack.c.h.b16 %v917
    %v3766 = vunpack.c.l.b16 %v918
    %v3767 = vunpack.c.h.b16 %v918
    %v3768 = vunpack.c.l.b16 %v919
    %v3769 = vunpack.c.h.b16 %v919
    %v3770 = vunpack.c.l.b16 %v920
    %v3771 = vunpack.c.h.b16 %v920
    %v3772 = vunpack.c.l.b16 %v921
    %v3773 = vunpack.c.h.b16 %v921
    %v3774 = vunpack.c.l.b16 %v922
    %v3775 = vunpack.c.h.b16 %v922
    %v3776 = vunpack.c.l.b16 %v923
    %v3777 = vunpack.c.h.b16 %v923
    %v3778 = vunpack.c.l.b16 %v924
    %v3779 = vunpack.c.h.b16 %v924
    %v3780 = vunpack.c.l.b16 %v925
    %v3781 = vunpack.c.h.b16 %v925
    %v3782 = vunpack.c.l.b16 %v926
    %v3783 = vunpack.c.h.b16 %v926
    %v3784 = vunpack.c.l.b16 %v927
    %v3785 = vunpack.c.h.b16 %v927
    %v3786 = vunpack.c.l.b16 %v928
    %v3787 = vunpack.c.h.b16 %v928
    %v3788 = vunpack.c.l.b16 %v929
    %v3789 = vunpack.c.h.b16 %v929
    %v3790 = vunpack.c.l.b16 %v930
    %v3791 = vunpack.c.h.b16 %v930
    %v3792 = vunpack.c.l.b16 %v931
    %v3793 = vunpack.c.h.b16 %v931
    %v3794 = vunpack.c.l.b16 %v932
    %v3795 = vunpack.c.h.b16 %v932
    %v3796 = vunpack.c.l.b16 %v933
    %v3797 = vunpack.c.h.b16 %v933
    %v3798 = vunpack.c.l.b16 %v934
    %v3799 = vunpack.c.h.b16 %v934
    %v3800 = vunpack.c.l.b16 %v935
    %v3801 = vunpack.c.h.b16 %v935
    %v3802 = vunpack.c.l.b16 %v936
    %v3803 = vunpack.c.h.b16 %v936
    %v3804 = vunpack.c.l.b16 %v937
    %v3805 = vunpack.c.h.b16 %v937
    %v3806 = vunpack.c.l.b16 %v938
    %v3807 = vunpack.c.h.b16 %v938
    %v3808 = vunpack.c.l.b16 %v939
    %v3809 = vunpack.c.h.b16 %v939
    %v3810 = vunpack.c.l.b16 %v940
    %v3811 = vunpack.c.h.b16 %v940
    %v3812 = vunpack.c.l.b16 %v941
    %v3813 = vunpack.c.h.b16 %v941
    %v3814 = vunpack.c.l.b16 %v942
    %v3815 = vunpack.c.h.b16 %v942
    %v3816 = vunpack.c.l.b16 %v943
    %v3817 = vunpack.c.h.b16 %v943
    %v3818 = vunpack.c.l.b16 %v944
    %v3819 = vunpack.c.h.b16 %v944
    %v3820 = vunpack.c.l.b16 %v945
    %v3821 = vunpack.c.h.b16 %v945
    %v3822 = vunpack.c.l.b16 %v946
    %v3823 = vunpack.c.h.b16 %v946
    %v3824 = vunpack.c.l.b16 %v947
    %v3825 = vunpack.c.h.b16 %v947
    %v3826 = vunpack.c.l.b16 %v948
    %v3827 = vunpack.c.h.b16 %v948
    %v3828 = vunpack.c.l.b16 %v949
    %v3829 = vunpack.c.h.b16 %v949
    %v3830 = vunpack.c.l.b16 %v950
    %v3831 = vunpack.c.h.b16 %v950
    %v3832 = vunpack.c.l.b16 %v951
    %v3833 = vunpack.c.h.b16 %v951
    %v3834 = vunpack.c.l.b16 %v952
    %v3835 = vunpack.c.h.b16 %v952
    %v3836 = vunpack.c.l.b16 %v953
    %v3837 = vunpack.c.h.b16 %v953
    %v3838 = vunpack.c.l.b16 %v954
    %v3839 = vunpack.c.h.b16 %v954
    %v3840 = vunpack.c.l.b16 %v955
    %v3841 = vunpack.c.h.b16 %v955
    %v3842 = vunpack.c.l.b16 %v956
    %v3843 = vunpack.c.h.b16 %v956
    %v3844 = vunpack.c.l.b16 %v957
    %v3845 = vunpack.c.h.b16 %v957
    %v3846 = vunpack.c.l.b16 %v958
    %v3847 = vunpack.c.h.b16 %v958
    %v3848 = vunpack.c.l.b16 %v959
    %v3849 = vunpack.c.h.b16 %v959
    %v3850 = vunpack.c.l.b16 %v960
    %v3851 = vunpack.c.h.b16 %v960
    %v3852 = vunpack.c.l.b16 %v961
    %v3853 = vunpack.c.h.b16 %v961
    %v3854 = vunpack.c.l.b16 %v962
    %v3855 = vunpack.c.h.b16 %v962
    %v3856 = vunpack.c.l.b16 %v963
    %v3857 = vunpack.c.h.b16 %v963
    %v3858 = vunpack.c.l.b16 %v964
    %v3859 = vunpack.c.h.b16 %v964
    %v3860 = vunpack.c.l.b16 %v965
    %v3861 = vunpack.c.h.b16 %v965
    %v3862 = vunpack.c.l.b16 %v966
    %v3863 = vunpack.c.h.b16 %v966
    %v3864 = vunpack.c.l.b16 %v967
    %v3865 = vunpack.c.h.b16 %v967
    %v3866 = vunpack.c.l.b16 %v968
    %v3867 = vunpack.c.h.b16 %v968
    %v3868 = vunpack.c.l.b16 %v969
    %v3869 = vunpack.c.h.b16 %v969
    %v3870 = vunpack.c.l.b16 %v970
    %v3871 = vunpack.c.h.b16 %v970
    %v3872 = vunpack.c.l.b16 %v971
    %v3873 = vunpack.c.h.b16 %v971
    %v3874 = vunpack.c.l.b16 %v972
    %v3875 = vunpack.c.h.b16 %v972
    %v3876 = vunpack.c.l.b16 %v973
    %v3877 = vunpack.c.h.b16 %v973
    %v3878 = vunpack.c.l.b16 %v974
    %v3879 = vunpack.c.h.b16 %v974
    %v3880 = vunpack.c.l.b16 %v975
    %v3881 = vunpack.c.h.b16 %v975
    %v3882 = vunpack.c.l.b16 %v976
    %v3883 = vunpack.c.h.b16 %v976
    %v3884 = vunpack.c.l.b16 %v977
    %v3885 = vunpack.c.h.b16 %v977
    %v3886 = vunpack.c.l.b16 %v978
    %v3887 = vunpack.c.h.b16 %v978
    %v3888 = vunpack.c.l.b16 %v979
    %v3889 = vunpack.c.h.b16 %v979
    %v3890 = vunpack.c.l.b16 %v980
    %v3891 = vunpack.c.h.b16 %v980
    %v3892 = vunpack.c.l.b16 %v981
    %v3893 = vunpack.c.h.b16 %v981
    %v3894 = vunpack.c.l.b16 %v982
    %v3895 = vunpack.c.h.b16 %v982
    %v3896 = vunpack.c.l.b16 %v983
    %v3897 = vunpack.c.h.b16 %v983
    %v3898 = vunpack.c.l.b16 %v984
    %v3899 = vunpack.c.h.b16 %v984
    %v3900 = vunpack.c.l.b16 %v985
    %v3901 = vunpack.c.h.b16 %v985
    %v3902 = vunpack.c.l.b16 %v986
    %v3903 = vunpack.c.h.b16 %v986
    %v3904 = vunpack.c.l.b16 %v987
    %v3905 = vunpack.c.h.b16 %v987
    %v3906 = vunpack.c.l.b16 %v988
    %v3907 = vunpack.c.h.b16 %v988
    %v3908 = vunpack.c.l.b16 %v989
    %v3909 = vunpack.c.h.b16 %v989
    %v3910 = vunpack.c.l.b16 %v990
    %v3911 = vunpack.c.h.b16 %v990
    %v3912 = vunpack.c.l.b16 %v991
    %v3913 = vunpack.c.h.b16 %v991
    %v3914 = vunpack.c.l.b16 %v992
    %v3915 = vunpack.c.h.b16 %v992
    %v3916 = vunpack.c.l.b16 %v993
    %v3917 = vunpack.c.h.b16 %v993
    %v3918 = vunpack.c.l.b16 %v994
    %v3919 = vunpack.c.h.b16 %v994
    %v3920 = vunpack.c.l.b16 %v995
    %v3921 = vunpack.c.h.b16 %v995
    %v3922 = vunpack.c.l.b16 %v996
    %v3923 = vunpack.c.h.b16 %v996
    %v3924 = vunpack.c.l.b16 %v997
    %v3925 = vunpack.c.h.b16 %v997
    %v3926 = vunpack.c.l.b16 %v998
    %v3927 = vunpack.c.h.b16 %v998
    %v3928 = vunpack.c.l.b16 %v999
    %v3929 = vunpack.c.h.b16 %v999
    %v3930 = vunpack.c.l.b16 %v1000
    %v3931 = vunpack.c.h.b16 %v1000
    %v3932 = vunpack.c.l.b16 %v1001
    %v3933 = vunpack.c.h.b16 %v1001
    %v3934 = vunpack.c.l.b16 %v1002
    %v3935 = vunpack.c.h.b16 %v1002
    %v3936 = vunpack.c.l.b16 %v1003
    %v3937 = vunpack.c.h.b16 %v1003
    %v3938 = vunpack.c.l.b16 %v1004
    %v3939 = vunpack.c.h.b16 %v1004
    %v3940 = vunpack.c.l.b16 %v1005
    %v3941 = vunpack.c.h.b16 %v1005
    %v3942 = vunpack.c.l.b16 %v1006
    %v3943 = vunpack.c.h.b16 %v1006
    %v3944 = vunpack.c.l.b16 %v1007
    %v3945 = vunpack.c.h.b16 %v1007
    %v3946 = vunpack.c.l.b16 %v1008
    %v3947 = vunpack.c.h.b16 %v1008
    %v3948 = vunpack.c.l.b16 %v1009
    %v3949 = vunpack.c.h.b16 %v1009
    %v3950 = vunpack.c.l.b16 %v1010
    %v3951 = vunpack.c.h.b16 %v1010
    %v3952 = vunpack.c.l.b16 %v1011
    %v3953 = vunpack.c.h.b16 %v1011
    %v3954 = vunpack.c.l.b16 %v1012
    %v3955 = vunpack.c.h.b16 %v1012
    %v3956 = vunpack.c.l.b16 %v1013
    %v3957 = vunpack.c.h.b16 %v1013
    %v3958 = vunpack.c.l.b16 %v1014
    %v3959 = vunpack.c.h.b16 %v1014
    %v3960 = vunpack.c.l.b16 %v1015
    %v3961 = vunpack.c.h.b16 %v1015
    %v3962 = vunpack.c.l.b16 %v1016
    %v3963 = vunpack.c.h.b16 %v1016
    %v3964 = vunpack.c.l.b16 %v1017
    %v3965 = vunpack.c.h.b16 %v1017
    %v3966 = vunpack.c.l.b16 %v1018
    %v3967 = vunpack.c.h.b16 %v1018
    %v3968 = vunpack.c.l.b16 %v1019
    %v3969 = vunpack.c.h.b16 %v1019
    %v3970 = vunpack.c.l.b16 %v1020
    %v3971 = vunpack.c.h.b16 %v1020
    %v3972 = vunpack.c.l.b16 %v1021
    %v3973 = vunpack.c.h.b16 %v1021
    %v3974 = vunpack.c.l.b16 %v1022
    %v3975 = vunpack.c.h.b16 %v1022
    %v3976 = vunpack.c.l.b16 %v1023
    %v3977 = vunpack.c.h.b16 %v1023
    %v3978 = vunpack.c.l.b16 %v1024
    %v3979 = vunpack.c.h.b16 %v1024
    %v3980 = vunpack.c.l.b16 %v1025
    %v3981 = vunpack.c.h.b16 %v1025
    %v3982 = vunpack.c.l.b16 %v1026
    %v3983 = vunpack.c.h.b16 %v1026
    %v3984 = vunpack.c.l.b16 %v1027
    %v3985 = vunpack.c.h.b16 %v1027
    %v3986 = vunpack.c.l.b16 %v1028
    %v3987 = vunpack.c.h.b16 %v1028
    %v3988 = vunpack.c.l.b16 %v1029
    %v3989 = vunpack.c.h.b16 %v1029
    %v3990 = vunpack.c.l.b16 %v1030
    %v3991 = vunpack.c.h.b16 %v1030
    %v3992 = vunpack.c.l.b16 %v1031
    %v3993 = vunpack.c.h.b16 %v1031
    %v3994 = vunpack.c.l.b16 %v1032
    %v3995 = vunpack.c.h.b16 %v1032
    %v3996 = vunpack.c.l.b16 %v1033
    %v3997 = vunpack.c.h.b16 %v1033
    %v3998 = vunpack.c.l.b16 %v1034
    %v3999 = vunpack.c.h.b16 %v1034
    %v4000 = vunpack.c.l.b16 %v1035
    %v4001 = vunpack.c.h.b16 %v1035
    %v4002 = vunpack.c.l.b16 %v1036
    %v4003 = vunpack.c.h.b16 %v1036
    %v4004 = vunpack.c.l.b16 %v1037
    %v4005 = vunpack.c.h.b16 %v1037
    %v4006 = vunpack.c.l.b16 %v1038
    %v4007 = vunpack.c.h.b16 %v1038
    %v4008 = vunpack.c.l.b16 %v1039
    %v4009 = vunpack.c.h.b16 %v1039
    %v4010 = vunpack.c.l.b16 %v1040
    %v4011 = vunpack.c.h.b16 %v1040
    %v4012 = vunpack.c.l.b16 %v1041
    %v4013 = vunpack.c.h.b16 %v1041
    %v4014 = vunpack.c.l.b16 %v1042
    %v4015 = vunpack.c.h.b16 %v1042
    %v4016 = vunpack.c.l.b16 %v1043
    %v4017 = vunpack.c.h.b16 %v1043
    %v4018 = vunpack.c.l.b16 %v1044
    %v4019 = vunpack.c.h.b16 %v1044
    %v4020 = vunpack.c.l.b16 %v1045
    %v4021 = vunpack.c.h.b16 %v1045
    %v4022 = vunpack.c.l.b16 %v1046
    %v4023 = vunpack.c.h.b16 %v1046
    %v4024 = vunpack.c.l.b16 %v1047
    %v4025 = vunpack.c.h.b16 %v1047
    %v4026 = vunpack.c.l.b16 %v1048
    %v4027 = vunpack.c.h.b16 %v1048
    %v4028 = vunpack.c.l.b16 %v1049
    %v4029 = vunpack.c.h.b16 %v1049
    %v4030 = vunpack.c.l.b16 %v1050
    %v4031 = vunpack.c.h.b16 %v1050
    %v4032 = vunpack.c.l.b16 %v1051
    %v4033 = vunpack.c.h.b16 %v1051
    %v4034 = vunpack.c.l.b16 %v1052
    %v4035 = vunpack.c.h.b16 %v1052
    %v4036 = vunpack.c.l.b16 %v1053
    %v4037 = vunpack.c.h.b16 %v1053
    %v4038 = vunpack.c.l.b16 %v1054
    %v4039 = vunpack.c.h.b16 %v1054
    %v4040 = vunpack.c.l.b16 %v1055
    %v4041 = vunpack.c.h.b16 %v1055
    %v4042 = vunpack.c.l.b16 %v1056
    %v4043 = vunpack.c.h.b16 %v1056
    %v4044 = vunpack.c.l.b16 %v1057
    %v4045 = vunpack.c.h.b16 %v1057
    %v4046 = vunpack.c.l.b16 %v1058
    %v4047 = vunpack.c.h.b16 %v1058
    %v4048 = vunpack.c.l.b16 %v1059
    %v4049 = vunpack.c.h.b16 %v1059
    %v4050 = vunpack.c.l.b16 %v1060
    %v4051 = vunpack.c.h.b16 %v1060
    %v4052 = vunpack.c.l.b16 %v1061
    %v4053 = vunpack.c.h.b16 %v1061
    %v4054 = vunpack.c.l.b16 %v1062
    %v4055 = vunpack.c.h.b16 %v1062
    %v4056 = vunpack.c.l.b16 %v1063
    %v4057 = vunpack.c.h.b16 %v1063
    %v4058 = vunpack.c.l.b16 %v1064
    %v4059 = vunpack.c.h.b16 %v1064
    %v4060 = vunpack.c.l.b16 %v1065
    %v4061 = vunpack.c.h.b16 %v1065
    %v4062 = vunpack.c.l.b16 %v1066
    %v4063 = vunpack.c.h.b16 %v1066
    %v4064 = vunpack.c.l.b16 %v1067
    %v4065 = vunpack.c.h.b16 %v1067
    %v4066 = vunpack.c.l.b16 %v1068
    %v4067 = vunpack.c.h.b16 %v1068
    %v4068 = vunpack.c.l.b16 %v1069
    %v4069 = vunpack.c.h.b16 %v1069
    %v4070 = vunpack.c.l.b16 %v1070
    %v4071 = vunpack.c.h.b16 %v1070
    %v4072 = vunpack.c.l.b16 %v1071
    %v4073 = vunpack.c.h.b16 %v1071
    %v4074 = vunpack.c.l.b16 %v1072
    %v4075 = vunpack.c.h.b16 %v1072
    %v4076 = vunpack.c.l.b16 %v1073
    %v4077 = vunpack.c.h.b16 %v1073
    %v4078 = vunpack.c.l.b16 %v1074
    %v4079 = vunpack.c.h.b16 %v1074
    %v4080 = vunpack.c.l.b16 %v1075
    %v4081 = vunpack.c.h.b16 %v1075
    %v4082 = vunpack.c.l.b16 %v1076
    %v4083 = vunpack.c.h.b16 %v1076
    %v4084 = vunpack.c.l.b16 %v1077
    %v4085 = vunpack.c.h.b16 %v1077
    %v4086 = vunpack.c.l.b16 %v1078
    %v4087 = vunpack.c.h.b16 %v1078
    %v4088 = vunpack.c.l.b16 %v1079
    %v4089 = vunpack.c.h.b16 %v1079
    %v4090 = vunpack.c.l.b16 %v1080
    %v4091 = vunpack.c.h.b16 %v1080
    %v4092 = vunpack.c.l.b16 %v1081
    %v4093 = vunpack.c.h.b16 %v1081
    %v4094 = vunpack.c.l.b16 %v1082
    %v4095 = vunpack.c.h.b16 %v1082
    %v4096 = vunpack.c.l.b16 %v1083
    %v4097 = vunpack.c.h.b16 %v1083
    %v4098 = vunpack.c.l.b16 %v1084
    %v4099 = vunpack.c.h.b16 %v1084
    %v4100 = vunpack.c.l.b16 %v1085
    %v4101 = vunpack.c.h.b16 %v1085
    %v4102 = vunpack.c.l.b16 %v1086
    %v4103 = vunpack.c.h.b16 %v1086
    %v4104 = vunpack.c.l.b16 %v1087
    %v4105 = vunpack.c.h.b16 %v1087
    %v4106 = vunpack.c.l.b16 %v1088
    %v4107 = vunpack.c.h.b16 %v1088
    %v4108 = vunpack.c.l.b16 %v1089
    %v4109 = vunpack.c.h.b16 %v1089
    %v4110 = vunpack.c.l.b16 %v1090
    %v4111 = vunpack.c.h.b16 %v1090
    %v4112 = vunpack.c.l.b16 %v1091
    %v4113 = vunpack.c.h.b16 %v1091
    %v4114 = vunpack.c.l.b16 %v1092
    %v4115 = vunpack.c.h.b16 %v1092
    %v4116 = vunpack.c.l.b16 %v1093
    %v4117 = vunpack.c.h.b16 %v1093
    %v4118 = vunpack.c.l.b16 %v1094
    %v4119 = vunpack.c.h.b16 %v1094
    %v4120 = vunpack.c.l.b16 %v1095
    %v4121 = vunpack.c.h.b16 %v1095
    %v4122 = vunpack.c.l.b16 %v1096
    %v4123 = vunpack.c.h.b16 %v1096
    %v4124 = vunpack.c.l.b16 %v1097
    %v4125 = vunpack.c.h.b16 %v1097
    %v4126 = vunpack.c.l.b16 %v1098
    %v4127 = vunpack.c.h.b16 %v1098
    %v4128 = vunpack.c.l.b16 %v1099
    %v4129 = vunpack.c.h.b16 %v1099
    %v4130 = vunpack.c.l.b16 %v1100
    %v4131 = vunpack.c.h.b16 %v1100
    %v4132 = vunpack.c.l.b16 %v1101
    %v4133 = vunpack.c.h.b16 %v1101
    %v4134 = vunpack.c.l.b16 %v1102
    %v4135 = vunpack.c.h.b16 %v1102
    %v4136 = vunpack.c.l.b16 %v1103
    %v4137 = vunpack.c.h.b16 %v1103
    %v4138 = vunpack.c.l.b16 %v1104
    %v4139 = vunpack.c.h.b16 %v1104
    %v4140 = vunpack.c.l.b16 %v1105
    %v4141 = vunpack.c.h.b16 %v1105
    %v4142 = vunpack.c.l.b16 %v1106
    %v4143 = vunpack.c.h.b16 %v1106
    %v4144 = vunpack.c.l.b16 %v1107
    %v4145 = vunpack.c.h.b16 %v1107
    %v4146 = vunpack.c.l.b16 %v1108
    %v4147 = vunpack.c.h.b16 %v1108
    %v4148 = vunpack.c.l.b16 %v1109
    %v4149 = vunpack.c.h.b16 %v1109
    %v4150 = vunpack.c.l.b16 %v1110
    %v4151 = vunpack.c.h.b16 %v1110
    %v4152 = vunpack.c.l.b16 %v1111
    %v4153 = vunpack.c.h.b16 %v1111
    %v4154 = vunpack.c.l.b16 %v1112
    %v4155 = vunpack.c.h.b16 %v1112
    %v4156 = vunpack.c.l.b16 %v1113
    %v4157 = vunpack.c.h.b16 %v1113
    %v4158 = vunpack.c.l.b16 %v1114
    %v4159 = vunpack.c.h.b16 %v1114
    %v4160 = vunpack.c.l.b16 %v1115
    %v4161 = vunpack.c.h.b16 %v1115
    %v4162 = vunpack.c.l.b16 %v1116
    %v4163 = vunpack.c.h.b16 %v1116
    %v4164 = vunpack.c.l.b16 %v1117
    %v4165 = vunpack.c.h.b16 %v1117
    %v4166 = vunpack.c.l.b16 %v1118
    %v4167 = vunpack.c.h.b16 %v1118
    %v4168 = vunpack.c.l.b16 %v1119
    %v4169 = vunpack.c.h.b16 %v1119
    %v4170 = vunpack.c.l.b16 %v1120
    %v4171 = vunpack.c.h.b16 %v1120
    %v4172 = vunpack.c.l.b16 %v1121
    %v4173 = vunpack.c.h.b16 %v1121
    %v4174 = vunpack.c.l.b16 %v1122
    %v4175 = vunpack.c.h.b16 %v1122
    %v4176 = vunpack.c.l.b16 %v1123
    %v4177 = vunpack.c.h.b16 %v1123
    %v4178 = vunpack.c.l.b16 %v1124
    %v4179 = vunpack.c.h.b16 %v1124
    %v4180 = vunpack.c.l.b16 %v1125
    %v4181 = vunpack.c.h.b16 %v1125
    %v4182 = vunpack.c.l.b16 %v1126
    %v4183 = vunpack.c.h.b16 %v1126
    %v4184 = vunpack.c.l.b16 %v1127
    %v4185 = vunpack.c.h.b16 %v1127
    %v4186 = vunpack.c.l.b16 %v1128
    %v4187 = vunpack.c.h.b16 %v1128
    %v4188 = vunpack.c.l.b16 %v1129
    %v4189 = vunpack.c.h.b16 %v1129
    %v4190 = vunpack.c.l.b16 %v1130
    %v4191 = vunpack.c.h.b16 %v1130
    %v4192 = vunpack.c.l.b16 %v1131
    %v4193 = vunpack.c.h.b16 %v1131
    %v4194 = vunpack.c.l.b16 %v1132
    %v4195 = vunpack.c.h.b16 %v1132
    %v4196 = vunpack.c.l.b16 %v1133
    %v4197 = vunpack.c.h.b16 %v1133
    %v4198 = vunpack.c.l.b16 %v1134
    %v4199 = vunpack.c.h.b16 %v1134
    %v4200 = vunpack.c.l.b16 %v1135
    %v4201 = vunpack.c.h.b16 %v1135
    %v4202 = vunpack.c.l.b16 %v1136
    %v4203 = vunpack.c.h.b16 %v1136
    %v4204 = vunpack.c.l.b16 %v1137
    %v4205 = vunpack.c.h.b16 %v1137
    %v4206 = vunpack.c.l.b16 %v1138
    %v4207 = vunpack.c.h.b16 %v1138
    %v4208 = vunpack.c.l.b16 %v1139
    %v4209 = vunpack.c.h.b16 %v1139
    %v4210 = vunpack.c.l.b16 %v1140
    %v4211 = vunpack.c.h.b16 %v1140
    %v4212 = vunpack.c.l.b16 %v1141
    %v4213 = vunpack.c.h.b16 %v1141
    %v4214 = vunpack.c.l.b16 %v1142
    %v4215 = vunpack.c.h.b16 %v1142
    %v4216 = vunpack.c.l.b16 %v1143
    %v4217 = vunpack.c.h.b16 %v1143
    %v4218 = vunpack.c.l.b16 %v1144
    %v4219 = vunpack.c.h.b16 %v1144
    %v4220 = vunpack.c.l.b16 %v1145
    %v4221 = vunpack.c.h.b16 %v1145
    %v4222 = vunpack.c.l.b16 %v1146
    %v4223 = vunpack.c.h.b16 %v1146
    %v4224 = vunpack.c.l.b16 %v1147
    %v4225 = vunpack.c.h.b16 %v1147
    %v4226 = vunpack.c.l.b16 %v1148
    %v4227 = vunpack.c.h.b16 %v1148
    %v4228 = vunpack.c.l.b16 %v1149
    %v4229 = vunpack.c.h.b16 %v1149
    %v4230 = vunpack.c.l.b16 %v1150
    %v4231 = vunpack.c.h.b16 %v1150
    %v4232 = vunpack.c.l.b16 %v1151
    %v4233 = vunpack.c.h.b16 %v1151
    %v4234 = vunpack.c.l.b16 %v1152
    %v4235 = vunpack.c.h.b16 %v1152
    %v4236 = vunpack.c.l.b16 %v1153
    %v4237 = vunpack.c.h.b16 %v1153
    %v4238 = vunpack.c.l.b16 %v1154
    %v4239 = vunpack.c.h.b16 %v1154
    %v4240 = vunpack.c.l.b16 %v1155
    %v4241 = vunpack.c.h.b16 %v1155
    %v4242 = vunpack.c.l.b16 %v1156
    %v4243 = vunpack.c.h.b16 %v1156
    %v4244 = vunpack.c.l.b16 %v1157
    %v4245 = vunpack.c.h.b16 %v1157
    %v4246 = vunpack.c.l.b16 %v1158
    %v4247 = vunpack.c.h.b16 %v1158
    %v4248 = vunpack.c.l.b16 %v1159
    %v4249 = vunpack.c.h.b16 %v1159
    %v4250 = vunpack.c.l.b16 %v1160
    %v4251 = vunpack.c.h.b16 %v1160
    %v4252 = vunpack.c.l.b16 %v1161
    %v4253 = vunpack.c.h.b16 %v1161
    %v4254 = vunpack.c.l.b16 %v1162
    %v4255 = vunpack.c.h.b16 %v1162
    %v4256 = vunpack.c.l.b16 %v1163
    %v4257 = vunpack.c.h.b16 %v1163
    %v4258 = vunpack.c.l.b16 %v1164
    %v4259 = vunpack.c.h.b16 %v1164
    %v4260 = vunpack.c.l.b16 %v1165
    %v4261 = vunpack.c.h.b16 %v1165
    %v4262 = vunpack.c.l.b16 %v1166
    %v4263 = vunpack.c.h.b16 %v1166
    %v4264 = vunpack.c.l.b16 %v1167
    %v4265 = vunpack.c.h.b16 %v1167
    %v4266 = vunpack.c.l.b16 %v1168
    %v4267 = vunpack.c.h.b16 %v1168
    %v4268 = vunpack.c.l.b16 %v1169
    %v4269 = vunpack.c.h.b16 %v1169
    %v4270 = vunpack.c.l.b16 %v1170
    %v4271 = vunpack.c.h.b16 %v1170
    %v4272 = vunpack.c.l.b16 %v1171
    %v4273 = vunpack.c.h.b16 %v1171
    %v4274 = vunpack.c.l.b16 %v1172
    %v4275 = vunpack.c.h.b16 %v1172
    %v4276 = vunpack.c.l.b16 %v1173
    %v4277 = vunpack.c.h.b16 %v1173
    %v4278 = vunpack.c.l.b16 %v1174
    %v4279 = vunpack.c.h.b16 %v1174
    %v4280 = vunpack.c.l.b16 %v1175
    %v4281 = vunpack.c.h.b16 %v1175
    %v4282 = vunpack.c.l.b16 %v1176
    %v4283 = vunpack.c.h.b16 %v1176
    %v4284 = vunpack.c.l.b16 %v1177
    %v4285 = vunpack.c.h.b16 %v1177
    %v4286 = vunpack.c.l.b16 %v1178
    %v4287 = vunpack.c.h.b16 %v1178
    %v4288 = vunpack.c.l.b16 %v1179
    %v4289 = vunpack.c.h.b16 %v1179
    %v4290 = vunpack.c.l.b16 %v1180
    %v4291 = vunpack.c.h.b16 %v1180
    %v4292 = vunpack.c.l.b16 %v1181
    %v4293 = vunpack.c.h.b16 %v1181
    %v4294 = vunpack.c.l.b16 %v1182
    %v4295 = vunpack.c.h.b16 %v1182
    %v4296 = vunpack.c.l.b16 %v1183
    %v4297 = vunpack.c.h.b16 %v1183
    %v4298 = vunpack.c.l.b16 %v1184
    %v4299 = vunpack.c.h.b16 %v1184
    %v4300 = vunpack.c.l.b16 %v1185
    %v4301 = vunpack.c.h.b16 %v1185
    %v4302 = vunpack.c.l.b16 %v1186
    %v4303 = vunpack.c.h.b16 %v1186
    %v4304 = vunpack.c.l.b16 %v1187
    %v4305 = vunpack.c.h.b16 %v1187
    %v4306 = vunpack.c.l.b16 %v1188
    %v4307 = vunpack.c.h.b16 %v1188
    %v4308 = vunpack.c.l.b16 %v1189
    %v4309 = vunpack.c.h.b16 %v1189
    %v4310 = vunpack.c.l.b16 %v1190
    %v4311 = vunpack.c.h.b16 %v1190
    %v4312 = vunpack.c.l.b16 %v1191
    %v4313 = vunpack.c.h.b16 %v1191
    %v4314 = vunpack.c.l.b16 %v1192
    %v4315 = vunpack.c.h.b16 %v1192
    %v4316 = vunpack.c.l.b16 %v1193
    %v4317 = vunpack.c.h.b16 %v1193
    %v4318 = vunpack.c.l.b16 %v1194
    %v4319 = vunpack.c.h.b16 %v1194
    %v4320 = vunpack.c.l.b16 %v1195
    %v4321 = vunpack.c.h.b16 %v1195
    %v4322 = vunpack.c.l.b16 %v1196
    %v4323 = vunpack.c.h.b16 %v1196
    %v4324 = vunpack.c.l.b16 %v1197
    %v4325 = vunpack.c.h.b16 %v1197
    %v4326 = vunpack.c.l.b16 %v1198
    %v4327 = vunpack.c.h.b16 %v1198
    %v4328 = vunpack.c.l.b16 %v1199
    %v4329 = vunpack.c.h.b16 %v1199
    %v4330 = vunpack.c.l.b16 %v1200
    %v4331 = vunpack.c.h.b16 %v1200
    %v4332 = vunpack.c.l.b16 %v1201
    %v4333 = vunpack.c.h.b16 %v1201
    %v4334 = vunpack.c.l.b16 %v1202
    %v4335 = vunpack.c.h.b16 %v1202
    %v4336 = vunpack.c.l.b16 %v1203
    %v4337 = vunpack.c.h.b16 %v1203
    %v4338 = vunpack.c.l.b16 %v1204
    %v4339 = vunpack.c.h.b16 %v1204
    %v4340 = vunpack.c.l.b16 %v1205
    %v4341 = vunpack.c.h.b16 %v1205
    %v4342 = vunpack.c.l.b16 %v1206
    %v4343 = vunpack.c.h.b16 %v1206
    %v4344 = vunpack.c.l.b16 %v1207
    %v4345 = vunpack.c.h.b16 %v1207
    %v4346 = vunpack.c.l.b16 %v1208
    %v4347 = vunpack.c.h.b16 %v1208
    %v4348 = vunpack.c.l.b16 %v1209
    %v4349 = vunpack.c.h.b16 %v1209
    %v4350 = vunpack.c.l.b16 %v1210
    %v4351 = vunpack.c.h.b16 %v1210
    %v4352 = vunpack.c.l.b16 %v1211
    %v4353 = vunpack.c.h.b16 %v1211
    %v4354 = vunpack.c.l.b16 %v1212
    %v4355 = vunpack.c.h.b16 %v1212
    %v4356 = vunpack.c.l.b16 %v1213
    %v4357 = vunpack.c.h.b16 %v1213
    %v4358 = vunpack.c.l.b16 %v1214
    %v4359 = vunpack.c.h.b16 %v1214
    %v4360 = vunpack.c.l.b16 %v1215
    %v4361 = vunpack.c.h.b16 %v1215
    %v4362 = vpack.c.b16 %v2322, %v2314
    %v4363 = vpack.c.b16 %v2323, %v2315
    %v4364 = vpack.c.b16 %v2324, %v2316
    %v4365 = vpack.c.b16 %v2325, %v2317
    %v4366 = vpack.c.b16 %v2326, %v2318
    %v4367 = vpack.c.b16 %v2327, %v2319
    %v4368 = vpack.c.b16 %v2328, %v2320
    %v4369 = vpack.c.b16 %v2329, %v2321
    %v4370 = vpack.c.b16 %v2338, %v2330
    %v4371 = vpack.c.b16 %v2339, %v2331
    %v4372 = vpack.c.b16 %v2340, %v2332
    %v4373 = vpack.c.b16 %v2341, %v2333
    %v4374 = vpack.c.b16 %v2342, %v2334
    %v4375 = vpack.c.b16 %v2343, %v2335
    %v4376 = vpack.c.b16 %v2344, %v2336
    %v4377 = vpack.c.b16 %v2345, %v2337
    %v4378 = vpack.c.b16 %v2354, %v2346
    %v4379 = vpack.c.b16 %v2355, %v2347
    %v4380 = vpack.c.b16 %v2356, %v2348
    %v4381 = vpack.c.b16 %v2357, %v2349
    %v4382 = vpack.c.b16 %v2358, %v2350
    %v4383 = vpack.c.b16 %v2359, %v2351
    %v4384 = vpack.c.b16 %v2360, %v2352
    %v4385 = vpack.c.b16 %v2361, %v2353
    %v4386 = vpack.c.b16 %v2370, %v2362
    %v4387 = vpack.c.b16 %v2371, %v2363
    %v4388 = vpack.c.b16 %v2372, %v2364
    %v4389 = vpack.c.b16 %v2373, %v2365
    %v4390 = vpack.c.b16 %v2374, %v2366
    %v4391 = vpack.c.b16 %v2375, %v2367
    %v4392 = vpack.c.b16 %v2376, %v2368
    %v4393 = vpack.c.b16 %v2377, %v2369
    %v4394 = vpack.c.b16 %v2386, %v2378
    %v4395 = vpack.c.b16 %v2387, %v2379
    %v4396 = vpack.c.b16 %v2388, %v2380
    %v4397 = vpack.c.b16 %v2389, %v2381
    %v4398 = vpack.c.b16 %v2390, %v2382
    %v4399 = vpack.c.b16 %v2391, %v2383
    %v4400 = vpack.c.b16 %v2392, %v2384
    %v4401 = vpack.c.b16 %v2393, %v2385
    %v4402 = vpack.c.b16 %v2402, %v2394
    %v4403 = vpack.c.b16 %v2403, %v2395
    %v4404 = vpack.c.b16 %v2404, %v2396
    %v4405 = vpack.c.b16 %v2405, %v2397
    %v4406 = vpack.c.b16 %v2406, %v2398
    %v4407 = vpack.c.b16 %v2407, %v2399
    %v4408 = vpack.c.b16 %v2408, %v2400
    %v4409 = vpack.c.b16 %v2409, %v2401
    %v4410 = vpack.c.b16 %v2418, %v2410
    %v4411 = vpack.c.b16 %v2419, %v2411
    %v4412 = vpack.c.b16 %v2420, %v2412
    %v4413 = vpack.c.b16 %v2421, %v2413
    %v4414 = vpack.c.b16 %v2422, %v2414
    %v4415 = vpack.c.b16 %v2423, %v2415
    %v4416 = vpack.c.b16 %v2424, %v2416
    %v4417 = vpack.c.b16 %v2425, %v2417
    %v4418 = vpack.c.b16 %v2434, %v2426
    %v4419 = vpack.c.b16 %v2435, %v2427
    %v4420 = vpack.c.b16 %v2436, %v2428
    %v4421 = vpack.c.b16 %v2437, %v2429
    %v4422 = vpack.c.b16 %v2438, %v2430
    %v4423 = vpack.c.b16 %v2439, %v2431
    %v4424 = vpack.c.b16 %v2440, %v2432
    %v4425 = vpack.c.b16 %v2441, %v2433
    %v4426 = vpack.c.b16 %v2450, %v2442
    %v4427 = vpack.c.b16 %v2451, %v2443
    %v4428 = vpack.c.b16 %v2452, %v2444
    %v4429 = vpack.c.b16 %v2453, %v2445
    %v4430 = vpack.c.b16 %v2454, %v2446
    %v4431 = vpack.c.b16 %v2455, %v2447
    %v4432 = vpack.c.b16 %v2456, %v2448
    %v4433 = vpack.c.b16 %v2457, %v2449
    %v4434 = vpack.c.b16 %v2466, %v2458
    %v4435 = vpack.c.b16 %v2467, %v2459
    %v4436 = vpack.c.b16 %v2468, %v2460
    %v4437 = vpack.c.b16 %v2469, %v2461
    %v4438 = vpack.c.b16 %v2470, %v2462
    %v4439 = vpack.c.b16 %v2471, %v2463
    %v4440 = vpack.c.b16 %v2472, %v2464
    %v4441 = vpack.c.b16 %v2473, %v2465
    %v4442 = vpack.c.b16 %v2482, %v2474
    %v4443 = vpack.c.b16 %v2483, %v2475
    %v4444 = vpack.c.b16 %v2484, %v2476
    %v4445 = vpack.c.b16 %v2485, %v2477
    %v4446 = vpack.c.b16 %v2486, %v2478
    %v4447 = vpack.c.b16 %v2487, %v2479
    %v4448 = vpack.c.b16 %v2488, %v2480
    %v4449 = vpack.c.b16 %v2489, %v2481
    %v4450 = vpack.c.b16 %v2498, %v2490
    %v4451 = vpack.c.b16 %v2499, %v2491
    %v4452 = vpack.c.b16 %v2500, %v2492
    %v4453 = vpack.c.b16 %v2501, %v2493
    %v4454 = vpack.c.b16 %v2502, %v2494
    %v4455 = vpack.c.b16 %v2503, %v2495
    %v4456 = vpack.c.b16 %v2504, %v2496
    %v4457 = vpack.c.b16 %v2505, %v2497
    %v4458 = vpack.c.b16 %v2514, %v2506
    %v4459 = vpack.c.b16 %v2515, %v2507
    %v4460 = vpack.c.b16 %v2516, %v2508
    %v4461 = vpack.c.b16 %v2517, %v2509
    %v4462 = vpack.c.b16 %v2518, %v2510
    %v4463 = vpack.c.b16 %v2519, %v2511
    %v4464 = vpack.c.b16 %v2520, %v2512
    %v4465 = vpack.c.b16 %v2521, %v2513
    %v4466 = vpack.c.b16 %v2530, %v2522
    %v4467 = vpack.c.b16 %v2531, %v2523
    %v4468 = vpack.c.b16 %v2532, %v2524
    %v4469 = vpack.c.b16 %v2533, %v2525
    %v4470 = vpack.c.b16 %v2534, %v2526
    %v4471 = vpack.c.b16 %v2535, %v2527
    %v4472 = vpack.c.b16 %v2536, %v2528
    %v4473 = vpack.c.b16 %v2537, %v2529
    %v4474 = vpack.c.b16 %v2546, %v2538
    %v4475 = vpack.c.b16 %v2547, %v2539
    %v4476 = vpack.c.b16 %v2548, %v2540
    %v4477 = vpack.c.b16 %v2549, %v2541
    %v4478 = vpack.c.b16 %v2550, %v2542
    %v4479 = vpack.c.b16 %v2551, %v2543
    %v4480 = vpack.c.b16 %v2552, %v2544
    %v4481 = vpack.c.b16 %v2553, %v2545
    %v4482 = vpack.c.b16 %v2562, %v2554
    %v4483 = vpack.c.b16 %v2563, %v2555
    %v4484 = vpack.c.b16 %v2564, %v2556
    %v4485 = vpack.c.b16 %v2565, %v2557
    %v4486 = vpack.c.b16 %v2566, %v2558
    %v4487 = vpack.c.b16 %v2567, %v2559
    %v4488 = vpack.c.b16 %v2568, %v2560
    %v4489 = vpack.c.b16 %v2569, %v2561
    %v4490 = vpack.c.b16 %v2578, %v2570
    %v4491 = vpack.c.b16 %v2579, %v2571
    %v4492 = vpack.c.b16 %v2580, %v2572
    %v4493 = vpack.c.b16 %v2581, %v2573
    %v4494 = vpack.c.b16 %v2582, %v2574
    %v4495 = vpack.c.b16 %v2583, %v2575
    %v4496 = vpack.c.b16 %v2584, %v2576
    %v4497 = vpack.c.b16 %v2585, %v2577
    %v4498 = vpack.c.b16 %v2594, %v2586
    %v4499 = vpack.c.b16 %v2595, %v2587
    %v4500 = vpack.c.b16 %v2596, %v2588
    %v4501 = vpack.c.b16 %v2597, %v2589
    %v4502 = vpack.c.b16 %v2598, %v2590
    %v4503 = vpack.c.b16 %v2599, %v2591
    %v4504 = vpack.c.b16 %v2600, %v2592
    %v4505 = vpack.c.b16 %v2601, %v2593
    %v4506 = vpack.c.b16 %v2610, %v2602
    %v4507 = vpack.c.b16 %v2611, %v2603
    %v4508 = vpack.c.b16 %v2612, %v2604
    %v4509 = vpack.c.b16 %v2613, %v2605
    %v4510 = vpack.c.b16 %v2614, %v2606
    %v4511 = vpack.c.b16 %v2615, %v2607
    %v4512 = vpack.c.b16 %v2616, %v2608
    %v4513 = vpack.c.b16 %v2617, %v2609
    %v4514 = vpack.c.b16 %v2626, %v2618
    %v4515 = vpack.c.b16 %v2627, %v2619
    %v4516 = vpack.c.b16 %v2628, %v2620
    %v4517 = vpack.c.b16 %v2629, %v2621
    %v4518 = vpack.c.b16 %v2630, %v2622
    %v4519 = vpack.c.b16 %v2631, %v2623
    %v4520 = vpack.c.b16 %v2632, %v2624
    %v4521 = vpack.c.b16 %v2633, %v2625
    %v4522 = vpack.c.b16 %v2642, %v2634
    %v4523 = vpack.c.b16 %v2643, %v2635
    %v4524 = vpack.c.b16 %v2644, %v2636
    %v4525 = vpack.c.b16 %v2645, %v2637
    %v4526 = vpack.c.b16 %v2646, %v2638
    %v4527 = vpack.c.b16 %v2647, %v2639
    %v4528 = vpack.c.b16 %v2648, %v2640
    %v4529 = vpack.c.b16 %v2649, %v2641
    %v4530 = vpack.c.b16 %v2658, %v2650
    %v4531 = vpack.c.b16 %v2659, %v2651
    %v4532 = vpack.c.b16 %v2660, %v2652
    %v4533 = vpack.c.b16 %v2661, %v2653
    %v4534 = vpack.c.b16 %v2662, %v2654
    %v4535 = vpack.c.b16 %v2663, %v2655
    %v4536 = vpack.c.b16 %v2664, %v2656
    %v4537 = vpack.c.b16 %v2665, %v2657
    %v4538 = vpack.c.b16 %v2674, %v2666
    %v4539 = vpack.c.b16 %v2675, %v2667
    %v4540 = vpack.c.b16 %v2676, %v2668
    %v4541 = vpack.c.b16 %v2677, %v2669
    %v4542 = vpack.c.b16 %v2678, %v2670
    %v4543 = vpack.c.b16 %v2679, %v2671
    %v4544 = vpack.c.b16 %v2680, %v2672
    %v4545 = vpack.c.b16 %v2681, %v2673
    %v4546 = vpack.c.b16 %v2690, %v2682
    %v4547 = vpack.c.b16 %v2691, %v2683
    %v4548 = vpack.c.b16 %v2692, %v2684
    %v4549 = vpack.c.b16 %v2693, %v2685
    %v4550 = vpack.c.b16 %v2694, %v2686
    %v4551 = vpack.c.b16 %v2695, %v2687
    %v4552 = vpack.c.b16 %v2696, %v2688
    %v4553 = vpack.c.b16 %v2697, %v2689
    %v4554 = vpack.c.b16 %v2706, %v2698
    %v4555 = vpack.c.b16 %v2707, %v2699
    %v4556 = vpack.c.b16 %v2708, %v2700
    %v4557 = vpack.c.b16 %v2709, %v2701
    %v4558 = vpack.c.b16 %v2710, %v2702
    %v4559 = vpack.c.b16 %v2711, %v2703
    %v4560 = vpack.c.b16 %v2712, %v2704
    %v4561 = vpack.c.b16 %v2713, %v2705
    %v4562 = vpack.c.b16 %v2722, %v2714
    %v4563 = vpack.c.b16 %v2723, %v2715
    %v4564 = vpack.c.b16 %v2724, %v2716
    %v4565 = vpack.c.b16 %v2725, %v2717
    %v4566 = vpack.c.b16 %v2726, %v2718
    %v4567 = vpack.c.b16 %v2727, %v2719
    %v4568 = vpack.c.b16 %v2728, %v2720
    %v4569 = vpack.c.b16 %v2729, %v2721
    %v4570 = vpack.c.b16 %v2738, %v2730
    %v4571 = vpack.c.b16 %v2739, %v2731
    %v4572 = vpack.c.b16 %v2740, %v2732
    %v4573 = vpack.c.b16 %v2741, %v2733
    %v4574 = vpack.c.b16 %v2742, %v2734
    %v4575 = vpack.c.b16 %v2743, %v2735
    %v4576 = vpack.c.b16 %v2744, %v2736
    %v4577 = vpack.c.b16 %v2745, %v2737
    %v4578 = vpack.c.b16 %v2754, %v2746
    %v4579 = vpack.c.b16 %v2755, %v2747
    %v4580 = vpack.c.b16 %v2756, %v2748
    %v4581 = vpack.c.b16 %v2757, %v2749
    %v4582 = vpack.c.b16 %v2758, %v2750
    %v4583 = vpack.c.b16 %v2759, %v2751
    %v4584 = vpack.c.b16 %v2760, %v2752
    %v4585 = vpack.c.b16 %v2761, %v2753
    %v4586 = vpack.c.b16 %v2770, %v2762
    %v4587 = vpack.c.b16 %v2771, %v2763
    %v4588 = vpack.c.b16 %v2772, %v2764
    %v4589 = vpack.c.b16 %v2773, %v2765
    %v4590 = vpack.c.b16 %v2774, %v2766
    %v4591 = vpack.c.b16 %v2775, %v2767
    %v4592 = vpack.c.b16 %v2776, %v2768
    %v4593 = vpack.c.b16 %v2777, %v2769
    %v4594 = vpack.c.b16 %v2786, %v2778
    %v4595 = vpack.c.b16 %v2787, %v2779
    %v4596 = vpack.c.b16 %v2788, %v2780
    %v4597 = vpack.c.b16 %v2789, %v2781
    %v4598 = vpack.c.b16 %v2790, %v2782
    %v4599 = vpack.c.b16 %v2791, %v2783
    %v4600 = vpack.c.b16 %v2792, %v2784
    %v4601 = vpack.c.b16 %v2793, %v2785
    %v4602 = vpack.c.b16 %v2802, %v2794
    %v4603 = vpack.c.b16 %v2803, %v2795
    %v4604 = vpack.c.b16 %v2804, %v2796
    %v4605 = vpack.c.b16 %v2805, %v2797
    %v4606 = vpack.c.b16 %v2806, %v2798
    %v4607 = vpack.c.b16 %v2807, %v2799
    %v4608 = vpack.c.b16 %v2808, %v2800
    %v4609 = vpack.c.b16 %v2809, %v2801
    %v4610 = vpack.c.b16 %v2818, %v2810
    %v4611 = vpack.c.b16 %v2819, %v2811
    %v4612 = vpack.c.b16 %v2820, %v2812
    %v4613 = vpack.c.b16 %v2821, %v2813
    %v4614 = vpack.c.b16 %v2822, %v2814
    %v4615 = vpack.c.b16 %v2823, %v2815
    %v4616 = vpack.c.b16 %v2824, %v2816
    %v4617 = vpack.c.b16 %v2825, %v2817
    %v4618 = vpack.c.b16 %v2834, %v2826
    %v4619 = vpack.c.b16 %v2835, %v2827
    %v4620 = vpack.c.b16 %v2836, %v2828
    %v4621 = vpack.c.b16 %v2837, %v2829
    %v4622 = vpack.c.b16 %v2838, %v2830
    %v4623 = vpack.c.b16 %v2839, %v2831
    %v4624 = vpack.c.b16 %v2840, %v2832
    %v4625 = vpack.c.b16 %v2841, %v2833
    %v4626 = vpack.c.b16 %v2850, %v2842
    %v4627 = vpack.c.b16 %v2851, %v2843
    %v4628 = vpack.c.b16 %v2852, %v2844
    %v4629 = vpack.c.b16 %v2853, %v2845
    %v4630 = vpack.c.b16 %v2854, %v2846
    %v4631 = vpack.c.b16 %v2855, %v2847
    %v4632 = vpack.c.b16 %v2856, %v2848
    %v4633 = vpack.c.b16 %v2857, %v2849
    %v4634 = vpack.c.b16 %v2866, %v2858
    %v4635 = vpack.c.b16 %v2867, %v2859
    %v4636 = vpack.c.b16 %v2868, %v2860
    %v4637 = vpack.c.b16 %v2869, %v2861
    %v4638 = vpack.c.b16 %v2870, %v2862
    %v4639 = vpack.c.b16 %v2871, %v2863
    %v4640 = vpack.c.b16 %v2872, %v2864
    %v4641 = vpack.c.b16 %v2873, %v2865
    %v4642 = vpack.c.b16 %v2882, %v2874
    %v4643 = vpack.c.b16 %v2883, %v2875
    %v4644 = vpack.c.b16 %v2884, %v2876
    %v4645 = vpack.c.b16 %v2885, %v2877
    %v4646 = vpack.c.b16 %v2886, %v2878
    %v4647 = vpack.c.b16 %v2887, %v2879
    %v4648 = vpack.c.b16 %v2888, %v2880
    %v4649 = vpack.c.b16 %v2889, %v2881
    %v4650 = vpack.c.b16 %v2898, %v2890
    %v4651 = vpack.c.b16 %v2899, %v2891
    %v4652 = vpack.c.b16 %v2900, %v2892
    %v4653 = vpack.c.b16 %v2901, %v2893
    %v4654 = vpack.c.b16 %v2902, %v2894
    %v4655 = vpack.c.b16 %v2903, %v2895
    %v4656 = vpack.c.b16 %v2904, %v2896
    %v4657 = vpack.c.b16 %v2905, %v2897
    %v4658 = vpack.c.b16 %v2914, %v2906
    %v4659 = vpack.c.b16 %v2915, %v2907
    %v4660 = vpack.c.b16 %v2916, %v2908
    %v4661 = vpack.c.b16 %v2917, %v2909
    %v4662 = vpack.c.b16 %v2918, %v2910
    %v4663 = vpack.c.b16 %v2919, %v2911
    %v4664 = vpack.c.b16 %v2920, %v2912
    %v4665 = vpack.c.b16 %v2921, %v2913
    %v4666 = vpack.c.b16 %v2930, %v2922
    %v4667 = vpack.c.b16 %v2931, %v2923
    %v4668 = vpack.c.b16 %v2932, %v2924
    %v4669 = vpack.c.b16 %v2933, %v2925
    %v4670 = vpack.c.b16 %v2934, %v2926
    %v4671 = vpack.c.b16 %v2935, %v2927
    %v4672 = vpack.c.b16 %v2936, %v2928
    %v4673 = vpack.c.b16 %v2937, %v2929
    %v4674 = vpack.c.b16 %v2946, %v2938
    %v4675 = vpack.c.b16 %v2947, %v2939
    %v4676 = vpack.c.b16 %v2948, %v2940
    %v4677 = vpack.c.b16 %v2949, %v2941
    %v4678 = vpack.c.b16 %v2950, %v2942
    %v4679 = vpack.c.b16 %v2951, %v2943
    %v4680 = vpack.c.b16 %v2952, %v2944
    %v4681 = vpack.c.b16 %v2953, %v2945
    %v4682 = vpack.c.b16 %v2962, %v2954
    %v4683 = vpack.c.b16 %v2963, %v2955
    %v4684 = vpack.c.b16 %v2964, %v2956
    %v4685 = vpack.c.b16 %v2965, %v2957
    %v4686 = vpack.c.b16 %v2966, %v2958
    %v4687 = vpack.c.b16 %v2967, %v2959
    %v4688 = vpack.c.b16 %v2968, %v2960
    %v4689 = vpack.c.b16 %v2969, %v2961
    %v4690 = vpack.c.b16 %v2978, %v2970
    %v4691 = vpack.c.b16 %v2979, %v2971
    %v4692 = vpack.c.b16 %v2980, %v2972
    %v4693 = vpack.c.b16 %v2981, %v2973
    %v4694 = vpack.c.b16 %v2982, %v2974
    %v4695 = vpack.c.b16 %v2983, %v2975
    %v4696 = vpack.c.b16 %v2984, %v2976
    %v4697 = vpack.c.b16 %v2985, %v2977
    %v4698 = vpack.c.b16 %v2994, %v2986
    %v4699 = vpack.c.b16 %v2995, %v2987
    %v4700 = vpack.c.b16 %v2996, %v2988
    %v4701 = vpack.c.b16 %v2997, %v2989
    %v4702 = vpack.c.b16 %v2998, %v2990
    %v4703 = vpack.c.b16 %v2999, %v2991
    %v4704 = vpack.c.b16 %v3000, %v2992
    %v4705 = vpack.c.b16 %v3001, %v2993
    %v4706 = vpack.c.b16 %v3010, %v3002
    %v4707 = vpack.c.b16 %v3011, %v3003
    %v4708 = vpack.c.b16 %v3012, %v3004
    %v4709 = vpack.c.b16 %v3013, %v3005
    %v4710 = vpack.c.b16 %v3014, %v3006
    %v4711 = vpack.c.b16 %v3015, %v3007
    %v4712 = vpack.c.b16 %v3016, %v3008
    %v4713 = vpack.c.b16 %v3017, %v3009
    %v4714 = vpack.c.b16 %v3026, %v3018
    %v4715 = vpack.c.b16 %v3027, %v3019
    %v4716 = vpack.c.b16 %v3028, %v3020
    %v4717 = vpack.c.b16 %v3029, %v3021
    %v4718 = vpack.c.b16 %v3030, %v3022
    %v4719 = vpack.c.b16 %v3031, %v3023
    %v4720 = vpack.c.b16 %v3032, %v3024
    %v4721 = vpack.c.b16 %v3033, %v3025
    %v4722 = vpack.c.b16 %v3042, %v3034
    %v4723 = vpack.c.b16 %v3043, %v3035
    %v4724 = vpack.c.b16 %v3044, %v3036
    %v4725 = vpack.c.b16 %v3045, %v3037
    %v4726 = vpack.c.b16 %v3046, %v3038
    %v4727 = vpack.c.b16 %v3047, %v3039
    %v4728 = vpack.c.b16 %v3048, %v3040
    %v4729 = vpack.c.b16 %v3049, %v3041
    %v4730 = vpack.c.b16 %v3058, %v3050
    %v4731 = vpack.c.b16 %v3059, %v3051
    %v4732 = vpack.c.b16 %v3060, %v3052
    %v4733 = vpack.c.b16 %v3061, %v3053
    %v4734 = vpack.c.b16 %v3062, %v3054
    %v4735 = vpack.c.b16 %v3063, %v3055
    %v4736 = vpack.c.b16 %v3064, %v3056
    %v4737 = vpack.c.b16 %v3065, %v3057
    %v4738 = vpack.c.b16 %v3074, %v3066
    %v4739 = vpack.c.b16 %v3075, %v3067
    %v4740 = vpack.c.b16 %v3076, %v3068
    %v4741 = vpack.c.b16 %v3077, %v3069
    %v4742 = vpack.c.b16 %v3078, %v3070
    %v4743 = vpack.c.b16 %v3079, %v3071
    %v4744 = vpack.c.b16 %v3080, %v3072
    %v4745 = vpack.c.b16 %v3081, %v3073
    %v4746 = vpack.c.b16 %v3090, %v3082
    %v4747 = vpack.c.b16 %v3091, %v3083
    %v4748 = vpack.c.b16 %v3092, %v3084
    %v4749 = vpack.c.b16 %v3093, %v3085
    %v4750 = vpack.c.b16 %v3094, %v3086
    %v4751 = vpack.c.b16 %v3095, %v3087
    %v4752 = vpack.c.b16 %v3096, %v3088
    %v4753 = vpack.c.b16 %v3097, %v3089
    %v4754 = vpack.c.b16 %v3106, %v3098
    %v4755 = vpack.c.b16 %v3107, %v3099
    %v4756 = vpack.c.b16 %v3108, %v3100
    %v4757 = vpack.c.b16 %v3109, %v3101
    %v4758 = vpack.c.b16 %v3110, %v3102
    %v4759 = vpack.c.b16 %v3111, %v3103
    %v4760 = vpack.c.b16 %v3112, %v3104
    %v4761 = vpack.c.b16 %v3113, %v3105
    %v4762 = vpack.c.b16 %v3122, %v3114
    %v4763 = vpack.c.b16 %v3123, %v3115
    %v4764 = vpack.c.b16 %v3124, %v3116
    %v4765 = vpack.c.b16 %v3125, %v3117
    %v4766 = vpack.c.b16 %v3126, %v3118
    %v4767 = vpack.c.b16 %v3127, %v3119
    %v4768 = vpack.c.b16 %v3128, %v3120
    %v4769 = vpack.c.b16 %v3129, %v3121
    %v4770 = vpack.c.b16 %v3138, %v3130
    %v4771 = vpack.c.b16 %v3139, %v3131
    %v4772 = vpack.c.b16 %v3140, %v3132
    %v4773 = vpack.c.b16 %v3141, %v3133
    %v4774 = vpack.c.b16 %v3142, %v3134
    %v4775 = vpack.c.b16 %v3143, %v3135
    %v4776 = vpack.c.b16 %v3144, %v3136
    %v4777 = vpack.c.b16 %v3145, %v3137
    %v4778 = vpack.c.b16 %v3154, %v3146
    %v4779 = vpack.c.b16 %v3155, %v3147
    %v4780 = vpack.c.b16 %v3156, %v3148
    %v4781 = vpack.c.b16 %v3157, %v3149
    %v4782 = vpack.c.b16 %v3158, %v3150
    %v4783 = vpack.c.b16 %v3159, %v3151
    %v4784 = vpack.c.b16 %v3160, %v3152
    %v4785 = vpack.c.b16 %v3161, %v3153
    %v4786 = vpack.c.b16 %v3170, %v3162
    %v4787 = vpack.c.b16 %v3171, %v3163
    %v4788 = vpack.c.b16 %v3172, %v3164
    %v4789 = vpack.c.b16 %v3173, %v3165
    %v4790 = vpack.c.b16 %v3174, %v3166
    %v4791 = vpack.c.b16 %v3175, %v3167
    %v4792 = vpack.c.b16 %v3176, %v3168
    %v4793 = vpack.c.b16 %v3177, %v3169
    %v4794 = vpack.c.b16 %v3186, %v3178
    %v4795 = vpack.c.b16 %v3187, %v3179
    %v4796 = vpack.c.b16 %v3188, %v3180
    %v4797 = vpack.c.b16 %v3189, %v3181
    %v4798 = vpack.c.b16 %v3190, %v3182
    %v4799 = vpack.c.b16 %v3191, %v3183
    %v4800 = vpack.c.b16 %v3192, %v3184
    %v4801 = vpack.c.b16 %v3193, %v3185
    %v4802 = vpack.c.b16 %v3202, %v3194
    %v4803 = vpack.c.b16 %v3203, %v3195
    %v4804 = vpack.c.b16 %v3204, %v3196
    %v4805 = vpack.c.b16 %v3205, %v3197
    %v4806 = vpack.c.b16 %v3206, %v3198
    %v4807 = vpack.c.b16 %v3207, %v3199
    %v4808 = vpack.c.b16 %v3208, %v3200
    %v4809 = vpack.c.b16 %v3209, %v3201
    %v4810 = vpack.c.b16 %v3218, %v3210
    %v4811 = vpack.c.b16 %v3219, %v3211
    %v4812 = vpack.c.b16 %v3220, %v3212
    %v4813 = vpack.c.b16 %v3221, %v3213
    %v4814 = vpack.c.b16 %v3222, %v3214
    %v4815 = vpack.c.b16 %v3223, %v3215
    %v4816 = vpack.c.b16 %v3224, %v3216
    %v4817 = vpack.c.b16 %v3225, %v3217
    %v4818 = vpack.c.b16 %v3234, %v3226
    %v4819 = vpack.c.b16 %v3235, %v3227
    %v4820 = vpack.c.b16 %v3236, %v3228
    %v4821 = vpack.c.b16 %v3237, %v3229
    %v4822 = vpack.c.b16 %v3238, %v3230
    %v4823 = vpack.c.b16 %v3239, %v3231
    %v4824 = vpack.c.b16 %v3240, %v3232
    %v4825 = vpack.c.b16 %v3241, %v3233
    %v4826 = vpack.c.b16 %v3250, %v3242
    %v4827 = vpack.c.b16 %v3251, %v3243
    %v4828 = vpack.c.b16 %v3252, %v3244
    %v4829 = vpack.c.b16 %v3253, %v3245
    %v4830 = vpack.c.b16 %v3254, %v3246
    %v4831 = vpack.c.b16 %v3255, %v3247
    %v4832 = vpack.c.b16 %v3256, %v3248
    %v4833 = vpack.c.b16 %v3257, %v3249
    %v4834 = vpack.c.b16 %v3266, %v3258
    %v4835 = vpack.c.b16 %v3267, %v3259
    %v4836 = vpack.c.b16 %v3268, %v3260
    %v4837 = vpack.c.b16 %v3269, %v3261
    %v4838 = vpack.c.b16 %v3270, %v3262
    %v4839 = vpack.c.b16 %v3271, %v3263
    %v4840 = vpack.c.b16 %v3272, %v3264
    %v4841 = vpack.c.b16 %v3273, %v3265
    %v4842 = vpack.c.b16 %v3282, %v3274
    %v4843 = vpack.c.b16 %v3283, %v3275
    %v4844 = vpack.c.b16 %v3284, %v3276
    %v4845 = vpack.c.b16 %v3285, %v3277
    %v4846 = vpack.c.b16 %v3286, %v3278
    %v4847 = vpack.c.b16 %v3287, %v3279
    %v4848 = vpack.c.b16 %v3288, %v3280
    %v4849 = vpack.c.b16 %v3289, %v3281
    %v4850 = vpack.c.b16 %v3298, %v3290
    %v4851 = vpack.c.b16 %v3299, %v3291
    %v4852 = vpack.c.b16 %v3300, %v3292
    %v4853 = vpack.c.b16 %v3301, %v3293
    %v4854 = vpack.c.b16 %v3302, %v3294
    %v4855 = vpack.c.b16 %v3303, %v3295
    %v4856 = vpack.c.b16 %v3304, %v3296
    %v4857 = vpack.c.b16 %v3305, %v3297
    %v4858 = vpack.c.b16 %v3314, %v3306
    %v4859 = vpack.c.b16 %v3315, %v3307
    %v4860 = vpack.c.b16 %v3316, %v3308
    %v4861 = vpack.c.b16 %v3317, %v3309
    %v4862 = vpack.c.b16 %v3318, %v3310
    %v4863 = vpack.c.b16 %v3319, %v3311
    %v4864 = vpack.c.b16 %v3320, %v3312
    %v4865 = vpack.c.b16 %v3321, %v3313
    %v4866 = vpack.c.b16 %v3330, %v3322
    %v4867 = vpack.c.b16 %v3331, %v3323
    %v4868 = vpack.c.b16 %v3332, %v3324
    %v4869 = vpack.c.b16 %v3333, %v3325
    %v4870 = vpack.c.b16 %v3334, %v3326
    %v4871 = vpack.c.b16 %v3335, %v3327
    %v4872 = vpack.c.b16 %v3336, %v3328
    %v4873 = vpack.c.b16 %v3337, %v3329
    %v4874 = vpack.c.b16 %v3346, %v3338
    %v4875 = vpack.c.b16 %v3347, %v3339
    %v4876 = vpack.c.b16 %v3348, %v3340
    %v4877 = vpack.c.b16 %v3349, %v3341
    %v4878 = vpack.c.b16 %v3350, %v3342
    %v4879 = vpack.c.b16 %v3351, %v3343
    %v4880 = vpack.c.b16 %v3352, %v3344
    %v4881 = vpack.c.b16 %v3353, %v3345
    %v4882 = vpack.c.b16 %v3362, %v3354
    %v4883 = vpack.c.b16 %v3363, %v3355
    %v4884 = vpack.c.b16 %v3364, %v3356
    %v4885 = vpack.c.b16 %v3365, %v3357
    %v4886 = vpack.c.b16 %v3366, %v3358
    %v4887 = vpack.c.b16 %v3367, %v3359
    %v4888 = vpack.c.b16 %v3368, %v3360
    %v4889 = vpack.c.b16 %v3369, %v3361
    %v4890 = vpack.c.b16 %v3378, %v3370
    %v4891 = vpack.c.b16 %v3379, %v3371
    %v4892 = vpack.c.b16 %v3380, %v3372
    %v4893 = vpack.c.b16 %v3381, %v3373
    %v4894 = vpack.c.b16 %v3382, %v3374
    %v4895 = vpack.c.b16 %v3383, %v3375
    %v4896 = vpack.c.b16 %v3384, %v3376
    %v4897 = vpack.c.b16 %v3385, %v3377
    %v4898 = vpack.c.b16 %v3394, %v3386
    %v4899 = vpack.c.b16 %v3395, %v3387
    %v4900 = vpack.c.b16 %v3396, %v3388
    %v4901 = vpack.c.b16 %v3397, %v3389
    %v4902 = vpack.c.b16 %v3398, %v3390
    %v4903 = vpack.c.b16 %v3399, %v3391
    %v4904 = vpack.c.b16 %v3400, %v3392
    %v4905 = vpack.c.b16 %v3401, %v3393
    %v4906 = vpack.c.b16 %v3410, %v3402
    %v4907 = vpack.c.b16 %v3411, %v3403
    %v4908 = vpack.c.b16 %v3412, %v3404
    %v4909 = vpack.c.b16 %v3413, %v3405
    %v4910 = vpack.c.b16 %v3414, %v3406
    %v4911 = vpack.c.b16 %v3415, %v3407
    %v4912 = vpack.c.b16 %v3416, %v3408
    %v4913 = vpack.c.b16 %v3417, %v3409
    %v4914 = vpack.c.b16 %v3426, %v3418
    %v4915 = vpack.c.b16 %v3427, %v3419
    %v4916 = vpack.c.b16 %v3428, %v3420
    %v4917 = vpack.c.b16 %v3429, %v3421
    %v4918 = vpack.c.b16 %v3430, %v3422
    %v4919 = vpack.c.b16 %v3431, %v3423
    %v4920 = vpack.c.b16 %v3432, %v3424
    %v4921 = vpack.c.b16 %v3433, %v3425
    %v4922 = vpack.c.b16 %v3442, %v3434
    %v4923 = vpack.c.b16 %v3443, %v3435
    %v4924 = vpack.c.b16 %v3444, %v3436
    %v4925 = vpack.c.b16 %v3445, %v3437
    %v4926 = vpack.c.b16 %v3446, %v3438
    %v4927 = vpack.c.b16 %v3447, %v3439
    %v4928 = vpack.c.b16 %v3448, %v3440
    %v4929 = vpack.c.b16 %v3449, %v3441
    %v4930 = vpack.c.b16 %v3458, %v3450
    %v4931 = vpack.c.b16 %v3459, %v3451
    %v4932 = vpack.c.b16 %v3460, %v3452
    %v4933 = vpack.c.b16 %v3461, %v3453
    %v4934 = vpack.c.b16 %v3462, %v3454
    %v4935 = vpack.c.b16 %v3463, %v3455
    %v4936 = vpack.c.b16 %v3464, %v3456
    %v4937 = vpack.c.b16 %v3465, %v3457
    %v4938 = vpack.c.b16 %v3474, %v3466
    %v4939 = vpack.c.b16 %v3475, %v3467
    %v4940 = vpack.c.b16 %v3476, %v3468
    %v4941 = vpack.c.b16 %v3477, %v3469
    %v4942 = vpack.c.b16 %v3478, %v3470
    %v4943 = vpack.c.b16 %v3479, %v3471
    %v4944 = vpack.c.b16 %v3480, %v3472
    %v4945 = vpack.c.b16 %v3481, %v3473
    %v4946 = vpack.c.b16 %v3490, %v3482
    %v4947 = vpack.c.b16 %v3491, %v3483
    %v4948 = vpack.c.b16 %v3492, %v3484
    %v4949 = vpack.c.b16 %v3493, %v3485
    %v4950 = vpack.c.b16 %v3494, %v3486
    %v4951 = vpack.c.b16 %v3495, %v3487
    %v4952 = vpack.c.b16 %v3496, %v3488
    %v4953 = vpack.c.b16 %v3497, %v3489
    %v4954 = vpack.c.b16 %v3506, %v3498
    %v4955 = vpack.c.b16 %v3507, %v3499
    %v4956 = vpack.c.b16 %v3508, %v3500
    %v4957 = vpack.c.b16 %v3509, %v3501
    %v4958 = vpack.c.b16 %v3510, %v3502
    %v4959 = vpack.c.b16 %v3511, %v3503
    %v4960 = vpack.c.b16 %v3512, %v3504
    %v4961 = vpack.c.b16 %v3513, %v3505
    %v4962 = vpack.c.b16 %v3522, %v3514
    %v4963 = vpack.c.b16 %v3523, %v3515
    %v4964 = vpack.c.b16 %v3524, %v3516
    %v4965 = vpack.c.b16 %v3525, %v3517
    %v4966 = vpack.c.b16 %v3526, %v3518
    %v4967 = vpack.c.b16 %v3527, %v3519
    %v4968 = vpack.c.b16 %v3528, %v3520
    %v4969 = vpack.c.b16 %v3529, %v3521
    %v4970 = vpack.c.b16 %v3538, %v3530
    %v4971 = vpack.c.b16 %v3539, %v3531
    %v4972 = vpack.c.b16 %v3540, %v3532
    %v4973 = vpack.c.b16 %v3541, %v3533
    %v4974 = vpack.c.b16 %v3542, %v3534
    %v4975 = vpack.c.b16 %v3543, %v3535
    %v4976 = vpack.c.b16 %v3544, %v3536
    %v4977 = vpack.c.b16 %v3545, %v3537
    %v4978 = vpack.c.b16 %v3554, %v3546
    %v4979 = vpack.c.b16 %v3555, %v3547
    %v4980 = vpack.c.b16 %v3556, %v3548
    %v4981 = vpack.c.b16 %v3557, %v3549
    %v4982 = vpack.c.b16 %v3558, %v3550
    %v4983 = vpack.c.b16 %v3559, %v3551
    %v4984 = vpack.c.b16 %v3560, %v3552
    %v4985 = vpack.c.b16 %v3561, %v3553
    %v4986 = vpack.c.b16 %v3570, %v3562
    %v4987 = vpack.c.b16 %v3571, %v3563
    %v4988 = vpack.c.b16 %v3572, %v3564
    %v4989 = vpack.c.b16 %v3573, %v3565
    %v4990 = vpack.c.b16 %v3574, %v3566
    %v4991 = vpack.c.b16 %v3575, %v3567
    %v4992 = vpack.c.b16 %v3576, %v3568
    %v4993 = vpack.c.b16 %v3577, %v3569
    %v4994 = vpack.c.b16 %v3586, %v3578
    %v4995 = vpack.c.b16 %v3587, %v3579
    %v4996 = vpack.c.b16 %v3588, %v3580
    %v4997 = vpack.c.b16 %v3589, %v3581
    %v4998 = vpack.c.b16 %v3590, %v3582
    %v4999 = vpack.c.b16 %v3591, %v3583
    %v5000 = vpack.c.b16 %v3592, %v3584
    %v5001 = vpack.c.b16 %v3593, %v3585
    %v5002 = vpack.c.b16 %v3602, %v3594
    %v5003 = vpack.c.b16 %v3603, %v3595
    %v5004 = vpack.c.b16 %v3604, %v3596
    %v5005 = vpack.c.b16 %v3605, %v3597
    %v5006 = vpack.c.b16 %v3606, %v3598
    %v5007 = vpack.c.b16 %v3607, %v3599
    %v5008 = vpack.c.b16 %v3608, %v3600
    %v5009 = vpack.c.b16 %v3609, %v3601
    %v5010 = vpack.c.b16 %v3618, %v3610
    %v5011 = vpack.c.b16 %v3619, %v3611
    %v5012 = vpack.c.b16 %v3620, %v3612
    %v5013 = vpack.c.b16 %v3621, %v3613
    %v5014 = vpack.c.b16 %v3622, %v3614
    %v5015 = vpack.c.b16 %v3623, %v3615
    %v5016 = vpack.c.b16 %v3624, %v3616
    %v5017 = vpack.c.b16 %v3625, %v3617
    %v5018 = vpack.c.b16 %v3634, %v3626
    %v5019 = vpack.c.b16 %v3635, %v3627
    %v5020 = vpack.c.b16 %v3636, %v3628
    %v5021 = vpack.c.b16 %v3637, %v3629
    %v5022 = vpack.c.b16 %v3638, %v3630
    %v5023 = vpack.c.b16 %v3639, %v3631
    %v5024 = vpack.c.b16 %v3640, %v3632
    %v5025 = vpack.c.b16 %v3641, %v3633
    %v5026 = vpack.c.b16 %v3650, %v3642
    %v5027 = vpack.c.b16 %v3651, %v3643
    %v5028 = vpack.c.b16 %v3652, %v3644
    %v5029 = vpack.c.b16 %v3653, %v3645
    %v5030 = vpack.c.b16 %v3654, %v3646
    %v5031 = vpack.c.b16 %v3655, %v3647
    %v5032 = vpack.c.b16 %v3656, %v3648
    %v5033 = vpack.c.b16 %v3657, %v3649
    %v5034 = vpack.c.b16 %v3666, %v3658
    %v5035 = vpack.c.b16 %v3667, %v3659
    %v5036 = vpack.c.b16 %v3668, %v3660
    %v5037 = vpack.c.b16 %v3669, %v3661
    %v5038 = vpack.c.b16 %v3670, %v3662
    %v5039 = vpack.c.b16 %v3671, %v3663
    %v5040 = vpack.c.b16 %v3672, %v3664
    %v5041 = vpack.c.b16 %v3673, %v3665
    %v5042 = vpack.c.b16 %v3682, %v3674
    %v5043 = vpack.c.b16 %v3683, %v3675
    %v5044 = vpack.c.b16 %v3684, %v3676
    %v5045 = vpack.c.b16 %v3685, %v3677
    %v5046 = vpack.c.b16 %v3686, %v3678
    %v5047 = vpack.c.b16 %v3687, %v3679
    %v5048 = vpack.c.b16 %v3688, %v3680
    %v5049 = vpack.c.b16 %v3689, %v3681
    %v5050 = vpack.c.b16 %v3698, %v3690
    %v5051 = vpack.c.b16 %v3699, %v3691
    %v5052 = vpack.c.b16 %v3700, %v3692
    %v5053 = vpack.c.b16 %v3701, %v3693
    %v5054 = vpack.c.b16 %v3702, %v3694
    %v5055 = vpack.c.b16 %v3703, %v3695
    %v5056 = vpack.c.b16 %v3704, %v3696
    %v5057 = vpack.c.b16 %v3705, %v3697
    %v5058 = vpack.c.b16 %v3714, %v3706
    %v5059 = vpack.c.b16 %v3715, %v3707
    %v5060 = vpack.c.b16 %v3716, %v3708
    %v5061 = vpack.c.b16 %v3717, %v3709
    %v5062 = vpack.c.b16 %v3718, %v3710
    %v5063 = vpack.c.b16 %v3719, %v3711
    %v5064 = vpack.c.b16 %v3720, %v3712
    %v5065 = vpack.c.b16 %v3721, %v3713
    %v5066 = vpack.c.b16 %v3730, %v3722
    %v5067 = vpack.c.b16 %v3731, %v3723
    %v5068 = vpack.c.b16 %v3732, %v3724
    %v5069 = vpack.c.b16 %v3733, %v3725
    %v5070 = vpack.c.b16 %v3734, %v3726
    %v5071 = vpack.c.b16 %v3735, %v3727
    %v5072 = vpack.c.b16 %v3736, %v3728
    %v5073 = vpack.c.b16 %v3737, %v3729
    %v5074 = vpack.c.b16 %v3746, %v3738
    %v5075 = vpack.c.b16 %v3747, %v3739
    %v5076 = vpack.c.b16 %v3748, %v3740
    %v5077 = vpack.c.b16 %v3749, %v3741
    %v5078 = vpack.c.b16 %v3750, %v3742
    %v5079 = vpack.c.b16 %v3751, %v3743
    %v5080 = vpack.c.b16 %v3752, %v3744
    %v5081 = vpack.c.b16 %v3753, %v3745
    %v5082 = vpack.c.b16 %v3762, %v3754
    %v5083 = vpack.c.b16 %v3763, %v3755
    %v5084 = vpack.c.b16 %v3764, %v3756
    %v5085 = vpack.c.b16 %v3765, %v3757
    %v5086 = vpack.c.b16 %v3766, %v3758
    %v5087 = vpack.c.b16 %v3767, %v3759
    %v5088 = vpack.c.b16 %v3768, %v3760
    %v5089 = vpack.c.b16 %v3769, %v3761
    %v5090 = vpack.c.b16 %v3778, %v3770
    %v5091 = vpack.c.b16 %v3779, %v3771
    %v5092 = vpack.c.b16 %v3780, %v3772
    %v5093 = vpack.c.b16 %v3781, %v3773
    %v5094 = vpack.c.b16 %v3782, %v3774
    %v5095 = vpack.c.b16 %v3783, %v3775
    %v5096 = vpack.c.b16 %v3784, %v3776
    %v5097 = vpack.c.b16 %v3785, %v3777
    %v5098 = vpack.c.b16 %v3794, %v3786
    %v5099 = vpack.c.b16 %v3795, %v3787
    %v5100 = vpack.c.b16 %v3796, %v3788
    %v5101 = vpack.c.b16 %v3797, %v3789
    %v5102 = vpack.c.b16 %v3798, %v3790
    %v5103 = vpack.c.b16 %v3799, %v3791
    %v5104 = vpack.c.b16 %v3800, %v3792
    %v5105 = vpack.c.b16 %v3801, %v3793
    %v5106 = vpack.c.b16 %v3810, %v3802
    %v5107 = vpack.c.b16 %v3811, %v3803
    %v5108 = vpack.c.b16 %v3812, %v3804
    %v5109 = vpack.c.b16 %v3813, %v3805
    %v5110 = vpack.c.b16 %v3814, %v3806
    %v5111 = vpack.c.b16 %v3815, %v3807
    %v5112 = vpack.c.b16 %v3816, %v3808
    %v5113 = vpack.c.b16 %v3817, %v3809
    %v5114 = vpack.c.b16 %v3826, %v3818
    %v5115 = vpack.c.b16 %v3827, %v3819
    %v5116 = vpack.c.b16 %v3828, %v3820
    %v5117 = vpack.c.b16 %v3829, %v3821
    %v5118 = vpack.c.b16 %v3830, %v3822
    %v5119 = vpack.c.b16 %v3831, %v3823
    %v5120 = vpack.c.b16 %v3832, %v3824
    %v5121 = vpack.c.b16 %v3833, %v3825
    %v5122 = vpack.c.b16 %v3842, %v3834
    %v5123 = vpack.c.b16 %v3843, %v3835
    %v5124 = vpack.c.b16 %v3844, %v3836
    %v5125 = vpack.c.b16 %v3845, %v3837
    %v5126 = vpack.c.b16 %v3846, %v3838
    %v5127 = vpack.c.b16 %v3847, %v3839
    %v5128 = vpack.c.b16 %v3848, %v3840
    %v5129 = vpack.c.b16 %v3849, %v3841
    %v5130 = vpack.c.b16 %v3858, %v3850
    %v5131 = vpack.c.b16 %v3859, %v3851
    %v5132 = vpack.c.b16 %v3860, %v3852
    %v5133 = vpack.c.b16 %v3861, %v3853
    %v5134 = vpack.c.b16 %v3862, %v3854
    %v5135 = vpack.c.b16 %v3863, %v3855
    %v5136 = vpack.c.b16 %v3864, %v3856
    %v5137 = vpack.c.b16 %v3865, %v3857
    %v5138 = vpack.c.b16 %v3874, %v3866
    %v5139 = vpack.c.b16 %v3875, %v3867
    %v5140 = vpack.c.b16 %v3876, %v3868
    %v5141 = vpack.c.b16 %v3877, %v3869
    %v5142 = vpack.c.b16 %v3878, %v3870
    %v5143 = vpack.c.b16 %v3879, %v3871
    %v5144 = vpack.c.b16 %v3880, %v3872
    %v5145 = vpack.c.b16 %v3881, %v3873
    %v5146 = vpack.c.b16 %v3890, %v3882
    %v5147 = vpack.c.b16 %v3891, %v3883
    %v5148 = vpack.c.b16 %v3892, %v3884
    %v5149 = vpack.c.b16 %v3893, %v3885
    %v5150 = vpack.c.b16 %v3894, %v3886
    %v5151 = vpack.c.b16 %v3895, %v3887
    %v5152 = vpack.c.b16 %v3896, %v3888
    %v5153 = vpack.c.b16 %v3897, %v3889
    %v5154 = vpack.c.b16 %v3906, %v3898
    %v5155 = vpack.c.b16 %v3907, %v3899
    %v5156 = vpack.c.b16 %v3908, %v3900
    %v5157 = vpack.c.b16 %v3909, %v3901
    %v5158 = vpack.c.b16 %v3910, %v3902
    %v5159 = vpack.c.b16 %v3911, %v3903
    %v5160 = vpack.c.b16 %v3912, %v3904
    %v5161 = vpack.c.b16 %v3913, %v3905
    %v5162 = vpack.c.b16 %v3922, %v3914
    %v5163 = vpack.c.b16 %v3923, %v3915
    %v5164 = vpack.c.b16 %v3924, %v3916
    %v5165 = vpack.c.b16 %v3925, %v3917
    %v5166 = vpack.c.b16 %v3926, %v3918
    %v5167 = vpack.c.b16 %v3927, %v3919
    %v5168 = vpack.c.b16 %v3928, %v3920
    %v5169 = vpack.c.b16 %v3929, %v3921
    %v5170 = vpack.c.b16 %v3938, %v3930
    %v5171 = vpack.c.b16 %v3939, %v3931
    %v5172 = vpack.c.b16 %v3940, %v3932
    %v5173 = vpack.c.b16 %v3941, %v3933
    %v5174 = vpack.c.b16 %v3942, %v3934
    %v5175 = vpack.c.b16 %v3943, %v3935
    %v5176 = vpack.c.b16 %v3944, %v3936
    %v5177 = vpack.c.b16 %v3945, %v3937
    %v5178 = vpack.c.b16 %v3954, %v3946
    %v5179 = vpack.c.b16 %v3955, %v3947
    %v5180 = vpack.c.b16 %v3956, %v3948
    %v5181 = vpack.c.b16 %v3957, %v3949
    %v5182 = vpack.c.b16 %v3958, %v3950
    %v5183 = vpack.c.b16 %v3959, %v3951
    %v5184 = vpack.c.b16 %v3960, %v3952
    %v5185 = vpack.c.b16 %v3961, %v3953
    %v5186 = vpack.c.b16 %v3970, %v3962
    %v5187 = vpack.c.b16 %v3971, %v3963
    %v5188 = vpack.c.b16 %v3972, %v3964
    %v5189 = vpack.c.b16 %v3973, %v3965
    %v5190 = vpack.c.b16 %v3974, %v3966
    %v5191 = vpack.c.b16 %v3975, %v3967
    %v5192 = vpack.c.b16 %v3976, %v3968
    %v5193 = vpack.c.b16 %v3977, %v3969
    %v5194 = vpack.c.b16 %v3986, %v3978
    %v5195 = vpack.c.b16 %v3987, %v3979
    %v5196 = vpack.c.b16 %v3988, %v3980
    %v5197 = vpack.c.b16 %v3989, %v3981
    %v5198 = vpack.c.b16 %v3990, %v3982
    %v5199 = vpack.c.b16 %v3991, %v3983
    %v5200 = vpack.c.b16 %v3992, %v3984
    %v5201 = vpack.c.b16 %v3993, %v3985
    %v5202 = vpack.c.b16 %v4002, %v3994
    %v5203 = vpack.c.b16 %v4003, %v3995
    %v5204 = vpack.c.b16 %v4004, %v3996
    %v5205 = vpack.c.b16 %v4005, %v3997
    %v5206 = vpack.c.b16 %v4006, %v3998
    %v5207 = vpack.c.b16 %v4007, %v3999
    %v5208 = vpack.c.b16 %v4008, %v4000
    %v5209 = vpack.c.b16 %v4009, %v4001
    %v5210 = vpack.c.b16 %v4018, %v4010
    %v5211 = vpack.c.b16 %v4019, %v4011
    %v5212 = vpack.c.b16 %v4020, %v4012
    %v5213 = vpack.c.b16 %v4021, %v4013
    %v5214 = vpack.c.b16 %v4022, %v4014
    %v5215 = vpack.c.b16 %v4023, %v4015
    %v5216 = vpack.c.b16 %v4024, %v4016
    %v5217 = vpack.c.b16 %v4025, %v4017
    %v5218 = vpack.c.b16 %v4034, %v4026
    %v5219 = vpack.c.b16 %v4035, %v4027
    %v5220 = vpack.c.b16 %v4036, %v4028
    %v5221 = vpack.c.b16 %v4037, %v4029
    %v5222 = vpack.c.b16 %v4038, %v4030
    %v5223 = vpack.c.b16 %v4039, %v4031
    %v5224 = vpack.c.b16 %v4040, %v4032
    %v5225 = vpack.c.b16 %v4041, %v4033
    %v5226 = vpack.c.b16 %v4050, %v4042
    %v5227 = vpack.c.b16 %v4051, %v4043
    %v5228 = vpack.c.b16 %v4052, %v4044
    %v5229 = vpack.c.b16 %v4053, %v4045
    %v5230 = vpack.c.b16 %v4054, %v4046
    %v5231 = vpack.c.b16 %v4055, %v4047
    %v5232 = vpack.c.b16 %v4056, %v4048
    %v5233 = vpack.c.b16 %v4057, %v4049
    %v5234 = vpack.c.b16 %v4066, %v4058
    %v5235 = vpack.c.b16 %v4067, %v4059
    %v5236 = vpack.c.b16 %v4068, %v4060
    %v5237 = vpack.c.b16 %v4069, %v4061
    %v5238 = vpack.c.b16 %v4070, %v4062
    %v5239 = vpack.c.b16 %v4071, %v4063
    %v5240 = vpack.c.b16 %v4072, %v4064
    %v5241 = vpack.c.b16 %v4073, %v4065
    %v5242 = vpack.c.b16 %v4082, %v4074
    %v5243 = vpack.c.b16 %v4083, %v4075
    %v5244 = vpack.c.b16 %v4084, %v4076
    %v5245 = vpack.c.b16 %v4085, %v4077
    %v5246 = vpack.c.b16 %v4086, %v4078
    %v5247 = vpack.c.b16 %v4087, %v4079
    %v5248 = vpack.c.b16 %v4088, %v4080
    %v5249 = vpack.c.b16 %v4089, %v4081
    %v5250 = vpack.c.b16 %v4098, %v4090
    %v5251 = vpack.c.b16 %v4099, %v4091
    %v5252 = vpack.c.b16 %v4100, %v4092
    %v5253 = vpack.c.b16 %v4101, %v4093
    %v5254 = vpack.c.b16 %v4102, %v4094
    %v5255 = vpack.c.b16 %v4103, %v4095
    %v5256 = vpack.c.b16 %v4104, %v4096
    %v5257 = vpack.c.b16 %v4105, %v4097
    %v5258 = vpack.c.b16 %v4114, %v4106
    %v5259 = vpack.c.b16 %v4115, %v4107
    %v5260 = vpack.c.b16 %v4116, %v4108
    %v5261 = vpack.c.b16 %v4117, %v4109
    %v5262 = vpack.c.b16 %v4118, %v4110
    %v5263 = vpack.c.b16 %v4119, %v4111
    %v5264 = vpack.c.b16 %v4120, %v4112
    %v5265 = vpack.c.b16 %v4121, %v4113
    %v5266 = vpack.c.b16 %v4130, %v4122
    %v5267 = vpack.c.b16 %v4131, %v4123
    %v5268 = vpack.c.b16 %v4132, %v4124
    %v5269 = vpack.c.b16 %v4133, %v4125
    %v5270 = vpack.c.b16 %v4134, %v4126
    %v5271 = vpack.c.b16 %v4135, %v4127
    %v5272 = vpack.c.b16 %v4136, %v4128
    %v5273 = vpack.c.b16 %v4137, %v4129
    %v5274 = vpack.c.b16 %v4146, %v4138
    %v5275 = vpack.c.b16 %v4147, %v4139
    %v5276 = vpack.c.b16 %v4148, %v4140
    %v5277 = vpack.c.b16 %v4149, %v4141
    %v5278 = vpack.c.b16 %v4150, %v4142
    %v5279 = vpack.c.b16 %v4151, %v4143
    %v5280 = vpack.c.b16 %v4152, %v4144
    %v5281 = vpack.c.b16 %v4153, %v4145
    %v5282 = vpack.c.b16 %v4162, %v4154
    %v5283 = vpack.c.b16 %v4163, %v4155
    %v5284 = vpack.c.b16 %v4164, %v4156
    %v5285 = vpack.c.b16 %v4165, %v4157
    %v5286 = vpack.c.b16 %v4166, %v4158
    %v5287 = vpack.c.b16 %v4167, %v4159
    %v5288 = vpack.c.b16 %v4168, %v4160
    %v5289 = vpack.c.b16 %v4169, %v4161
    %v5290 = vpack.c.b16 %v4178, %v4170
    %v5291 = vpack.c.b16 %v4179, %v4171
    %v5292 = vpack.c.b16 %v4180, %v4172
    %v5293 = vpack.c.b16 %v4181, %v4173
    %v5294 = vpack.c.b16 %v4182, %v4174
    %v5295 = vpack.c.b16 %v4183, %v4175
    %v5296 = vpack.c.b16 %v4184, %v4176
    %v5297 = vpack.c.b16 %v4185, %v4177
    %v5298 = vpack.c.b16 %v4194, %v4186
    %v5299 = vpack.c.b16 %v4195, %v4187
    %v5300 = vpack.c.b16 %v4196, %v4188
    %v5301 = vpack.c.b16 %v4197, %v4189
    %v5302 = vpack.c.b16 %v4198, %v4190
    %v5303 = vpack.c.b16 %v4199, %v4191
    %v5304 = vpack.c.b16 %v4200, %v4192
    %v5305 = vpack.c.b16 %v4201, %v4193
    %v5306 = vpack.c.b16 %v4210, %v4202
    %v5307 = vpack.c.b16 %v4211, %v4203
    %v5308 = vpack.c.b16 %v4212, %v4204
    %v5309 = vpack.c.b16 %v4213, %v4205
    %v5310 = vpack.c.b16 %v4214, %v4206
    %v5311 = vpack.c.b16 %v4215, %v4207
    %v5312 = vpack.c.b16 %v4216, %v4208
    %v5313 = vpack.c.b16 %v4217, %v4209
    %v5314 = vpack.c.b16 %v4226, %v4218
    %v5315 = vpack.c.b16 %v4227, %v4219
    %v5316 = vpack.c.b16 %v4228, %v4220
    %v5317 = vpack.c.b16 %v4229, %v4221
    %v5318 = vpack.c.b16 %v4230, %v4222
    %v5319 = vpack.c.b16 %v4231, %v4223
    %v5320 = vpack.c.b16 %v4232, %v4224
    %v5321 = vpack.c.b16 %v4233, %v4225
    %v5322 = vpack.c.b16 %v4242, %v4234
    %v5323 = vpack.c.b16 %v4243, %v4235
    %v5324 = vpack.c.b16 %v4244, %v4236
    %v5325 = vpack.c.b16 %v4245, %v4237
    %v5326 = vpack.c.b16 %v4246, %v4238
    %v5327 = vpack.c.b16 %v4247, %v4239
    %v5328 = vpack.c.b16 %v4248, %v4240
    %v5329 = vpack.c.b16 %v4249, %v4241
    %v5330 = vpack.c.b16 %v4258, %v4250
    %v5331 = vpack.c.b16 %v4259, %v4251
    %v5332 = vpack.c.b16 %v4260, %v4252
    %v5333 = vpack.c.b16 %v4261, %v4253
    %v5334 = vpack.c.b16 %v4262, %v4254
    %v5335 = vpack.c.b16 %v4263, %v4255
    %v5336 = vpack.c.b16 %v4264, %v4256
    %v5337 = vpack.c.b16 %v4265, %v4257
    %v5338 = vpack.c.b16 %v4274, %v4266
    %v5339 = vpack.c.b16 %v4275, %v4267
    %v5340 = vpack.c.b16 %v4276, %v4268
    %v5341 = vpack.c.b16 %v4277, %v4269
    %v5342 = vpack.c.b16 %v4278, %v4270
    %v5343 = vpack.c.b16 %v4279, %v4271
    %v5344 = vpack.c.b16 %v4280, %v4272
    %v5345 = vpack.c.b16 %v4281, %v4273
    %v5346 = vpack.c.b16 %v4290, %v4282
    %v5347 = vpack.c.b16 %v4291, %v4283
    %v5348 = vpack.c.b16 %v4292, %v4284
    %v5349 = vpack.c.b16 %v4293, %v4285
    %v5350 = vpack.c.b16 %v4294, %v4286
    %v5351 = vpack.c.b16 %v4295, %v4287
    %v5352 = vpack.c.b16 %v4296, %v4288
    %v5353 = vpack.c.b16 %v4297, %v4289
    %v5354 = vpack.c.b16 %v4306, %v4298
    %v5355 = vpack.c.b16 %v4307, %v4299
    %v5356 = vpack.c.b16 %v4308, %v4300
    %v5357 = vpack.c.b16 %v4309, %v4301
    %v5358 = vpack.c.b16 %v4310, %v4302
    %v5359 = vpack.c.b16 %v4311, %v4303
    %v5360 = vpack.c.b16 %v4312, %v4304
    %v5361 = vpack.c.b16 %v4313, %v4305
    %v5362 = vpack.c.b16 %v4322, %v4314
    %v5363 = vpack.c.b16 %v4323, %v4315
    %v5364 = vpack.c.b16 %v4324, %v4316
    %v5365 = vpack.c.b16 %v4325, %v4317
    %v5366 = vpack.c.b16 %v4326, %v4318
    %v5367 = vpack.c.b16 %v4327, %v4319
    %v5368 = vpack.c.b16 %v4328, %v4320
    %v5369 = vpack.c.b16 %v4329, %v4321
    %v5370 = vpack.c.b16 %v4338, %v4330
    %v5371 = vpack.c.b16 %v4339, %v4331
    %v5372 = vpack.c.b16 %v4340, %v4332
    %v5373 = vpack.c.b16 %v4341, %v4333
    %v5374 = vpack.c.b16 %v4342, %v4334
    %v5375 = vpack.c.b16 %v4343, %v4335
    %v5376 = vpack.c.b16 %v4344, %v4336
    %v5377 = vpack.c.b16 %v4345, %v4337
    %v5378 = vpack.c.b16 %v4354, %v4346
    %v5379 = vpack.c.b16 %v4355, %v4347
    %v5380 = vpack.c.b16 %v4356, %v4348
    %v5381 = vpack.c.b16 %v4357, %v4349
    %v5382 = vpack.c.b16 %v4358, %v4350
    %v5383 = vpack.c.b16 %v4359, %v4351
    %v5384 = vpack.c.b16 %v4360, %v4352
    %v5385 = vpack.c.b16 %v4361, %v4353
    %6410 = vmatpush.bf16.msra.mxu0 %v4418
    %6411 = vmatpush.bf16.msra.mxu0 %v4410
    %6412 = vmatpush.bf16.msra.mxu0 %v4402
    %6413 = vmatpush.bf16.msra.mxu0 %v4394
    %6414 = vmatpush.bf16.msra.mxu0 %v4386
    %6415 = vmatpush.bf16.msra.mxu0 %v4378
    %6416 = vmatpush.bf16.msra.mxu0 %v4370
    %6417 = vmatpush.bf16.msra.mxu0 %v4362
    %6418 = vmatmul.bf16.gmra.mxu0 %v1258
    %v6419 = vpop.f32.mrf.mxu0
    %v6420 = vadd.f32 %v1218, %v6419
    %v6421 = vpop.f32.mrf.mxu0
    %6422 = vdwg.mxu0
    %6423 = vmatpush.bf16.msra.mxu0 %v4482
    %6424 = vmatpush.bf16.msra.mxu0 %v4474
    %6425 = vmatpush.bf16.msra.mxu0 %v4466
    %6426 = vmatpush.bf16.msra.mxu0 %v4458
    %6427 = vmatpush.bf16.msra.mxu0 %v4450
    %6428 = vmatpush.bf16.msra.mxu0 %v4442
    %6429 = vmatpush.bf16.msra.mxu0 %v4434
    %6430 = vmatpush.bf16.msra.mxu0 %v4426
    %6431 = vmatmul.bf16.gmra.mxu0 %v1259
    %v6432 = vpop.f32.mrf.mxu0
    %v6433 = vadd.f32 %v6420, %v6432
    %v6434 = vpop.f32.mrf.mxu0
    %6435 = vdwg.mxu0
    %6436 = vmatpush.bf16.msra.mxu0 %v4546
    %6437 = vmatpush.bf16.msra.mxu0 %v4538
    %6438 = vmatpush.bf16.msra.mxu0 %v4530
    %6439 = vmatpush.bf16.msra.mxu0 %v4522
    %6440 = vmatpush.bf16.msra.mxu0 %v4514
    %6441 = vmatpush.bf16.msra.mxu0 %v4506
    %6442 = vmatpush.bf16.msra.mxu0 %v4498
    %6443 = vmatpush.bf16.msra.mxu0 %v4490
    %6444 = vmatmul.bf16.gmra.mxu0 %v1260
    %v6445 = vpop.f32.mrf.mxu0
    %v6446 = vadd.f32 %v6433, %v6445
    %v6447 = vpop.f32.mrf.mxu0
    %6448 = vdwg.mxu0
    %6449 = vmatpush.bf16.msra.mxu0 %v4610
    %6450 = vmatpush.bf16.msra.mxu0 %v4602
    %6451 = vmatpush.bf16.msra.mxu0 %v4594
    %6452 = vmatpush.bf16.msra.mxu0 %v4586
    %6453 = vmatpush.bf16.msra.mxu0 %v4578
    %6454 = vmatpush.bf16.msra.mxu0 %v4570
    %6455 = vmatpush.bf16.msra.mxu0 %v4562
    %6456 = vmatpush.bf16.msra.mxu0 %v4554
    %6457 = vmatmul.bf16.gmra.mxu0 %v1261
    %v6458 = vpop.f32.mrf.mxu0
    %v6459 = vadd.f32 %v6446, %v6458
    %v6460 = vpop.f32.mrf.mxu0
    %6461 = vdwg.mxu0
    %6462 = vmatpush.bf16.msra.mxu0 %v4674
    %6463 = vmatpush.bf16.msra.mxu0 %v4666
    %6464 = vmatpush.bf16.msra.mxu0 %v4658
    %6465 = vmatpush.bf16.msra.mxu0 %v4650
    %6466 = vmatpush.bf16.msra.mxu0 %v4642
    %6467 = vmatpush.bf16.msra.mxu0 %v4634
    %6468 = vmatpush.bf16.msra.mxu0 %v4626
    %6469 = vmatpush.bf16.msra.mxu0 %v4618
    %6470 = vmatmul.bf16.gmra.mxu0 %v1262
    %v6471 = vpop.f32.mrf.mxu0
    %v6472 = vadd.f32 %v6459, %v6471
    %v6473 = vpop.f32.mrf.mxu0
    %6474 = vdwg.mxu0
    %6475 = vmatpush.bf16.msra.mxu0 %v4738
    %6476 = vmatpush.bf16.msra.mxu0 %v4730
    %6477 = vmatpush.bf16.msra.mxu0 %v4722
    %6478 = vmatpush.bf16.msra.mxu0 %v4714
    %6479 = vmatpush.bf16.msra.mxu0 %v4706
    %6480 = vmatpush.bf16.msra.mxu0 %v4698
    %6481 = vmatpush.bf16.msra.mxu0 %v4690
    %6482 = vmatpush.bf16.msra.mxu0 %v4682
    %6483 = vmatmul.bf16.gmra.mxu0 %v1263
    %v6484 = vpop.f32.mrf.mxu0
    %v6485 = vadd.f32 %v6472, %v6484
    %v6486 = vpop.f32.mrf.mxu0
    %6487 = vdwg.mxu0
    %6488 = vmatpush.bf16.msra.mxu0 %v4802
    %6489 = vmatpush.bf16.msra.mxu0 %v4794
    %6490 = vmatpush.bf16.msra.mxu0 %v4786
    %6491 = vmatpush.bf16.msra.mxu0 %v4778
    %6492 = vmatpush.bf16.msra.mxu0 %v4770
    %6493 = vmatpush.bf16.msra.mxu0 %v4762
    %6494 = vmatpush.bf16.msra.mxu0 %v4754
    %6495 = vmatpush.bf16.msra.mxu0 %v4746
    %6496 = vmatmul.bf16.gmra.mxu0 %v1264
    %v6497 = vpop.f32.mrf.mxu0
    %v6498 = vadd.f32 %v6485, %v6497
    %v6499 = vpop.f32.mrf.mxu0
    %6500 = vdwg.mxu0
    %6501 = vmatpush.bf16.msra.mxu0 %v4866
    %6502 = vmatpush.bf16.msra.mxu0 %v4858
    %6503 = vmatpush.bf16.msra.mxu0 %v4850
    %6504 = vmatpush.bf16.msra.mxu0 %v4842
    %6505 = vmatpush.bf16.msra.mxu0 %v4834
    %6506 = vmatpush.bf16.msra.mxu0 %v4826
    %6507 = vmatpush.bf16.msra.mxu0 %v4818
    %6508 = vmatpush.bf16.msra.mxu0 %v4810
    %6509 = vmatmul.bf16.gmra.mxu0 %v1265
    %v6510 = vpop.f32.mrf.mxu0
    %v6511 = vadd.f32 %v6498, %v6510
    %v6512 = vpop.f32.mrf.mxu0
    %6513 = vdwg.mxu0
    %6514 = vmatpush.bf16.msra.mxu0 %v4930
    %6515 = vmatpush.bf16.msra.mxu0 %v4922
    %6516 = vmatpush.bf16.msra.mxu0 %v4914
    %6517 = vmatpush.bf16.msra.mxu0 %v4906
    %6518 = vmatpush.bf16.msra.mxu0 %v4898
    %6519 = vmatpush.bf16.msra.mxu0 %v4890
    %6520 = vmatpush.bf16.msra.mxu0 %v4882
    %6521 = vmatpush.bf16.msra.mxu0 %v4874
    %6522 = vmatmul.bf16.gmra.mxu0 %v1266
    %v6523 = vpop.f32.mrf.mxu0
    %v6524 = vadd.f32 %v6511, %v6523
    %v6525 = vpop.f32.mrf.mxu0
    %6526 = vdwg.mxu0
    %6527 = vmatpush.bf16.msra.mxu0 %v4994
    %6528 = vmatpush.bf16.msra.mxu0 %v4986
    %6529 = vmatpush.bf16.msra.mxu0 %v4978
    %6530 = vmatpush.bf16.msra.mxu0 %v4970
    %6531 = vmatpush.bf16.msra.mxu0 %v4962
    %6532 = vmatpush.bf16.msra.mxu0 %v4954
    %6533 = vmatpush.bf16.msra.mxu0 %v4946
    %6534 = vmatpush.bf16.msra.mxu0 %v4938
    %6535 = vmatmul.bf16.gmra.mxu0 %v1267
    %v6536 = vpop.f32.mrf.mxu0
    %v6537 = vadd.f32 %v6524, %v6536
    %v6538 = vpop.f32.mrf.mxu0
    %6539 = vdwg.mxu0
    %6540 = vmatpush.bf16.msra.mxu0 %v5058
    %6541 = vmatpush.bf16.msra.mxu0 %v5050
    %6542 = vmatpush.bf16.msra.mxu0 %v5042
    %6543 = vmatpush.bf16.msra.mxu0 %v5034
    %6544 = vmatpush.bf16.msra.mxu0 %v5026
    %6545 = vmatpush.bf16.msra.mxu0 %v5018
    %6546 = vmatpush.bf16.msra.mxu0 %v5010
    %6547 = vmatpush.bf16.msra.mxu0 %v5002
    %6548 = vmatmul.bf16.gmra.mxu0 %v1268
    %v6549 = vpop.f32.mrf.mxu0
    %v6550 = vadd.f32 %v6537, %v6549
    %v6551 = vpop.f32.mrf.mxu0
    %6552 = vdwg.mxu0
    %6553 = vmatpush.bf16.msra.mxu0 %v5122
    %6554 = vmatpush.bf16.msra.mxu0 %v5114
    %6555 = vmatpush.bf16.msra.mxu0 %v5106
    %6556 = vmatpush.bf16.msra.mxu0 %v5098
    %6557 = vmatpush.bf16.msra.mxu0 %v5090
    %6558 = vmatpush.bf16.msra.mxu0 %v5082
    %6559 = vmatpush.bf16.msra.mxu0 %v5074
    %6560 = vmatpush.bf16.msra.mxu0 %v5066
    %6561 = vmatmul.bf16.gmra.mxu0 %v1269
    %v6562 = vpop.f32.mrf.mxu0
    %v6563 = vadd.f32 %v6550, %v6562
    %v6564 = vpop.f32.mrf.mxu0
    %6565 = vdwg.mxu0
    %6566 = vmatpush.bf16.msra.mxu0 %v5186
    %6567 = vmatpush.bf16.msra.mxu0 %v5178
    %6568 = vmatpush.bf16.msra.mxu0 %v5170
    %6569 = vmatpush.bf16.msra.mxu0 %v5162
    %6570 = vmatpush.bf16.msra.mxu0 %v5154
    %6571 = vmatpush.bf16.msra.mxu0 %v5146
    %6572 = vmatpush.bf16.msra.mxu0 %v5138
    %6573 = vmatpush.bf16.msra.mxu0 %v5130
    %6574 = vmatmul.bf16.gmra.mxu0 %v1270
    %v6575 = vpop.f32.mrf.mxu0
    %v6576 = vadd.f32 %v6563, %v6575
    %v6577 = vpop.f32.mrf.mxu0
    %6578 = vdwg.mxu0
    %6579 = vmatpush.bf16.msra.mxu0 %v5250
    %6580 = vmatpush.bf16.msra.mxu0 %v5242
    %6581 = vmatpush.bf16.msra.mxu0 %v5234
    %6582 = vmatpush.bf16.msra.mxu0 %v5226
    %6583 = vmatpush.bf16.msra.mxu0 %v5218
    %6584 = vmatpush.bf16.msra.mxu0 %v5210
    %6585 = vmatpush.bf16.msra.mxu0 %v5202
    %6586 = vmatpush.bf16.msra.mxu0 %v5194
    %6587 = vmatmul.bf16.gmra.mxu0 %v1271
    %v6588 = vpop.f32.mrf.mxu0
    %v6589 = vadd.f32 %v6576, %v6588
    %v6590 = vpop.f32.mrf.mxu0
    %6591 = vdwg.mxu0
    %6592 = vmatpush.bf16.msra.mxu0 %v5314
    %6593 = vmatpush.bf16.msra.mxu0 %v5306
    %6594 = vmatpush.bf16.msra.mxu0 %v5298
    %6595 = vmatpush.bf16.msra.mxu0 %v5290
    %6596 = vmatpush.bf16.msra.mxu0 %v5282
    %6597 = vmatpush.bf16.msra.mxu0 %v5274
    %6598 = vmatpush.bf16.msra.mxu0 %v5266
    %6599 = vmatpush.bf16.msra.mxu0 %v5258
    %6600 = vmatmul.bf16.gmra.mxu0 %v1272
    %v6601 = vpop.f32.mrf.mxu0
    %v6602 = vadd.f32 %v6589, %v6601
    %v6603 = vpop.f32.mrf.mxu0
    %6604 = vdwg.mxu0
    %6605 = vmatpush.bf16.msra.mxu0 %v5378
    %6606 = vmatpush.bf16.msra.mxu0 %v5370
    %6607 = vmatpush.bf16.msra.mxu0 %v5362
    %6608 = vmatpush.bf16.msra.mxu0 %v5354
    %6609 = vmatpush.bf16.msra.mxu0 %v5346
    %6610 = vmatpush.bf16.msra.mxu0 %v5338
    %6611 = vmatpush.bf16.msra.mxu0 %v5330
    %6612 = vmatpush.bf16.msra.mxu0 %v5322
    %6613 = vmatmul.bf16.gmra.mxu0 %v1273
    %v6614 = vpop.f32.mrf.mxu0
    %v6615 = vadd.f32 %v6602, %v6614
    %v6616 = vpop.f32.mrf.mxu0
    %6617 = vdwg.mxu0
    %6618 = vmatpush.bf16.msra.mxu0 %v4419
    %6619 = vmatpush.bf16.msra.mxu0 %v4411
    %6620 = vmatpush.bf16.msra.mxu0 %v4403
    %6621 = vmatpush.bf16.msra.mxu0 %v4395
    %6622 = vmatpush.bf16.msra.mxu0 %v4387
    %6623 = vmatpush.bf16.msra.mxu0 %v4379
    %6624 = vmatpush.bf16.msra.mxu0 %v4371
    %6625 = vmatpush.bf16.msra.mxu0 %v4363
    %6626 = vmatmul.bf16.gmra.mxu0 %v1258
    %v6627 = vpop.f32.mrf.mxu0
    %v6628 = vadd.f32 %v1219, %v6627
    %v6629 = vpop.f32.mrf.mxu0
    %6630 = vdwg.mxu0
    %6631 = vmatpush.bf16.msra.mxu0 %v4483
    %6632 = vmatpush.bf16.msra.mxu0 %v4475
    %6633 = vmatpush.bf16.msra.mxu0 %v4467
    %6634 = vmatpush.bf16.msra.mxu0 %v4459
    %6635 = vmatpush.bf16.msra.mxu0 %v4451
    %6636 = vmatpush.bf16.msra.mxu0 %v4443
    %6637 = vmatpush.bf16.msra.mxu0 %v4435
    %6638 = vmatpush.bf16.msra.mxu0 %v4427
    %6639 = vmatmul.bf16.gmra.mxu0 %v1259
    %v6640 = vpop.f32.mrf.mxu0
    %v6641 = vadd.f32 %v6628, %v6640
    %v6642 = vpop.f32.mrf.mxu0
    %6643 = vdwg.mxu0
    %6644 = vmatpush.bf16.msra.mxu0 %v4547
    %6645 = vmatpush.bf16.msra.mxu0 %v4539
    %6646 = vmatpush.bf16.msra.mxu0 %v4531
    %6647 = vmatpush.bf16.msra.mxu0 %v4523
    %6648 = vmatpush.bf16.msra.mxu0 %v4515
    %6649 = vmatpush.bf16.msra.mxu0 %v4507
    %6650 = vmatpush.bf16.msra.mxu0 %v4499
    %6651 = vmatpush.bf16.msra.mxu0 %v4491
    %6652 = vmatmul.bf16.gmra.mxu0 %v1260
    %v6653 = vpop.f32.mrf.mxu0
    %v6654 = vadd.f32 %v6641, %v6653
    %v6655 = vpop.f32.mrf.mxu0
    %6656 = vdwg.mxu0
    %6657 = vmatpush.bf16.msra.mxu0 %v4611
    %6658 = vmatpush.bf16.msra.mxu0 %v4603
    %6659 = vmatpush.bf16.msra.mxu0 %v4595
    %6660 = vmatpush.bf16.msra.mxu0 %v4587
    %6661 = vmatpush.bf16.msra.mxu0 %v4579
    %6662 = vmatpush.bf16.msra.mxu0 %v4571
    %6663 = vmatpush.bf16.msra.mxu0 %v4563
    %6664 = vmatpush.bf16.msra.mxu0 %v4555
    %6665 = vmatmul.bf16.gmra.mxu0 %v1261
    %v6666 = vpop.f32.mrf.mxu0
    %v6667 = vadd.f32 %v6654, %v6666
    %v6668 = vpop.f32.mrf.mxu0
    %6669 = vdwg.mxu0
    %6670 = vmatpush.bf16.msra.mxu0 %v4675
    %6671 = vmatpush.bf16.msra.mxu0 %v4667
    %6672 = vmatpush.bf16.msra.mxu0 %v4659
    %6673 = vmatpush.bf16.msra.mxu0 %v4651
    %6674 = vmatpush.bf16.msra.mxu0 %v4643
    %6675 = vmatpush.bf16.msra.mxu0 %v4635
    %6676 = vmatpush.bf16.msra.mxu0 %v4627
    %6677 = vmatpush.bf16.msra.mxu0 %v4619
    %6678 = vmatmul.bf16.gmra.mxu0 %v1262
    %v6679 = vpop.f32.mrf.mxu0
    %v6680 = vadd.f32 %v6667, %v6679
    %v6681 = vpop.f32.mrf.mxu0
    %6682 = vdwg.mxu0
    %6683 = vmatpush.bf16.msra.mxu0 %v4739
    %6684 = vmatpush.bf16.msra.mxu0 %v4731
    %6685 = vmatpush.bf16.msra.mxu0 %v4723
    %6686 = vmatpush.bf16.msra.mxu0 %v4715
    %6687 = vmatpush.bf16.msra.mxu0 %v4707
    %6688 = vmatpush.bf16.msra.mxu0 %v4699
    %6689 = vmatpush.bf16.msra.mxu0 %v4691
    %6690 = vmatpush.bf16.msra.mxu0 %v4683
    %6691 = vmatmul.bf16.gmra.mxu0 %v1263
    %v6692 = vpop.f32.mrf.mxu0
    %v6693 = vadd.f32 %v6680, %v6692
    %v6694 = vpop.f32.mrf.mxu0
    %6695 = vdwg.mxu0
    %6696 = vmatpush.bf16.msra.mxu0 %v4803
    %6697 = vmatpush.bf16.msra.mxu0 %v4795
    %6698 = vmatpush.bf16.msra.mxu0 %v4787
    %6699 = vmatpush.bf16.msra.mxu0 %v4779
    %6700 = vmatpush.bf16.msra.mxu0 %v4771
    %6701 = vmatpush.bf16.msra.mxu0 %v4763
    %6702 = vmatpush.bf16.msra.mxu0 %v4755
    %6703 = vmatpush.bf16.msra.mxu0 %v4747
    %6704 = vmatmul.bf16.gmra.mxu0 %v1264
    %v6705 = vpop.f32.mrf.mxu0
    %v6706 = vadd.f32 %v6693, %v6705
    %v6707 = vpop.f32.mrf.mxu0
    %6708 = vdwg.mxu0
    %6709 = vmatpush.bf16.msra.mxu0 %v4867
    %6710 = vmatpush.bf16.msra.mxu0 %v4859
    %6711 = vmatpush.bf16.msra.mxu0 %v4851
    %6712 = vmatpush.bf16.msra.mxu0 %v4843
    %6713 = vmatpush.bf16.msra.mxu0 %v4835
    %6714 = vmatpush.bf16.msra.mxu0 %v4827
    %6715 = vmatpush.bf16.msra.mxu0 %v4819
    %6716 = vmatpush.bf16.msra.mxu0 %v4811
    %6717 = vmatmul.bf16.gmra.mxu0 %v1265
    %v6718 = vpop.f32.mrf.mxu0
    %v6719 = vadd.f32 %v6706, %v6718
    %v6720 = vpop.f32.mrf.mxu0
    %6721 = vdwg.mxu0
    %6722 = vmatpush.bf16.msra.mxu0 %v4931
    %6723 = vmatpush.bf16.msra.mxu0 %v4923
    %6724 = vmatpush.bf16.msra.mxu0 %v4915
    %6725 = vmatpush.bf16.msra.mxu0 %v4907
    %6726 = vmatpush.bf16.msra.mxu0 %v4899
    %6727 = vmatpush.bf16.msra.mxu0 %v4891
    %6728 = vmatpush.bf16.msra.mxu0 %v4883
    %6729 = vmatpush.bf16.msra.mxu0 %v4875
    %6730 = vmatmul.bf16.gmra.mxu0 %v1266
    %v6731 = vpop.f32.mrf.mxu0
    %v6732 = vadd.f32 %v6719, %v6731
    %v6733 = vpop.f32.mrf.mxu0
    %6734 = vdwg.mxu0
    %6735 = vmatpush.bf16.msra.mxu0 %v4995
    %6736 = vmatpush.bf16.msra.mxu0 %v4987
    %6737 = vmatpush.bf16.msra.mxu0 %v4979
    %6738 = vmatpush.bf16.msra.mxu0 %v4971
    %6739 = vmatpush.bf16.msra.mxu0 %v4963
    %6740 = vmatpush.bf16.msra.mxu0 %v4955
    %6741 = vmatpush.bf16.msra.mxu0 %v4947
    %6742 = vmatpush.bf16.msra.mxu0 %v4939
    %6743 = vmatmul.bf16.gmra.mxu0 %v1267
    %v6744 = vpop.f32.mrf.mxu0
    %v6745 = vadd.f32 %v6732, %v6744
    %v6746 = vpop.f32.mrf.mxu0
    %6747 = vdwg.mxu0
    %6748 = vmatpush.bf16.msra.mxu0 %v5059
    %6749 = vmatpush.bf16.msra.mxu0 %v5051
    %6750 = vmatpush.bf16.msra.mxu0 %v5043
    %6751 = vmatpush.bf16.msra.mxu0 %v5035
    %6752 = vmatpush.bf16.msra.mxu0 %v5027
    %6753 = vmatpush.bf16.msra.mxu0 %v5019
    %6754 = vmatpush.bf16.msra.mxu0 %v5011
    %6755 = vmatpush.bf16.msra.mxu0 %v5003
    %6756 = vmatmul.bf16.gmra.mxu0 %v1268
    %v6757 = vpop.f32.mrf.mxu0
    %v6758 = vadd.f32 %v6745, %v6757
    %v6759 = vpop.f32.mrf.mxu0
    %6760 = vdwg.mxu0
    %6761 = vmatpush.bf16.msra.mxu0 %v5123
    %6762 = vmatpush.bf16.msra.mxu0 %v5115
    %6763 = vmatpush.bf16.msra.mxu0 %v5107
    %6764 = vmatpush.bf16.msra.mxu0 %v5099
    %6765 = vmatpush.bf16.msra.mxu0 %v5091
    %6766 = vmatpush.bf16.msra.mxu0 %v5083
    %6767 = vmatpush.bf16.msra.mxu0 %v5075
    %6768 = vmatpush.bf16.msra.mxu0 %v5067
    %6769 = vmatmul.bf16.gmra.mxu0 %v1269
    %v6770 = vpop.f32.mrf.mxu0
    %v6771 = vadd.f32 %v6758, %v6770
    %v6772 = vpop.f32.mrf.mxu0
    %6773 = vdwg.mxu0
    %6774 = vmatpush.bf16.msra.mxu0 %v5187
    %6775 = vmatpush.bf16.msra.mxu0 %v5179
    %6776 = vmatpush.bf16.msra.mxu0 %v5171
    %6777 = vmatpush.bf16.msra.mxu0 %v5163
    %6778 = vmatpush.bf16.msra.mxu0 %v5155
    %6779 = vmatpush.bf16.msra.mxu0 %v5147
    %6780 = vmatpush.bf16.msra.mxu0 %v5139
    %6781 = vmatpush.bf16.msra.mxu0 %v5131
    %6782 = vmatmul.bf16.gmra.mxu0 %v1270
    %v6783 = vpop.f32.mrf.mxu0
    %v6784 = vadd.f32 %v6771, %v6783
    %v6785 = vpop.f32.mrf.mxu0
    %6786 = vdwg.mxu0
    %6787 = vmatpush.bf16.msra.mxu0 %v5251
    %6788 = vmatpush.bf16.msra.mxu0 %v5243
    %6789 = vmatpush.bf16.msra.mxu0 %v5235
    %6790 = vmatpush.bf16.msra.mxu0 %v5227
    %6791 = vmatpush.bf16.msra.mxu0 %v5219
    %6792 = vmatpush.bf16.msra.mxu0 %v5211
    %6793 = vmatpush.bf16.msra.mxu0 %v5203
    %6794 = vmatpush.bf16.msra.mxu0 %v5195
    %6795 = vmatmul.bf16.gmra.mxu0 %v1271
    %v6796 = vpop.f32.mrf.mxu0
    %v6797 = vadd.f32 %v6784, %v6796
    %v6798 = vpop.f32.mrf.mxu0
    %6799 = vdwg.mxu0
    %6800 = vmatpush.bf16.msra.mxu0 %v5315
    %6801 = vmatpush.bf16.msra.mxu0 %v5307
    %6802 = vmatpush.bf16.msra.mxu0 %v5299
    %6803 = vmatpush.bf16.msra.mxu0 %v5291
    %6804 = vmatpush.bf16.msra.mxu0 %v5283
    %6805 = vmatpush.bf16.msra.mxu0 %v5275
    %6806 = vmatpush.bf16.msra.mxu0 %v5267
    %6807 = vmatpush.bf16.msra.mxu0 %v5259
    %6808 = vmatmul.bf16.gmra.mxu0 %v1272
    %v6809 = vpop.f32.mrf.mxu0
    %v6810 = vadd.f32 %v6797, %v6809
    %v6811 = vpop.f32.mrf.mxu0
    %6812 = vdwg.mxu0
    %6813 = vmatpush.bf16.msra.mxu0 %v5379
    %6814 = vmatpush.bf16.msra.mxu0 %v5371
    %6815 = vmatpush.bf16.msra.mxu0 %v5363
    %6816 = vmatpush.bf16.msra.mxu0 %v5355
    %6817 = vmatpush.bf16.msra.mxu0 %v5347
    %6818 = vmatpush.bf16.msra.mxu0 %v5339
    %6819 = vmatpush.bf16.msra.mxu0 %v5331
    %6820 = vmatpush.bf16.msra.mxu0 %v5323
    %6821 = vmatmul.bf16.gmra.mxu0 %v1273
    %v6822 = vpop.f32.mrf.mxu0
    %v6823 = vadd.f32 %v6810, %v6822
    %v6824 = vpop.f32.mrf.mxu0
    %6825 = vdwg.mxu0
    %6826 = vmatpush.bf16.msra.mxu0 %v4420
    %6827 = vmatpush.bf16.msra.mxu0 %v4412
    %6828 = vmatpush.bf16.msra.mxu0 %v4404
    %6829 = vmatpush.bf16.msra.mxu0 %v4396
    %6830 = vmatpush.bf16.msra.mxu0 %v4388
    %6831 = vmatpush.bf16.msra.mxu0 %v4380
    %6832 = vmatpush.bf16.msra.mxu0 %v4372
    %6833 = vmatpush.bf16.msra.mxu0 %v4364
    %6834 = vmatmul.bf16.gmra.mxu0 %v1258
    %v6835 = vpop.f32.mrf.mxu0
    %v6836 = vadd.f32 %v1220, %v6835
    %v6837 = vpop.f32.mrf.mxu0
    %6838 = vdwg.mxu0
    %6839 = vmatpush.bf16.msra.mxu0 %v4484
    %6840 = vmatpush.bf16.msra.mxu0 %v4476
    %6841 = vmatpush.bf16.msra.mxu0 %v4468
    %6842 = vmatpush.bf16.msra.mxu0 %v4460
    %6843 = vmatpush.bf16.msra.mxu0 %v4452
    %6844 = vmatpush.bf16.msra.mxu0 %v4444
    %6845 = vmatpush.bf16.msra.mxu0 %v4436
    %6846 = vmatpush.bf16.msra.mxu0 %v4428
    %6847 = vmatmul.bf16.gmra.mxu0 %v1259
    %v6848 = vpop.f32.mrf.mxu0
    %v6849 = vadd.f32 %v6836, %v6848
    %v6850 = vpop.f32.mrf.mxu0
    %6851 = vdwg.mxu0
    %6852 = vmatpush.bf16.msra.mxu0 %v4548
    %6853 = vmatpush.bf16.msra.mxu0 %v4540
    %6854 = vmatpush.bf16.msra.mxu0 %v4532
    %6855 = vmatpush.bf16.msra.mxu0 %v4524
    %6856 = vmatpush.bf16.msra.mxu0 %v4516
    %6857 = vmatpush.bf16.msra.mxu0 %v4508
    %6858 = vmatpush.bf16.msra.mxu0 %v4500
    %6859 = vmatpush.bf16.msra.mxu0 %v4492
    %6860 = vmatmul.bf16.gmra.mxu0 %v1260
    %v6861 = vpop.f32.mrf.mxu0
    %v6862 = vadd.f32 %v6849, %v6861
    %v6863 = vpop.f32.mrf.mxu0
    %6864 = vdwg.mxu0
    %6865 = vmatpush.bf16.msra.mxu0 %v4612
    %6866 = vmatpush.bf16.msra.mxu0 %v4604
    %6867 = vmatpush.bf16.msra.mxu0 %v4596
    %6868 = vmatpush.bf16.msra.mxu0 %v4588
    %6869 = vmatpush.bf16.msra.mxu0 %v4580
    %6870 = vmatpush.bf16.msra.mxu0 %v4572
    %6871 = vmatpush.bf16.msra.mxu0 %v4564
    %6872 = vmatpush.bf16.msra.mxu0 %v4556
    %6873 = vmatmul.bf16.gmra.mxu0 %v1261
    %v6874 = vpop.f32.mrf.mxu0
    %v6875 = vadd.f32 %v6862, %v6874
    %v6876 = vpop.f32.mrf.mxu0
    %6877 = vdwg.mxu0
    %6878 = vmatpush.bf16.msra.mxu0 %v4676
    %6879 = vmatpush.bf16.msra.mxu0 %v4668
    %6880 = vmatpush.bf16.msra.mxu0 %v4660
    %6881 = vmatpush.bf16.msra.mxu0 %v4652
    %6882 = vmatpush.bf16.msra.mxu0 %v4644
    %6883 = vmatpush.bf16.msra.mxu0 %v4636
    %6884 = vmatpush.bf16.msra.mxu0 %v4628
    %6885 = vmatpush.bf16.msra.mxu0 %v4620
    %6886 = vmatmul.bf16.gmra.mxu0 %v1262
    %v6887 = vpop.f32.mrf.mxu0
    %v6888 = vadd.f32 %v6875, %v6887
    %v6889 = vpop.f32.mrf.mxu0
    %6890 = vdwg.mxu0
    %6891 = vmatpush.bf16.msra.mxu0 %v4740
    %6892 = vmatpush.bf16.msra.mxu0 %v4732
    %6893 = vmatpush.bf16.msra.mxu0 %v4724
    %6894 = vmatpush.bf16.msra.mxu0 %v4716
    %6895 = vmatpush.bf16.msra.mxu0 %v4708
    %6896 = vmatpush.bf16.msra.mxu0 %v4700
    %6897 = vmatpush.bf16.msra.mxu0 %v4692
    %6898 = vmatpush.bf16.msra.mxu0 %v4684
    %6899 = vmatmul.bf16.gmra.mxu0 %v1263
    %v6900 = vpop.f32.mrf.mxu0
    %v6901 = vadd.f32 %v6888, %v6900
    %v6902 = vpop.f32.mrf.mxu0
    %6903 = vdwg.mxu0
    %6904 = vmatpush.bf16.msra.mxu0 %v4804
    %6905 = vmatpush.bf16.msra.mxu0 %v4796
    %6906 = vmatpush.bf16.msra.mxu0 %v4788
    %6907 = vmatpush.bf16.msra.mxu0 %v4780
    %6908 = vmatpush.bf16.msra.mxu0 %v4772
    %6909 = vmatpush.bf16.msra.mxu0 %v4764
    %6910 = vmatpush.bf16.msra.mxu0 %v4756
    %6911 = vmatpush.bf16.msra.mxu0 %v4748
    %6912 = vmatmul.bf16.gmra.mxu0 %v1264
    %v6913 = vpop.f32.mrf.mxu0
    %v6914 = vadd.f32 %v6901, %v6913
    %v6915 = vpop.f32.mrf.mxu0
    %6916 = vdwg.mxu0
    %6917 = vmatpush.bf16.msra.mxu0 %v4868
    %6918 = vmatpush.bf16.msra.mxu0 %v4860
    %6919 = vmatpush.bf16.msra.mxu0 %v4852
    %6920 = vmatpush.bf16.msra.mxu0 %v4844
    %6921 = vmatpush.bf16.msra.mxu0 %v4836
    %6922 = vmatpush.bf16.msra.mxu0 %v4828
    %6923 = vmatpush.bf16.msra.mxu0 %v4820
    %6924 = vmatpush.bf16.msra.mxu0 %v4812
    %6925 = vmatmul.bf16.gmra.mxu0 %v1265
    %v6926 = vpop.f32.mrf.mxu0
    %v6927 = vadd.f32 %v6914, %v6926
    %v6928 = vpop.f32.mrf.mxu0
    %6929 = vdwg.mxu0
    %6930 = vmatpush.bf16.msra.mxu0 %v4932
    %6931 = vmatpush.bf16.msra.mxu0 %v4924
    %6932 = vmatpush.bf16.msra.mxu0 %v4916
    %6933 = vmatpush.bf16.msra.mxu0 %v4908
    %6934 = vmatpush.bf16.msra.mxu0 %v4900
    %6935 = vmatpush.bf16.msra.mxu0 %v4892
    %6936 = vmatpush.bf16.msra.mxu0 %v4884
    %6937 = vmatpush.bf16.msra.mxu0 %v4876
    %6938 = vmatmul.bf16.gmra.mxu0 %v1266
    %v6939 = vpop.f32.mrf.mxu0
    %v6940 = vadd.f32 %v6927, %v6939
    %v6941 = vpop.f32.mrf.mxu0
    %6942 = vdwg.mxu0
    %6943 = vmatpush.bf16.msra.mxu0 %v4996
    %6944 = vmatpush.bf16.msra.mxu0 %v4988
    %6945 = vmatpush.bf16.msra.mxu0 %v4980
    %6946 = vmatpush.bf16.msra.mxu0 %v4972
    %6947 = vmatpush.bf16.msra.mxu0 %v4964
    %6948 = vmatpush.bf16.msra.mxu0 %v4956
    %6949 = vmatpush.bf16.msra.mxu0 %v4948
    %6950 = vmatpush.bf16.msra.mxu0 %v4940
    %6951 = vmatmul.bf16.gmra.mxu0 %v1267
    %v6952 = vpop.f32.mrf.mxu0
    %v6953 = vadd.f32 %v6940, %v6952
    %v6954 = vpop.f32.mrf.mxu0
    %6955 = vdwg.mxu0
    %6956 = vmatpush.bf16.msra.mxu0 %v5060
    %6957 = vmatpush.bf16.msra.mxu0 %v5052
    %6958 = vmatpush.bf16.msra.mxu0 %v5044
    %6959 = vmatpush.bf16.msra.mxu0 %v5036
    %6960 = vmatpush.bf16.msra.mxu0 %v5028
    %6961 = vmatpush.bf16.msra.mxu0 %v5020
    %6962 = vmatpush.bf16.msra.mxu0 %v5012
    %6963 = vmatpush.bf16.msra.mxu0 %v5004
    %6964 = vmatmul.bf16.gmra.mxu0 %v1268
    %v6965 = vpop.f32.mrf.mxu0
    %v6966 = vadd.f32 %v6953, %v6965
    %v6967 = vpop.f32.mrf.mxu0
    %6968 = vdwg.mxu0
    %6969 = vmatpush.bf16.msra.mxu0 %v5124
    %6970 = vmatpush.bf16.msra.mxu0 %v5116
    %6971 = vmatpush.bf16.msra.mxu0 %v5108
    %6972 = vmatpush.bf16.msra.mxu0 %v5100
    %6973 = vmatpush.bf16.msra.mxu0 %v5092
    %6974 = vmatpush.bf16.msra.mxu0 %v5084
    %6975 = vmatpush.bf16.msra.mxu0 %v5076
    %6976 = vmatpush.bf16.msra.mxu0 %v5068
    %6977 = vmatmul.bf16.gmra.mxu0 %v1269
    %v6978 = vpop.f32.mrf.mxu0
    %v6979 = vadd.f32 %v6966, %v6978
    %v6980 = vpop.f32.mrf.mxu0
    %6981 = vdwg.mxu0
    %6982 = vmatpush.bf16.msra.mxu0 %v5188
    %6983 = vmatpush.bf16.msra.mxu0 %v5180
    %6984 = vmatpush.bf16.msra.mxu0 %v5172
    %6985 = vmatpush.bf16.msra.mxu0 %v5164
    %6986 = vmatpush.bf16.msra.mxu0 %v5156
    %6987 = vmatpush.bf16.msra.mxu0 %v5148
    %6988 = vmatpush.bf16.msra.mxu0 %v5140
    %6989 = vmatpush.bf16.msra.mxu0 %v5132
    %6990 = vmatmul.bf16.gmra.mxu0 %v1270
    %v6991 = vpop.f32.mrf.mxu0
    %v6992 = vadd.f32 %v6979, %v6991
    %v6993 = vpop.f32.mrf.mxu0
    %6994 = vdwg.mxu0
    %6995 = vmatpush.bf16.msra.mxu0 %v5252
    %6996 = vmatpush.bf16.msra.mxu0 %v5244
    %6997 = vmatpush.bf16.msra.mxu0 %v5236
    %6998 = vmatpush.bf16.msra.mxu0 %v5228
    %6999 = vmatpush.bf16.msra.mxu0 %v5220
    %7000 = vmatpush.bf16.msra.mxu0 %v5212
    %7001 = vmatpush.bf16.msra.mxu0 %v5204
    %7002 = vmatpush.bf16.msra.mxu0 %v5196
    %7003 = vmatmul.bf16.gmra.mxu0 %v1271
    %v7004 = vpop.f32.mrf.mxu0
    %v7005 = vadd.f32 %v6992, %v7004
    %v7006 = vpop.f32.mrf.mxu0
    %7007 = vdwg.mxu0
    %7008 = vmatpush.bf16.msra.mxu0 %v5316
    %7009 = vmatpush.bf16.msra.mxu0 %v5308
    %7010 = vmatpush.bf16.msra.mxu0 %v5300
    %7011 = vmatpush.bf16.msra.mxu0 %v5292
    %7012 = vmatpush.bf16.msra.mxu0 %v5284
    %7013 = vmatpush.bf16.msra.mxu0 %v5276
    %7014 = vmatpush.bf16.msra.mxu0 %v5268
    %7015 = vmatpush.bf16.msra.mxu0 %v5260
    %7016 = vmatmul.bf16.gmra.mxu0 %v1272
    %v7017 = vpop.f32.mrf.mxu0
    %v7018 = vadd.f32 %v7005, %v7017
    %v7019 = vpop.f32.mrf.mxu0
    %7020 = vdwg.mxu0
    %7021 = vmatpush.bf16.msra.mxu0 %v5380
    %7022 = vmatpush.bf16.msra.mxu0 %v5372
    %7023 = vmatpush.bf16.msra.mxu0 %v5364
    %7024 = vmatpush.bf16.msra.mxu0 %v5356
    %7025 = vmatpush.bf16.msra.mxu0 %v5348
    %7026 = vmatpush.bf16.msra.mxu0 %v5340
    %7027 = vmatpush.bf16.msra.mxu0 %v5332
    %7028 = vmatpush.bf16.msra.mxu0 %v5324
    %7029 = vmatmul.bf16.gmra.mxu0 %v1273
    %v7030 = vpop.f32.mrf.mxu0
    %v7031 = vadd.f32 %v7018, %v7030
    %v7032 = vpop.f32.mrf.mxu0
    %7033 = vdwg.mxu0
    %7034 = vmatpush.bf16.msra.mxu0 %v4421
    %7035 = vmatpush.bf16.msra.mxu0 %v4413
    %7036 = vmatpush.bf16.msra.mxu0 %v4405
    %7037 = vmatpush.bf16.msra.mxu0 %v4397
    %7038 = vmatpush.bf16.msra.mxu0 %v4389
    %7039 = vmatpush.bf16.msra.mxu0 %v4381
    %7040 = vmatpush.bf16.msra.mxu0 %v4373
    %7041 = vmatpush.bf16.msra.mxu0 %v4365
    %7042 = vmatmul.bf16.gmra.mxu0 %v1258
    %v7043 = vpop.f32.mrf.mxu0
    %v7044 = vadd.f32 %v1221, %v7043
    %v7045 = vpop.f32.mrf.mxu0
    %7046 = vdwg.mxu0
    %7047 = vmatpush.bf16.msra.mxu0 %v4485
    %7048 = vmatpush.bf16.msra.mxu0 %v4477
    %7049 = vmatpush.bf16.msra.mxu0 %v4469
    %7050 = vmatpush.bf16.msra.mxu0 %v4461
    %7051 = vmatpush.bf16.msra.mxu0 %v4453
    %7052 = vmatpush.bf16.msra.mxu0 %v4445
    %7053 = vmatpush.bf16.msra.mxu0 %v4437
    %7054 = vmatpush.bf16.msra.mxu0 %v4429
    %7055 = vmatmul.bf16.gmra.mxu0 %v1259
    %v7056 = vpop.f32.mrf.mxu0
    %v7057 = vadd.f32 %v7044, %v7056
    %v7058 = vpop.f32.mrf.mxu0
    %7059 = vdwg.mxu0
    %7060 = vmatpush.bf16.msra.mxu0 %v4549
    %7061 = vmatpush.bf16.msra.mxu0 %v4541
    %7062 = vmatpush.bf16.msra.mxu0 %v4533
    %7063 = vmatpush.bf16.msra.mxu0 %v4525
    %7064 = vmatpush.bf16.msra.mxu0 %v4517
    %7065 = vmatpush.bf16.msra.mxu0 %v4509
    %7066 = vmatpush.bf16.msra.mxu0 %v4501
    %7067 = vmatpush.bf16.msra.mxu0 %v4493
    %7068 = vmatmul.bf16.gmra.mxu0 %v1260
    %v7069 = vpop.f32.mrf.mxu0
    %v7070 = vadd.f32 %v7057, %v7069
    %v7071 = vpop.f32.mrf.mxu0
    %7072 = vdwg.mxu0
    %7073 = vmatpush.bf16.msra.mxu0 %v4613
    %7074 = vmatpush.bf16.msra.mxu0 %v4605
    %7075 = vmatpush.bf16.msra.mxu0 %v4597
    %7076 = vmatpush.bf16.msra.mxu0 %v4589
    %7077 = vmatpush.bf16.msra.mxu0 %v4581
    %7078 = vmatpush.bf16.msra.mxu0 %v4573
    %7079 = vmatpush.bf16.msra.mxu0 %v4565
    %7080 = vmatpush.bf16.msra.mxu0 %v4557
    %7081 = vmatmul.bf16.gmra.mxu0 %v1261
    %v7082 = vpop.f32.mrf.mxu0
    %v7083 = vadd.f32 %v7070, %v7082
    %v7084 = vpop.f32.mrf.mxu0
    %7085 = vdwg.mxu0
    %7086 = vmatpush.bf16.msra.mxu0 %v4677
    %7087 = vmatpush.bf16.msra.mxu0 %v4669
    %7088 = vmatpush.bf16.msra.mxu0 %v4661
    %7089 = vmatpush.bf16.msra.mxu0 %v4653
    %7090 = vmatpush.bf16.msra.mxu0 %v4645
    %7091 = vmatpush.bf16.msra.mxu0 %v4637
    %7092 = vmatpush.bf16.msra.mxu0 %v4629
    %7093 = vmatpush.bf16.msra.mxu0 %v4621
    %7094 = vmatmul.bf16.gmra.mxu0 %v1262
    %v7095 = vpop.f32.mrf.mxu0
    %v7096 = vadd.f32 %v7083, %v7095
    %v7097 = vpop.f32.mrf.mxu0
    %7098 = vdwg.mxu0
    %7099 = vmatpush.bf16.msra.mxu0 %v4741
    %7100 = vmatpush.bf16.msra.mxu0 %v4733
    %7101 = vmatpush.bf16.msra.mxu0 %v4725
    %7102 = vmatpush.bf16.msra.mxu0 %v4717
    %7103 = vmatpush.bf16.msra.mxu0 %v4709
    %7104 = vmatpush.bf16.msra.mxu0 %v4701
    %7105 = vmatpush.bf16.msra.mxu0 %v4693
    %7106 = vmatpush.bf16.msra.mxu0 %v4685
    %7107 = vmatmul.bf16.gmra.mxu0 %v1263
    %v7108 = vpop.f32.mrf.mxu0
    %v7109 = vadd.f32 %v7096, %v7108
    %v7110 = vpop.f32.mrf.mxu0
    %7111 = vdwg.mxu0
    %7112 = vmatpush.bf16.msra.mxu0 %v4805
    %7113 = vmatpush.bf16.msra.mxu0 %v4797
    %7114 = vmatpush.bf16.msra.mxu0 %v4789
    %7115 = vmatpush.bf16.msra.mxu0 %v4781
    %7116 = vmatpush.bf16.msra.mxu0 %v4773
    %7117 = vmatpush.bf16.msra.mxu0 %v4765
    %7118 = vmatpush.bf16.msra.mxu0 %v4757
    %7119 = vmatpush.bf16.msra.mxu0 %v4749
    %7120 = vmatmul.bf16.gmra.mxu0 %v1264
    %v7121 = vpop.f32.mrf.mxu0
    %v7122 = vadd.f32 %v7109, %v7121
    %v7123 = vpop.f32.mrf.mxu0
    %7124 = vdwg.mxu0
    %7125 = vmatpush.bf16.msra.mxu0 %v4869
    %7126 = vmatpush.bf16.msra.mxu0 %v4861
    %7127 = vmatpush.bf16.msra.mxu0 %v4853
    %7128 = vmatpush.bf16.msra.mxu0 %v4845
    %7129 = vmatpush.bf16.msra.mxu0 %v4837
    %7130 = vmatpush.bf16.msra.mxu0 %v4829
    %7131 = vmatpush.bf16.msra.mxu0 %v4821
    %7132 = vmatpush.bf16.msra.mxu0 %v4813
    %7133 = vmatmul.bf16.gmra.mxu0 %v1265
    %v7134 = vpop.f32.mrf.mxu0
    %v7135 = vadd.f32 %v7122, %v7134
    %v7136 = vpop.f32.mrf.mxu0
    %7137 = vdwg.mxu0
    %7138 = vmatpush.bf16.msra.mxu0 %v4933
    %7139 = vmatpush.bf16.msra.mxu0 %v4925
    %7140 = vmatpush.bf16.msra.mxu0 %v4917
    %7141 = vmatpush.bf16.msra.mxu0 %v4909
    %7142 = vmatpush.bf16.msra.mxu0 %v4901
    %7143 = vmatpush.bf16.msra.mxu0 %v4893
    %7144 = vmatpush.bf16.msra.mxu0 %v4885
    %7145 = vmatpush.bf16.msra.mxu0 %v4877
    %7146 = vmatmul.bf16.gmra.mxu0 %v1266
    %v7147 = vpop.f32.mrf.mxu0
    %v7148 = vadd.f32 %v7135, %v7147
    %v7149 = vpop.f32.mrf.mxu0
    %7150 = vdwg.mxu0
    %7151 = vmatpush.bf16.msra.mxu0 %v4997
    %7152 = vmatpush.bf16.msra.mxu0 %v4989
    %7153 = vmatpush.bf16.msra.mxu0 %v4981
    %7154 = vmatpush.bf16.msra.mxu0 %v4973
    %7155 = vmatpush.bf16.msra.mxu0 %v4965
    %7156 = vmatpush.bf16.msra.mxu0 %v4957
    %7157 = vmatpush.bf16.msra.mxu0 %v4949
    %7158 = vmatpush.bf16.msra.mxu0 %v4941
    %7159 = vmatmul.bf16.gmra.mxu0 %v1267
    %v7160 = vpop.f32.mrf.mxu0
    %v7161 = vadd.f32 %v7148, %v7160
    %v7162 = vpop.f32.mrf.mxu0
    %7163 = vdwg.mxu0
    %7164 = vmatpush.bf16.msra.mxu0 %v5061
    %7165 = vmatpush.bf16.msra.mxu0 %v5053
    %7166 = vmatpush.bf16.msra.mxu0 %v5045
    %7167 = vmatpush.bf16.msra.mxu0 %v5037
    %7168 = vmatpush.bf16.msra.mxu0 %v5029
    %7169 = vmatpush.bf16.msra.mxu0 %v5021
    %7170 = vmatpush.bf16.msra.mxu0 %v5013
    %7171 = vmatpush.bf16.msra.mxu0 %v5005
    %7172 = vmatmul.bf16.gmra.mxu0 %v1268
    %v7173 = vpop.f32.mrf.mxu0
    %v7174 = vadd.f32 %v7161, %v7173
    %v7175 = vpop.f32.mrf.mxu0
    %7176 = vdwg.mxu0
    %7177 = vmatpush.bf16.msra.mxu0 %v5125
    %7178 = vmatpush.bf16.msra.mxu0 %v5117
    %7179 = vmatpush.bf16.msra.mxu0 %v5109
    %7180 = vmatpush.bf16.msra.mxu0 %v5101
    %7181 = vmatpush.bf16.msra.mxu0 %v5093
    %7182 = vmatpush.bf16.msra.mxu0 %v5085
    %7183 = vmatpush.bf16.msra.mxu0 %v5077
    %7184 = vmatpush.bf16.msra.mxu0 %v5069
    %7185 = vmatmul.bf16.gmra.mxu0 %v1269
    %v7186 = vpop.f32.mrf.mxu0
    %v7187 = vadd.f32 %v7174, %v7186
    %v7188 = vpop.f32.mrf.mxu0
    %7189 = vdwg.mxu0
    %7190 = vmatpush.bf16.msra.mxu0 %v5189
    %7191 = vmatpush.bf16.msra.mxu0 %v5181
    %7192 = vmatpush.bf16.msra.mxu0 %v5173
    %7193 = vmatpush.bf16.msra.mxu0 %v5165
    %7194 = vmatpush.bf16.msra.mxu0 %v5157
    %7195 = vmatpush.bf16.msra.mxu0 %v5149
    %7196 = vmatpush.bf16.msra.mxu0 %v5141
    %7197 = vmatpush.bf16.msra.mxu0 %v5133
    %7198 = vmatmul.bf16.gmra.mxu0 %v1270
    %v7199 = vpop.f32.mrf.mxu0
    %v7200 = vadd.f32 %v7187, %v7199
    %v7201 = vpop.f32.mrf.mxu0
    %7202 = vdwg.mxu0
    %7203 = vmatpush.bf16.msra.mxu0 %v5253
    %7204 = vmatpush.bf16.msra.mxu0 %v5245
    %7205 = vmatpush.bf16.msra.mxu0 %v5237
    %7206 = vmatpush.bf16.msra.mxu0 %v5229
    %7207 = vmatpush.bf16.msra.mxu0 %v5221
    %7208 = vmatpush.bf16.msra.mxu0 %v5213
    %7209 = vmatpush.bf16.msra.mxu0 %v5205
    %7210 = vmatpush.bf16.msra.mxu0 %v5197
    %7211 = vmatmul.bf16.gmra.mxu0 %v1271
    %v7212 = vpop.f32.mrf.mxu0
    %v7213 = vadd.f32 %v7200, %v7212
    %v7214 = vpop.f32.mrf.mxu0
    %7215 = vdwg.mxu0
    %7216 = vmatpush.bf16.msra.mxu0 %v5317
    %7217 = vmatpush.bf16.msra.mxu0 %v5309
    %7218 = vmatpush.bf16.msra.mxu0 %v5301
    %7219 = vmatpush.bf16.msra.mxu0 %v5293
    %7220 = vmatpush.bf16.msra.mxu0 %v5285
    %7221 = vmatpush.bf16.msra.mxu0 %v5277
    %7222 = vmatpush.bf16.msra.mxu0 %v5269
    %7223 = vmatpush.bf16.msra.mxu0 %v5261
    %7224 = vmatmul.bf16.gmra.mxu0 %v1272
    %v7225 = vpop.f32.mrf.mxu0
    %v7226 = vadd.f32 %v7213, %v7225
    %v7227 = vpop.f32.mrf.mxu0
    %7228 = vdwg.mxu0
    %7229 = vmatpush.bf16.msra.mxu0 %v5381
    %7230 = vmatpush.bf16.msra.mxu0 %v5373
    %7231 = vmatpush.bf16.msra.mxu0 %v5365
    %7232 = vmatpush.bf16.msra.mxu0 %v5357
    %7233 = vmatpush.bf16.msra.mxu0 %v5349
    %7234 = vmatpush.bf16.msra.mxu0 %v5341
    %7235 = vmatpush.bf16.msra.mxu0 %v5333
    %7236 = vmatpush.bf16.msra.mxu0 %v5325
    %7237 = vmatmul.bf16.gmra.mxu0 %v1273
    %v7238 = vpop.f32.mrf.mxu0
    %v7239 = vadd.f32 %v7226, %v7238
    %v7240 = vpop.f32.mrf.mxu0
    %7241 = vdwg.mxu0
    %7242 = vmatpush.bf16.msra.mxu0 %v4422
    %7243 = vmatpush.bf16.msra.mxu0 %v4414
    %7244 = vmatpush.bf16.msra.mxu0 %v4406
    %7245 = vmatpush.bf16.msra.mxu0 %v4398
    %7246 = vmatpush.bf16.msra.mxu0 %v4390
    %7247 = vmatpush.bf16.msra.mxu0 %v4382
    %7248 = vmatpush.bf16.msra.mxu0 %v4374
    %7249 = vmatpush.bf16.msra.mxu0 %v4366
    %7250 = vmatmul.bf16.gmra.mxu0 %v1258
    %v7251 = vpop.f32.mrf.mxu0
    %v7252 = vadd.f32 %v1222, %v7251
    %v7253 = vpop.f32.mrf.mxu0
    %7254 = vdwg.mxu0
    %7255 = vmatpush.bf16.msra.mxu0 %v4486
    %7256 = vmatpush.bf16.msra.mxu0 %v4478
    %7257 = vmatpush.bf16.msra.mxu0 %v4470
    %7258 = vmatpush.bf16.msra.mxu0 %v4462
    %7259 = vmatpush.bf16.msra.mxu0 %v4454
    %7260 = vmatpush.bf16.msra.mxu0 %v4446
    %7261 = vmatpush.bf16.msra.mxu0 %v4438
    %7262 = vmatpush.bf16.msra.mxu0 %v4430
    %7263 = vmatmul.bf16.gmra.mxu0 %v1259
    %v7264 = vpop.f32.mrf.mxu0
    %v7265 = vadd.f32 %v7252, %v7264
    %v7266 = vpop.f32.mrf.mxu0
    %7267 = vdwg.mxu0
    %7268 = vmatpush.bf16.msra.mxu0 %v4550
    %7269 = vmatpush.bf16.msra.mxu0 %v4542
    %7270 = vmatpush.bf16.msra.mxu0 %v4534
    %7271 = vmatpush.bf16.msra.mxu0 %v4526
    %7272 = vmatpush.bf16.msra.mxu0 %v4518
    %7273 = vmatpush.bf16.msra.mxu0 %v4510
    %7274 = vmatpush.bf16.msra.mxu0 %v4502
    %7275 = vmatpush.bf16.msra.mxu0 %v4494
    %7276 = vmatmul.bf16.gmra.mxu0 %v1260
    %v7277 = vpop.f32.mrf.mxu0
    %v7278 = vadd.f32 %v7265, %v7277
    %v7279 = vpop.f32.mrf.mxu0
    %7280 = vdwg.mxu0
    %7281 = vmatpush.bf16.msra.mxu0 %v4614
    %7282 = vmatpush.bf16.msra.mxu0 %v4606
    %7283 = vmatpush.bf16.msra.mxu0 %v4598
    %7284 = vmatpush.bf16.msra.mxu0 %v4590
    %7285 = vmatpush.bf16.msra.mxu0 %v4582
    %7286 = vmatpush.bf16.msra.mxu0 %v4574
    %7287 = vmatpush.bf16.msra.mxu0 %v4566
    %7288 = vmatpush.bf16.msra.mxu0 %v4558
    %7289 = vmatmul.bf16.gmra.mxu0 %v1261
    %v7290 = vpop.f32.mrf.mxu0
    %v7291 = vadd.f32 %v7278, %v7290
    %v7292 = vpop.f32.mrf.mxu0
    %7293 = vdwg.mxu0
    %7294 = vmatpush.bf16.msra.mxu0 %v4678
    %7295 = vmatpush.bf16.msra.mxu0 %v4670
    %7296 = vmatpush.bf16.msra.mxu0 %v4662
    %7297 = vmatpush.bf16.msra.mxu0 %v4654
    %7298 = vmatpush.bf16.msra.mxu0 %v4646
    %7299 = vmatpush.bf16.msra.mxu0 %v4638
    %7300 = vmatpush.bf16.msra.mxu0 %v4630
    %7301 = vmatpush.bf16.msra.mxu0 %v4622
    %7302 = vmatmul.bf16.gmra.mxu0 %v1262
    %v7303 = vpop.f32.mrf.mxu0
    %v7304 = vadd.f32 %v7291, %v7303
    %v7305 = vpop.f32.mrf.mxu0
    %7306 = vdwg.mxu0
    %7307 = vmatpush.bf16.msra.mxu0 %v4742
    %7308 = vmatpush.bf16.msra.mxu0 %v4734
    %7309 = vmatpush.bf16.msra.mxu0 %v4726
    %7310 = vmatpush.bf16.msra.mxu0 %v4718
    %7311 = vmatpush.bf16.msra.mxu0 %v4710
    %7312 = vmatpush.bf16.msra.mxu0 %v4702
    %7313 = vmatpush.bf16.msra.mxu0 %v4694
    %7314 = vmatpush.bf16.msra.mxu0 %v4686
    %7315 = vmatmul.bf16.gmra.mxu0 %v1263
    %v7316 = vpop.f32.mrf.mxu0
    %v7317 = vadd.f32 %v7304, %v7316
    %v7318 = vpop.f32.mrf.mxu0
    %7319 = vdwg.mxu0
    %7320 = vmatpush.bf16.msra.mxu0 %v4806
    %7321 = vmatpush.bf16.msra.mxu0 %v4798
    %7322 = vmatpush.bf16.msra.mxu0 %v4790
    %7323 = vmatpush.bf16.msra.mxu0 %v4782
    %7324 = vmatpush.bf16.msra.mxu0 %v4774
    %7325 = vmatpush.bf16.msra.mxu0 %v4766
    %7326 = vmatpush.bf16.msra.mxu0 %v4758
    %7327 = vmatpush.bf16.msra.mxu0 %v4750
    %7328 = vmatmul.bf16.gmra.mxu0 %v1264
    %v7329 = vpop.f32.mrf.mxu0
    %v7330 = vadd.f32 %v7317, %v7329
    %v7331 = vpop.f32.mrf.mxu0
    %7332 = vdwg.mxu0
    %7333 = vmatpush.bf16.msra.mxu0 %v4870
    %7334 = vmatpush.bf16.msra.mxu0 %v4862
    %7335 = vmatpush.bf16.msra.mxu0 %v4854
    %7336 = vmatpush.bf16.msra.mxu0 %v4846
    %7337 = vmatpush.bf16.msra.mxu0 %v4838
    %7338 = vmatpush.bf16.msra.mxu0 %v4830
    %7339 = vmatpush.bf16.msra.mxu0 %v4822
    %7340 = vmatpush.bf16.msra.mxu0 %v4814
    %7341 = vmatmul.bf16.gmra.mxu0 %v1265
    %v7342 = vpop.f32.mrf.mxu0
    %v7343 = vadd.f32 %v7330, %v7342
    %v7344 = vpop.f32.mrf.mxu0
    %7345 = vdwg.mxu0
    %7346 = vmatpush.bf16.msra.mxu0 %v4934
    %7347 = vmatpush.bf16.msra.mxu0 %v4926
    %7348 = vmatpush.bf16.msra.mxu0 %v4918
    %7349 = vmatpush.bf16.msra.mxu0 %v4910
    %7350 = vmatpush.bf16.msra.mxu0 %v4902
    %7351 = vmatpush.bf16.msra.mxu0 %v4894
    %7352 = vmatpush.bf16.msra.mxu0 %v4886
    %7353 = vmatpush.bf16.msra.mxu0 %v4878
    %7354 = vmatmul.bf16.gmra.mxu0 %v1266
    %v7355 = vpop.f32.mrf.mxu0
    %v7356 = vadd.f32 %v7343, %v7355
    %v7357 = vpop.f32.mrf.mxu0
    %7358 = vdwg.mxu0
    %7359 = vmatpush.bf16.msra.mxu0 %v4998
    %7360 = vmatpush.bf16.msra.mxu0 %v4990
    %7361 = vmatpush.bf16.msra.mxu0 %v4982
    %7362 = vmatpush.bf16.msra.mxu0 %v4974
    %7363 = vmatpush.bf16.msra.mxu0 %v4966
    %7364 = vmatpush.bf16.msra.mxu0 %v4958
    %7365 = vmatpush.bf16.msra.mxu0 %v4950
    %7366 = vmatpush.bf16.msra.mxu0 %v4942
    %7367 = vmatmul.bf16.gmra.mxu0 %v1267
    %v7368 = vpop.f32.mrf.mxu0
    %v7369 = vadd.f32 %v7356, %v7368
    %v7370 = vpop.f32.mrf.mxu0
    %7371 = vdwg.mxu0
    %7372 = vmatpush.bf16.msra.mxu0 %v5062
    %7373 = vmatpush.bf16.msra.mxu0 %v5054
    %7374 = vmatpush.bf16.msra.mxu0 %v5046
    %7375 = vmatpush.bf16.msra.mxu0 %v5038
    %7376 = vmatpush.bf16.msra.mxu0 %v5030
    %7377 = vmatpush.bf16.msra.mxu0 %v5022
    %7378 = vmatpush.bf16.msra.mxu0 %v5014
    %7379 = vmatpush.bf16.msra.mxu0 %v5006
    %7380 = vmatmul.bf16.gmra.mxu0 %v1268
    %v7381 = vpop.f32.mrf.mxu0
    %v7382 = vadd.f32 %v7369, %v7381
    %v7383 = vpop.f32.mrf.mxu0
    %7384 = vdwg.mxu0
    %7385 = vmatpush.bf16.msra.mxu0 %v5126
    %7386 = vmatpush.bf16.msra.mxu0 %v5118
    %7387 = vmatpush.bf16.msra.mxu0 %v5110
    %7388 = vmatpush.bf16.msra.mxu0 %v5102
    %7389 = vmatpush.bf16.msra.mxu0 %v5094
    %7390 = vmatpush.bf16.msra.mxu0 %v5086
    %7391 = vmatpush.bf16.msra.mxu0 %v5078
    %7392 = vmatpush.bf16.msra.mxu0 %v5070
    %7393 = vmatmul.bf16.gmra.mxu0 %v1269
    %v7394 = vpop.f32.mrf.mxu0
    %v7395 = vadd.f32 %v7382, %v7394
    %v7396 = vpop.f32.mrf.mxu0
    %7397 = vdwg.mxu0
    %7398 = vmatpush.bf16.msra.mxu0 %v5190
    %7399 = vmatpush.bf16.msra.mxu0 %v5182
    %7400 = vmatpush.bf16.msra.mxu0 %v5174
    %7401 = vmatpush.bf16.msra.mxu0 %v5166
    %7402 = vmatpush.bf16.msra.mxu0 %v5158
    %7403 = vmatpush.bf16.msra.mxu0 %v5150
    %7404 = vmatpush.bf16.msra.mxu0 %v5142
    %7405 = vmatpush.bf16.msra.mxu0 %v5134
    %7406 = vmatmul.bf16.gmra.mxu0 %v1270
    %v7407 = vpop.f32.mrf.mxu0
    %v7408 = vadd.f32 %v7395, %v7407
    %v7409 = vpop.f32.mrf.mxu0
    %7410 = vdwg.mxu0
    %7411 = vmatpush.bf16.msra.mxu0 %v5254
    %7412 = vmatpush.bf16.msra.mxu0 %v5246
    %7413 = vmatpush.bf16.msra.mxu0 %v5238
    %7414 = vmatpush.bf16.msra.mxu0 %v5230
    %7415 = vmatpush.bf16.msra.mxu0 %v5222
    %7416 = vmatpush.bf16.msra.mxu0 %v5214
    %7417 = vmatpush.bf16.msra.mxu0 %v5206
    %7418 = vmatpush.bf16.msra.mxu0 %v5198
    %7419 = vmatmul.bf16.gmra.mxu0 %v1271
    %v7420 = vpop.f32.mrf.mxu0
    %v7421 = vadd.f32 %v7408, %v7420
    %v7422 = vpop.f32.mrf.mxu0
    %7423 = vdwg.mxu0
    %7424 = vmatpush.bf16.msra.mxu0 %v5318
    %7425 = vmatpush.bf16.msra.mxu0 %v5310
    %7426 = vmatpush.bf16.msra.mxu0 %v5302
    %7427 = vmatpush.bf16.msra.mxu0 %v5294
    %7428 = vmatpush.bf16.msra.mxu0 %v5286
    %7429 = vmatpush.bf16.msra.mxu0 %v5278
    %7430 = vmatpush.bf16.msra.mxu0 %v5270
    %7431 = vmatpush.bf16.msra.mxu0 %v5262
    %7432 = vmatmul.bf16.gmra.mxu0 %v1272
    %v7433 = vpop.f32.mrf.mxu0
    %v7434 = vadd.f32 %v7421, %v7433
    %v7435 = vpop.f32.mrf.mxu0
    %7436 = vdwg.mxu0
    %7437 = vmatpush.bf16.msra.mxu0 %v5382
    %7438 = vmatpush.bf16.msra.mxu0 %v5374
    %7439 = vmatpush.bf16.msra.mxu0 %v5366
    %7440 = vmatpush.bf16.msra.mxu0 %v5358
    %7441 = vmatpush.bf16.msra.mxu0 %v5350
    %7442 = vmatpush.bf16.msra.mxu0 %v5342
    %7443 = vmatpush.bf16.msra.mxu0 %v5334
    %7444 = vmatpush.bf16.msra.mxu0 %v5326
    %7445 = vmatmul.bf16.gmra.mxu0 %v1273
    %v7446 = vpop.f32.mrf.mxu0
    %v7447 = vadd.f32 %v7434, %v7446
    %v7448 = vpop.f32.mrf.mxu0
    %7449 = vdwg.mxu0
    %7450 = vmatpush.bf16.msra.mxu0 %v4423
    %7451 = vmatpush.bf16.msra.mxu0 %v4415
    %7452 = vmatpush.bf16.msra.mxu0 %v4407
    %7453 = vmatpush.bf16.msra.mxu0 %v4399
    %7454 = vmatpush.bf16.msra.mxu0 %v4391
    %7455 = vmatpush.bf16.msra.mxu0 %v4383
    %7456 = vmatpush.bf16.msra.mxu0 %v4375
    %7457 = vmatpush.bf16.msra.mxu0 %v4367
    %7458 = vmatmul.bf16.gmra.mxu0 %v1258
    %v7459 = vpop.f32.mrf.mxu0
    %v7460 = vadd.f32 %v1223, %v7459
    %v7461 = vpop.f32.mrf.mxu0
    %7462 = vdwg.mxu0
    %7463 = vmatpush.bf16.msra.mxu0 %v4487
    %7464 = vmatpush.bf16.msra.mxu0 %v4479
    %7465 = vmatpush.bf16.msra.mxu0 %v4471
    %7466 = vmatpush.bf16.msra.mxu0 %v4463
    %7467 = vmatpush.bf16.msra.mxu0 %v4455
    %7468 = vmatpush.bf16.msra.mxu0 %v4447
    %7469 = vmatpush.bf16.msra.mxu0 %v4439
    %7470 = vmatpush.bf16.msra.mxu0 %v4431
    %7471 = vmatmul.bf16.gmra.mxu0 %v1259
    %v7472 = vpop.f32.mrf.mxu0
    %v7473 = vadd.f32 %v7460, %v7472
    %v7474 = vpop.f32.mrf.mxu0
    %7475 = vdwg.mxu0
    %7476 = vmatpush.bf16.msra.mxu0 %v4551
    %7477 = vmatpush.bf16.msra.mxu0 %v4543
    %7478 = vmatpush.bf16.msra.mxu0 %v4535
    %7479 = vmatpush.bf16.msra.mxu0 %v4527
    %7480 = vmatpush.bf16.msra.mxu0 %v4519
    %7481 = vmatpush.bf16.msra.mxu0 %v4511
    %7482 = vmatpush.bf16.msra.mxu0 %v4503
    %7483 = vmatpush.bf16.msra.mxu0 %v4495
    %7484 = vmatmul.bf16.gmra.mxu0 %v1260
    %v7485 = vpop.f32.mrf.mxu0
    %v7486 = vadd.f32 %v7473, %v7485
    %v7487 = vpop.f32.mrf.mxu0
    %7488 = vdwg.mxu0
    %7489 = vmatpush.bf16.msra.mxu0 %v4615
    %7490 = vmatpush.bf16.msra.mxu0 %v4607
    %7491 = vmatpush.bf16.msra.mxu0 %v4599
    %7492 = vmatpush.bf16.msra.mxu0 %v4591
    %7493 = vmatpush.bf16.msra.mxu0 %v4583
    %7494 = vmatpush.bf16.msra.mxu0 %v4575
    %7495 = vmatpush.bf16.msra.mxu0 %v4567
    %7496 = vmatpush.bf16.msra.mxu0 %v4559
    %7497 = vmatmul.bf16.gmra.mxu0 %v1261
    %v7498 = vpop.f32.mrf.mxu0
    %v7499 = vadd.f32 %v7486, %v7498
    %v7500 = vpop.f32.mrf.mxu0
    %7501 = vdwg.mxu0
    %7502 = vmatpush.bf16.msra.mxu0 %v4679
    %7503 = vmatpush.bf16.msra.mxu0 %v4671
    %7504 = vmatpush.bf16.msra.mxu0 %v4663
    %7505 = vmatpush.bf16.msra.mxu0 %v4655
    %7506 = vmatpush.bf16.msra.mxu0 %v4647
    %7507 = vmatpush.bf16.msra.mxu0 %v4639
    %7508 = vmatpush.bf16.msra.mxu0 %v4631
    %7509 = vmatpush.bf16.msra.mxu0 %v4623
    %7510 = vmatmul.bf16.gmra.mxu0 %v1262
    %v7511 = vpop.f32.mrf.mxu0
    %v7512 = vadd.f32 %v7499, %v7511
    %v7513 = vpop.f32.mrf.mxu0
    %7514 = vdwg.mxu0
    %7515 = vmatpush.bf16.msra.mxu0 %v4743
    %7516 = vmatpush.bf16.msra.mxu0 %v4735
    %7517 = vmatpush.bf16.msra.mxu0 %v4727
    %7518 = vmatpush.bf16.msra.mxu0 %v4719
    %7519 = vmatpush.bf16.msra.mxu0 %v4711
    %7520 = vmatpush.bf16.msra.mxu0 %v4703
    %7521 = vmatpush.bf16.msra.mxu0 %v4695
    %7522 = vmatpush.bf16.msra.mxu0 %v4687
    %7523 = vmatmul.bf16.gmra.mxu0 %v1263
    %v7524 = vpop.f32.mrf.mxu0
    %v7525 = vadd.f32 %v7512, %v7524
    %v7526 = vpop.f32.mrf.mxu0
    %7527 = vdwg.mxu0
    %7528 = vmatpush.bf16.msra.mxu0 %v4807
    %7529 = vmatpush.bf16.msra.mxu0 %v4799
    %7530 = vmatpush.bf16.msra.mxu0 %v4791
    %7531 = vmatpush.bf16.msra.mxu0 %v4783
    %7532 = vmatpush.bf16.msra.mxu0 %v4775
    %7533 = vmatpush.bf16.msra.mxu0 %v4767
    %7534 = vmatpush.bf16.msra.mxu0 %v4759
    %7535 = vmatpush.bf16.msra.mxu0 %v4751
    %7536 = vmatmul.bf16.gmra.mxu0 %v1264
    %v7537 = vpop.f32.mrf.mxu0
    %v7538 = vadd.f32 %v7525, %v7537
    %v7539 = vpop.f32.mrf.mxu0
    %7540 = vdwg.mxu0
    %7541 = vmatpush.bf16.msra.mxu0 %v4871
    %7542 = vmatpush.bf16.msra.mxu0 %v4863
    %7543 = vmatpush.bf16.msra.mxu0 %v4855
    %7544 = vmatpush.bf16.msra.mxu0 %v4847
    %7545 = vmatpush.bf16.msra.mxu0 %v4839
    %7546 = vmatpush.bf16.msra.mxu0 %v4831
    %7547 = vmatpush.bf16.msra.mxu0 %v4823
    %7548 = vmatpush.bf16.msra.mxu0 %v4815
    %7549 = vmatmul.bf16.gmra.mxu0 %v1265
    %v7550 = vpop.f32.mrf.mxu0
    %v7551 = vadd.f32 %v7538, %v7550
    %v7552 = vpop.f32.mrf.mxu0
    %7553 = vdwg.mxu0
    %7554 = vmatpush.bf16.msra.mxu0 %v4935
    %7555 = vmatpush.bf16.msra.mxu0 %v4927
    %7556 = vmatpush.bf16.msra.mxu0 %v4919
    %7557 = vmatpush.bf16.msra.mxu0 %v4911
    %7558 = vmatpush.bf16.msra.mxu0 %v4903
    %7559 = vmatpush.bf16.msra.mxu0 %v4895
    %7560 = vmatpush.bf16.msra.mxu0 %v4887
    %7561 = vmatpush.bf16.msra.mxu0 %v4879
    %7562 = vmatmul.bf16.gmra.mxu0 %v1266
    %v7563 = vpop.f32.mrf.mxu0
    %v7564 = vadd.f32 %v7551, %v7563
    %v7565 = vpop.f32.mrf.mxu0
    %7566 = vdwg.mxu0
    %7567 = vmatpush.bf16.msra.mxu0 %v4999
    %7568 = vmatpush.bf16.msra.mxu0 %v4991
    %7569 = vmatpush.bf16.msra.mxu0 %v4983
    %7570 = vmatpush.bf16.msra.mxu0 %v4975
    %7571 = vmatpush.bf16.msra.mxu0 %v4967
    %7572 = vmatpush.bf16.msra.mxu0 %v4959
    %7573 = vmatpush.bf16.msra.mxu0 %v4951
    %7574 = vmatpush.bf16.msra.mxu0 %v4943
    %7575 = vmatmul.bf16.gmra.mxu0 %v1267
    %v7576 = vpop.f32.mrf.mxu0
    %v7577 = vadd.f32 %v7564, %v7576
    %v7578 = vpop.f32.mrf.mxu0
    %7579 = vdwg.mxu0
    %7580 = vmatpush.bf16.msra.mxu0 %v5063
    %7581 = vmatpush.bf16.msra.mxu0 %v5055
    %7582 = vmatpush.bf16.msra.mxu0 %v5047
    %7583 = vmatpush.bf16.msra.mxu0 %v5039
    %7584 = vmatpush.bf16.msra.mxu0 %v5031
    %7585 = vmatpush.bf16.msra.mxu0 %v5023
    %7586 = vmatpush.bf16.msra.mxu0 %v5015
    %7587 = vmatpush.bf16.msra.mxu0 %v5007
    %7588 = vmatmul.bf16.gmra.mxu0 %v1268
    %v7589 = vpop.f32.mrf.mxu0
    %v7590 = vadd.f32 %v7577, %v7589
    %v7591 = vpop.f32.mrf.mxu0
    %7592 = vdwg.mxu0
    %7593 = vmatpush.bf16.msra.mxu0 %v5127
    %7594 = vmatpush.bf16.msra.mxu0 %v5119
    %7595 = vmatpush.bf16.msra.mxu0 %v5111
    %7596 = vmatpush.bf16.msra.mxu0 %v5103
    %7597 = vmatpush.bf16.msra.mxu0 %v5095
    %7598 = vmatpush.bf16.msra.mxu0 %v5087
    %7599 = vmatpush.bf16.msra.mxu0 %v5079
    %7600 = vmatpush.bf16.msra.mxu0 %v5071
    %7601 = vmatmul.bf16.gmra.mxu0 %v1269
    %v7602 = vpop.f32.mrf.mxu0
    %v7603 = vadd.f32 %v7590, %v7602
    %v7604 = vpop.f32.mrf.mxu0
    %7605 = vdwg.mxu0
    %7606 = vmatpush.bf16.msra.mxu0 %v5191
    %7607 = vmatpush.bf16.msra.mxu0 %v5183
    %7608 = vmatpush.bf16.msra.mxu0 %v5175
    %7609 = vmatpush.bf16.msra.mxu0 %v5167
    %7610 = vmatpush.bf16.msra.mxu0 %v5159
    %7611 = vmatpush.bf16.msra.mxu0 %v5151
    %7612 = vmatpush.bf16.msra.mxu0 %v5143
    %7613 = vmatpush.bf16.msra.mxu0 %v5135
    %7614 = vmatmul.bf16.gmra.mxu0 %v1270
    %v7615 = vpop.f32.mrf.mxu0
    %v7616 = vadd.f32 %v7603, %v7615
    %v7617 = vpop.f32.mrf.mxu0
    %7618 = vdwg.mxu0
    %7619 = vmatpush.bf16.msra.mxu0 %v5255
    %7620 = vmatpush.bf16.msra.mxu0 %v5247
    %7621 = vmatpush.bf16.msra.mxu0 %v5239
    %7622 = vmatpush.bf16.msra.mxu0 %v5231
    %7623 = vmatpush.bf16.msra.mxu0 %v5223
    %7624 = vmatpush.bf16.msra.mxu0 %v5215
    %7625 = vmatpush.bf16.msra.mxu0 %v5207
    %7626 = vmatpush.bf16.msra.mxu0 %v5199
    %7627 = vmatmul.bf16.gmra.mxu0 %v1271
    %v7628 = vpop.f32.mrf.mxu0
    %v7629 = vadd.f32 %v7616, %v7628
    %v7630 = vpop.f32.mrf.mxu0
    %7631 = vdwg.mxu0
    %7632 = vmatpush.bf16.msra.mxu0 %v5319
    %7633 = vmatpush.bf16.msra.mxu0 %v5311
    %7634 = vmatpush.bf16.msra.mxu0 %v5303
    %7635 = vmatpush.bf16.msra.mxu0 %v5295
    %7636 = vmatpush.bf16.msra.mxu0 %v5287
    %7637 = vmatpush.bf16.msra.mxu0 %v5279
    %7638 = vmatpush.bf16.msra.mxu0 %v5271
    %7639 = vmatpush.bf16.msra.mxu0 %v5263
    %7640 = vmatmul.bf16.gmra.mxu0 %v1272
    %v7641 = vpop.f32.mrf.mxu0
    %v7642 = vadd.f32 %v7629, %v7641
    %v7643 = vpop.f32.mrf.mxu0
    %7644 = vdwg.mxu0
    %7645 = vmatpush.bf16.msra.mxu0 %v5383
    %7646 = vmatpush.bf16.msra.mxu0 %v5375
    %7647 = vmatpush.bf16.msra.mxu0 %v5367
    %7648 = vmatpush.bf16.msra.mxu0 %v5359
    %7649 = vmatpush.bf16.msra.mxu0 %v5351
    %7650 = vmatpush.bf16.msra.mxu0 %v5343
    %7651 = vmatpush.bf16.msra.mxu0 %v5335
    %7652 = vmatpush.bf16.msra.mxu0 %v5327
    %7653 = vmatmul.bf16.gmra.mxu0 %v1273
    %v7654 = vpop.f32.mrf.mxu0
    %v7655 = vadd.f32 %v7642, %v7654
    %v7656 = vpop.f32.mrf.mxu0
    %7657 = vdwg.mxu0
    %7658 = vmatpush.bf16.msra.mxu0 %v4424
    %7659 = vmatpush.bf16.msra.mxu0 %v4416
    %7660 = vmatpush.bf16.msra.mxu0 %v4408
    %7661 = vmatpush.bf16.msra.mxu0 %v4400
    %7662 = vmatpush.bf16.msra.mxu0 %v4392
    %7663 = vmatpush.bf16.msra.mxu0 %v4384
    %7664 = vmatpush.bf16.msra.mxu0 %v4376
    %7665 = vmatpush.bf16.msra.mxu0 %v4368
    %7666 = vmatmul.bf16.gmra.mxu0 %v1258
    %v7667 = vpop.f32.mrf.mxu0
    %v7668 = vadd.f32 %v1224, %v7667
    %v7669 = vpop.f32.mrf.mxu0
    %7670 = vdwg.mxu0
    %7671 = vmatpush.bf16.msra.mxu0 %v4488
    %7672 = vmatpush.bf16.msra.mxu0 %v4480
    %7673 = vmatpush.bf16.msra.mxu0 %v4472
    %7674 = vmatpush.bf16.msra.mxu0 %v4464
    %7675 = vmatpush.bf16.msra.mxu0 %v4456
    %7676 = vmatpush.bf16.msra.mxu0 %v4448
    %7677 = vmatpush.bf16.msra.mxu0 %v4440
    %7678 = vmatpush.bf16.msra.mxu0 %v4432
    %7679 = vmatmul.bf16.gmra.mxu0 %v1259
    %v7680 = vpop.f32.mrf.mxu0
    %v7681 = vadd.f32 %v7668, %v7680
    %v7682 = vpop.f32.mrf.mxu0
    %7683 = vdwg.mxu0
    %7684 = vmatpush.bf16.msra.mxu0 %v4552
    %7685 = vmatpush.bf16.msra.mxu0 %v4544
    %7686 = vmatpush.bf16.msra.mxu0 %v4536
    %7687 = vmatpush.bf16.msra.mxu0 %v4528
    %7688 = vmatpush.bf16.msra.mxu0 %v4520
    %7689 = vmatpush.bf16.msra.mxu0 %v4512
    %7690 = vmatpush.bf16.msra.mxu0 %v4504
    %7691 = vmatpush.bf16.msra.mxu0 %v4496
    %7692 = vmatmul.bf16.gmra.mxu0 %v1260
    %v7693 = vpop.f32.mrf.mxu0
    %v7694 = vadd.f32 %v7681, %v7693
    %v7695 = vpop.f32.mrf.mxu0
    %7696 = vdwg.mxu0
    %7697 = vmatpush.bf16.msra.mxu0 %v4616
    %7698 = vmatpush.bf16.msra.mxu0 %v4608
    %7699 = vmatpush.bf16.msra.mxu0 %v4600
    %7700 = vmatpush.bf16.msra.mxu0 %v4592
    %7701 = vmatpush.bf16.msra.mxu0 %v4584
    %7702 = vmatpush.bf16.msra.mxu0 %v4576
    %7703 = vmatpush.bf16.msra.mxu0 %v4568
    %7704 = vmatpush.bf16.msra.mxu0 %v4560
    %7705 = vmatmul.bf16.gmra.mxu0 %v1261
    %v7706 = vpop.f32.mrf.mxu0
    %v7707 = vadd.f32 %v7694, %v7706
    %v7708 = vpop.f32.mrf.mxu0
    %7709 = vdwg.mxu0
    %7710 = vmatpush.bf16.msra.mxu0 %v4680
    %7711 = vmatpush.bf16.msra.mxu0 %v4672
    %7712 = vmatpush.bf16.msra.mxu0 %v4664
    %7713 = vmatpush.bf16.msra.mxu0 %v4656
    %7714 = vmatpush.bf16.msra.mxu0 %v4648
    %7715 = vmatpush.bf16.msra.mxu0 %v4640
    %7716 = vmatpush.bf16.msra.mxu0 %v4632
    %7717 = vmatpush.bf16.msra.mxu0 %v4624
    %7718 = vmatmul.bf16.gmra.mxu0 %v1262
    %v7719 = vpop.f32.mrf.mxu0
    %v7720 = vadd.f32 %v7707, %v7719
    %v7721 = vpop.f32.mrf.mxu0
    %7722 = vdwg.mxu0
    %7723 = vmatpush.bf16.msra.mxu0 %v4744
    %7724 = vmatpush.bf16.msra.mxu0 %v4736
    %7725 = vmatpush.bf16.msra.mxu0 %v4728
    %7726 = vmatpush.bf16.msra.mxu0 %v4720
    %7727 = vmatpush.bf16.msra.mxu0 %v4712
    %7728 = vmatpush.bf16.msra.mxu0 %v4704
    %7729 = vmatpush.bf16.msra.mxu0 %v4696
    %7730 = vmatpush.bf16.msra.mxu0 %v4688
    %7731 = vmatmul.bf16.gmra.mxu0 %v1263
    %v7732 = vpop.f32.mrf.mxu0
    %v7733 = vadd.f32 %v7720, %v7732
    %v7734 = vpop.f32.mrf.mxu0
    %7735 = vdwg.mxu0
    %7736 = vmatpush.bf16.msra.mxu0 %v4808
    %7737 = vmatpush.bf16.msra.mxu0 %v4800
    %7738 = vmatpush.bf16.msra.mxu0 %v4792
    %7739 = vmatpush.bf16.msra.mxu0 %v4784
    %7740 = vmatpush.bf16.msra.mxu0 %v4776
    %7741 = vmatpush.bf16.msra.mxu0 %v4768
    %7742 = vmatpush.bf16.msra.mxu0 %v4760
    %7743 = vmatpush.bf16.msra.mxu0 %v4752
    %7744 = vmatmul.bf16.gmra.mxu0 %v1264
    %v7745 = vpop.f32.mrf.mxu0
    %v7746 = vadd.f32 %v7733, %v7745
    %v7747 = vpop.f32.mrf.mxu0
    %7748 = vdwg.mxu0
    %7749 = vmatpush.bf16.msra.mxu0 %v4872
    %7750 = vmatpush.bf16.msra.mxu0 %v4864
    %7751 = vmatpush.bf16.msra.mxu0 %v4856
    %7752 = vmatpush.bf16.msra.mxu0 %v4848
    %7753 = vmatpush.bf16.msra.mxu0 %v4840
    %7754 = vmatpush.bf16.msra.mxu0 %v4832
    %7755 = vmatpush.bf16.msra.mxu0 %v4824
    %7756 = vmatpush.bf16.msra.mxu0 %v4816
    %7757 = vmatmul.bf16.gmra.mxu0 %v1265
    %v7758 = vpop.f32.mrf.mxu0
    %v7759 = vadd.f32 %v7746, %v7758
    %v7760 = vpop.f32.mrf.mxu0
    %7761 = vdwg.mxu0
    %7762 = vmatpush.bf16.msra.mxu0 %v4936
    %7763 = vmatpush.bf16.msra.mxu0 %v4928
    %7764 = vmatpush.bf16.msra.mxu0 %v4920
    %7765 = vmatpush.bf16.msra.mxu0 %v4912
    %7766 = vmatpush.bf16.msra.mxu0 %v4904
    %7767 = vmatpush.bf16.msra.mxu0 %v4896
    %7768 = vmatpush.bf16.msra.mxu0 %v4888
    %7769 = vmatpush.bf16.msra.mxu0 %v4880
    %7770 = vmatmul.bf16.gmra.mxu0 %v1266
    %v7771 = vpop.f32.mrf.mxu0
    %v7772 = vadd.f32 %v7759, %v7771
    %v7773 = vpop.f32.mrf.mxu0
    %7774 = vdwg.mxu0
    %7775 = vmatpush.bf16.msra.mxu0 %v5000
    %7776 = vmatpush.bf16.msra.mxu0 %v4992
    %7777 = vmatpush.bf16.msra.mxu0 %v4984
    %7778 = vmatpush.bf16.msra.mxu0 %v4976
    %7779 = vmatpush.bf16.msra.mxu0 %v4968
    %7780 = vmatpush.bf16.msra.mxu0 %v4960
    %7781 = vmatpush.bf16.msra.mxu0 %v4952
    %7782 = vmatpush.bf16.msra.mxu0 %v4944
    %7783 = vmatmul.bf16.gmra.mxu0 %v1267
    %v7784 = vpop.f32.mrf.mxu0
    %v7785 = vadd.f32 %v7772, %v7784
    %v7786 = vpop.f32.mrf.mxu0
    %7787 = vdwg.mxu0
    %7788 = vmatpush.bf16.msra.mxu0 %v5064
    %7789 = vmatpush.bf16.msra.mxu0 %v5056
    %7790 = vmatpush.bf16.msra.mxu0 %v5048
    %7791 = vmatpush.bf16.msra.mxu0 %v5040
    %7792 = vmatpush.bf16.msra.mxu0 %v5032
    %7793 = vmatpush.bf16.msra.mxu0 %v5024
    %7794 = vmatpush.bf16.msra.mxu0 %v5016
    %7795 = vmatpush.bf16.msra.mxu0 %v5008
    %7796 = vmatmul.bf16.gmra.mxu0 %v1268
    %v7797 = vpop.f32.mrf.mxu0
    %v7798 = vadd.f32 %v7785, %v7797
    %v7799 = vpop.f32.mrf.mxu0
    %7800 = vdwg.mxu0
    %7801 = vmatpush.bf16.msra.mxu0 %v5128
    %7802 = vmatpush.bf16.msra.mxu0 %v5120
    %7803 = vmatpush.bf16.msra.mxu0 %v5112
    %7804 = vmatpush.bf16.msra.mxu0 %v5104
    %7805 = vmatpush.bf16.msra.mxu0 %v5096
    %7806 = vmatpush.bf16.msra.mxu0 %v5088
    %7807 = vmatpush.bf16.msra.mxu0 %v5080
    %7808 = vmatpush.bf16.msra.mxu0 %v5072
    %7809 = vmatmul.bf16.gmra.mxu0 %v1269
    %v7810 = vpop.f32.mrf.mxu0
    %v7811 = vadd.f32 %v7798, %v7810
    %v7812 = vpop.f32.mrf.mxu0
    %7813 = vdwg.mxu0
    %7814 = vmatpush.bf16.msra.mxu0 %v5192
    %7815 = vmatpush.bf16.msra.mxu0 %v5184
    %7816 = vmatpush.bf16.msra.mxu0 %v5176
    %7817 = vmatpush.bf16.msra.mxu0 %v5168
    %7818 = vmatpush.bf16.msra.mxu0 %v5160
    %7819 = vmatpush.bf16.msra.mxu0 %v5152
    %7820 = vmatpush.bf16.msra.mxu0 %v5144
    %7821 = vmatpush.bf16.msra.mxu0 %v5136
    %7822 = vmatmul.bf16.gmra.mxu0 %v1270
    %v7823 = vpop.f32.mrf.mxu0
    %v7824 = vadd.f32 %v7811, %v7823
    %v7825 = vpop.f32.mrf.mxu0
    %7826 = vdwg.mxu0
    %7827 = vmatpush.bf16.msra.mxu0 %v5256
    %7828 = vmatpush.bf16.msra.mxu0 %v5248
    %7829 = vmatpush.bf16.msra.mxu0 %v5240
    %7830 = vmatpush.bf16.msra.mxu0 %v5232
    %7831 = vmatpush.bf16.msra.mxu0 %v5224
    %7832 = vmatpush.bf16.msra.mxu0 %v5216
    %7833 = vmatpush.bf16.msra.mxu0 %v5208
    %7834 = vmatpush.bf16.msra.mxu0 %v5200
    %7835 = vmatmul.bf16.gmra.mxu0 %v1271
    %v7836 = vpop.f32.mrf.mxu0
    %v7837 = vadd.f32 %v7824, %v7836
    %v7838 = vpop.f32.mrf.mxu0
    %7839 = vdwg.mxu0
    %7840 = vmatpush.bf16.msra.mxu0 %v5320
    %7841 = vmatpush.bf16.msra.mxu0 %v5312
    %7842 = vmatpush.bf16.msra.mxu0 %v5304
    %7843 = vmatpush.bf16.msra.mxu0 %v5296
    %7844 = vmatpush.bf16.msra.mxu0 %v5288
    %7845 = vmatpush.bf16.msra.mxu0 %v5280
    %7846 = vmatpush.bf16.msra.mxu0 %v5272
    %7847 = vmatpush.bf16.msra.mxu0 %v5264
    %7848 = vmatmul.bf16.gmra.mxu0 %v1272
    %v7849 = vpop.f32.mrf.mxu0
    %v7850 = vadd.f32 %v7837, %v7849
    %v7851 = vpop.f32.mrf.mxu0
    %7852 = vdwg.mxu0
    %7853 = vmatpush.bf16.msra.mxu0 %v5384
    %7854 = vmatpush.bf16.msra.mxu0 %v5376
    %7855 = vmatpush.bf16.msra.mxu0 %v5368
    %7856 = vmatpush.bf16.msra.mxu0 %v5360
    %7857 = vmatpush.bf16.msra.mxu0 %v5352
    %7858 = vmatpush.bf16.msra.mxu0 %v5344
    %7859 = vmatpush.bf16.msra.mxu0 %v5336
    %7860 = vmatpush.bf16.msra.mxu0 %v5328
    %7861 = vmatmul.bf16.gmra.mxu0 %v1273
    %v7862 = vpop.f32.mrf.mxu0
    %v7863 = vadd.f32 %v7850, %v7862
    %v7864 = vpop.f32.mrf.mxu0
    %7865 = vdwg.mxu0
    %7866 = vmatpush.bf16.msra.mxu0 %v4425
    %7867 = vmatpush.bf16.msra.mxu0 %v4417
    %7868 = vmatpush.bf16.msra.mxu0 %v4409
    %7869 = vmatpush.bf16.msra.mxu0 %v4401
    %7870 = vmatpush.bf16.msra.mxu0 %v4393
    %7871 = vmatpush.bf16.msra.mxu0 %v4385
    %7872 = vmatpush.bf16.msra.mxu0 %v4377
    %7873 = vmatpush.bf16.msra.mxu0 %v4369
    %7874 = vmatmul.bf16.gmra.mxu0 %v1258
    %v7875 = vpop.f32.mrf.mxu0
    %v7876 = vadd.f32 %v1225, %v7875
    %v7877 = vpop.f32.mrf.mxu0
    %7878 = vdwg.mxu0
    %7879 = vmatpush.bf16.msra.mxu0 %v4489
    %7880 = vmatpush.bf16.msra.mxu0 %v4481
    %7881 = vmatpush.bf16.msra.mxu0 %v4473
    %7882 = vmatpush.bf16.msra.mxu0 %v4465
    %7883 = vmatpush.bf16.msra.mxu0 %v4457
    %7884 = vmatpush.bf16.msra.mxu0 %v4449
    %7885 = vmatpush.bf16.msra.mxu0 %v4441
    %7886 = vmatpush.bf16.msra.mxu0 %v4433
    %7887 = vmatmul.bf16.gmra.mxu0 %v1259
    %v7888 = vpop.f32.mrf.mxu0
    %v7889 = vadd.f32 %v7876, %v7888
    %v7890 = vpop.f32.mrf.mxu0
    %7891 = vdwg.mxu0
    %7892 = vmatpush.bf16.msra.mxu0 %v4553
    %7893 = vmatpush.bf16.msra.mxu0 %v4545
    %7894 = vmatpush.bf16.msra.mxu0 %v4537
    %7895 = vmatpush.bf16.msra.mxu0 %v4529
    %7896 = vmatpush.bf16.msra.mxu0 %v4521
    %7897 = vmatpush.bf16.msra.mxu0 %v4513
    %7898 = vmatpush.bf16.msra.mxu0 %v4505
    %7899 = vmatpush.bf16.msra.mxu0 %v4497
    %7900 = vmatmul.bf16.gmra.mxu0 %v1260
    %v7901 = vpop.f32.mrf.mxu0
    %v7902 = vadd.f32 %v7889, %v7901
    %v7903 = vpop.f32.mrf.mxu0
    %7904 = vdwg.mxu0
    %7905 = vmatpush.bf16.msra.mxu0 %v4617
    %7906 = vmatpush.bf16.msra.mxu0 %v4609
    %7907 = vmatpush.bf16.msra.mxu0 %v4601
    %7908 = vmatpush.bf16.msra.mxu0 %v4593
    %7909 = vmatpush.bf16.msra.mxu0 %v4585
    %7910 = vmatpush.bf16.msra.mxu0 %v4577
    %7911 = vmatpush.bf16.msra.mxu0 %v4569
    %7912 = vmatpush.bf16.msra.mxu0 %v4561
    %7913 = vmatmul.bf16.gmra.mxu0 %v1261
    %v7914 = vpop.f32.mrf.mxu0
    %v7915 = vadd.f32 %v7902, %v7914
    %v7916 = vpop.f32.mrf.mxu0
    %7917 = vdwg.mxu0
    %7918 = vmatpush.bf16.msra.mxu0 %v4681
    %7919 = vmatpush.bf16.msra.mxu0 %v4673
    %7920 = vmatpush.bf16.msra.mxu0 %v4665
    %7921 = vmatpush.bf16.msra.mxu0 %v4657
    %7922 = vmatpush.bf16.msra.mxu0 %v4649
    %7923 = vmatpush.bf16.msra.mxu0 %v4641
    %7924 = vmatpush.bf16.msra.mxu0 %v4633
    %7925 = vmatpush.bf16.msra.mxu0 %v4625
    %7926 = vmatmul.bf16.gmra.mxu0 %v1262
    %v7927 = vpop.f32.mrf.mxu0
    %v7928 = vadd.f32 %v7915, %v7927
    %v7929 = vpop.f32.mrf.mxu0
    %7930 = vdwg.mxu0
    %7931 = vmatpush.bf16.msra.mxu0 %v4745
    %7932 = vmatpush.bf16.msra.mxu0 %v4737
    %7933 = vmatpush.bf16.msra.mxu0 %v4729
    %7934 = vmatpush.bf16.msra.mxu0 %v4721
    %7935 = vmatpush.bf16.msra.mxu0 %v4713
    %7936 = vmatpush.bf16.msra.mxu0 %v4705
    %7937 = vmatpush.bf16.msra.mxu0 %v4697
    %7938 = vmatpush.bf16.msra.mxu0 %v4689
    %7939 = vmatmul.bf16.gmra.mxu0 %v1263
    %v7940 = vpop.f32.mrf.mxu0
    %v7941 = vadd.f32 %v7928, %v7940
    %v7942 = vpop.f32.mrf.mxu0
    %7943 = vdwg.mxu0
    %7944 = vmatpush.bf16.msra.mxu0 %v4809
    %7945 = vmatpush.bf16.msra.mxu0 %v4801
    %7946 = vmatpush.bf16.msra.mxu0 %v4793
    %7947 = vmatpush.bf16.msra.mxu0 %v4785
    %7948 = vmatpush.bf16.msra.mxu0 %v4777
    %7949 = vmatpush.bf16.msra.mxu0 %v4769
    %7950 = vmatpush.bf16.msra.mxu0 %v4761
    %7951 = vmatpush.bf16.msra.mxu0 %v4753
    %7952 = vmatmul.bf16.gmra.mxu0 %v1264
    %v7953 = vpop.f32.mrf.mxu0
    %v7954 = vadd.f32 %v7941, %v7953
    %v7955 = vpop.f32.mrf.mxu0
    %7956 = vdwg.mxu0
    %7957 = vmatpush.bf16.msra.mxu0 %v4873
    %7958 = vmatpush.bf16.msra.mxu0 %v4865
    %7959 = vmatpush.bf16.msra.mxu0 %v4857
    %7960 = vmatpush.bf16.msra.mxu0 %v4849
    %7961 = vmatpush.bf16.msra.mxu0 %v4841
    %7962 = vmatpush.bf16.msra.mxu0 %v4833
    %7963 = vmatpush.bf16.msra.mxu0 %v4825
    %7964 = vmatpush.bf16.msra.mxu0 %v4817
    %7965 = vmatmul.bf16.gmra.mxu0 %v1265
    %v7966 = vpop.f32.mrf.mxu0
    %v7967 = vadd.f32 %v7954, %v7966
    %v7968 = vpop.f32.mrf.mxu0
    %7969 = vdwg.mxu0
    %7970 = vmatpush.bf16.msra.mxu0 %v4937
    %7971 = vmatpush.bf16.msra.mxu0 %v4929
    %7972 = vmatpush.bf16.msra.mxu0 %v4921
    %7973 = vmatpush.bf16.msra.mxu0 %v4913
    %7974 = vmatpush.bf16.msra.mxu0 %v4905
    %7975 = vmatpush.bf16.msra.mxu0 %v4897
    %7976 = vmatpush.bf16.msra.mxu0 %v4889
    %7977 = vmatpush.bf16.msra.mxu0 %v4881
    %7978 = vmatmul.bf16.gmra.mxu0 %v1266
    %v7979 = vpop.f32.mrf.mxu0
    %v7980 = vadd.f32 %v7967, %v7979
    %v7981 = vpop.f32.mrf.mxu0
    %7982 = vdwg.mxu0
    %7983 = vmatpush.bf16.msra.mxu0 %v5001
    %7984 = vmatpush.bf16.msra.mxu0 %v4993
    %7985 = vmatpush.bf16.msra.mxu0 %v4985
    %7986 = vmatpush.bf16.msra.mxu0 %v4977
    %7987 = vmatpush.bf16.msra.mxu0 %v4969
    %7988 = vmatpush.bf16.msra.mxu0 %v4961
    %7989 = vmatpush.bf16.msra.mxu0 %v4953
    %7990 = vmatpush.bf16.msra.mxu0 %v4945
    %7991 = vmatmul.bf16.gmra.mxu0 %v1267
    %v7992 = vpop.f32.mrf.mxu0
    %v7993 = vadd.f32 %v7980, %v7992
    %v7994 = vpop.f32.mrf.mxu0
    %7995 = vdwg.mxu0
    %7996 = vmatpush.bf16.msra.mxu0 %v5065
    %7997 = vmatpush.bf16.msra.mxu0 %v5057
    %7998 = vmatpush.bf16.msra.mxu0 %v5049
    %7999 = vmatpush.bf16.msra.mxu0 %v5041
    %8000 = vmatpush.bf16.msra.mxu0 %v5033
    %8001 = vmatpush.bf16.msra.mxu0 %v5025
    %8002 = vmatpush.bf16.msra.mxu0 %v5017
    %8003 = vmatpush.bf16.msra.mxu0 %v5009
    %8004 = vmatmul.bf16.gmra.mxu0 %v1268
    %v8005 = vpop.f32.mrf.mxu0
    %v8006 = vadd.f32 %v7993, %v8005
    %v8007 = vpop.f32.mrf.mxu0
    %8008 = vdwg.mxu0
    %8009 = vmatpush.bf16.msra.mxu0 %v5129
    %8010 = vmatpush.bf16.msra.mxu0 %v5121
    %8011 = vmatpush.bf16.msra.mxu0 %v5113
    %8012 = vmatpush.bf16.msra.mxu0 %v5105
    %8013 = vmatpush.bf16.msra.mxu0 %v5097
    %8014 = vmatpush.bf16.msra.mxu0 %v5089
    %8015 = vmatpush.bf16.msra.mxu0 %v5081
    %8016 = vmatpush.bf16.msra.mxu0 %v5073
    %8017 = vmatmul.bf16.gmra.mxu0 %v1269
    %v8018 = vpop.f32.mrf.mxu0
    %v8019 = vadd.f32 %v8006, %v8018
    %v8020 = vpop.f32.mrf.mxu0
    %8021 = vdwg.mxu0
    %8022 = vmatpush.bf16.msra.mxu0 %v5193
    %8023 = vmatpush.bf16.msra.mxu0 %v5185
    %8024 = vmatpush.bf16.msra.mxu0 %v5177
    %8025 = vmatpush.bf16.msra.mxu0 %v5169
    %8026 = vmatpush.bf16.msra.mxu0 %v5161
    %8027 = vmatpush.bf16.msra.mxu0 %v5153
    %8028 = vmatpush.bf16.msra.mxu0 %v5145
    %8029 = vmatpush.bf16.msra.mxu0 %v5137
    %8030 = vmatmul.bf16.gmra.mxu0 %v1270
    %v8031 = vpop.f32.mrf.mxu0
    %v8032 = vadd.f32 %v8019, %v8031
    %v8033 = vpop.f32.mrf.mxu0
    %8034 = vdwg.mxu0
    %8035 = vmatpush.bf16.msra.mxu0 %v5257
    %8036 = vmatpush.bf16.msra.mxu0 %v5249
    %8037 = vmatpush.bf16.msra.mxu0 %v5241
    %8038 = vmatpush.bf16.msra.mxu0 %v5233
    %8039 = vmatpush.bf16.msra.mxu0 %v5225
    %8040 = vmatpush.bf16.msra.mxu0 %v5217
    %8041 = vmatpush.bf16.msra.mxu0 %v5209
    %8042 = vmatpush.bf16.msra.mxu0 %v5201
    %8043 = vmatmul.bf16.gmra.mxu0 %v1271
    %v8044 = vpop.f32.mrf.mxu0
    %v8045 = vadd.f32 %v8032, %v8044
    %v8046 = vpop.f32.mrf.mxu0
    %8047 = vdwg.mxu0
    %8048 = vmatpush.bf16.msra.mxu0 %v5321
    %8049 = vmatpush.bf16.msra.mxu0 %v5313
    %8050 = vmatpush.bf16.msra.mxu0 %v5305
    %8051 = vmatpush.bf16.msra.mxu0 %v5297
    %8052 = vmatpush.bf16.msra.mxu0 %v5289
    %8053 = vmatpush.bf16.msra.mxu0 %v5281
    %8054 = vmatpush.bf16.msra.mxu0 %v5273
    %8055 = vmatpush.bf16.msra.mxu0 %v5265
    %8056 = vmatmul.bf16.gmra.mxu0 %v1272
    %v8057 = vpop.f32.mrf.mxu0
    %v8058 = vadd.f32 %v8045, %v8057
    %v8059 = vpop.f32.mrf.mxu0
    %8060 = vdwg.mxu0
    %8061 = vmatpush.bf16.msra.mxu0 %v5385
    %8062 = vmatpush.bf16.msra.mxu0 %v5377
    %8063 = vmatpush.bf16.msra.mxu0 %v5369
    %8064 = vmatpush.bf16.msra.mxu0 %v5361
    %8065 = vmatpush.bf16.msra.mxu0 %v5353
    %8066 = vmatpush.bf16.msra.mxu0 %v5345
    %8067 = vmatpush.bf16.msra.mxu0 %v5337
    %8068 = vmatpush.bf16.msra.mxu0 %v5329
    %8069 = vmatmul.bf16.gmra.mxu0 %v1273
    %v8070 = vpop.f32.mrf.mxu0
    %v8071 = vadd.f32 %v8058, %v8070
    %v8072 = vpop.f32.mrf.mxu0
    %8073 = vdwg.mxu0
    %v8074 = vmax.f32 %v6615, 0.0
    %v8075 = vmax.f32 %v6823, 0.0
    %v8076 = vmax.f32 %v7031, 0.0
    %v8077 = vmax.f32 %v7239, 0.0
    %v8078 = vmax.f32 %v7447, 0.0
    %v8079 = vmax.f32 %v7655, 0.0
    %v8080 = vmax.f32 %v7863, 0.0
    %v8081 = vmax.f32 %v8071, 0.0
    %v8082 = vpack.c.bf16 %v8074, %v8074
    %v8083 = vpack.c.bf16 %v8075, %v8075
    %v8084 = vpack.c.bf16 %v8076, %v8076
    %v8085 = vpack.c.bf16 %v8077, %v8077
    %v8086 = vpack.c.bf16 %v8078, %v8078
    %v8087 = vpack.c.bf16 %v8079, %v8079
    %v8088 = vpack.c.bf16 %v8080, %v8080
    %v8089 = vpack.c.bf16 %v8081, %v8081
    %v8090 = vld [vmem:[#allocation6] sm:$0xff]
    %v8091 = vld [vmem:[#allocation6 + $0x8] sm:$0xff]
    %v8092 = vld [vmem:[#allocation6 + $0x10] sm:$0xff]
    %v8093 = vld [vmem:[#allocation6 + $0x18] sm:$0xff]
    %v8094 = vld [vmem:[#allocation6 + $0x20] sm:$0xff]
    %v8095 = vld [vmem:[#allocation6 + $0x28] sm:$0xff]
    %v8096 = vld [vmem:[#allocation6 + $0x30] sm:$0xff]
    %v8097 = vld [vmem:[#allocation6 + $0x38] sm:$0xff]
    %v8098 = vld [vmem:[#allocation6 + $0x40] sm:$0xff]
    %v8099 = vld [vmem:[#allocation6 + $0x48] sm:$0xff]
    %v8100 = vld [vmem:[#allocation6 + $0x50] sm:$0xff]
    %v8101 = vld [vmem:[#allocation6 + $0x58] sm:$0xff]
    %v8102 = vld [vmem:[#allocation6 + $0x60] sm:$0xff]
    %v8103 = vld [vmem:[#allocation6 + $0x68] sm:$0xff]
    %v8104 = vld [vmem:[#allocation6 + $0x70] sm:$0xff]
    %v8105 = vld [vmem:[#allocation6 + $0x78] sm:$0xff]
    %v8106 = vld [vmem:[#allocation6 + $0x80] sm:$0xff]
    %v8107 = vld [vmem:[#allocation6 + $0x88] sm:$0xff]
    %v8108 = vld [vmem:[#allocation6 + $0x90] sm:$0xff]
    %v8109 = vld [vmem:[#allocation6 + $0x98] sm:$0xff]
    %v8110 = vld [vmem:[#allocation6 + $0xa0] sm:$0xff]
    %v8111 = vld [vmem:[#allocation6 + $0xa8] sm:$0xff]
    %v8112 = vld [vmem:[#allocation6 + $0xb0] sm:$0xff]
    %v8113 = vld [vmem:[#allocation6 + $0xb8] sm:$0xff]
    %v8114 = vld [vmem:[#allocation6 + $0xc0] sm:$0xff]
    %v8115 = vld [vmem:[#allocation6 + $0xc8] sm:$0xff]
    %v8116 = vld [vmem:[#allocation6 + $0xd0] sm:$0xff]
    %v8117 = vld [vmem:[#allocation6 + $0xd8] sm:$0xff]
    %v8118 = vld [vmem:[#allocation6 + $0xe0] sm:$0xff]
    %v8119 = vld [vmem:[#allocation6 + $0xe8] sm:$0xff]
    %v8120 = vld [vmem:[#allocation6 + $0xf0] sm:$0xff]
    %v8121 = vld [vmem:[#allocation6 + $0xf8] sm:$0xff]
    %v8122 = vld [vmem:[#allocation6 + $0x100] sm:$0xff]
    %v8123 = vld [vmem:[#allocation6 + $0x108] sm:$0xff]
    %v8124 = vld [vmem:[#allocation6 + $0x110] sm:$0xff]
    %v8125 = vld [vmem:[#allocation6 + $0x118] sm:$0xff]
    %v8126 = vld [vmem:[#allocation6 + $0x120] sm:$0xff]
    %v8127 = vld [vmem:[#allocation6 + $0x128] sm:$0xff]
    %v8128 = vld [vmem:[#allocation6 + $0x130] sm:$0xff]
    %v8129 = vld [vmem:[#allocation6 + $0x138] sm:$0xff]
    %v8130 = vld [vmem:[#allocation6 + $0x140] sm:$0xff]
    %v8131 = vld [vmem:[#allocation6 + $0x148] sm:$0xff]
    %v8132 = vld [vmem:[#allocation6 + $0x150] sm:$0xff]
    %v8133 = vld [vmem:[#allocation6 + $0x158] sm:$0xff]
    %v8134 = vld [vmem:[#allocation6 + $0x160] sm:$0xff]
    %v8135 = vld [vmem:[#allocation6 + $0x168] sm:$0xff]
    %v8136 = vld [vmem:[#allocation6 + $0x170] sm:$0xff]
    %v8137 = vld [vmem:[#allocation6 + $0x178] sm:$0xff]
    %v8138 = vld [vmem:[#allocation6 + $0x180] sm:$0xff]
    %v8139 = vld [vmem:[#allocation6 + $0x188] sm:$0xff]
    %v8140 = vld [vmem:[#allocation6 + $0x190] sm:$0xff]
    %v8141 = vld [vmem:[#allocation6 + $0x198] sm:$0xff]
    %v8142 = vld [vmem:[#allocation6 + $0x1a0] sm:$0xff]
    %v8143 = vld [vmem:[#allocation6 + $0x1a8] sm:$0xff]
    %v8144 = vld [vmem:[#allocation6 + $0x1b0] sm:$0xff]
    %v8145 = vld [vmem:[#allocation6 + $0x1b8] sm:$0xff]
    %v8146 = vld [vmem:[#allocation6 + $0x1c0] sm:$0xff]
    %v8147 = vld [vmem:[#allocation6 + $0x1c8] sm:$0xff]
    %v8148 = vld [vmem:[#allocation6 + $0x1d0] sm:$0xff]
    %v8149 = vld [vmem:[#allocation6 + $0x1d8] sm:$0xff]
    %v8150 = vld [vmem:[#allocation6 + $0x1e0] sm:$0xff]
    %v8151 = vld [vmem:[#allocation6 + $0x1e8] sm:$0xff]
    %v8152 = vld [vmem:[#allocation6 + $0x1f0] sm:$0xff]
    %v8153 = vld [vmem:[#allocation6 + $0x1f8] sm:$0xff]
    %v8154 = vld [vmem:[#allocation6 + $0x200] sm:$0xff]
    %v8155 = vld [vmem:[#allocation6 + $0x208] sm:$0xff]
    %v8156 = vld [vmem:[#allocation6 + $0x210] sm:$0xff]
    %v8157 = vld [vmem:[#allocation6 + $0x218] sm:$0xff]
    %v8158 = vld [vmem:[#allocation6 + $0x220] sm:$0xff]
    %v8159 = vld [vmem:[#allocation6 + $0x228] sm:$0xff]
    %v8160 = vld [vmem:[#allocation6 + $0x230] sm:$0xff]
    %v8161 = vld [vmem:[#allocation6 + $0x238] sm:$0xff]
    %v8162 = vld [vmem:[#allocation6 + $0x240] sm:$0xff]
    %v8163 = vld [vmem:[#allocation6 + $0x248] sm:$0xff]
    %v8164 = vld [vmem:[#allocation6 + $0x250] sm:$0xff]
    %v8165 = vld [vmem:[#allocation6 + $0x258] sm:$0xff]
    %v8166 = vld [vmem:[#allocation6 + $0x260] sm:$0xff]
    %v8167 = vld [vmem:[#allocation6 + $0x268] sm:$0xff]
    %v8168 = vld [vmem:[#allocation6 + $0x270] sm:$0xff]
    %v8169 = vld [vmem:[#allocation6 + $0x278] sm:$0xff]
    %v8170 = vld [vmem:[#allocation6 + $0x280] sm:$0xff]
    %v8171 = vld [vmem:[#allocation6 + $0x288] sm:$0xff]
    %v8172 = vld [vmem:[#allocation6 + $0x290] sm:$0xff]
    %v8173 = vld [vmem:[#allocation6 + $0x298] sm:$0xff]
    %v8174 = vld [vmem:[#allocation6 + $0x2a0] sm:$0xff]
    %v8175 = vld [vmem:[#allocation6 + $0x2a8] sm:$0xff]
    %v8176 = vld [vmem:[#allocation6 + $0x2b0] sm:$0xff]
    %v8177 = vld [vmem:[#allocation6 + $0x2b8] sm:$0xff]
    %v8178 = vld [vmem:[#allocation6 + $0x2c0] sm:$0xff]
    %v8179 = vld [vmem:[#allocation6 + $0x2c8] sm:$0xff]
    %v8180 = vld [vmem:[#allocation6 + $0x2d0] sm:$0xff]
    %v8181 = vld [vmem:[#allocation6 + $0x2d8] sm:$0xff]
    %v8182 = vld [vmem:[#allocation6 + $0x2e0] sm:$0xff]
    %v8183 = vld [vmem:[#allocation6 + $0x2e8] sm:$0xff]
    %v8184 = vld [vmem:[#allocation6 + $0x2f0] sm:$0xff]
    %v8185 = vld [vmem:[#allocation6 + $0x2f8] sm:$0xff]
    %v8186 = vld [vmem:[#allocation6 + $0x300] sm:$0xff]
    %v8187 = vld [vmem:[#allocation6 + $0x308] sm:$0xff]
    %v8188 = vld [vmem:[#allocation6 + $0x310] sm:$0xff]
    %v8189 = vld [vmem:[#allocation6 + $0x318] sm:$0xff]
    %v8190 = vld [vmem:[#allocation6 + $0x320] sm:$0xff]
    %v8191 = vld [vmem:[#allocation6 + $0x328] sm:$0xff]
    %v8192 = vld [vmem:[#allocation6 + $0x330] sm:$0xff]
    %v8193 = vld [vmem:[#allocation6 + $0x338] sm:$0xff]
    %v8194 = vld [vmem:[#allocation6 + $0x340] sm:$0xff]
    %v8195 = vld [vmem:[#allocation6 + $0x348] sm:$0xff]
    %v8196 = vld [vmem:[#allocation6 + $0x350] sm:$0xff]
    %v8197 = vld [vmem:[#allocation6 + $0x358] sm:$0xff]
    %v8198 = vld [vmem:[#allocation6 + $0x360] sm:$0xff]
    %v8199 = vld [vmem:[#allocation6 + $0x368] sm:$0xff]
    %v8200 = vld [vmem:[#allocation6 + $0x370] sm:$0xff]
    %v8201 = vld [vmem:[#allocation6 + $0x378] sm:$0xff]
    %v8202 = vld [vmem:[#allocation6 + $0x380] sm:$0xff]
    %v8203 = vld [vmem:[#allocation6 + $0x388] sm:$0xff]
    %v8204 = vld [vmem:[#allocation6 + $0x390] sm:$0xff]
    %v8205 = vld [vmem:[#allocation6 + $0x398] sm:$0xff]
    %v8206 = vld [vmem:[#allocation6 + $0x3a0] sm:$0xff]
    %v8207 = vld [vmem:[#allocation6 + $0x3a8] sm:$0xff]
    %v8208 = vld [vmem:[#allocation6 + $0x3b0] sm:$0xff]
    %v8209 = vld [vmem:[#allocation6 + $0x3b8] sm:$0xff]
    %v8210 = vld [vmem:[#allocation6 + $0x3c0] sm:$0xff]
    %v8211 = vld [vmem:[#allocation6 + $0x3c8] sm:$0xff]
    %v8212 = vld [vmem:[#allocation6 + $0x3d0] sm:$0xff]
    %v8213 = vld [vmem:[#allocation6 + $0x3d8] sm:$0xff]
    %v8214 = vld [vmem:[#allocation6 + $0x3e0] sm:$0xff]
    %v8215 = vld [vmem:[#allocation6 + $0x3e8] sm:$0xff]
    %v8216 = vld [vmem:[#allocation6 + $0x3f0] sm:$0xff]
    %v8217 = vld [vmem:[#allocation6 + $0x3f8] sm:$0xff]
    %v8218 = vld [vmem:[#allocation6 + $0x400] sm:$0xff]
    %v8219 = vld [vmem:[#allocation6 + $0x408] sm:$0xff]
    %v8220 = vld [vmem:[#allocation6 + $0x410] sm:$0xff]
    %v8221 = vld [vmem:[#allocation6 + $0x418] sm:$0xff]
    %v8222 = vld [vmem:[#allocation6 + $0x420] sm:$0xff]
    %v8223 = vld [vmem:[#allocation6 + $0x428] sm:$0xff]
    %v8224 = vld [vmem:[#allocation6 + $0x430] sm:$0xff]
    %v8225 = vld [vmem:[#allocation6 + $0x438] sm:$0xff]
    %v8226 = vld [vmem:[#allocation6 + $0x440] sm:$0xff]
    %v8227 = vld [vmem:[#allocation6 + $0x448] sm:$0xff]
    %v8228 = vld [vmem:[#allocation6 + $0x450] sm:$0xff]
    %v8229 = vld [vmem:[#allocation6 + $0x458] sm:$0xff]
    %v8230 = vld [vmem:[#allocation6 + $0x460] sm:$0xff]
    %v8231 = vld [vmem:[#allocation6 + $0x468] sm:$0xff]
    %v8232 = vld [vmem:[#allocation6 + $0x470] sm:$0xff]
    %v8233 = vld [vmem:[#allocation6 + $0x478] sm:$0xff]
    %v8234 = vld [vmem:[#allocation6 + $0x480] sm:$0xff]
    %v8235 = vld [vmem:[#allocation6 + $0x488] sm:$0xff]
    %v8236 = vld [vmem:[#allocation6 + $0x490] sm:$0xff]
    %v8237 = vld [vmem:[#allocation6 + $0x498] sm:$0xff]
    %v8238 = vld [vmem:[#allocation6 + $0x4a0] sm:$0xff]
    %v8239 = vld [vmem:[#allocation6 + $0x4a8] sm:$0xff]
    %v8240 = vld [vmem:[#allocation6 + $0x4b0] sm:$0xff]
    %v8241 = vld [vmem:[#allocation6 + $0x4b8] sm:$0xff]
    %v8242 = vld [vmem:[#allocation6 + $0x4c0] sm:$0xff]
    %v8243 = vld [vmem:[#allocation6 + $0x4c8] sm:$0xff]
    %v8244 = vld [vmem:[#allocation6 + $0x4d0] sm:$0xff]
    %v8245 = vld [vmem:[#allocation6 + $0x4d8] sm:$0xff]
    %v8246 = vld [vmem:[#allocation6 + $0x4e0] sm:$0xff]
    %v8247 = vld [vmem:[#allocation6 + $0x4e8] sm:$0xff]
    %v8248 = vld [vmem:[#allocation6 + $0x4f0] sm:$0xff]
    %v8249 = vld [vmem:[#allocation6 + $0x4f8] sm:$0xff]
    %v8250 = vld [vmem:[#allocation6 + $0x500] sm:$0xff]
    %v8251 = vld [vmem:[#allocation6 + $0x508] sm:$0xff]
    %v8252 = vld [vmem:[#allocation6 + $0x510] sm:$0xff]
    %v8253 = vld [vmem:[#allocation6 + $0x518] sm:$0xff]
    %v8254 = vld [vmem:[#allocation6 + $0x520] sm:$0xff]
    %v8255 = vld [vmem:[#allocation6 + $0x528] sm:$0xff]
    %v8256 = vld [vmem:[#allocation6 + $0x530] sm:$0xff]
    %v8257 = vld [vmem:[#allocation6 + $0x538] sm:$0xff]
    %v8258 = vld [vmem:[#allocation6 + $0x540] sm:$0xff]
    %v8259 = vld [vmem:[#allocation6 + $0x548] sm:$0xff]
    %v8260 = vld [vmem:[#allocation6 + $0x550] sm:$0xff]
    %v8261 = vld [vmem:[#allocation6 + $0x558] sm:$0xff]
    %v8262 = vld [vmem:[#allocation6 + $0x560] sm:$0xff]
    %v8263 = vld [vmem:[#allocation6 + $0x568] sm:$0xff]
    %v8264 = vld [vmem:[#allocation6 + $0x570] sm:$0xff]
    %v8265 = vld [vmem:[#allocation6 + $0x578] sm:$0xff]
    %v8266 = vld [vmem:[#allocation6 + $0x580] sm:$0xff]
    %v8267 = vld [vmem:[#allocation6 + $0x588] sm:$0xff]
    %v8268 = vld [vmem:[#allocation6 + $0x590] sm:$0xff]
    %v8269 = vld [vmem:[#allocation6 + $0x598] sm:$0xff]
    %v8270 = vld [vmem:[#allocation6 + $0x5a0] sm:$0xff]
    %v8271 = vld [vmem:[#allocation6 + $0x5a8] sm:$0xff]
    %v8272 = vld [vmem:[#allocation6 + $0x5b0] sm:$0xff]
    %v8273 = vld [vmem:[#allocation6 + $0x5b8] sm:$0xff]
    %v8274 = vld [vmem:[#allocation6 + $0x5c0] sm:$0xff]
    %v8275 = vld [vmem:[#allocation6 + $0x5c8] sm:$0xff]
    %v8276 = vld [vmem:[#allocation6 + $0x5d0] sm:$0xff]
    %v8277 = vld [vmem:[#allocation6 + $0x5d8] sm:$0xff]
    %v8278 = vld [vmem:[#allocation6 + $0x5e0] sm:$0xff]
    %v8279 = vld [vmem:[#allocation6 + $0x5e8] sm:$0xff]
    %v8280 = vld [vmem:[#allocation6 + $0x5f0] sm:$0xff]
    %v8281 = vld [vmem:[#allocation6 + $0x5f8] sm:$0xff]
    %v8282 = vld [vmem:[#allocation6 + $0x600] sm:$0xff]
    %v8283 = vld [vmem:[#allocation6 + $0x608] sm:$0xff]
    %v8284 = vld [vmem:[#allocation6 + $0x610] sm:$0xff]
    %v8285 = vld [vmem:[#allocation6 + $0x618] sm:$0xff]
    %v8286 = vld [vmem:[#allocation6 + $0x620] sm:$0xff]
    %v8287 = vld [vmem:[#allocation6 + $0x628] sm:$0xff]
    %v8288 = vld [vmem:[#allocation6 + $0x630] sm:$0xff]
    %v8289 = vld [vmem:[#allocation6 + $0x638] sm:$0xff]
    %v8290 = vld [vmem:[#allocation6 + $0x640] sm:$0xff]
    %v8291 = vld [vmem:[#allocation6 + $0x648] sm:$0xff]
    %v8292 = vld [vmem:[#allocation6 + $0x650] sm:$0xff]
    %v8293 = vld [vmem:[#allocation6 + $0x658] sm:$0xff]
    %v8294 = vld [vmem:[#allocation6 + $0x660] sm:$0xff]
    %v8295 = vld [vmem:[#allocation6 + $0x668] sm:$0xff]
    %v8296 = vld [vmem:[#allocation6 + $0x670] sm:$0xff]
    %v8297 = vld [vmem:[#allocation6 + $0x678] sm:$0xff]
    %v8298 = vld [vmem:[#allocation6 + $0x680] sm:$0xff]
    %v8299 = vld [vmem:[#allocation6 + $0x688] sm:$0xff]
    %v8300 = vld [vmem:[#allocation6 + $0x690] sm:$0xff]
    %v8301 = vld [vmem:[#allocation6 + $0x698] sm:$0xff]
    %v8302 = vld [vmem:[#allocation6 + $0x6a0] sm:$0xff]
    %v8303 = vld [vmem:[#allocation6 + $0x6a8] sm:$0xff]
    %v8304 = vld [vmem:[#allocation6 + $0x6b0] sm:$0xff]
    %v8305 = vld [vmem:[#allocation6 + $0x6b8] sm:$0xff]
    %v8306 = vld [vmem:[#allocation6 + $0x6c0] sm:$0xff]
    %v8307 = vld [vmem:[#allocation6 + $0x6c8] sm:$0xff]
    %v8308 = vld [vmem:[#allocation6 + $0x6d0] sm:$0xff]
    %v8309 = vld [vmem:[#allocation6 + $0x6d8] sm:$0xff]
    %v8310 = vld [vmem:[#allocation6 + $0x6e0] sm:$0xff]
    %v8311 = vld [vmem:[#allocation6 + $0x6e8] sm:$0xff]
    %v8312 = vld [vmem:[#allocation6 + $0x6f0] sm:$0xff]
    %v8313 = vld [vmem:[#allocation6 + $0x6f8] sm:$0xff]
    %v8314 = vld [vmem:[#allocation6 + $0x700] sm:$0xff]
    %v8315 = vld [vmem:[#allocation6 + $0x708] sm:$0xff]
    %v8316 = vld [vmem:[#allocation6 + $0x710] sm:$0xff]
    %v8317 = vld [vmem:[#allocation6 + $0x718] sm:$0xff]
    %v8318 = vld [vmem:[#allocation6 + $0x720] sm:$0xff]
    %v8319 = vld [vmem:[#allocation6 + $0x728] sm:$0xff]
    %v8320 = vld [vmem:[#allocation6 + $0x730] sm:$0xff]
    %v8321 = vld [vmem:[#allocation6 + $0x738] sm:$0xff]
    %v8322 = vld [vmem:[#allocation6 + $0x740] sm:$0xff]
    %v8323 = vld [vmem:[#allocation6 + $0x748] sm:$0xff]
    %v8324 = vld [vmem:[#allocation6 + $0x750] sm:$0xff]
    %v8325 = vld [vmem:[#allocation6 + $0x758] sm:$0xff]
    %v8326 = vld [vmem:[#allocation6 + $0x760] sm:$0xff]
    %v8327 = vld [vmem:[#allocation6 + $0x768] sm:$0xff]
    %v8328 = vld [vmem:[#allocation6 + $0x770] sm:$0xff]
    %v8329 = vld [vmem:[#allocation6 + $0x778] sm:$0xff]
    %v8330 = vld [vmem:[#allocation6 + $0x780] sm:$0xff]
    %v8331 = vld [vmem:[#allocation6 + $0x788] sm:$0xff]
    %v8332 = vld [vmem:[#allocation6 + $0x790] sm:$0xff]
    %v8333 = vld [vmem:[#allocation6 + $0x798] sm:$0xff]
    %v8334 = vld [vmem:[#allocation6 + $0x7a0] sm:$0xff]
    %v8335 = vld [vmem:[#allocation6 + $0x7a8] sm:$0xff]
    %v8336 = vld [vmem:[#allocation6 + $0x7b0] sm:$0xff]
    %v8337 = vld [vmem:[#allocation6 + $0x7b8] sm:$0xff]
    %v8338 = vld [vmem:[#allocation6 + $0x7c0] sm:$0xff]
    %v8339 = vld [vmem:[#allocation6 + $0x7c8] sm:$0xff]
    %v8340 = vld [vmem:[#allocation6 + $0x7d0] sm:$0xff]
    %v8341 = vld [vmem:[#allocation6 + $0x7d8] sm:$0xff]
    %v8342 = vld [vmem:[#allocation6 + $0x7e0] sm:$0xff]
    %v8343 = vld [vmem:[#allocation6 + $0x7e8] sm:$0xff]
    %v8344 = vld [vmem:[#allocation6 + $0x7f0] sm:$0xff]
    %v8345 = vld [vmem:[#allocation6 + $0x7f8] sm:$0xff]
    %v8346 = vld [vmem:[#allocation7] sm:$0xf]
    %v8348 = vperm.slane %v8346, 0
    %v8349 = vperm.slane %v8346, 1
    %v8350 = vperm.slane %v8346, 2
    %v8351 = vperm.slane %v8346, 3
    %v8612 = vunpack.c.l.b16 %v8090
    %v8613 = vunpack.c.h.b16 %v8090
    %v8614 = vunpack.c.l.b16 %v8091
    %v8615 = vunpack.c.h.b16 %v8091
    %v8616 = vunpack.c.l.b16 %v8092
    %v8617 = vunpack.c.h.b16 %v8092
    %v8618 = vunpack.c.l.b16 %v8093
    %v8619 = vunpack.c.h.b16 %v8093
    %v8620 = vunpack.c.l.b16 %v8094
    %v8621 = vunpack.c.h.b16 %v8094
    %v8622 = vunpack.c.l.b16 %v8095
    %v8623 = vunpack.c.h.b16 %v8095
    %v8624 = vunpack.c.l.b16 %v8096
    %v8625 = vunpack.c.h.b16 %v8096
    %v8626 = vunpack.c.l.b16 %v8097
    %v8627 = vunpack.c.h.b16 %v8097
    %v8628 = vunpack.c.l.b16 %v8098
    %v8629 = vunpack.c.h.b16 %v8098
    %v8630 = vunpack.c.l.b16 %v8099
    %v8631 = vunpack.c.h.b16 %v8099
    %v8632 = vunpack.c.l.b16 %v8100
    %v8633 = vunpack.c.h.b16 %v8100
    %v8634 = vunpack.c.l.b16 %v8101
    %v8635 = vunpack.c.h.b16 %v8101
    %v8636 = vunpack.c.l.b16 %v8102
    %v8637 = vunpack.c.h.b16 %v8102
    %v8638 = vunpack.c.l.b16 %v8103
    %v8639 = vunpack.c.h.b16 %v8103
    %v8640 = vunpack.c.l.b16 %v8104
    %v8641 = vunpack.c.h.b16 %v8104
    %v8642 = vunpack.c.l.b16 %v8105
    %v8643 = vunpack.c.h.b16 %v8105
    %v8644 = vunpack.c.l.b16 %v8106
    %v8645 = vunpack.c.h.b16 %v8106
    %v8646 = vunpack.c.l.b16 %v8107
    %v8647 = vunpack.c.h.b16 %v8107
    %v8648 = vunpack.c.l.b16 %v8108
    %v8649 = vunpack.c.h.b16 %v8108
    %v8650 = vunpack.c.l.b16 %v8109
    %v8651 = vunpack.c.h.b16 %v8109
    %v8652 = vunpack.c.l.b16 %v8110
    %v8653 = vunpack.c.h.b16 %v8110
    %v8654 = vunpack.c.l.b16 %v8111
    %v8655 = vunpack.c.h.b16 %v8111
    %v8656 = vunpack.c.l.b16 %v8112
    %v8657 = vunpack.c.h.b16 %v8112
    %v8658 = vunpack.c.l.b16 %v8113
    %v8659 = vunpack.c.h.b16 %v8113
    %v8660 = vunpack.c.l.b16 %v8114
    %v8661 = vunpack.c.h.b16 %v8114
    %v8662 = vunpack.c.l.b16 %v8115
    %v8663 = vunpack.c.h.b16 %v8115
    %v8664 = vunpack.c.l.b16 %v8116
    %v8665 = vunpack.c.h.b16 %v8116
    %v8666 = vunpack.c.l.b16 %v8117
    %v8667 = vunpack.c.h.b16 %v8117
    %v8668 = vunpack.c.l.b16 %v8118
    %v8669 = vunpack.c.h.b16 %v8118
    %v8670 = vunpack.c.l.b16 %v8119
    %v8671 = vunpack.c.h.b16 %v8119
    %v8672 = vunpack.c.l.b16 %v8120
    %v8673 = vunpack.c.h.b16 %v8120
    %v8674 = vunpack.c.l.b16 %v8121
    %v8675 = vunpack.c.h.b16 %v8121
    %v8676 = vunpack.c.l.b16 %v8122
    %v8677 = vunpack.c.h.b16 %v8122
    %v8678 = vunpack.c.l.b16 %v8123
    %v8679 = vunpack.c.h.b16 %v8123
    %v8680 = vunpack.c.l.b16 %v8124
    %v8681 = vunpack.c.h.b16 %v8124
    %v8682 = vunpack.c.l.b16 %v8125
    %v8683 = vunpack.c.h.b16 %v8125
    %v8684 = vunpack.c.l.b16 %v8126
    %v8685 = vunpack.c.h.b16 %v8126
    %v8686 = vunpack.c.l.b16 %v8127
    %v8687 = vunpack.c.h.b16 %v8127
    %v8688 = vunpack.c.l.b16 %v8128
    %v8689 = vunpack.c.h.b16 %v8128
    %v8690 = vunpack.c.l.b16 %v8129
    %v8691 = vunpack.c.h.b16 %v8129
    %v8692 = vunpack.c.l.b16 %v8130
    %v8693 = vunpack.c.h.b16 %v8130
    %v8694 = vunpack.c.l.b16 %v8131
    %v8695 = vunpack.c.h.b16 %v8131
    %v8696 = vunpack.c.l.b16 %v8132
    %v8697 = vunpack.c.h.b16 %v8132
    %v8698 = vunpack.c.l.b16 %v8133
    %v8699 = vunpack.c.h.b16 %v8133
    %v8700 = vunpack.c.l.b16 %v8134
    %v8701 = vunpack.c.h.b16 %v8134
    %v8702 = vunpack.c.l.b16 %v8135
    %v8703 = vunpack.c.h.b16 %v8135
    %v8704 = vunpack.c.l.b16 %v8136
    %v8705 = vunpack.c.h.b16 %v8136
    %v8706 = vunpack.c.l.b16 %v8137
    %v8707 = vunpack.c.h.b16 %v8137
    %v8708 = vunpack.c.l.b16 %v8138
    %v8709 = vunpack.c.h.b16 %v8138
    %v8710 = vunpack.c.l.b16 %v8139
    %v8711 = vunpack.c.h.b16 %v8139
    %v8712 = vunpack.c.l.b16 %v8140
    %v8713 = vunpack.c.h.b16 %v8140
    %v8714 = vunpack.c.l.b16 %v8141
    %v8715 = vunpack.c.h.b16 %v8141
    %v8716 = vunpack.c.l.b16 %v8142
    %v8717 = vunpack.c.h.b16 %v8142
    %v8718 = vunpack.c.l.b16 %v8143
    %v8719 = vunpack.c.h.b16 %v8143
    %v8720 = vunpack.c.l.b16 %v8144
    %v8721 = vunpack.c.h.b16 %v8144
    %v8722 = vunpack.c.l.b16 %v8145
    %v8723 = vunpack.c.h.b16 %v8145
    %v8724 = vunpack.c.l.b16 %v8146
    %v8725 = vunpack.c.h.b16 %v8146
    %v8726 = vunpack.c.l.b16 %v8147
    %v8727 = vunpack.c.h.b16 %v8147
    %v8728 = vunpack.c.l.b16 %v8148
    %v8729 = vunpack.c.h.b16 %v8148
    %v8730 = vunpack.c.l.b16 %v8149
    %v8731 = vunpack.c.h.b16 %v8149
    %v8732 = vunpack.c.l.b16 %v8150
    %v8733 = vunpack.c.h.b16 %v8150
    %v8734 = vunpack.c.l.b16 %v8151
    %v8735 = vunpack.c.h.b16 %v8151
    %v8736 = vunpack.c.l.b16 %v8152
    %v8737 = vunpack.c.h.b16 %v8152
    %v8738 = vunpack.c.l.b16 %v8153
    %v8739 = vunpack.c.h.b16 %v8153
    %v8740 = vunpack.c.l.b16 %v8154
    %v8741 = vunpack.c.h.b16 %v8154
    %v8742 = vunpack.c.l.b16 %v8155
    %v8743 = vunpack.c.h.b16 %v8155
    %v8744 = vunpack.c.l.b16 %v8156
    %v8745 = vunpack.c.h.b16 %v8156
    %v8746 = vunpack.c.l.b16 %v8157
    %v8747 = vunpack.c.h.b16 %v8157
    %v8748 = vunpack.c.l.b16 %v8158
    %v8749 = vunpack.c.h.b16 %v8158
    %v8750 = vunpack.c.l.b16 %v8159
    %v8751 = vunpack.c.h.b16 %v8159
    %v8752 = vunpack.c.l.b16 %v8160
    %v8753 = vunpack.c.h.b16 %v8160
    %v8754 = vunpack.c.l.b16 %v8161
    %v8755 = vunpack.c.h.b16 %v8161
    %v8756 = vunpack.c.l.b16 %v8162
    %v8757 = vunpack.c.h.b16 %v8162
    %v8758 = vunpack.c.l.b16 %v8163
    %v8759 = vunpack.c.h.b16 %v8163
    %v8760 = vunpack.c.l.b16 %v8164
    %v8761 = vunpack.c.h.b16 %v8164
    %v8762 = vunpack.c.l.b16 %v8165
    %v8763 = vunpack.c.h.b16 %v8165
    %v8764 = vunpack.c.l.b16 %v8166
    %v8765 = vunpack.c.h.b16 %v8166
    %v8766 = vunpack.c.l.b16 %v8167
    %v8767 = vunpack.c.h.b16 %v8167
    %v8768 = vunpack.c.l.b16 %v8168
    %v8769 = vunpack.c.h.b16 %v8168
    %v8770 = vunpack.c.l.b16 %v8169
    %v8771 = vunpack.c.h.b16 %v8169
    %v8772 = vunpack.c.l.b16 %v8170
    %v8773 = vunpack.c.h.b16 %v8170
    %v8774 = vunpack.c.l.b16 %v8171
    %v8775 = vunpack.c.h.b16 %v8171
    %v8776 = vunpack.c.l.b16 %v8172
    %v8777 = vunpack.c.h.b16 %v8172
    %v8778 = vunpack.c.l.b16 %v8173
    %v8779 = vunpack.c.h.b16 %v8173
    %v8780 = vunpack.c.l.b16 %v8174
    %v8781 = vunpack.c.h.b16 %v8174
    %v8782 = vunpack.c.l.b16 %v8175
    %v8783 = vunpack.c.h.b16 %v8175
    %v8784 = vunpack.c.l.b16 %v8176
    %v8785 = vunpack.c.h.b16 %v8176
    %v8786 = vunpack.c.l.b16 %v8177
    %v8787 = vunpack.c.h.b16 %v8177
    %v8788 = vunpack.c.l.b16 %v8178
    %v8789 = vunpack.c.h.b16 %v8178
    %v8790 = vunpack.c.l.b16 %v8179
    %v8791 = vunpack.c.h.b16 %v8179
    %v8792 = vunpack.c.l.b16 %v8180
    %v8793 = vunpack.c.h.b16 %v8180
    %v8794 = vunpack.c.l.b16 %v8181
    %v8795 = vunpack.c.h.b16 %v8181
    %v8796 = vunpack.c.l.b16 %v8182
    %v8797 = vunpack.c.h.b16 %v8182
    %v8798 = vunpack.c.l.b16 %v8183
    %v8799 = vunpack.c.h.b16 %v8183
    %v8800 = vunpack.c.l.b16 %v8184
    %v8801 = vunpack.c.h.b16 %v8184
    %v8802 = vunpack.c.l.b16 %v8185
    %v8803 = vunpack.c.h.b16 %v8185
    %v8804 = vunpack.c.l.b16 %v8186
    %v8805 = vunpack.c.h.b16 %v8186
    %v8806 = vunpack.c.l.b16 %v8187
    %v8807 = vunpack.c.h.b16 %v8187
    %v8808 = vunpack.c.l.b16 %v8188
    %v8809 = vunpack.c.h.b16 %v8188
    %v8810 = vunpack.c.l.b16 %v8189
    %v8811 = vunpack.c.h.b16 %v8189
    %v8812 = vunpack.c.l.b16 %v8190
    %v8813 = vunpack.c.h.b16 %v8190
    %v8814 = vunpack.c.l.b16 %v8191
    %v8815 = vunpack.c.h.b16 %v8191
    %v8816 = vunpack.c.l.b16 %v8192
    %v8817 = vunpack.c.h.b16 %v8192
    %v8818 = vunpack.c.l.b16 %v8193
    %v8819 = vunpack.c.h.b16 %v8193
    %v8820 = vunpack.c.l.b16 %v8194
    %v8821 = vunpack.c.h.b16 %v8194
    %v8822 = vunpack.c.l.b16 %v8195
    %v8823 = vunpack.c.h.b16 %v8195
    %v8824 = vunpack.c.l.b16 %v8196
    %v8825 = vunpack.c.h.b16 %v8196
    %v8826 = vunpack.c.l.b16 %v8197
    %v8827 = vunpack.c.h.b16 %v8197
    %v8828 = vunpack.c.l.b16 %v8198
    %v8829 = vunpack.c.h.b16 %v8198
    %v8830 = vunpack.c.l.b16 %v8199
    %v8831 = vunpack.c.h.b16 %v8199
    %v8832 = vunpack.c.l.b16 %v8200
    %v8833 = vunpack.c.h.b16 %v8200
    %v8834 = vunpack.c.l.b16 %v8201
    %v8835 = vunpack.c.h.b16 %v8201
    %v8836 = vunpack.c.l.b16 %v8202
    %v8837 = vunpack.c.h.b16 %v8202
    %v8838 = vunpack.c.l.b16 %v8203
    %v8839 = vunpack.c.h.b16 %v8203
    %v8840 = vunpack.c.l.b16 %v8204
    %v8841 = vunpack.c.h.b16 %v8204
    %v8842 = vunpack.c.l.b16 %v8205
    %v8843 = vunpack.c.h.b16 %v8205
    %v8844 = vunpack.c.l.b16 %v8206
    %v8845 = vunpack.c.h.b16 %v8206
    %v8846 = vunpack.c.l.b16 %v8207
    %v8847 = vunpack.c.h.b16 %v8207
    %v8848 = vunpack.c.l.b16 %v8208
    %v8849 = vunpack.c.h.b16 %v8208
    %v8850 = vunpack.c.l.b16 %v8209
    %v8851 = vunpack.c.h.b16 %v8209
    %v8852 = vunpack.c.l.b16 %v8210
    %v8853 = vunpack.c.h.b16 %v8210
    %v8854 = vunpack.c.l.b16 %v8211
    %v8855 = vunpack.c.h.b16 %v8211
    %v8856 = vunpack.c.l.b16 %v8212
    %v8857 = vunpack.c.h.b16 %v8212
    %v8858 = vunpack.c.l.b16 %v8213
    %v8859 = vunpack.c.h.b16 %v8213
    %v8860 = vunpack.c.l.b16 %v8214
    %v8861 = vunpack.c.h.b16 %v8214
    %v8862 = vunpack.c.l.b16 %v8215
    %v8863 = vunpack.c.h.b16 %v8215
    %v8864 = vunpack.c.l.b16 %v8216
    %v8865 = vunpack.c.h.b16 %v8216
    %v8866 = vunpack.c.l.b16 %v8217
    %v8867 = vunpack.c.h.b16 %v8217
    %v8868 = vunpack.c.l.b16 %v8218
    %v8869 = vunpack.c.h.b16 %v8218
    %v8870 = vunpack.c.l.b16 %v8219
    %v8871 = vunpack.c.h.b16 %v8219
    %v8872 = vunpack.c.l.b16 %v8220
    %v8873 = vunpack.c.h.b16 %v8220
    %v8874 = vunpack.c.l.b16 %v8221
    %v8875 = vunpack.c.h.b16 %v8221
    %v8876 = vunpack.c.l.b16 %v8222
    %v8877 = vunpack.c.h.b16 %v8222
    %v8878 = vunpack.c.l.b16 %v8223
    %v8879 = vunpack.c.h.b16 %v8223
    %v8880 = vunpack.c.l.b16 %v8224
    %v8881 = vunpack.c.h.b16 %v8224
    %v8882 = vunpack.c.l.b16 %v8225
    %v8883 = vunpack.c.h.b16 %v8225
    %v8884 = vunpack.c.l.b16 %v8226
    %v8885 = vunpack.c.h.b16 %v8226
    %v8886 = vunpack.c.l.b16 %v8227
    %v8887 = vunpack.c.h.b16 %v8227
    %v8888 = vunpack.c.l.b16 %v8228
    %v8889 = vunpack.c.h.b16 %v8228
    %v8890 = vunpack.c.l.b16 %v8229
    %v8891 = vunpack.c.h.b16 %v8229
    %v8892 = vunpack.c.l.b16 %v8230
    %v8893 = vunpack.c.h.b16 %v8230
    %v8894 = vunpack.c.l.b16 %v8231
    %v8895 = vunpack.c.h.b16 %v8231
    %v8896 = vunpack.c.l.b16 %v8232
    %v8897 = vunpack.c.h.b16 %v8232
    %v8898 = vunpack.c.l.b16 %v8233
    %v8899 = vunpack.c.h.b16 %v8233
    %v8900 = vunpack.c.l.b16 %v8234
    %v8901 = vunpack.c.h.b16 %v8234
    %v8902 = vunpack.c.l.b16 %v8235
    %v8903 = vunpack.c.h.b16 %v8235
    %v8904 = vunpack.c.l.b16 %v8236
    %v8905 = vunpack.c.h.b16 %v8236
    %v8906 = vunpack.c.l.b16 %v8237
    %v8907 = vunpack.c.h.b16 %v8237
    %v8908 = vunpack.c.l.b16 %v8238
    %v8909 = vunpack.c.h.b16 %v8238
    %v8910 = vunpack.c.l.b16 %v8239
    %v8911 = vunpack.c.h.b16 %v8239
    %v8912 = vunpack.c.l.b16 %v8240
    %v8913 = vunpack.c.h.b16 %v8240
    %v8914 = vunpack.c.l.b16 %v8241
    %v8915 = vunpack.c.h.b16 %v8241
    %v8916 = vunpack.c.l.b16 %v8242
    %v8917 = vunpack.c.h.b16 %v8242
    %v8918 = vunpack.c.l.b16 %v8243
    %v8919 = vunpack.c.h.b16 %v8243
    %v8920 = vunpack.c.l.b16 %v8244
    %v8921 = vunpack.c.h.b16 %v8244
    %v8922 = vunpack.c.l.b16 %v8245
    %v8923 = vunpack.c.h.b16 %v8245
    %v8924 = vunpack.c.l.b16 %v8246
    %v8925 = vunpack.c.h.b16 %v8246
    %v8926 = vunpack.c.l.b16 %v8247
    %v8927 = vunpack.c.h.b16 %v8247
    %v8928 = vunpack.c.l.b16 %v8248
    %v8929 = vunpack.c.h.b16 %v8248
    %v8930 = vunpack.c.l.b16 %v8249
    %v8931 = vunpack.c.h.b16 %v8249
    %v8932 = vunpack.c.l.b16 %v8250
    %v8933 = vunpack.c.h.b16 %v8250
    %v8934 = vunpack.c.l.b16 %v8251
    %v8935 = vunpack.c.h.b16 %v8251
    %v8936 = vunpack.c.l.b16 %v8252
    %v8937 = vunpack.c.h.b16 %v8252
    %v8938 = vunpack.c.l.b16 %v8253
    %v8939 = vunpack.c.h.b16 %v8253
    %v8940 = vunpack.c.l.b16 %v8254
    %v8941 = vunpack.c.h.b16 %v8254
    %v8942 = vunpack.c.l.b16 %v8255
    %v8943 = vunpack.c.h.b16 %v8255
    %v8944 = vunpack.c.l.b16 %v8256
    %v8945 = vunpack.c.h.b16 %v8256
    %v8946 = vunpack.c.l.b16 %v8257
    %v8947 = vunpack.c.h.b16 %v8257
    %v8948 = vunpack.c.l.b16 %v8258
    %v8949 = vunpack.c.h.b16 %v8258
    %v8950 = vunpack.c.l.b16 %v8259
    %v8951 = vunpack.c.h.b16 %v8259
    %v8952 = vunpack.c.l.b16 %v8260
    %v8953 = vunpack.c.h.b16 %v8260
    %v8954 = vunpack.c.l.b16 %v8261
    %v8955 = vunpack.c.h.b16 %v8261
    %v8956 = vunpack.c.l.b16 %v8262
    %v8957 = vunpack.c.h.b16 %v8262
    %v8958 = vunpack.c.l.b16 %v8263
    %v8959 = vunpack.c.h.b16 %v8263
    %v8960 = vunpack.c.l.b16 %v8264
    %v8961 = vunpack.c.h.b16 %v8264
    %v8962 = vunpack.c.l.b16 %v8265
    %v8963 = vunpack.c.h.b16 %v8265
    %v8964 = vunpack.c.l.b16 %v8266
    %v8965 = vunpack.c.h.b16 %v8266
    %v8966 = vunpack.c.l.b16 %v8267
    %v8967 = vunpack.c.h.b16 %v8267
    %v8968 = vunpack.c.l.b16 %v8268
    %v8969 = vunpack.c.h.b16 %v8268
    %v8970 = vunpack.c.l.b16 %v8269
    %v8971 = vunpack.c.h.b16 %v8269
    %v8972 = vunpack.c.l.b16 %v8270
    %v8973 = vunpack.c.h.b16 %v8270
    %v8974 = vunpack.c.l.b16 %v8271
    %v8975 = vunpack.c.h.b16 %v8271
    %v8976 = vunpack.c.l.b16 %v8272
    %v8977 = vunpack.c.h.b16 %v8272
    %v8978 = vunpack.c.l.b16 %v8273
    %v8979 = vunpack.c.h.b16 %v8273
    %v8980 = vunpack.c.l.b16 %v8274
    %v8981 = vunpack.c.h.b16 %v8274
    %v8982 = vunpack.c.l.b16 %v8275
    %v8983 = vunpack.c.h.b16 %v8275
    %v8984 = vunpack.c.l.b16 %v8276
    %v8985 = vunpack.c.h.b16 %v8276
    %v8986 = vunpack.c.l.b16 %v8277
    %v8987 = vunpack.c.h.b16 %v8277
    %v8988 = vunpack.c.l.b16 %v8278
    %v8989 = vunpack.c.h.b16 %v8278
    %v8990 = vunpack.c.l.b16 %v8279
    %v8991 = vunpack.c.h.b16 %v8279
    %v8992 = vunpack.c.l.b16 %v8280
    %v8993 = vunpack.c.h.b16 %v8280
    %v8994 = vunpack.c.l.b16 %v8281
    %v8995 = vunpack.c.h.b16 %v8281
    %v8996 = vunpack.c.l.b16 %v8282
    %v8997 = vunpack.c.h.b16 %v8282
    %v8998 = vunpack.c.l.b16 %v8283
    %v8999 = vunpack.c.h.b16 %v8283
    %v9000 = vunpack.c.l.b16 %v8284
    %v9001 = vunpack.c.h.b16 %v8284
    %v9002 = vunpack.c.l.b16 %v8285
    %v9003 = vunpack.c.h.b16 %v8285
    %v9004 = vunpack.c.l.b16 %v8286
    %v9005 = vunpack.c.h.b16 %v8286
    %v9006 = vunpack.c.l.b16 %v8287
    %v9007 = vunpack.c.h.b16 %v8287
    %v9008 = vunpack.c.l.b16 %v8288
    %v9009 = vunpack.c.h.b16 %v8288
    %v9010 = vunpack.c.l.b16 %v8289
    %v9011 = vunpack.c.h.b16 %v8289
    %v9012 = vunpack.c.l.b16 %v8290
    %v9013 = vunpack.c.h.b16 %v8290
    %v9014 = vunpack.c.l.b16 %v8291
    %v9015 = vunpack.c.h.b16 %v8291
    %v9016 = vunpack.c.l.b16 %v8292
    %v9017 = vunpack.c.h.b16 %v8292
    %v9018 = vunpack.c.l.b16 %v8293
    %v9019 = vunpack.c.h.b16 %v8293
    %v9020 = vunpack.c.l.b16 %v8294
    %v9021 = vunpack.c.h.b16 %v8294
    %v9022 = vunpack.c.l.b16 %v8295
    %v9023 = vunpack.c.h.b16 %v8295
    %v9024 = vunpack.c.l.b16 %v8296
    %v9025 = vunpack.c.h.b16 %v8296
    %v9026 = vunpack.c.l.b16 %v8297
    %v9027 = vunpack.c.h.b16 %v8297
    %v9028 = vunpack.c.l.b16 %v8298
    %v9029 = vunpack.c.h.b16 %v8298
    %v9030 = vunpack.c.l.b16 %v8299
    %v9031 = vunpack.c.h.b16 %v8299
    %v9032 = vunpack.c.l.b16 %v8300
    %v9033 = vunpack.c.h.b16 %v8300
    %v9034 = vunpack.c.l.b16 %v8301
    %v9035 = vunpack.c.h.b16 %v8301
    %v9036 = vunpack.c.l.b16 %v8302
    %v9037 = vunpack.c.h.b16 %v8302
    %v9038 = vunpack.c.l.b16 %v8303
    %v9039 = vunpack.c.h.b16 %v8303
    %v9040 = vunpack.c.l.b16 %v8304
    %v9041 = vunpack.c.h.b16 %v8304
    %v9042 = vunpack.c.l.b16 %v8305
    %v9043 = vunpack.c.h.b16 %v8305
    %v9044 = vunpack.c.l.b16 %v8306
    %v9045 = vunpack.c.h.b16 %v8306
    %v9046 = vunpack.c.l.b16 %v8307
    %v9047 = vunpack.c.h.b16 %v8307
    %v9048 = vunpack.c.l.b16 %v8308
    %v9049 = vunpack.c.h.b16 %v8308
    %v9050 = vunpack.c.l.b16 %v8309
    %v9051 = vunpack.c.h.b16 %v8309
    %v9052 = vunpack.c.l.b16 %v8310
    %v9053 = vunpack.c.h.b16 %v8310
    %v9054 = vunpack.c.l.b16 %v8311
    %v9055 = vunpack.c.h.b16 %v8311
    %v9056 = vunpack.c.l.b16 %v8312
    %v9057 = vunpack.c.h.b16 %v8312
    %v9058 = vunpack.c.l.b16 %v8313
    %v9059 = vunpack.c.h.b16 %v8313
    %v9060 = vunpack.c.l.b16 %v8314
    %v9061 = vunpack.c.h.b16 %v8314
    %v9062 = vunpack.c.l.b16 %v8315
    %v9063 = vunpack.c.h.b16 %v8315
    %v9064 = vunpack.c.l.b16 %v8316
    %v9065 = vunpack.c.h.b16 %v8316
    %v9066 = vunpack.c.l.b16 %v8317
    %v9067 = vunpack.c.h.b16 %v8317
    %v9068 = vunpack.c.l.b16 %v8318
    %v9069 = vunpack.c.h.b16 %v8318
    %v9070 = vunpack.c.l.b16 %v8319
    %v9071 = vunpack.c.h.b16 %v8319
    %v9072 = vunpack.c.l.b16 %v8320
    %v9073 = vunpack.c.h.b16 %v8320
    %v9074 = vunpack.c.l.b16 %v8321
    %v9075 = vunpack.c.h.b16 %v8321
    %v9076 = vunpack.c.l.b16 %v8322
    %v9077 = vunpack.c.h.b16 %v8322
    %v9078 = vunpack.c.l.b16 %v8323
    %v9079 = vunpack.c.h.b16 %v8323
    %v9080 = vunpack.c.l.b16 %v8324
    %v9081 = vunpack.c.h.b16 %v8324
    %v9082 = vunpack.c.l.b16 %v8325
    %v9083 = vunpack.c.h.b16 %v8325
    %v9084 = vunpack.c.l.b16 %v8326
    %v9085 = vunpack.c.h.b16 %v8326
    %v9086 = vunpack.c.l.b16 %v8327
    %v9087 = vunpack.c.h.b16 %v8327
    %v9088 = vunpack.c.l.b16 %v8328
    %v9089 = vunpack.c.h.b16 %v8328
    %v9090 = vunpack.c.l.b16 %v8329
    %v9091 = vunpack.c.h.b16 %v8329
    %v9092 = vunpack.c.l.b16 %v8330
    %v9093 = vunpack.c.h.b16 %v8330
    %v9094 = vunpack.c.l.b16 %v8331
    %v9095 = vunpack.c.h.b16 %v8331
    %v9096 = vunpack.c.l.b16 %v8332
    %v9097 = vunpack.c.h.b16 %v8332
    %v9098 = vunpack.c.l.b16 %v8333
    %v9099 = vunpack.c.h.b16 %v8333
    %v9100 = vunpack.c.l.b16 %v8334
    %v9101 = vunpack.c.h.b16 %v8334
    %v9102 = vunpack.c.l.b16 %v8335
    %v9103 = vunpack.c.h.b16 %v8335
    %v9104 = vunpack.c.l.b16 %v8336
    %v9105 = vunpack.c.h.b16 %v8336
    %v9106 = vunpack.c.l.b16 %v8337
    %v9107 = vunpack.c.h.b16 %v8337
    %v9108 = vunpack.c.l.b16 %v8338
    %v9109 = vunpack.c.h.b16 %v8338
    %v9110 = vunpack.c.l.b16 %v8339
    %v9111 = vunpack.c.h.b16 %v8339
    %v9112 = vunpack.c.l.b16 %v8340
    %v9113 = vunpack.c.h.b16 %v8340
    %v9114 = vunpack.c.l.b16 %v8341
    %v9115 = vunpack.c.h.b16 %v8341
    %v9116 = vunpack.c.l.b16 %v8342
    %v9117 = vunpack.c.h.b16 %v8342
    %v9118 = vunpack.c.l.b16 %v8343
    %v9119 = vunpack.c.h.b16 %v8343
    %v9120 = vunpack.c.l.b16 %v8344
    %v9121 = vunpack.c.h.b16 %v8344
    %v9122 = vunpack.c.l.b16 %v8345
    %v9123 = vunpack.c.h.b16 %v8345
    %v9124 = vpack.c.b16 %v8616, %v8612
    %v9125 = vpack.c.b16 %v8617, %v8613
    %v9126 = vpack.c.b16 %v8618, %v8614
    %v9127 = vpack.c.b16 %v8619, %v8615
    %v9128 = vpack.c.b16 %v8624, %v8620
    %v9129 = vpack.c.b16 %v8625, %v8621
    %v9130 = vpack.c.b16 %v8626, %v8622
    %v9131 = vpack.c.b16 %v8627, %v8623
    %v9132 = vpack.c.b16 %v8632, %v8628
    %v9133 = vpack.c.b16 %v8633, %v8629
    %v9134 = vpack.c.b16 %v8634, %v8630
    %v9135 = vpack.c.b16 %v8635, %v8631
    %v9136 = vpack.c.b16 %v8640, %v8636
    %v9137 = vpack.c.b16 %v8641, %v8637
    %v9138 = vpack.c.b16 %v8642, %v8638
    %v9139 = vpack.c.b16 %v8643, %v8639
    %v9140 = vpack.c.b16 %v8648, %v8644
    %v9141 = vpack.c.b16 %v8649, %v8645
    %v9142 = vpack.c.b16 %v8650, %v8646
    %v9143 = vpack.c.b16 %v8651, %v8647
    %v9144 = vpack.c.b16 %v8656, %v8652
    %v9145 = vpack.c.b16 %v8657, %v8653
    %v9146 = vpack.c.b16 %v8658, %v8654
    %v9147 = vpack.c.b16 %v8659, %v8655
    %v9148 = vpack.c.b16 %v8664, %v8660
    %v9149 = vpack.c.b16 %v8665, %v8661
    %v9150 = vpack.c.b16 %v8666, %v8662
    %v9151 = vpack.c.b16 %v8667, %v8663
    %v9152 = vpack.c.b16 %v8672, %v8668
    %v9153 = vpack.c.b16 %v8673, %v8669
    %v9154 = vpack.c.b16 %v8674, %v8670
    %v9155 = vpack.c.b16 %v8675, %v8671
    %v9156 = vpack.c.b16 %v8680, %v8676
    %v9157 = vpack.c.b16 %v8681, %v8677
    %v9158 = vpack.c.b16 %v8682, %v8678
    %v9159 = vpack.c.b16 %v8683, %v8679
    %v9160 = vpack.c.b16 %v8688, %v8684
    %v9161 = vpack.c.b16 %v8689, %v8685
    %v9162 = vpack.c.b16 %v8690, %v8686
    %v9163 = vpack.c.b16 %v8691, %v8687
    %v9164 = vpack.c.b16 %v8696, %v8692
    %v9165 = vpack.c.b16 %v8697, %v8693
    %v9166 = vpack.c.b16 %v8698, %v8694
    %v9167 = vpack.c.b16 %v8699, %v8695
    %v9168 = vpack.c.b16 %v8704, %v8700
    %v9169 = vpack.c.b16 %v8705, %v8701
    %v9170 = vpack.c.b16 %v8706, %v8702
    %v9171 = vpack.c.b16 %v8707, %v8703
    %v9172 = vpack.c.b16 %v8712, %v8708
    %v9173 = vpack.c.b16 %v8713, %v8709
    %v9174 = vpack.c.b16 %v8714, %v8710
    %v9175 = vpack.c.b16 %v8715, %v8711
    %v9176 = vpack.c.b16 %v8720, %v8716
    %v9177 = vpack.c.b16 %v8721, %v8717
    %v9178 = vpack.c.b16 %v8722, %v8718
    %v9179 = vpack.c.b16 %v8723, %v8719
    %v9180 = vpack.c.b16 %v8728, %v8724
    %v9181 = vpack.c.b16 %v8729, %v8725
    %v9182 = vpack.c.b16 %v8730, %v8726
    %v9183 = vpack.c.b16 %v8731, %v8727
    %v9184 = vpack.c.b16 %v8736, %v8732
    %v9185 = vpack.c.b16 %v8737, %v8733
    %v9186 = vpack.c.b16 %v8738, %v8734
    %v9187 = vpack.c.b16 %v8739, %v8735
    %v9188 = vpack.c.b16 %v8744, %v8740
    %v9189 = vpack.c.b16 %v8745, %v8741
    %v9190 = vpack.c.b16 %v8746, %v8742
    %v9191 = vpack.c.b16 %v8747, %v8743
    %v9192 = vpack.c.b16 %v8752, %v8748
    %v9193 = vpack.c.b16 %v8753, %v8749
    %v9194 = vpack.c.b16 %v8754, %v8750
    %v9195 = vpack.c.b16 %v8755, %v8751
    %v9196 = vpack.c.b16 %v8760, %v8756
    %v9197 = vpack.c.b16 %v8761, %v8757
    %v9198 = vpack.c.b16 %v8762, %v8758
    %v9199 = vpack.c.b16 %v8763, %v8759
    %v9200 = vpack.c.b16 %v8768, %v8764
    %v9201 = vpack.c.b16 %v8769, %v8765
    %v9202 = vpack.c.b16 %v8770, %v8766
    %v9203 = vpack.c.b16 %v8771, %v8767
    %v9204 = vpack.c.b16 %v8776, %v8772
    %v9205 = vpack.c.b16 %v8777, %v8773
    %v9206 = vpack.c.b16 %v8778, %v8774
    %v9207 = vpack.c.b16 %v8779, %v8775
    %v9208 = vpack.c.b16 %v8784, %v8780
    %v9209 = vpack.c.b16 %v8785, %v8781
    %v9210 = vpack.c.b16 %v8786, %v8782
    %v9211 = vpack.c.b16 %v8787, %v8783
    %v9212 = vpack.c.b16 %v8792, %v8788
    %v9213 = vpack.c.b16 %v8793, %v8789
    %v9214 = vpack.c.b16 %v8794, %v8790
    %v9215 = vpack.c.b16 %v8795, %v8791
    %v9216 = vpack.c.b16 %v8800, %v8796
    %v9217 = vpack.c.b16 %v8801, %v8797
    %v9218 = vpack.c.b16 %v8802, %v8798
    %v9219 = vpack.c.b16 %v8803, %v8799
    %v9220 = vpack.c.b16 %v8808, %v8804
    %v9221 = vpack.c.b16 %v8809, %v8805
    %v9222 = vpack.c.b16 %v8810, %v8806
    %v9223 = vpack.c.b16 %v8811, %v8807
    %v9224 = vpack.c.b16 %v8816, %v8812
    %v9225 = vpack.c.b16 %v8817, %v8813
    %v9226 = vpack.c.b16 %v8818, %v8814
    %v9227 = vpack.c.b16 %v8819, %v8815
    %v9228 = vpack.c.b16 %v8824, %v8820
    %v9229 = vpack.c.b16 %v8825, %v8821
    %v9230 = vpack.c.b16 %v8826, %v8822
    %v9231 = vpack.c.b16 %v8827, %v8823
    %v9232 = vpack.c.b16 %v8832, %v8828
    %v9233 = vpack.c.b16 %v8833, %v8829
    %v9234 = vpack.c.b16 %v8834, %v8830
    %v9235 = vpack.c.b16 %v8835, %v8831
    %v9236 = vpack.c.b16 %v8840, %v8836
    %v9237 = vpack.c.b16 %v8841, %v8837
    %v9238 = vpack.c.b16 %v8842, %v8838
    %v9239 = vpack.c.b16 %v8843, %v8839
    %v9240 = vpack.c.b16 %v8848, %v8844
    %v9241 = vpack.c.b16 %v8849, %v8845
    %v9242 = vpack.c.b16 %v8850, %v8846
    %v9243 = vpack.c.b16 %v8851, %v8847
    %v9244 = vpack.c.b16 %v8856, %v8852
    %v9245 = vpack.c.b16 %v8857, %v8853
    %v9246 = vpack.c.b16 %v8858, %v8854
    %v9247 = vpack.c.b16 %v8859, %v8855
    %v9248 = vpack.c.b16 %v8864, %v8860
    %v9249 = vpack.c.b16 %v8865, %v8861
    %v9250 = vpack.c.b16 %v8866, %v8862
    %v9251 = vpack.c.b16 %v8867, %v8863
    %v9252 = vpack.c.b16 %v8872, %v8868
    %v9253 = vpack.c.b16 %v8873, %v8869
    %v9254 = vpack.c.b16 %v8874, %v8870
    %v9255 = vpack.c.b16 %v8875, %v8871
    %v9256 = vpack.c.b16 %v8880, %v8876
    %v9257 = vpack.c.b16 %v8881, %v8877
    %v9258 = vpack.c.b16 %v8882, %v8878
    %v9259 = vpack.c.b16 %v8883, %v8879
    %v9260 = vpack.c.b16 %v8888, %v8884
    %v9261 = vpack.c.b16 %v8889, %v8885
    %v9262 = vpack.c.b16 %v8890, %v8886
    %v9263 = vpack.c.b16 %v8891, %v8887
    %v9264 = vpack.c.b16 %v8896, %v8892
    %v9265 = vpack.c.b16 %v8897, %v8893
    %v9266 = vpack.c.b16 %v8898, %v8894
    %v9267 = vpack.c.b16 %v8899, %v8895
    %v9268 = vpack.c.b16 %v8904, %v8900
    %v9269 = vpack.c.b16 %v8905, %v8901
    %v9270 = vpack.c.b16 %v8906, %v8902
    %v9271 = vpack.c.b16 %v8907, %v8903
    %v9272 = vpack.c.b16 %v8912, %v8908
    %v9273 = vpack.c.b16 %v8913, %v8909
    %v9274 = vpack.c.b16 %v8914, %v8910
    %v9275 = vpack.c.b16 %v8915, %v8911
    %v9276 = vpack.c.b16 %v8920, %v8916
    %v9277 = vpack.c.b16 %v8921, %v8917
    %v9278 = vpack.c.b16 %v8922, %v8918
    %v9279 = vpack.c.b16 %v8923, %v8919
    %v9280 = vpack.c.b16 %v8928, %v8924
    %v9281 = vpack.c.b16 %v8929, %v8925
    %v9282 = vpack.c.b16 %v8930, %v8926
    %v9283 = vpack.c.b16 %v8931, %v8927
    %v9284 = vpack.c.b16 %v8936, %v8932
    %v9285 = vpack.c.b16 %v8937, %v8933
    %v9286 = vpack.c.b16 %v8938, %v8934
    %v9287 = vpack.c.b16 %v8939, %v8935
    %v9288 = vpack.c.b16 %v8944, %v8940
    %v9289 = vpack.c.b16 %v8945, %v8941
    %v9290 = vpack.c.b16 %v8946, %v8942
    %v9291 = vpack.c.b16 %v8947, %v8943
    %v9292 = vpack.c.b16 %v8952, %v8948
    %v9293 = vpack.c.b16 %v8953, %v8949
    %v9294 = vpack.c.b16 %v8954, %v8950
    %v9295 = vpack.c.b16 %v8955, %v8951
    %v9296 = vpack.c.b16 %v8960, %v8956
    %v9297 = vpack.c.b16 %v8961, %v8957
    %v9298 = vpack.c.b16 %v8962, %v8958
    %v9299 = vpack.c.b16 %v8963, %v8959
    %v9300 = vpack.c.b16 %v8968, %v8964
    %v9301 = vpack.c.b16 %v8969, %v8965
    %v9302 = vpack.c.b16 %v8970, %v8966
    %v9303 = vpack.c.b16 %v8971, %v8967
    %v9304 = vpack.c.b16 %v8976, %v8972
    %v9305 = vpack.c.b16 %v8977, %v8973
    %v9306 = vpack.c.b16 %v8978, %v8974
    %v9307 = vpack.c.b16 %v8979, %v8975
    %v9308 = vpack.c.b16 %v8984, %v8980
    %v9309 = vpack.c.b16 %v8985, %v8981
    %v9310 = vpack.c.b16 %v8986, %v8982
    %v9311 = vpack.c.b16 %v8987, %v8983
    %v9312 = vpack.c.b16 %v8992, %v8988
    %v9313 = vpack.c.b16 %v8993, %v8989
    %v9314 = vpack.c.b16 %v8994, %v8990
    %v9315 = vpack.c.b16 %v8995, %v8991
    %v9316 = vpack.c.b16 %v9000, %v8996
    %v9317 = vpack.c.b16 %v9001, %v8997
    %v9318 = vpack.c.b16 %v9002, %v8998
    %v9319 = vpack.c.b16 %v9003, %v8999
    %v9320 = vpack.c.b16 %v9008, %v9004
    %v9321 = vpack.c.b16 %v9009, %v9005
    %v9322 = vpack.c.b16 %v9010, %v9006
    %v9323 = vpack.c.b16 %v9011, %v9007
    %v9324 = vpack.c.b16 %v9016, %v9012
    %v9325 = vpack.c.b16 %v9017, %v9013
    %v9326 = vpack.c.b16 %v9018, %v9014
    %v9327 = vpack.c.b16 %v9019, %v9015
    %v9328 = vpack.c.b16 %v9024, %v9020
    %v9329 = vpack.c.b16 %v9025, %v9021
    %v9330 = vpack.c.b16 %v9026, %v9022
    %v9331 = vpack.c.b16 %v9027, %v9023
    %v9332 = vpack.c.b16 %v9032, %v9028
    %v9333 = vpack.c.b16 %v9033, %v9029
    %v9334 = vpack.c.b16 %v9034, %v9030
    %v9335 = vpack.c.b16 %v9035, %v9031
    %v9336 = vpack.c.b16 %v9040, %v9036
    %v9337 = vpack.c.b16 %v9041, %v9037
    %v9338 = vpack.c.b16 %v9042, %v9038
    %v9339 = vpack.c.b16 %v9043, %v9039
    %v9340 = vpack.c.b16 %v9048, %v9044
    %v9341 = vpack.c.b16 %v9049, %v9045
    %v9342 = vpack.c.b16 %v9050, %v9046
    %v9343 = vpack.c.b16 %v9051, %v9047
    %v9344 = vpack.c.b16 %v9056, %v9052
    %v9345 = vpack.c.b16 %v9057, %v9053
    %v9346 = vpack.c.b16 %v9058, %v9054
    %v9347 = vpack.c.b16 %v9059, %v9055
    %v9348 = vpack.c.b16 %v9064, %v9060
    %v9349 = vpack.c.b16 %v9065, %v9061
    %v9350 = vpack.c.b16 %v9066, %v9062
    %v9351 = vpack.c.b16 %v9067, %v9063
    %v9352 = vpack.c.b16 %v9072, %v9068
    %v9353 = vpack.c.b16 %v9073, %v9069
    %v9354 = vpack.c.b16 %v9074, %v9070
    %v9355 = vpack.c.b16 %v9075, %v9071
    %v9356 = vpack.c.b16 %v9080, %v9076
    %v9357 = vpack.c.b16 %v9081, %v9077
    %v9358 = vpack.c.b16 %v9082, %v9078
    %v9359 = vpack.c.b16 %v9083, %v9079
    %v9360 = vpack.c.b16 %v9088, %v9084
    %v9361 = vpack.c.b16 %v9089, %v9085
    %v9362 = vpack.c.b16 %v9090, %v9086
    %v9363 = vpack.c.b16 %v9091, %v9087
    %v9364 = vpack.c.b16 %v9096, %v9092
    %v9365 = vpack.c.b16 %v9097, %v9093
    %v9366 = vpack.c.b16 %v9098, %v9094
    %v9367 = vpack.c.b16 %v9099, %v9095
    %v9368 = vpack.c.b16 %v9104, %v9100
    %v9369 = vpack.c.b16 %v9105, %v9101
    %v9370 = vpack.c.b16 %v9106, %v9102
    %v9371 = vpack.c.b16 %v9107, %v9103
    %v9372 = vpack.c.b16 %v9112, %v9108
    %v9373 = vpack.c.b16 %v9113, %v9109
    %v9374 = vpack.c.b16 %v9114, %v9110
    %v9375 = vpack.c.b16 %v9115, %v9111
    %v9376 = vpack.c.b16 %v9120, %v9116
    %v9377 = vpack.c.b16 %v9121, %v9117
    %v9378 = vpack.c.b16 %v9122, %v9118
    %v9379 = vpack.c.b16 %v9123, %v9119
    %9636 = vmatpush.bf16.msra.mxu0 %v9152
    %9637 = vmatpush.bf16.msra.mxu0 %v9148
    %9638 = vmatpush.bf16.msra.mxu0 %v9144
    %9639 = vmatpush.bf16.msra.mxu0 %v9140
    %9640 = vmatpush.bf16.msra.mxu0 %v9136
    %9641 = vmatpush.bf16.msra.mxu0 %v9132
    %9642 = vmatpush.bf16.msra.mxu0 %v9128
    %9643 = vmatpush.bf16.msra.mxu0 %v9124
    %9644 = vmatmul.bf16.gmra.mxu0 %v8082
    %v9645 = vpop.f32.mrf.mxu0
    %v9646 = vadd.f32 %v8348, %v9645
    %v9647 = vpop.f32.mrf.mxu0
    %9648 = vdwg.mxu0
    %9649 = vmatpush.bf16.msra.mxu0 %v9184
    %9650 = vmatpush.bf16.msra.mxu0 %v9180
    %9651 = vmatpush.bf16.msra.mxu0 %v9176
    %9652 = vmatpush.bf16.msra.mxu0 %v9172
    %9653 = vmatpush.bf16.msra.mxu0 %v9168
    %9654 = vmatpush.bf16.msra.mxu0 %v9164
    %9655 = vmatpush.bf16.msra.mxu0 %v9160
    %9656 = vmatpush.bf16.msra.mxu0 %v9156
    %9657 = vmatmul.bf16.gmra.mxu0 %v8083
    %v9658 = vpop.f32.mrf.mxu0
    %v9659 = vadd.f32 %v9646, %v9658
    %v9660 = vpop.f32.mrf.mxu0
    %9661 = vdwg.mxu0
    %9662 = vmatpush.bf16.msra.mxu0 %v9216
    %9663 = vmatpush.bf16.msra.mxu0 %v9212
    %9664 = vmatpush.bf16.msra.mxu0 %v9208
    %9665 = vmatpush.bf16.msra.mxu0 %v9204
    %9666 = vmatpush.bf16.msra.mxu0 %v9200
    %9667 = vmatpush.bf16.msra.mxu0 %v9196
    %9668 = vmatpush.bf16.msra.mxu0 %v9192
    %9669 = vmatpush.bf16.msra.mxu0 %v9188
    %9670 = vmatmul.bf16.gmra.mxu0 %v8084
    %v9671 = vpop.f32.mrf.mxu0
    %v9672 = vadd.f32 %v9659, %v9671
    %v9673 = vpop.f32.mrf.mxu0
    %9674 = vdwg.mxu0
    %9675 = vmatpush.bf16.msra.mxu0 %v9248
    %9676 = vmatpush.bf16.msra.mxu0 %v9244
    %9677 = vmatpush.bf16.msra.mxu0 %v9240
    %9678 = vmatpush.bf16.msra.mxu0 %v9236
    %9679 = vmatpush.bf16.msra.mxu0 %v9232
    %9680 = vmatpush.bf16.msra.mxu0 %v9228
    %9681 = vmatpush.bf16.msra.mxu0 %v9224
    %9682 = vmatpush.bf16.msra.mxu0 %v9220
    %9683 = vmatmul.bf16.gmra.mxu0 %v8085
    %v9684 = vpop.f32.mrf.mxu0
    %v9685 = vadd.f32 %v9672, %v9684
    %v9686 = vpop.f32.mrf.mxu0
    %9687 = vdwg.mxu0
    %9688 = vmatpush.bf16.msra.mxu0 %v9280
    %9689 = vmatpush.bf16.msra.mxu0 %v9276
    %9690 = vmatpush.bf16.msra.mxu0 %v9272
    %9691 = vmatpush.bf16.msra.mxu0 %v9268
    %9692 = vmatpush.bf16.msra.mxu0 %v9264
    %9693 = vmatpush.bf16.msra.mxu0 %v9260
    %9694 = vmatpush.bf16.msra.mxu0 %v9256
    %9695 = vmatpush.bf16.msra.mxu0 %v9252
    %9696 = vmatmul.bf16.gmra.mxu0 %v8086
    %v9697 = vpop.f32.mrf.mxu0
    %v9698 = vadd.f32 %v9685, %v9697
    %v9699 = vpop.f32.mrf.mxu0
    %9700 = vdwg.mxu0
    %9701 = vmatpush.bf16.msra.mxu0 %v9312
    %9702 = vmatpush.bf16.msra.mxu0 %v9308
    %9703 = vmatpush.bf16.msra.mxu0 %v9304
    %9704 = vmatpush.bf16.msra.mxu0 %v9300
    %9705 = vmatpush.bf16.msra.mxu0 %v9296
    %9706 = vmatpush.bf16.msra.mxu0 %v9292
    %9707 = vmatpush.bf16.msra.mxu0 %v9288
    %9708 = vmatpush.bf16.msra.mxu0 %v9284
    %9709 = vmatmul.bf16.gmra.mxu0 %v8087
    %v9710 = vpop.f32.mrf.mxu0
    %v9711 = vadd.f32 %v9698, %v9710
    %v9712 = vpop.f32.mrf.mxu0
    %9713 = vdwg.mxu0
    %9714 = vmatpush.bf16.msra.mxu0 %v9344
    %9715 = vmatpush.bf16.msra.mxu0 %v9340
    %9716 = vmatpush.bf16.msra.mxu0 %v9336
    %9717 = vmatpush.bf16.msra.mxu0 %v9332
    %9718 = vmatpush.bf16.msra.mxu0 %v9328
    %9719 = vmatpush.bf16.msra.mxu0 %v9324
    %9720 = vmatpush.bf16.msra.mxu0 %v9320
    %9721 = vmatpush.bf16.msra.mxu0 %v9316
    %9722 = vmatmul.bf16.gmra.mxu0 %v8088
    %v9723 = vpop.f32.mrf.mxu0
    %v9724 = vadd.f32 %v9711, %v9723
    %v9725 = vpop.f32.mrf.mxu0
    %9726 = vdwg.mxu0
    %9727 = vmatpush.bf16.msra.mxu0 %v9376
    %9728 = vmatpush.bf16.msra.mxu0 %v9372
    %9729 = vmatpush.bf16.msra.mxu0 %v9368
    %9730 = vmatpush.bf16.msra.mxu0 %v9364
    %9731 = vmatpush.bf16.msra.mxu0 %v9360
    %9732 = vmatpush.bf16.msra.mxu0 %v9356
    %9733 = vmatpush.bf16.msra.mxu0 %v9352
    %9734 = vmatpush.bf16.msra.mxu0 %v9348
    %9735 = vmatmul.bf16.gmra.mxu0 %v8089
    %v9736 = vpop.f32.mrf.mxu0
    %v9737 = vadd.f32 %v9724, %v9736
    %v9738 = vpop.f32.mrf.mxu0
    %9739 = vdwg.mxu0
    %9740 = vmatpush.bf16.msra.mxu0 %v9153
    %9741 = vmatpush.bf16.msra.mxu0 %v9149
    %9742 = vmatpush.bf16.msra.mxu0 %v9145
    %9743 = vmatpush.bf16.msra.mxu0 %v9141
    %9744 = vmatpush.bf16.msra.mxu0 %v9137
    %9745 = vmatpush.bf16.msra.mxu0 %v9133
    %9746 = vmatpush.bf16.msra.mxu0 %v9129
    %9747 = vmatpush.bf16.msra.mxu0 %v9125
    %9748 = vmatmul.bf16.gmra.mxu0 %v8082
    %v9749 = vpop.f32.mrf.mxu0
    %v9750 = vadd.f32 %v8349, %v9749
    %v9751 = vpop.f32.mrf.mxu0
    %9752 = vdwg.mxu0
    %9753 = vmatpush.bf16.msra.mxu0 %v9185
    %9754 = vmatpush.bf16.msra.mxu0 %v9181
    %9755 = vmatpush.bf16.msra.mxu0 %v9177
    %9756 = vmatpush.bf16.msra.mxu0 %v9173
    %9757 = vmatpush.bf16.msra.mxu0 %v9169
    %9758 = vmatpush.bf16.msra.mxu0 %v9165
    %9759 = vmatpush.bf16.msra.mxu0 %v9161
    %9760 = vmatpush.bf16.msra.mxu0 %v9157
    %9761 = vmatmul.bf16.gmra.mxu0 %v8083
    %v9762 = vpop.f32.mrf.mxu0
    %v9763 = vadd.f32 %v9750, %v9762
    %v9764 = vpop.f32.mrf.mxu0
    %9765 = vdwg.mxu0
    %9766 = vmatpush.bf16.msra.mxu0 %v9217
    %9767 = vmatpush.bf16.msra.mxu0 %v9213
    %9768 = vmatpush.bf16.msra.mxu0 %v9209
    %9769 = vmatpush.bf16.msra.mxu0 %v9205
    %9770 = vmatpush.bf16.msra.mxu0 %v9201
    %9771 = vmatpush.bf16.msra.mxu0 %v9197
    %9772 = vmatpush.bf16.msra.mxu0 %v9193
    %9773 = vmatpush.bf16.msra.mxu0 %v9189
    %9774 = vmatmul.bf16.gmra.mxu0 %v8084
    %v9775 = vpop.f32.mrf.mxu0
    %v9776 = vadd.f32 %v9763, %v9775
    %v9777 = vpop.f32.mrf.mxu0
    %9778 = vdwg.mxu0
    %9779 = vmatpush.bf16.msra.mxu0 %v9249
    %9780 = vmatpush.bf16.msra.mxu0 %v9245
    %9781 = vmatpush.bf16.msra.mxu0 %v9241
    %9782 = vmatpush.bf16.msra.mxu0 %v9237
    %9783 = vmatpush.bf16.msra.mxu0 %v9233
    %9784 = vmatpush.bf16.msra.mxu0 %v9229
    %9785 = vmatpush.bf16.msra.mxu0 %v9225
    %9786 = vmatpush.bf16.msra.mxu0 %v9221
    %9787 = vmatmul.bf16.gmra.mxu0 %v8085
    %v9788 = vpop.f32.mrf.mxu0
    %v9789 = vadd.f32 %v9776, %v9788
    %v9790 = vpop.f32.mrf.mxu0
    %9791 = vdwg.mxu0
    %9792 = vmatpush.bf16.msra.mxu0 %v9281
    %9793 = vmatpush.bf16.msra.mxu0 %v9277
    %9794 = vmatpush.bf16.msra.mxu0 %v9273
    %9795 = vmatpush.bf16.msra.mxu0 %v9269
    %9796 = vmatpush.bf16.msra.mxu0 %v9265
    %9797 = vmatpush.bf16.msra.mxu0 %v9261
    %9798 = vmatpush.bf16.msra.mxu0 %v9257
    %9799 = vmatpush.bf16.msra.mxu0 %v9253
    %9800 = vmatmul.bf16.gmra.mxu0 %v8086
    %v9801 = vpop.f32.mrf.mxu0
    %v9802 = vadd.f32 %v9789, %v9801
    %v9803 = vpop.f32.mrf.mxu0
    %9804 = vdwg.mxu0
    %9805 = vmatpush.bf16.msra.mxu0 %v9313
    %9806 = vmatpush.bf16.msra.mxu0 %v9309
    %9807 = vmatpush.bf16.msra.mxu0 %v9305
    %9808 = vmatpush.bf16.msra.mxu0 %v9301
    %9809 = vmatpush.bf16.msra.mxu0 %v9297
    %9810 = vmatpush.bf16.msra.mxu0 %v9293
    %9811 = vmatpush.bf16.msra.mxu0 %v9289
    %9812 = vmatpush.bf16.msra.mxu0 %v9285
    %9813 = vmatmul.bf16.gmra.mxu0 %v8087
    %v9814 = vpop.f32.mrf.mxu0
    %v9815 = vadd.f32 %v9802, %v9814
    %v9816 = vpop.f32.mrf.mxu0
    %9817 = vdwg.mxu0
    %9818 = vmatpush.bf16.msra.mxu0 %v9345
    %9819 = vmatpush.bf16.msra.mxu0 %v9341
    %9820 = vmatpush.bf16.msra.mxu0 %v9337
    %9821 = vmatpush.bf16.msra.mxu0 %v9333
    %9822 = vmatpush.bf16.msra.mxu0 %v9329
    %9823 = vmatpush.bf16.msra.mxu0 %v9325
    %9824 = vmatpush.bf16.msra.mxu0 %v9321
    %9825 = vmatpush.bf16.msra.mxu0 %v9317
    %9826 = vmatmul.bf16.gmra.mxu0 %v8088
    %v9827 = vpop.f32.mrf.mxu0
    %v9828 = vadd.f32 %v9815, %v9827
    %v9829 = vpop.f32.mrf.mxu0
    %9830 = vdwg.mxu0
    %9831 = vmatpush.bf16.msra.mxu0 %v9377
    %9832 = vmatpush.bf16.msra.mxu0 %v9373
    %9833 = vmatpush.bf16.msra.mxu0 %v9369
    %9834 = vmatpush.bf16.msra.mxu0 %v9365
    %9835 = vmatpush.bf16.msra.mxu0 %v9361
    %9836 = vmatpush.bf16.msra.mxu0 %v9357
    %9837 = vmatpush.bf16.msra.mxu0 %v9353
    %9838 = vmatpush.bf16.msra.mxu0 %v9349
    %9839 = vmatmul.bf16.gmra.mxu0 %v8089
    %v9840 = vpop.f32.mrf.mxu0
    %v9841 = vadd.f32 %v9828, %v9840
    %v9842 = vpop.f32.mrf.mxu0
    %9843 = vdwg.mxu0
    %9844 = vmatpush.bf16.msra.mxu0 %v9154
    %9845 = vmatpush.bf16.msra.mxu0 %v9150
    %9846 = vmatpush.bf16.msra.mxu0 %v9146
    %9847 = vmatpush.bf16.msra.mxu0 %v9142
    %9848 = vmatpush.bf16.msra.mxu0 %v9138
    %9849 = vmatpush.bf16.msra.mxu0 %v9134
    %9850 = vmatpush.bf16.msra.mxu0 %v9130
    %9851 = vmatpush.bf16.msra.mxu0 %v9126
    %9852 = vmatmul.bf16.gmra.mxu0 %v8082
    %v9853 = vpop.f32.mrf.mxu0
    %v9854 = vadd.f32 %v8350, %v9853
    %v9855 = vpop.f32.mrf.mxu0
    %9856 = vdwg.mxu0
    %9857 = vmatpush.bf16.msra.mxu0 %v9186
    %9858 = vmatpush.bf16.msra.mxu0 %v9182
    %9859 = vmatpush.bf16.msra.mxu0 %v9178
    %9860 = vmatpush.bf16.msra.mxu0 %v9174
    %9861 = vmatpush.bf16.msra.mxu0 %v9170
    %9862 = vmatpush.bf16.msra.mxu0 %v9166
    %9863 = vmatpush.bf16.msra.mxu0 %v9162
    %9864 = vmatpush.bf16.msra.mxu0 %v9158
    %9865 = vmatmul.bf16.gmra.mxu0 %v8083
    %v9866 = vpop.f32.mrf.mxu0
    %v9867 = vadd.f32 %v9854, %v9866
    %v9868 = vpop.f32.mrf.mxu0
    %9869 = vdwg.mxu0
    %9870 = vmatpush.bf16.msra.mxu0 %v9218
    %9871 = vmatpush.bf16.msra.mxu0 %v9214
    %9872 = vmatpush.bf16.msra.mxu0 %v9210
    %9873 = vmatpush.bf16.msra.mxu0 %v9206
    %9874 = vmatpush.bf16.msra.mxu0 %v9202
    %9875 = vmatpush.bf16.msra.mxu0 %v9198
    %9876 = vmatpush.bf16.msra.mxu0 %v9194
    %9877 = vmatpush.bf16.msra.mxu0 %v9190
    %9878 = vmatmul.bf16.gmra.mxu0 %v8084
    %v9879 = vpop.f32.mrf.mxu0
    %v9880 = vadd.f32 %v9867, %v9879
    %v9881 = vpop.f32.mrf.mxu0
    %9882 = vdwg.mxu0
    %9883 = vmatpush.bf16.msra.mxu0 %v9250
    %9884 = vmatpush.bf16.msra.mxu0 %v9246
    %9885 = vmatpush.bf16.msra.mxu0 %v9242
    %9886 = vmatpush.bf16.msra.mxu0 %v9238
    %9887 = vmatpush.bf16.msra.mxu0 %v9234
    %9888 = vmatpush.bf16.msra.mxu0 %v9230
    %9889 = vmatpush.bf16.msra.mxu0 %v9226
    %9890 = vmatpush.bf16.msra.mxu0 %v9222
    %9891 = vmatmul.bf16.gmra.mxu0 %v8085
    %v9892 = vpop.f32.mrf.mxu0
    %v9893 = vadd.f32 %v9880, %v9892
    %v9894 = vpop.f32.mrf.mxu0
    %9895 = vdwg.mxu0
    %9896 = vmatpush.bf16.msra.mxu0 %v9282
    %9897 = vmatpush.bf16.msra.mxu0 %v9278
    %9898 = vmatpush.bf16.msra.mxu0 %v9274
    %9899 = vmatpush.bf16.msra.mxu0 %v9270
    %9900 = vmatpush.bf16.msra.mxu0 %v9266
    %9901 = vmatpush.bf16.msra.mxu0 %v9262
    %9902 = vmatpush.bf16.msra.mxu0 %v9258
    %9903 = vmatpush.bf16.msra.mxu0 %v9254
    %9904 = vmatmul.bf16.gmra.mxu0 %v8086
    %v9905 = vpop.f32.mrf.mxu0
    %v9906 = vadd.f32 %v9893, %v9905
    %v9907 = vpop.f32.mrf.mxu0
    %9908 = vdwg.mxu0
    %9909 = vmatpush.bf16.msra.mxu0 %v9314
    %9910 = vmatpush.bf16.msra.mxu0 %v9310
    %9911 = vmatpush.bf16.msra.mxu0 %v9306
    %9912 = vmatpush.bf16.msra.mxu0 %v9302
    %9913 = vmatpush.bf16.msra.mxu0 %v9298
    %9914 = vmatpush.bf16.msra.mxu0 %v9294
    %9915 = vmatpush.bf16.msra.mxu0 %v9290
    %9916 = vmatpush.bf16.msra.mxu0 %v9286
    %9917 = vmatmul.bf16.gmra.mxu0 %v8087
    %v9918 = vpop.f32.mrf.mxu0
    %v9919 = vadd.f32 %v9906, %v9918
    %v9920 = vpop.f32.mrf.mxu0
    %9921 = vdwg.mxu0
    %9922 = vmatpush.bf16.msra.mxu0 %v9346
    %9923 = vmatpush.bf16.msra.mxu0 %v9342
    %9924 = vmatpush.bf16.msra.mxu0 %v9338
    %9925 = vmatpush.bf16.msra.mxu0 %v9334
    %9926 = vmatpush.bf16.msra.mxu0 %v9330
    %9927 = vmatpush.bf16.msra.mxu0 %v9326
    %9928 = vmatpush.bf16.msra.mxu0 %v9322
    %9929 = vmatpush.bf16.msra.mxu0 %v9318
    %9930 = vmatmul.bf16.gmra.mxu0 %v8088
    %v9931 = vpop.f32.mrf.mxu0
    %v9932 = vadd.f32 %v9919, %v9931
    %v9933 = vpop.f32.mrf.mxu0
    %9934 = vdwg.mxu0
    %9935 = vmatpush.bf16.msra.mxu0 %v9378
    %9936 = vmatpush.bf16.msra.mxu0 %v9374
    %9937 = vmatpush.bf16.msra.mxu0 %v9370
    %9938 = vmatpush.bf16.msra.mxu0 %v9366
    %9939 = vmatpush.bf16.msra.mxu0 %v9362
    %9940 = vmatpush.bf16.msra.mxu0 %v9358
    %9941 = vmatpush.bf16.msra.mxu0 %v9354
    %9942 = vmatpush.bf16.msra.mxu0 %v9350
    %9943 = vmatmul.bf16.gmra.mxu0 %v8089
    %v9944 = vpop.f32.mrf.mxu0
    %v9945 = vadd.f32 %v9932, %v9944
    %v9946 = vpop.f32.mrf.mxu0
    %9947 = vdwg.mxu0
    %9948 = vmatpush.bf16.msra.mxu0 %v9155
    %9949 = vmatpush.bf16.msra.mxu0 %v9151
    %9950 = vmatpush.bf16.msra.mxu0 %v9147
    %9951 = vmatpush.bf16.msra.mxu0 %v9143
    %9952 = vmatpush.bf16.msra.mxu0 %v9139
    %9953 = vmatpush.bf16.msra.mxu0 %v9135
    %9954 = vmatpush.bf16.msra.mxu0 %v9131
    %9955 = vmatpush.bf16.msra.mxu0 %v9127
    %9956 = vmatmul.bf16.gmra.mxu0 %v8082
    %v9957 = vpop.f32.mrf.mxu0
    %v9958 = vadd.f32 %v8351, %v9957
    %v9959 = vpop.f32.mrf.mxu0
    %9960 = vdwg.mxu0
    %9961 = vmatpush.bf16.msra.mxu0 %v9187
    %9962 = vmatpush.bf16.msra.mxu0 %v9183
    %9963 = vmatpush.bf16.msra.mxu0 %v9179
    %9964 = vmatpush.bf16.msra.mxu0 %v9175
    %9965 = vmatpush.bf16.msra.mxu0 %v9171
    %9966 = vmatpush.bf16.msra.mxu0 %v9167
    %9967 = vmatpush.bf16.msra.mxu0 %v9163
    %9968 = vmatpush.bf16.msra.mxu0 %v9159
    %9969 = vmatmul.bf16.gmra.mxu0 %v8083
    %v9970 = vpop.f32.mrf.mxu0
    %v9971 = vadd.f32 %v9958, %v9970
    %v9972 = vpop.f32.mrf.mxu0
    %9973 = vdwg.mxu0
    %9974 = vmatpush.bf16.msra.mxu0 %v9219
    %9975 = vmatpush.bf16.msra.mxu0 %v9215
    %9976 = vmatpush.bf16.msra.mxu0 %v9211
    %9977 = vmatpush.bf16.msra.mxu0 %v9207
    %9978 = vmatpush.bf16.msra.mxu0 %v9203
    %9979 = vmatpush.bf16.msra.mxu0 %v9199
    %9980 = vmatpush.bf16.msra.mxu0 %v9195
    %9981 = vmatpush.bf16.msra.mxu0 %v9191
    %9982 = vmatmul.bf16.gmra.mxu0 %v8084
    %v9983 = vpop.f32.mrf.mxu0
    %v9984 = vadd.f32 %v9971, %v9983
    %v9985 = vpop.f32.mrf.mxu0
    %9986 = vdwg.mxu0
    %9987 = vmatpush.bf16.msra.mxu0 %v9251
    %9988 = vmatpush.bf16.msra.mxu0 %v9247
    %9989 = vmatpush.bf16.msra.mxu0 %v9243
    %9990 = vmatpush.bf16.msra.mxu0 %v9239
    %9991 = vmatpush.bf16.msra.mxu0 %v9235
    %9992 = vmatpush.bf16.msra.mxu0 %v9231
    %9993 = vmatpush.bf16.msra.mxu0 %v9227
    %9994 = vmatpush.bf16.msra.mxu0 %v9223
    %9995 = vmatmul.bf16.gmra.mxu0 %v8085
    %v9996 = vpop.f32.mrf.mxu0
    %v9997 = vadd.f32 %v9984, %v9996
    %v9998 = vpop.f32.mrf.mxu0
    %9999 = vdwg.mxu0
    %10000 = vmatpush.bf16.msra.mxu0 %v9283
    %10001 = vmatpush.bf16.msra.mxu0 %v9279
    %10002 = vmatpush.bf16.msra.mxu0 %v9275
    %10003 = vmatpush.bf16.msra.mxu0 %v9271
    %10004 = vmatpush.bf16.msra.mxu0 %v9267
    %10005 = vmatpush.bf16.msra.mxu0 %v9263
    %10006 = vmatpush.bf16.msra.mxu0 %v9259
    %10007 = vmatpush.bf16.msra.mxu0 %v9255
    %10008 = vmatmul.bf16.gmra.mxu0 %v8086
    %v10009 = vpop.f32.mrf.mxu0
    %v10010 = vadd.f32 %v9997, %v10009
    %v10011 = vpop.f32.mrf.mxu0
    %10012 = vdwg.mxu0
    %10013 = vmatpush.bf16.msra.mxu0 %v9315
    %10014 = vmatpush.bf16.msra.mxu0 %v9311
    %10015 = vmatpush.bf16.msra.mxu0 %v9307
    %10016 = vmatpush.bf16.msra.mxu0 %v9303
    %10017 = vmatpush.bf16.msra.mxu0 %v9299
    %10018 = vmatpush.bf16.msra.mxu0 %v9295
    %10019 = vmatpush.bf16.msra.mxu0 %v9291
    %10020 = vmatpush.bf16.msra.mxu0 %v9287
    %10021 = vmatmul.bf16.gmra.mxu0 %v8087
    %v10022 = vpop.f32.mrf.mxu0
    %v10023 = vadd.f32 %v10010, %v10022
    %v10024 = vpop.f32.mrf.mxu0
    %10025 = vdwg.mxu0
    %10026 = vmatpush.bf16.msra.mxu0 %v9347
    %10027 = vmatpush.bf16.msra.mxu0 %v9343
    %10028 = vmatpush.bf16.msra.mxu0 %v9339
    %10029 = vmatpush.bf16.msra.mxu0 %v9335
    %10030 = vmatpush.bf16.msra.mxu0 %v9331
    %10031 = vmatpush.bf16.msra.mxu0 %v9327
    %10032 = vmatpush.bf16.msra.mxu0 %v9323
    %10033 = vmatpush.bf16.msra.mxu0 %v9319
    %10034 = vmatmul.bf16.gmra.mxu0 %v8088
    %v10035 = vpop.f32.mrf.mxu0
    %v10036 = vadd.f32 %v10023, %v10035
    %v10037 = vpop.f32.mrf.mxu0
    %10038 = vdwg.mxu0
    %10039 = vmatpush.bf16.msra.mxu0 %v9379
    %10040 = vmatpush.bf16.msra.mxu0 %v9375
    %10041 = vmatpush.bf16.msra.mxu0 %v9371
    %10042 = vmatpush.bf16.msra.mxu0 %v9367
    %10043 = vmatpush.bf16.msra.mxu0 %v9363
    %10044 = vmatpush.bf16.msra.mxu0 %v9359
    %10045 = vmatpush.bf16.msra.mxu0 %v9355
    %10046 = vmatpush.bf16.msra.mxu0 %v9351
    %10047 = vmatmul.bf16.gmra.mxu0 %v8089
    %v10048 = vpop.f32.mrf.mxu0
    %v10049 = vadd.f32 %v10036, %v10048
    %v10050 = vpop.f32.mrf.mxu0
    %10051 = vdwg.mxu0
    %v10052 = vmax.f32 %v9737, 0.0
    %v10053 = vmax.f32 %v9841, 0.0
    %v10054 = vmax.f32 %v9945, 0.0
    %v10055 = vmax.f32 %v10049, 0.0
    %v10056 = vpack.c.bf16 %v10052, %v10052
    %v10057 = vpack.c.bf16 %v10053, %v10053
    %v10058 = vpack.c.bf16 %v10054, %v10054
    %v10059 = vpack.c.bf16 %v10055, %v10055
    %v10060 = vld [vmem:[#allocation9] sm:$0xff]
    %v10061 = vld [vmem:[#allocation9 + $0x8] sm:$0xff]
    %v10062 = vld [vmem:[#allocation9 + $0x10] sm:$0xff]
    %v10063 = vld [vmem:[#allocation9 + $0x18] sm:$0xff]
    %v10064 = vld [vmem:[#allocation9 + $0x20] sm:$0xff]
    %v10065 = vld [vmem:[#allocation9 + $0x28] sm:$0xff]
    %v10066 = vld [vmem:[#allocation9 + $0x30] sm:$0xff]
    %v10067 = vld [vmem:[#allocation9 + $0x38] sm:$0xff]
    %v10068 = vld [vmem:[#allocation9 + $0x40] sm:$0xff]
    %v10069 = vld [vmem:[#allocation9 + $0x48] sm:$0xff]
    %v10070 = vld [vmem:[#allocation9 + $0x50] sm:$0xff]
    %v10071 = vld [vmem:[#allocation9 + $0x58] sm:$0xff]
    %v10072 = vld [vmem:[#allocation9 + $0x60] sm:$0xff]
    %v10073 = vld [vmem:[#allocation9 + $0x68] sm:$0xff]
    %v10074 = vld [vmem:[#allocation9 + $0x70] sm:$0xff]
    %v10075 = vld [vmem:[#allocation9 + $0x78] sm:$0xff]
    %v10076 = vld [vmem:[#allocation9 + $0x80] sm:$0xff]
    %v10077 = vld [vmem:[#allocation9 + $0x88] sm:$0xff]
    %v10078 = vld [vmem:[#allocation9 + $0x90] sm:$0xff]
    %v10079 = vld [vmem:[#allocation9 + $0x98] sm:$0xff]
    %v10080 = vld [vmem:[#allocation9 + $0xa0] sm:$0xff]
    %v10081 = vld [vmem:[#allocation9 + $0xa8] sm:$0xff]
    %v10082 = vld [vmem:[#allocation9 + $0xb0] sm:$0xff]
    %v10083 = vld [vmem:[#allocation9 + $0xb8] sm:$0xff]
    %v10084 = vld [vmem:[#allocation9 + $0xc0] sm:$0xff]
    %v10085 = vld [vmem:[#allocation9 + $0xc8] sm:$0xff]
    %v10086 = vld [vmem:[#allocation9 + $0xd0] sm:$0xff]
    %v10087 = vld [vmem:[#allocation9 + $0xd8] sm:$0xff]
    %v10088 = vld [vmem:[#allocation9 + $0xe0] sm:$0xff]
    %v10089 = vld [vmem:[#allocation9 + $0xe8] sm:$0xff]
    %v10090 = vld [vmem:[#allocation9 + $0xf0] sm:$0xff]
    %v10091 = vld [vmem:[#allocation9 + $0xf8] sm:$0xff]
    %v10092 = vld [vmem:[#allocation9 + $0x100] sm:$0xff]
    %v10093 = vld [vmem:[#allocation9 + $0x108] sm:$0xff]
    %v10094 = vld [vmem:[#allocation9 + $0x110] sm:$0xff]
    %v10095 = vld [vmem:[#allocation9 + $0x118] sm:$0xff]
    %v10096 = vld [vmem:[#allocation9 + $0x120] sm:$0xff]
    %v10097 = vld [vmem:[#allocation9 + $0x128] sm:$0xff]
    %v10098 = vld [vmem:[#allocation9 + $0x130] sm:$0xff]
    %v10099 = vld [vmem:[#allocation9 + $0x138] sm:$0xff]
    %v10100 = vld [vmem:[#allocation9 + $0x140] sm:$0xff]
    %v10101 = vld [vmem:[#allocation9 + $0x148] sm:$0xff]
    %v10102 = vld [vmem:[#allocation9 + $0x150] sm:$0xff]
    %v10103 = vld [vmem:[#allocation9 + $0x158] sm:$0xff]
    %v10104 = vld [vmem:[#allocation9 + $0x160] sm:$0xff]
    %v10105 = vld [vmem:[#allocation9 + $0x168] sm:$0xff]
    %v10106 = vld [vmem:[#allocation9 + $0x170] sm:$0xff]
    %v10107 = vld [vmem:[#allocation9 + $0x178] sm:$0xff]
    %v10108 = vld [vmem:[#allocation9 + $0x180] sm:$0xff]
    %v10109 = vld [vmem:[#allocation9 + $0x188] sm:$0xff]
    %v10110 = vld [vmem:[#allocation9 + $0x190] sm:$0xff]
    %v10111 = vld [vmem:[#allocation9 + $0x198] sm:$0xff]
    %v10112 = vld [vmem:[#allocation9 + $0x1a0] sm:$0xff]
    %v10113 = vld [vmem:[#allocation9 + $0x1a8] sm:$0xff]
    %v10114 = vld [vmem:[#allocation9 + $0x1b0] sm:$0xff]
    %v10115 = vld [vmem:[#allocation9 + $0x1b8] sm:$0xff]
    %v10116 = vld [vmem:[#allocation9 + $0x1c0] sm:$0xff]
    %v10117 = vld [vmem:[#allocation9 + $0x1c8] sm:$0xff]
    %v10118 = vld [vmem:[#allocation9 + $0x1d0] sm:$0xff]
    %v10119 = vld [vmem:[#allocation9 + $0x1d8] sm:$0xff]
    %v10120 = vld [vmem:[#allocation9 + $0x1e0] sm:$0xff]
    %v10121 = vld [vmem:[#allocation9 + $0x1e8] sm:$0xff]
    %v10122 = vld [vmem:[#allocation9 + $0x1f0] sm:$0xff]
    %v10123 = vld [vmem:[#allocation9 + $0x1f8] sm:$0xff]
    %v10124 = vld [vmem:[#allocation10] sm:$0x3]
    %v10126 = vperm.slane %v10124, 0
    %v10127 = vperm.slane %v10124, 1
    %v10194 = vunpack.c.l.b16 %v10060
    %v10195 = vunpack.c.h.b16 %v10060
    %v10196 = vunpack.c.l.b16 %v10061
    %v10197 = vunpack.c.h.b16 %v10061
    %v10198 = vunpack.c.l.b16 %v10062
    %v10199 = vunpack.c.h.b16 %v10062
    %v10200 = vunpack.c.l.b16 %v10063
    %v10201 = vunpack.c.h.b16 %v10063
    %v10202 = vunpack.c.l.b16 %v10064
    %v10203 = vunpack.c.h.b16 %v10064
    %v10204 = vunpack.c.l.b16 %v10065
    %v10205 = vunpack.c.h.b16 %v10065
    %v10206 = vunpack.c.l.b16 %v10066
    %v10207 = vunpack.c.h.b16 %v10066
    %v10208 = vunpack.c.l.b16 %v10067
    %v10209 = vunpack.c.h.b16 %v10067
    %v10210 = vunpack.c.l.b16 %v10068
    %v10211 = vunpack.c.h.b16 %v10068
    %v10212 = vunpack.c.l.b16 %v10069
    %v10213 = vunpack.c.h.b16 %v10069
    %v10214 = vunpack.c.l.b16 %v10070
    %v10215 = vunpack.c.h.b16 %v10070
    %v10216 = vunpack.c.l.b16 %v10071
    %v10217 = vunpack.c.h.b16 %v10071
    %v10218 = vunpack.c.l.b16 %v10072
    %v10219 = vunpack.c.h.b16 %v10072
    %v10220 = vunpack.c.l.b16 %v10073
    %v10221 = vunpack.c.h.b16 %v10073
    %v10222 = vunpack.c.l.b16 %v10074
    %v10223 = vunpack.c.h.b16 %v10074
    %v10224 = vunpack.c.l.b16 %v10075
    %v10225 = vunpack.c.h.b16 %v10075
    %v10226 = vunpack.c.l.b16 %v10076
    %v10227 = vunpack.c.h.b16 %v10076
    %v10228 = vunpack.c.l.b16 %v10077
    %v10229 = vunpack.c.h.b16 %v10077
    %v10230 = vunpack.c.l.b16 %v10078
    %v10231 = vunpack.c.h.b16 %v10078
    %v10232 = vunpack.c.l.b16 %v10079
    %v10233 = vunpack.c.h.b16 %v10079
    %v10234 = vunpack.c.l.b16 %v10080
    %v10235 = vunpack.c.h.b16 %v10080
    %v10236 = vunpack.c.l.b16 %v10081
    %v10237 = vunpack.c.h.b16 %v10081
    %v10238 = vunpack.c.l.b16 %v10082
    %v10239 = vunpack.c.h.b16 %v10082
    %v10240 = vunpack.c.l.b16 %v10083
    %v10241 = vunpack.c.h.b16 %v10083
    %v10242 = vunpack.c.l.b16 %v10084
    %v10243 = vunpack.c.h.b16 %v10084
    %v10244 = vunpack.c.l.b16 %v10085
    %v10245 = vunpack.c.h.b16 %v10085
    %v10246 = vunpack.c.l.b16 %v10086
    %v10247 = vunpack.c.h.b16 %v10086
    %v10248 = vunpack.c.l.b16 %v10087
    %v10249 = vunpack.c.h.b16 %v10087
    %v10250 = vunpack.c.l.b16 %v10088
    %v10251 = vunpack.c.h.b16 %v10088
    %v10252 = vunpack.c.l.b16 %v10089
    %v10253 = vunpack.c.h.b16 %v10089
    %v10254 = vunpack.c.l.b16 %v10090
    %v10255 = vunpack.c.h.b16 %v10090
    %v10256 = vunpack.c.l.b16 %v10091
    %v10257 = vunpack.c.h.b16 %v10091
    %v10258 = vunpack.c.l.b16 %v10092
    %v10259 = vunpack.c.h.b16 %v10092
    %v10260 = vunpack.c.l.b16 %v10093
    %v10261 = vunpack.c.h.b16 %v10093
    %v10262 = vunpack.c.l.b16 %v10094
    %v10263 = vunpack.c.h.b16 %v10094
    %v10264 = vunpack.c.l.b16 %v10095
    %v10265 = vunpack.c.h.b16 %v10095
    %v10266 = vunpack.c.l.b16 %v10096
    %v10267 = vunpack.c.h.b16 %v10096
    %v10268 = vunpack.c.l.b16 %v10097
    %v10269 = vunpack.c.h.b16 %v10097
    %v10270 = vunpack.c.l.b16 %v10098
    %v10271 = vunpack.c.h.b16 %v10098
    %v10272 = vunpack.c.l.b16 %v10099
    %v10273 = vunpack.c.h.b16 %v10099
    %v10274 = vunpack.c.l.b16 %v10100
    %v10275 = vunpack.c.h.b16 %v10100
    %v10276 = vunpack.c.l.b16 %v10101
    %v10277 = vunpack.c.h.b16 %v10101
    %v10278 = vunpack.c.l.b16 %v10102
    %v10279 = vunpack.c.h.b16 %v10102
    %v10280 = vunpack.c.l.b16 %v10103
    %v10281 = vunpack.c.h.b16 %v10103
    %v10282 = vunpack.c.l.b16 %v10104
    %v10283 = vunpack.c.h.b16 %v10104
    %v10284 = vunpack.c.l.b16 %v10105
    %v10285 = vunpack.c.h.b16 %v10105
    %v10286 = vunpack.c.l.b16 %v10106
    %v10287 = vunpack.c.h.b16 %v10106
    %v10288 = vunpack.c.l.b16 %v10107
    %v10289 = vunpack.c.h.b16 %v10107
    %v10290 = vunpack.c.l.b16 %v10108
    %v10291 = vunpack.c.h.b16 %v10108
    %v10292 = vunpack.c.l.b16 %v10109
    %v10293 = vunpack.c.h.b16 %v10109
    %v10294 = vunpack.c.l.b16 %v10110
    %v10295 = vunpack.c.h.b16 %v10110
    %v10296 = vunpack.c.l.b16 %v10111
    %v10297 = vunpack.c.h.b16 %v10111
    %v10298 = vunpack.c.l.b16 %v10112
    %v10299 = vunpack.c.h.b16 %v10112
    %v10300 = vunpack.c.l.b16 %v10113
    %v10301 = vunpack.c.h.b16 %v10113
    %v10302 = vunpack.c.l.b16 %v10114
    %v10303 = vunpack.c.h.b16 %v10114
    %v10304 = vunpack.c.l.b16 %v10115
    %v10305 = vunpack.c.h.b16 %v10115
    %v10306 = vunpack.c.l.b16 %v10116
    %v10307 = vunpack.c.h.b16 %v10116
    %v10308 = vunpack.c.l.b16 %v10117
    %v10309 = vunpack.c.h.b16 %v10117
    %v10310 = vunpack.c.l.b16 %v10118
    %v10311 = vunpack.c.h.b16 %v10118
    %v10312 = vunpack.c.l.b16 %v10119
    %v10313 = vunpack.c.h.b16 %v10119
    %v10314 = vunpack.c.l.b16 %v10120
    %v10315 = vunpack.c.h.b16 %v10120
    %v10316 = vunpack.c.l.b16 %v10121
    %v10317 = vunpack.c.h.b16 %v10121
    %v10318 = vunpack.c.l.b16 %v10122
    %v10319 = vunpack.c.h.b16 %v10122
    %v10320 = vunpack.c.l.b16 %v10123
    %v10321 = vunpack.c.h.b16 %v10123
    %v10322 = vpack.c.b16 %v10196, %v10194
    %v10323 = vpack.c.b16 %v10197, %v10195
    %v10324 = vpack.c.b16 %v10200, %v10198
    %v10325 = vpack.c.b16 %v10201, %v10199
    %v10326 = vpack.c.b16 %v10204, %v10202
    %v10327 = vpack.c.b16 %v10205, %v10203
    %v10328 = vpack.c.b16 %v10208, %v10206
    %v10329 = vpack.c.b16 %v10209, %v10207
    %v10330 = vpack.c.b16 %v10212, %v10210
    %v10331 = vpack.c.b16 %v10213, %v10211
    %v10332 = vpack.c.b16 %v10216, %v10214
    %v10333 = vpack.c.b16 %v10217, %v10215
    %v10334 = vpack.c.b16 %v10220, %v10218
    %v10335 = vpack.c.b16 %v10221, %v10219
    %v10336 = vpack.c.b16 %v10224, %v10222
    %v10337 = vpack.c.b16 %v10225, %v10223
    %v10338 = vpack.c.b16 %v10228, %v10226
    %v10339 = vpack.c.b16 %v10229, %v10227
    %v10340 = vpack.c.b16 %v10232, %v10230
    %v10341 = vpack.c.b16 %v10233, %v10231
    %v10342 = vpack.c.b16 %v10236, %v10234
    %v10343 = vpack.c.b16 %v10237, %v10235
    %v10344 = vpack.c.b16 %v10240, %v10238
    %v10345 = vpack.c.b16 %v10241, %v10239
    %v10346 = vpack.c.b16 %v10244, %v10242
    %v10347 = vpack.c.b16 %v10245, %v10243
    %v10348 = vpack.c.b16 %v10248, %v10246
    %v10349 = vpack.c.b16 %v10249, %v10247
    %v10350 = vpack.c.b16 %v10252, %v10250
    %v10351 = vpack.c.b16 %v10253, %v10251
    %v10352 = vpack.c.b16 %v10256, %v10254
    %v10353 = vpack.c.b16 %v10257, %v10255
    %v10354 = vpack.c.b16 %v10260, %v10258
    %v10355 = vpack.c.b16 %v10261, %v10259
    %v10356 = vpack.c.b16 %v10264, %v10262
    %v10357 = vpack.c.b16 %v10265, %v10263
    %v10358 = vpack.c.b16 %v10268, %v10266
    %v10359 = vpack.c.b16 %v10269, %v10267
    %v10360 = vpack.c.b16 %v10272, %v10270
    %v10361 = vpack.c.b16 %v10273, %v10271
    %v10362 = vpack.c.b16 %v10276, %v10274
    %v10363 = vpack.c.b16 %v10277, %v10275
    %v10364 = vpack.c.b16 %v10280, %v10278
    %v10365 = vpack.c.b16 %v10281, %v10279
    %v10366 = vpack.c.b16 %v10284, %v10282
    %v10367 = vpack.c.b16 %v10285, %v10283
    %v10368 = vpack.c.b16 %v10288, %v10286
    %v10369 = vpack.c.b16 %v10289, %v10287
    %v10370 = vpack.c.b16 %v10292, %v10290
    %v10371 = vpack.c.b16 %v10293, %v10291
    %v10372 = vpack.c.b16 %v10296, %v10294
    %v10373 = vpack.c.b16 %v10297, %v10295
    %v10374 = vpack.c.b16 %v10300, %v10298
    %v10375 = vpack.c.b16 %v10301, %v10299
    %v10376 = vpack.c.b16 %v10304, %v10302
    %v10377 = vpack.c.b16 %v10305, %v10303
    %v10378 = vpack.c.b16 %v10308, %v10306
    %v10379 = vpack.c.b16 %v10309, %v10307
    %v10380 = vpack.c.b16 %v10312, %v10310
    %v10381 = vpack.c.b16 %v10313, %v10311
    %v10382 = vpack.c.b16 %v10316, %v10314
    %v10383 = vpack.c.b16 %v10317, %v10315
    %v10384 = vpack.c.b16 %v10320, %v10318
    %v10385 = vpack.c.b16 %v10321, %v10319
    %10450 = vmatpush.bf16.msra.mxu0 %v10336
    %10451 = vmatpush.bf16.msra.mxu0 %v10334
    %10452 = vmatpush.bf16.msra.mxu0 %v10332
    %10453 = vmatpush.bf16.msra.mxu0 %v10330
    %10454 = vmatpush.bf16.msra.mxu0 %v10328
    %10455 = vmatpush.bf16.msra.mxu0 %v10326
    %10456 = vmatpush.bf16.msra.mxu0 %v10324
    %10457 = vmatpush.bf16.msra.mxu0 %v10322
    %10458 = vmatmul.bf16.gmra.mxu0 %v10056
    %v10459 = vpop.f32.mrf.mxu0
    %v10460 = vadd.f32 %v10126, %v10459
    %v10461 = vpop.f32.mrf.mxu0
    %10462 = vdwg.mxu0
    %10463 = vmatpush.bf16.msra.mxu0 %v10352
    %10464 = vmatpush.bf16.msra.mxu0 %v10350
    %10465 = vmatpush.bf16.msra.mxu0 %v10348
    %10466 = vmatpush.bf16.msra.mxu0 %v10346
    %10467 = vmatpush.bf16.msra.mxu0 %v10344
    %10468 = vmatpush.bf16.msra.mxu0 %v10342
    %10469 = vmatpush.bf16.msra.mxu0 %v10340
    %10470 = vmatpush.bf16.msra.mxu0 %v10338
    %10471 = vmatmul.bf16.gmra.mxu0 %v10057
    %v10472 = vpop.f32.mrf.mxu0
    %v10473 = vadd.f32 %v10460, %v10472
    %v10474 = vpop.f32.mrf.mxu0
    %10475 = vdwg.mxu0
    %10476 = vmatpush.bf16.msra.mxu0 %v10368
    %10477 = vmatpush.bf16.msra.mxu0 %v10366
    %10478 = vmatpush.bf16.msra.mxu0 %v10364
    %10479 = vmatpush.bf16.msra.mxu0 %v10362
    %10480 = vmatpush.bf16.msra.mxu0 %v10360
    %10481 = vmatpush.bf16.msra.mxu0 %v10358
    %10482 = vmatpush.bf16.msra.mxu0 %v10356
    %10483 = vmatpush.bf16.msra.mxu0 %v10354
    %10484 = vmatmul.bf16.gmra.mxu0 %v10058
    %v10485 = vpop.f32.mrf.mxu0
    %v10486 = vadd.f32 %v10473, %v10485
    %v10487 = vpop.f32.mrf.mxu0
    %10488 = vdwg.mxu0
    %10489 = vmatpush.bf16.msra.mxu0 %v10384
    %10490 = vmatpush.bf16.msra.mxu0 %v10382
    %10491 = vmatpush.bf16.msra.mxu0 %v10380
    %10492 = vmatpush.bf16.msra.mxu0 %v10378
    %10493 = vmatpush.bf16.msra.mxu0 %v10376
    %10494 = vmatpush.bf16.msra.mxu0 %v10374
    %10495 = vmatpush.bf16.msra.mxu0 %v10372
    %10496 = vmatpush.bf16.msra.mxu0 %v10370
    %10497 = vmatmul.bf16.gmra.mxu0 %v10059
    %v10498 = vpop.f32.mrf.mxu0
    %v10499 = vadd.f32 %v10486, %v10498
    %v10500 = vpop.f32.mrf.mxu0
    %10501 = vdwg.mxu0
    %10502 = vmatpush.bf16.msra.mxu0 %v10337
    %10503 = vmatpush.bf16.msra.mxu0 %v10335
    %10504 = vmatpush.bf16.msra.mxu0 %v10333
    %10505 = vmatpush.bf16.msra.mxu0 %v10331
    %10506 = vmatpush.bf16.msra.mxu0 %v10329
    %10507 = vmatpush.bf16.msra.mxu0 %v10327
    %10508 = vmatpush.bf16.msra.mxu0 %v10325
    %10509 = vmatpush.bf16.msra.mxu0 %v10323
    %10510 = vmatmul.bf16.gmra.mxu0 %v10056
    %v10511 = vpop.f32.mrf.mxu0
    %v10512 = vadd.f32 %v10127, %v10511
    %v10513 = vpop.f32.mrf.mxu0
    %10514 = vdwg.mxu0
    %10515 = vmatpush.bf16.msra.mxu0 %v10353
    %10516 = vmatpush.bf16.msra.mxu0 %v10351
    %10517 = vmatpush.bf16.msra.mxu0 %v10349
    %10518 = vmatpush.bf16.msra.mxu0 %v10347
    %10519 = vmatpush.bf16.msra.mxu0 %v10345
    %10520 = vmatpush.bf16.msra.mxu0 %v10343
    %10521 = vmatpush.bf16.msra.mxu0 %v10341
    %10522 = vmatpush.bf16.msra.mxu0 %v10339
    %10523 = vmatmul.bf16.gmra.mxu0 %v10057
    %v10524 = vpop.f32.mrf.mxu0
    %v10525 = vadd.f32 %v10512, %v10524
    %v10526 = vpop.f32.mrf.mxu0
    %10527 = vdwg.mxu0
    %10528 = vmatpush.bf16.msra.mxu0 %v10369
    %10529 = vmatpush.bf16.msra.mxu0 %v10367
    %10530 = vmatpush.bf16.msra.mxu0 %v10365
    %10531 = vmatpush.bf16.msra.mxu0 %v10363
    %10532 = vmatpush.bf16.msra.mxu0 %v10361
    %10533 = vmatpush.bf16.msra.mxu0 %v10359
    %10534 = vmatpush.bf16.msra.mxu0 %v10357
    %10535 = vmatpush.bf16.msra.mxu0 %v10355
    %10536 = vmatmul.bf16.gmra.mxu0 %v10058
    %v10537 = vpop.f32.mrf.mxu0
    %v10538 = vadd.f32 %v10525, %v10537
    %v10539 = vpop.f32.mrf.mxu0
    %10540 = vdwg.mxu0
    %10541 = vmatpush.bf16.msra.mxu0 %v10385
    %10542 = vmatpush.bf16.msra.mxu0 %v10383
    %10543 = vmatpush.bf16.msra.mxu0 %v10381
    %10544 = vmatpush.bf16.msra.mxu0 %v10379
    %10545 = vmatpush.bf16.msra.mxu0 %v10377
    %10546 = vmatpush.bf16.msra.mxu0 %v10375
    %10547 = vmatpush.bf16.msra.mxu0 %v10373
    %10548 = vmatpush.bf16.msra.mxu0 %v10371
    %10549 = vmatmul.bf16.gmra.mxu0 %v10059
    %v10550 = vpop.f32.mrf.mxu0
    %v10551 = vadd.f32 %v10538, %v10550
    %v10552 = vpop.f32.mrf.mxu0
    %10553 = vdwg.mxu0
    %v10554 = vmax.f32 %v10499, 0.0
    %v10555 = vmax.f32 %v10551, 0.0
    %v10556 = vpack.c.bf16 %v10554, %v10554
    %v10557 = vpack.c.bf16 %v10555, %v10555
    %v10558 = vld [vmem:[#allocation12] sm:$0xf]
    %v10559 = vld [vmem:[#allocation12 + $0x4] sm:$0xf]
    %v10560 = vld [vmem:[#allocation12 + $0x8] sm:$0xf]
    %v10561 = vld [vmem:[#allocation12 + $0xc] sm:$0xf]
    %v10562 = vld [vmem:[#allocation12 + $0x10] sm:$0xf]
    %v10563 = vld [vmem:[#allocation12 + $0x14] sm:$0xf]
    %v10564 = vld [vmem:[#allocation12 + $0x18] sm:$0xf]
    %v10565 = vld [vmem:[#allocation12 + $0x1c] sm:$0xf]
    %v10566 = vld [vmem:[#allocation12 + $0x20] sm:$0xf]
    %v10567 = vld [vmem:[#allocation12 + $0x24] sm:$0xf]
    %v10568 = vld [vmem:[#allocation12 + $0x28] sm:$0xf]
    %v10569 = vld [vmem:[#allocation12 + $0x2c] sm:$0xf]
    %v10570 = vld [vmem:[#allocation12 + $0x30] sm:$0xf]
    %v10571 = vld [vmem:[#allocation12 + $0x34] sm:$0xf]
    %v10572 = vld [vmem:[#allocation12 + $0x38] sm:$0xf]
    %v10573 = vld [vmem:[#allocation12 + $0x3c] sm:$0xf]
    %v10574 = vld [vmem:[#allocation12 + $0x40] sm:$0xf]
    %v10575 = vld [vmem:[#allocation12 + $0x44] sm:$0xf]
    %v10576 = vld [vmem:[#allocation12 + $0x48] sm:$0xf]
    %v10577 = vld [vmem:[#allocation12 + $0x4c] sm:$0xf]
    %v10578 = vld [vmem:[#allocation12 + $0x50] sm:$0xf]
    %v10579 = vld [vmem:[#allocation12 + $0x54] sm:$0xf]
    %v10580 = vld [vmem:[#allocation12 + $0x58] sm:$0xf]
    %v10581 = vld [vmem:[#allocation12 + $0x5c] sm:$0xf]
    %v10582 = vld [vmem:[#allocation12 + $0x60] sm:$0xf]
    %v10583 = vld [vmem:[#allocation12 + $0x64] sm:$0xf]
    %v10584 = vld [vmem:[#allocation12 + $0x68] sm:$0xf]
    %v10585 = vld [vmem:[#allocation12 + $0x6c] sm:$0xf]
    %v10586 = vld [vmem:[#allocation12 + $0x70] sm:$0xf]
    %v10587 = vld [vmem:[#allocation12 + $0x74] sm:$0xf]
    %v10588 = vld [vmem:[#allocation12 + $0x78] sm:$0xf]
    %v10589 = vld [vmem:[#allocation12 + $0x7c] sm:$0xf]
    %v10590 = vld [vmem:[#allocation13] sm:$0x1]
    %v10592 = vperm.slane %v10590, 0
    %v10626 = vunpack.c.l.b16 %v10558
    %v10627 = vunpack.c.l.b16 %v10559
    %v10628 = vunpack.c.l.b16 %v10560
    %v10629 = vunpack.c.l.b16 %v10561
    %v10630 = vunpack.c.l.b16 %v10562
    %v10631 = vunpack.c.l.b16 %v10563
    %v10632 = vunpack.c.l.b16 %v10564
    %v10633 = vunpack.c.l.b16 %v10565
    %v10634 = vunpack.c.l.b16 %v10566
    %v10635 = vunpack.c.l.b16 %v10567
    %v10636 = vunpack.c.l.b16 %v10568
    %v10637 = vunpack.c.l.b16 %v10569
    %v10638 = vunpack.c.l.b16 %v10570
    %v10639 = vunpack.c.l.b16 %v10571
    %v10640 = vunpack.c.l.b16 %v10572
    %v10641 = vunpack.c.l.b16 %v10573
    %v10642 = vunpack.c.l.b16 %v10574
    %v10643 = vunpack.c.l.b16 %v10575
    %v10644 = vunpack.c.l.b16 %v10576
    %v10645 = vunpack.c.l.b16 %v10577
    %v10646 = vunpack.c.l.b16 %v10578
    %v10647 = vunpack.c.l.b16 %v10579
    %v10648 = vunpack.c.l.b16 %v10580
    %v10649 = vunpack.c.l.b16 %v10581
    %v10650 = vunpack.c.l.b16 %v10582
    %v10651 = vunpack.c.l.b16 %v10583
    %v10652 = vunpack.c.l.b16 %v10584
    %v10653 = vunpack.c.l.b16 %v10585
    %v10654 = vunpack.c.l.b16 %v10586
    %v10655 = vunpack.c.l.b16 %v10587
    %v10656 = vunpack.c.l.b16 %v10588
    %v10657 = vunpack.c.l.b16 %v10589
    %v10658 = vpack.c.b16 %v10627, %v10626
    %v10659 = vpack.c.b16 %v10629, %v10628
    %v10660 = vpack.c.b16 %v10631, %v10630
    %v10661 = vpack.c.b16 %v10633, %v10632
    %v10662 = vpack.c.b16 %v10635, %v10634
    %v10663 = vpack.c.b16 %v10637, %v10636
    %v10664 = vpack.c.b16 %v10639, %v10638
    %v10665 = vpack.c.b16 %v10641, %v10640
    %v10666 = vpack.c.b16 %v10643, %v10642
    %v10667 = vpack.c.b16 %v10645, %v10644
    %v10668 = vpack.c.b16 %v10647, %v10646
    %v10669 = vpack.c.b16 %v10649, %v10648
    %v10670 = vpack.c.b16 %v10651, %v10650
    %v10671 = vpack.c.b16 %v10653, %v10652
    %v10672 = vpack.c.b16 %v10655, %v10654
    %v10673 = vpack.c.b16 %v10657, %v10656
    %10690 = vmatpush.bf16.msra.mxu0 %v10665
    %10691 = vmatpush.bf16.msra.mxu0 %v10664
    %10692 = vmatpush.bf16.msra.mxu0 %v10663
    %10693 = vmatpush.bf16.msra.mxu0 %v10662
    %10694 = vmatpush.bf16.msra.mxu0 %v10661
    %10695 = vmatpush.bf16.msra.mxu0 %v10660
    %10696 = vmatpush.bf16.msra.mxu0 %v10659
    %10697 = vmatpush.bf16.msra.mxu0 %v10658
    %10698 = vmatmul.bf16.gmra.mxu0 %v10556
    %v10699 = vpop.f32.mrf.mxu0
    %v10700 = vadd.f32 %v10592, %v10699
    %v10701 = vpop.f32.mrf.mxu0
    %10702 = vdwg.mxu0
    %10703 = vmatpush.bf16.msra.mxu0 %v10673
    %10704 = vmatpush.bf16.msra.mxu0 %v10672
    %10705 = vmatpush.bf16.msra.mxu0 %v10671
    %10706 = vmatpush.bf16.msra.mxu0 %v10670
    %10707 = vmatpush.bf16.msra.mxu0 %v10669
    %10708 = vmatpush.bf16.msra.mxu0 %v10668
    %10709 = vmatpush.bf16.msra.mxu0 %v10667
    %10710 = vmatpush.bf16.msra.mxu0 %v10666
    %10711 = vmatmul.bf16.gmra.mxu0 %v10557
    %v10712 = vpop.f32.mrf.mxu0
    %v10713 = vadd.f32 %v10700, %v10712
    %v10714 = vpop.f32.mrf.mxu0
    %10715 = vdwg.mxu0
    %v10716 = vmax.f32 %v10713, 0.0
    %v10717 = vpack.c.bf16 %v10716, %v10716
    %v10718 = vld [vmem:[#allocation15] sm:$0xf]
    %v10719 = vld [vmem:[#allocation15 + $0x4] sm:$0xf]
    %v10720 = vld [vmem:[#allocation15 + $0x8] sm:$0xf]
    %v10721 = vld [vmem:[#allocation15 + $0xc] sm:$0xf]
    %v10722 = vld [vmem:[#allocation15 + $0x10] sm:$0xf]
    %v10723 = vld [vmem:[#allocation15 + $0x14] sm:$0xf]
    %v10724 = vld [vmem:[#allocation15 + $0x18] sm:$0xf]
    %v10725 = vld [vmem:[#allocation15 + $0x1c] sm:$0xf]
    %v10726 = vld [vmem:[#allocation15 + $0x20] sm:$0xf]
    %v10727 = vld [vmem:[#allocation15 + $0x24] sm:$0xf]
    %v10728 = vld [vmem:[#allocation15 + $0x28] sm:$0xf]
    %v10729 = vld [vmem:[#allocation15 + $0x2c] sm:$0xf]
    %v10730 = vld [vmem:[#allocation15 + $0x30] sm:$0xf]
    %v10731 = vld [vmem:[#allocation15 + $0x34] sm:$0xf]
    %v10732 = vld [vmem:[#allocation15 + $0x38] sm:$0xf]
    %v10733 = vld [vmem:[#allocation15 + $0x3c] sm:$0xf]
    %v10734 = vld [vmem:[#allocation16] sm:$0x1]
    %v10736 = vperm.slane %v10734, 0
    %v10754 = vunpack.c.l.b16 %v10718
    %v10755 = vunpack.c.l.b16 %v10719
    %v10756 = vunpack.c.l.b16 %v10720
    %v10757 = vunpack.c.l.b16 %v10721
    %v10758 = vunpack.c.l.b16 %v10722
    %v10759 = vunpack.c.l.b16 %v10723
    %v10760 = vunpack.c.l.b16 %v10724
    %v10761 = vunpack.c.l.b16 %v10725
    %v10762 = vunpack.c.l.b16 %v10726
    %v10763 = vunpack.c.l.b16 %v10727
    %v10764 = vunpack.c.l.b16 %v10728
    %v10765 = vunpack.c.l.b16 %v10729
    %v10766 = vunpack.c.l.b16 %v10730
    %v10767 = vunpack.c.l.b16 %v10731
    %v10768 = vunpack.c.l.b16 %v10732
    %v10769 = vunpack.c.l.b16 %v10733
    %v10770 = vpack.c.b16 %v10755, %v10754
    %v10771 = vpack.c.b16 %v10757, %v10756
    %v10772 = vpack.c.b16 %v10759, %v10758
    %v10773 = vpack.c.b16 %v10761, %v10760
    %v10774 = vpack.c.b16 %v10763, %v10762
    %v10775 = vpack.c.b16 %v10765, %v10764
    %v10776 = vpack.c.b16 %v10767, %v10766
    %v10777 = vpack.c.b16 %v10769, %v10768
    %10786 = vmatpush.bf16.msra.mxu0 %v10777
    %10787 = vmatpush.bf16.msra.mxu0 %v10776
    %10788 = vmatpush.bf16.msra.mxu0 %v10775
    %10789 = vmatpush.bf16.msra.mxu0 %v10774
    %10790 = vmatpush.bf16.msra.mxu0 %v10773
    %10791 = vmatpush.bf16.msra.mxu0 %v10772
    %10792 = vmatpush.bf16.msra.mxu0 %v10771
    %10793 = vmatpush.bf16.msra.mxu0 %v10770
    %10794 = vmatmul.bf16.gmra.mxu0 %v10717
    %v10795 = vpop.f32.mrf.mxu0
    %v10796 = vadd.f32 %v10736, %v10795
    %v10797 = vpop.f32.mrf.mxu0
    %10798 = vdwg.mxu0
    %v10799 = vmul.f32 %v10796, %v10796
    %10800 = vadd.xlane.f32.xlu0 %v10799
    %v10801 = vpop.xlane.xlu0 %10800
    %v10802 = vmax.f32 %v10801, 1e-24
    %v10803 = vrsqrt.pop %v10802
    %v10804 = vmul.f32 %v10803, %v10802
    %v10805 = vmul.f32 %v10804, %v10803
    %v10806 = vmul.f32 0.5, %v10805
    %v10807 = vsub.f32 1.5, %v10806
    %v10808 = vmul.f32 %v10803, %v10807
    %vm10809 = vweird.f32 %v10802
    %vm10810 = vweird.f32 %v10803
    %vm10811 = vmor %vm10809, %vm10810
    %v10812 = vsel %vm10811, %v10803, %v10808
    %v10813 = vmul.f32 %v10796, %v10812
    %10814 = vst [vmem:[%s11] sm:$0xff] %v10813
    // Predicated region
    $region86: #{contrastive_ssl_forward.1} parent=1 // pred_check
      _
    $region87: #{contrastive_ssl_forward.1} parent=1 // pred_check_branch
      %10816 = sbr.rel (0) target = $region89
    $region88: #{contrastive_ssl_forward.1} parent=1 // pred_region
      _
    $region89: #{contrastive_ssl_forward.1} parent=1 // pred_fallthru
      _
    // Predicated region
    $region90: #{contrastive_ssl_forward.1} parent=1 // pred_check
      _
    $region91: #{contrastive_ssl_forward.1} parent=1 // pred_check_branch
      %10818 = sbr.rel (0) target = $region93
    $region92: #{contrastive_ssl_forward.1} parent=1 // pred_region
      _
    $region93: #{contrastive_ssl_forward.1} parent=1 // pred_fallthru
      _
    %10819 = vsyncpa [#allocation3], 1
    %10820 = vsyncpa [#allocation5], 1
    %10821 = vsyncpa [#allocation8], 1
    %10822 = vsyncpa [#allocation11], 1
    %10823 = vsyncpa [#allocation14], 1
    %10824 = vsyncpa [#allocation17], 1

</llo_original>
